<compile_context>
chip_gen: v6e
topology: v6e:2x2x1
jax: 0.10.0
libtpu: 0.0.40
codegen_flags: <defaults>
</compile_context>

<pallas_src>
import functools

import numpy as np
import jax
import jax.numpy as jnp
from jax.experimental import pallas as pl
from jax.experimental.pallas import tpu as pltpu


def _round_up(x, m):
    return ((x + m - 1) // m) * m


def _folded_bn(gamma, beta, mean, var, eps=1e-5):
    scale = gamma / jnp.sqrt(var + eps)
    return scale, beta - mean * scale


def _conv3x3_taps(a, w_ref, H, W, cout_pad, cdt):
    """a: (H, W, Cp) f32 value.  w_ref: (9, Cp, cout_pad) VMEM ref.

    Returns the 3x3 (pad=1) convolution as (H*W, cout_pad) f32, computed as
    9 accumulated MXU matmuls (one per tap)."""
    Cp = a.shape[-1]
    # Build the zero halo in-value (no padded scratch re-staging).
    zrow = jnp.zeros((1, W, Cp), jnp.float32)
    zcol = jnp.zeros((H + 2, 1, Cp), jnp.float32)
    ap = jnp.concatenate([zrow, a, zrow], axis=0)        # (H+2, W,   Cp)
    ap = jnp.concatenate([zcol, ap, zcol], axis=1)       # (H+2, W+2, Cp)

    acc = jnp.zeros((H * W, cout_pad), jnp.float32)
    for t in range(9):                                   # only the 9-tap loop unrolled
        dy, dx = divmod(t, 3)
        sl = ap[dy:dy + H, dx:dx + W, :].reshape(H * W, Cp).astype(cdt)
        acc = acc + jnp.dot(sl, w_ref[t], preferred_element_type=jnp.float32)
    return acc


def _resblock_kernel(x_ref, w1_ref, w2_ref, wsc_ref, aff_ref, out_ref,
                     *, H, W, use_projection):
    """One grid step = one batch sample (channels-last, channel-padded).

    x_ref   : (1, H, W, Cin_pad)      VMEM f32   input sample
    w1_ref  : (9, Cin_pad, Cout_pad)  VMEM       per-tap conv1 weight matrices
    w2_ref  : (9, Cout_pad, Cout_pad) VMEM       per-tap conv2 weight matrices
    wsc_ref : (Cin_pad, Cout_pad)     VMEM       1x1 projection weights (or zeros)
    aff_ref : (8, Cout_pad) f32       VMEM       rows: s1,b1,s2,b2,ssc,bsc,-,-
    out_ref : (1, H*W, Cout_pad)      VMEM f32   output sample (lane-dense)
    """
    cdt = w1_ref.dtype
    cout_pad = out_ref.shape[-1]
    HW = H * W

    x = x_ref[0]                                          # (H, W, Cin_pad) f32
    aff = aff_ref[...]                                    # load once, slice in-value
    s1, b1 = aff[0:1, :], aff[1:2, :]
    s2, b2 = aff[2:3, :], aff[3:4, :]

    # ---- conv1 (3x3, pad=1, no bias) + BN1 + ReLU --------------------------
    h = _conv3x3_taps(x, w1_ref, H, W, cout_pad, cdt)     # (HW, Cout_pad) f32
    h = jnp.maximum(h * s1 + b1, 0.0)

    # ---- conv2 (3x3, pad=1, no bias) + BN2 ---------------------------------
    y = _conv3x3_taps(h.reshape(H, W, cout_pad), w2_ref, H, W, cout_pad, cdt)
    y = y * s2 + b2

    # ---- shortcut (identity or 1x1-conv projection + BN) -------------------
    x_flat = x.reshape(HW, x.shape[-1])
    if use_projection:
        ssc, bsc = aff[4:5, :], aff[5:6, :]
        sc = jnp.dot(x_flat.astype(cdt), wsc_ref[...],
                     preferred_element_type=jnp.float32)
        sc = sc * ssc + bsc
    else:
        sc = x_flat                                       # Cin == Cout (same padding)

    out_ref[0] = jnp.maximum(y + sc, 0.0).astype(out_ref.dtype)


def residual_block_forward(x, params, stride=1, compute_dtype=jnp.bfloat16):
    """Pallas TPU forward of ResidualBlock.  x: (N, Cin, H, W) float32, NCHW."""
    if stride != 1:
        # TODO(synk): stride > 1 (spatial downsampling) not implemented.
        raise NotImplementedError("stride != 1 not implemented")
    N, Cin, H, W = x.shape
    w1 = params["w1"]
    Cout = w1.shape[0]
    use_projection = (Cin != Cout)
    cin_pad = _round_up(Cin, 128)
    cout_pad = _round_up(Cout, 128)
    if not use_projection:
        assert Cin == Cout and cin_pad == cout_pad, "identity shortcut needs Cin == Cout"

    # ---- folded (inference) BatchNorm params --------------------------------
    s1, b1 = _folded_bn(params["bn1_gamma"], params["bn1_beta"],
                        params["bn1_mean"], params["bn1_var"])
    s2, b2 = _folded_bn(params["bn2_gamma"], params["bn2_beta"],
                        params["bn2_mean"], params["bn2_var"])
    if use_projection:
        ssc, bsc = _folded_bn(params["bnsc_gamma"], params["bnsc_beta"],
                              params["bnsc_mean"], params["bnsc_var"])
        wsc = params["wsc"][:, :, 0, 0]                    # (Cout, Cin)
        wsc_t = jnp.pad(jnp.transpose(wsc).astype(jnp.float32),
                        ((0, cin_pad - Cin), (0, cout_pad - Cout))
                        ).astype(compute_dtype)
    else:
        ssc = jnp.ones((Cout,), jnp.float32)
        bsc = jnp.zeros((Cout,), jnp.float32)
        wsc_t = jnp.zeros((cin_pad, cout_pad), compute_dtype)

    def pad_vec(v):
        return jnp.pad(v.astype(jnp.float32), (0, cout_pad - Cout))

    aff = jnp.zeros((8, cout_pad), jnp.float32)
    for i, v in enumerate((s1, b1, s2, b2, ssc, bsc)):
        aff = aff.at[i].set(pad_vec(v))

    # ---- conv weights as per-tap MXU-ready matrices (9, Cin_pad, Cout_pad) --
    def conv_taps(w, cip, cop):
        co, ci = w.shape[0], w.shape[1]
        wt = jnp.transpose(w.astype(jnp.float32), (2, 3, 1, 0)).reshape(9, ci, co)
        wt = jnp.pad(wt, ((0, 0), (0, cip - ci), (0, cop - co)))
        return wt.astype(compute_dtype)

    w1t = conv_taps(w1, cin_pad, cout_pad)
    w2t = conv_taps(params["w2"], cout_pad, cout_pad)

    # ---- activations: NCHW -> NHWC, channel-pad to the 128-lane width -------
    x_nhwc = jnp.transpose(x.astype(jnp.float32), (0, 2, 3, 1))
    x_nhwc = jnp.pad(x_nhwc, ((0, 0), (0, 0), (0, 0), (0, cin_pad - Cin)))

    kernel = functools.partial(_resblock_kernel, H=H, W=W,
                               use_projection=use_projection)

    out_flat = pl.pallas_call(
        kernel,
        out_shape=jax.ShapeDtypeStruct((N, H * W, cout_pad), jnp.float32),
        grid_spec=pltpu.PrefetchScalarGridSpec(
            num_scalar_prefetch=0,
            grid=(N,),
            in_specs=[
                pl.BlockSpec((1, H, W, cin_pad), lambda n: (n, 0, 0, 0)),
                pl.BlockSpec((9, cin_pad, cout_pad), lambda n: (0, 0, 0)),
                pl.BlockSpec((9, cout_pad, cout_pad), lambda n: (0, 0, 0)),
                pl.BlockSpec((cin_pad, cout_pad), lambda n: (0, 0)),
                pl.BlockSpec((8, cout_pad), lambda n: (0, 0)),
            ],
            out_specs=pl.BlockSpec((1, H * W, cout_pad), lambda n: (n, 0, 0)),
        ),
        compiler_params=pltpu.CompilerParams(
            dimension_semantics=("parallel",)),
    )(x_nhwc, w1t, w2t, wsc_t, aff)

    out = out_flat.reshape(N, H, W, cout_pad)[..., :Cout]
    return jnp.transpose(out, (0, 3, 1, 2))


def residual_block_reference(x, params):
    """Pure-JAX reference (lax conv, full f32) with the same folded-BN semantics."""
    N, Cin, H, W = x.shape
    w1 = params["w1"]
    Cout = w1.shape[0]
    use_projection = (Cin != Cout)
    prec = jax.lax.Precision.HIGHEST

    def conv(a, w, pad):
        return jax.lax.conv_general_dilated(
            a, w, window_strides=(1, 1), padding=((pad, pad), (pad, pad)),
            dimension_numbers=("NCHW", "OIHW", "NCHW"), precision=prec)

    def bn(a, scale, bias):
        return a * scale[None, :, None, None] + bias[None, :, None, None]

    s1, b1 = _folded_bn(params["bn1_gamma"], params["bn1_beta"],
                        params["bn1_mean"], params["bn1_var"])
    s2, b2 = _folded_bn(params["bn2_gamma"], params["bn2_beta"],
                        params["bn2_mean"], params["bn2_var"])

    out = jax.nn.relu(bn(conv(x, w1, 1), s1, b1))
    out = bn(conv(out, params["w2"], 1), s2, b2)
    if use_projection:
        ssc, bsc = _folded_bn(params["bnsc_gamma"], params["bnsc_beta"],
                              params["bnsc_mean"], params["bnsc_var"])
        identity = bn(conv(x, params["wsc"], 0), ssc, bsc)
    else:
        identity = x
    return jax.nn.relu(out + identity)


def init_params(key, in_channels, out_channels):
    ks = jax.random.split(key, 12)
    p = {
        "w1": 0.1 * jax.random.normal(ks[0], (out_channels, in_channels, 3, 3), jnp.float32),
        "bn1_gamma": jax.random.uniform(ks[1], (out_channels,), jnp.float32, 0.5, 1.5),
        "bn1_beta": 0.1 * jax.random.normal(ks[2], (out_channels,), jnp.float32),
        "bn1_mean": 0.1 * jax.random.normal(ks[3], (out_channels,), jnp.float32),
        "bn1_var": jax.random.uniform(ks[4], (out_channels,), jnp.float32, 0.5, 1.5),
        "w2": 0.1 * jax.random.normal(ks[5], (out_channels, out_channels, 3, 3), jnp.float32),
        "bn2_gamma": jax.random.uniform(ks[6], (out_channels,), jnp.float32, 0.5, 1.5),
        "bn2_beta": 0.1 * jax.random.normal(ks[7], (out_channels,), jnp.float32),
        "bn2_mean": 0.1 * jax.random.normal(ks[8], (out_channels,), jnp.float32),
        "bn2_var": jax.random.uniform(ks[9], (out_channels,), jnp.float32, 0.5, 1.5),
    }
    if in_channels != out_channels:
        p["wsc"] = 0.1 * jax.random.normal(ks[10], (out_channels, in_channels, 1, 1), jnp.float32)
        ksc = jax.random.split(ks[11], 4)
        p["bnsc_gamma"] = jax.random.uniform(ksc[0], (out_channels,), jnp.float32, 0.5, 1.5)
        p["bnsc_beta"] = 0.1 * jax.random.normal(ksc[1], (out_channels,), jnp.float32)
        p["bnsc_mean"] = 0.1 * jax.random.normal(ksc[2], (out_channels,), jnp.float32)
        p["bnsc_var"] = jax.random.uniform(ksc[3], (out_channels,), jnp.float32, 0.5, 1.5)
    return p


if __name__ == "__main__":
    key = jax.random.PRNGKey(0)

    # Case 1: identity shortcut (Cin == Cout, stride=1), f32 matmul operands.
    N, Cin, Cout, H, W = 2, 4, 4, 16, 16
    params = init_params(jax.random.fold_in(key, 1), Cin, Cout)
    x = jax.random.normal(jax.random.fold_in(key, 2), (N, Cin, H, W), jnp.float32)
    out = jax.block_until_ready(
        residual_block_forward(x, params, compute_dtype=jnp.float32))
    ref = residual_block_reference(x, params)
    assert out.shape == (N, Cout, H, W)
    # tolerance leaves headroom for MXU matmul-precision modes on f32 operands
    np.testing.assert_allclose(np.asarray(out), np.asarray(ref), rtol=3e-2, atol=3e-2)

    # Case 2: projection shortcut (Cin != Cout, stride=1), f32 matmul operands.
    N2, Cin2, Cout2, H2, W2 = 2, 4, 8, 8, 8
    params2 = init_params(jax.random.fold_in(key, 3), Cin2, Cout2)
    x2 = jax.random.normal(jax.random.fold_in(key, 4), (N2, Cin2, H2, W2), jnp.float32)
    out2 = jax.block_until_ready(
        residual_block_forward(x2, params2, compute_dtype=jnp.float32))
    ref2 = residual_block_reference(x2, params2)
    assert out2.shape == (N2, Cout2, H2, W2)
    np.testing.assert_allclose(np.asarray(out2), np.asarray(ref2), rtol=3e-2, atol=3e-2)

    # Case 3: bf16 matmul operands (f32 accumulation), looser tolerance.
    out3 = jax.block_until_ready(
        residual_block_forward(x, params, compute_dtype=jnp.bfloat16))
    np.testing.assert_allclose(np.asarray(out3), np.asarray(ref), rtol=1e-1, atol=1e-1)

    print("KERNEL_OK")
</pallas_src>

<mosaic_0001>
module attributes {stable_mosaic.version = 11 : i64} {
  func.func @_resblock_kernel(%arg0: i32, %arg1: memref<1x16x16x128xf32, #tpu.memory_space<vmem>>, %arg2: memref<9x128x128xf32, #tpu.memory_space<vmem>>, %arg3: memref<9x128x128xf32, #tpu.memory_space<vmem>>, %arg4: memref<128x128xf32, #tpu.memory_space<vmem>>, %arg5: memref<8x128xf32, #tpu.memory_space<vmem>>, %arg6: memref<1x256x128xf32, #tpu.memory_space<vmem>>) attributes {dimension_semantics = [#tpu.dimension_semantics<parallel>], iteration_bounds = array<i64: 2>, scalar_prefetch = 0 : i64, scratch_operands = 0 : i64, tpu.core_type = #tpu.core_type<tc>, window_params = [{transform_indices = @transform_0, window_bounds = array<i64: 1, 16, 16, 128>}, {pipeline_mode = #tpu.pipeline_mode<synchronous>, transform_indices = @transform_1, window_bounds = array<i64: 9, 128, 128>}, {pipeline_mode = #tpu.pipeline_mode<synchronous>, transform_indices = @transform_2, window_bounds = array<i64: 9, 128, 128>}, {pipeline_mode = #tpu.pipeline_mode<synchronous>, transform_indices = @transform_3, window_bounds = array<i64: 128, 128>}, {pipeline_mode = #tpu.pipeline_mode<synchronous>, transform_indices = @transform_4, window_bounds = array<i64: 8, 128>}, {transform_indices = @transform_5, window_bounds = array<i64: 1, 256, 128>}]} {
    %c0 = arith.constant 0 : index
    %c0_0 = arith.constant 0 : index
    %c0_1 = arith.constant 0 : index
    %c0_2 = arith.constant 0 : index
    %0 = vector.load %arg1[%c0, %c0_0, %c0_1, %c0_2] : memref<1x16x16x128xf32, #tpu.memory_space<vmem>>, vector<1x16x16x128xf32>
    %1 = vector.shape_cast %0 : vector<1x16x16x128xf32> to vector<16x16x128xf32>
    %c0_3 = arith.constant 0 : index
    %c0_4 = arith.constant 0 : index
    %2 = vector.load %arg5[%c0_3, %c0_4] : memref<8x128xf32, #tpu.memory_space<vmem>>, vector<8x128xf32>
    %3 = vector.extract_strided_slice %2 {offsets = [0, 0], sizes = [1, 128], strides = [1, 1]} : vector<8x128xf32> to vector<1x128xf32>
    %4 = vector.extract_strided_slice %2 {offsets = [1, 0], sizes = [1, 128], strides = [1, 1]} : vector<8x128xf32> to vector<1x128xf32>
    %5 = vector.extract_strided_slice %2 {offsets = [2, 0], sizes = [1, 128], strides = [1, 1]} : vector<8x128xf32> to vector<1x128xf32>
    %6 = vector.extract_strided_slice %2 {offsets = [3, 0], sizes = [1, 128], strides = [1, 1]} : vector<8x128xf32> to vector<1x128xf32>
    %cst = arith.constant 0.000000e+00 : f32
    %7 = vector.broadcast %cst : f32 to vector<1x16x128xf32>
    %cst_5 = arith.constant 0.000000e+00 : f32
    %8 = vector.broadcast %cst_5 : f32 to vector<18x1x128xf32>
    %9 = tpu.concatenate %7, %1, %7 in 0 : vector<1x16x128xf32>, vector<16x16x128xf32>, vector<1x16x128xf32> -> vector<18x16x128xf32>
    %10 = tpu.concatenate %8, %9, %8 in 1 : vector<18x1x128xf32>, vector<18x16x128xf32>, vector<18x1x128xf32> -> vector<18x18x128xf32>
    %cst_6 = arith.constant 0.000000e+00 : f32
    %11 = vector.broadcast %cst_6 : f32 to vector<256x128xf32>
    %12 = vector.extract_strided_slice %10 {offsets = [0, 0, 0], sizes = [16, 16, 128], strides = [1, 1, 1]} : vector<18x18x128xf32> to vector<16x16x128xf32>
    %13 = vector.shape_cast %12 : vector<16x16x128xf32> to vector<256x128xf32>
    %c0_7 = arith.constant 0 : index
    %c0_8 = arith.constant 0 : index
    %c0_9 = arith.constant 0 : index
    %14 = vector.load %arg2[%c0_7, %c0_8, %c0_9] : memref<9x128x128xf32, #tpu.memory_space<vmem>>, vector<1x128x128xf32>
    %15 = vector.shape_cast %14 : vector<1x128x128xf32> to vector<128x128xf32>
    %cst_10 = arith.constant dense<0.000000e+00> : vector<256x128xf32>
    %16 = tpu.matmul %13, %15, %cst_10 {dimension_numbers = #tpu.dot_dimension_numbers<[1], [0], [0], [1], [0, 0, 1, 1], [], []>} : vector<256x128xf32>, vector<128x128xf32>, vector<256x128xf32> -> vector<256x128xf32>
    %17 = arith.addf %11, %16 : vector<256x128xf32>
    %18 = vector.extract_strided_slice %10 {offsets = [0, 1, 0], sizes = [16, 16, 128], strides = [1, 1, 1]} : vector<18x18x128xf32> to vector<16x16x128xf32>
    %19 = vector.shape_cast %18 : vector<16x16x128xf32> to vector<256x128xf32>
    %c1 = arith.constant 1 : index
    %c0_11 = arith.constant 0 : index
    %c0_12 = arith.constant 0 : index
    %20 = vector.load %arg2[%c1, %c0_11, %c0_12] : memref<9x128x128xf32, #tpu.memory_space<vmem>>, vector<1x128x128xf32>
    %21 = vector.shape_cast %20 : vector<1x128x128xf32> to vector<128x128xf32>
    %cst_13 = arith.constant dense<0.000000e+00> : vector<256x128xf32>
    %22 = tpu.matmul %19, %21, %cst_13 {dimension_numbers = #tpu.dot_dimension_numbers<[1], [0], [0], [1], [0, 0, 1, 1], [], []>} : vector<256x128xf32>, vector<128x128xf32>, vector<256x128xf32> -> vector<256x128xf32>
    %23 = arith.addf %17, %22 : vector<256x128xf32>
    %24 = vector.extract_strided_slice %10 {offsets = [0, 2, 0], sizes = [16, 16, 128], strides = [1, 1, 1]} : vector<18x18x128xf32> to vector<16x16x128xf32>
    %25 = vector.shape_cast %24 : vector<16x16x128xf32> to vector<256x128xf32>
    %c2 = arith.constant 2 : index
    %c0_14 = arith.constant 0 : index
    %c0_15 = arith.constant 0 : index
    %26 = vector.load %arg2[%c2, %c0_14, %c0_15] : memref<9x128x128xf32, #tpu.memory_space<vmem>>, vector<1x128x128xf32>
    %27 = vector.shape_cast %26 : vector<1x128x128xf32> to vector<128x128xf32>
    %cst_16 = arith.constant dense<0.000000e+00> : vector<256x128xf32>
    %28 = tpu.matmul %25, %27, %cst_16 {dimension_numbers = #tpu.dot_dimension_numbers<[1], [0], [0], [1], [0, 0, 1, 1], [], []>} : vector<256x128xf32>, vector<128x128xf32>, vector<256x128xf32> -> vector<256x128xf32>
    %29 = arith.addf %23, %28 : vector<256x128xf32>
    %30 = vector.extract_strided_slice %10 {offsets = [1, 0, 0], sizes = [16, 16, 128], strides = [1, 1, 1]} : vector<18x18x128xf32> to vector<16x16x128xf32>
    %31 = vector.shape_cast %30 : vector<16x16x128xf32> to vector<256x128xf32>
    %c3 = arith.constant 3 : index
    %c0_17 = arith.constant 0 : index
    %c0_18 = arith.constant 0 : index
    %32 = vector.load %arg2[%c3, %c0_17, %c0_18] : memref<9x128x128xf32, #tpu.memory_space<vmem>>, vector<1x128x128xf32>
    %33 = vector.shape_cast %32 : vector<1x128x128xf32> to vector<128x128xf32>
    %cst_19 = arith.constant dense<0.000000e+00> : vector<256x128xf32>
    %34 = tpu.matmul %31, %33, %cst_19 {dimension_numbers = #tpu.dot_dimension_numbers<[1], [0], [0], [1], [0, 0, 1, 1], [], []>} : vector<256x128xf32>, vector<128x128xf32>, vector<256x128xf32> -> vector<256x128xf32>
    %35 = arith.addf %29, %34 : vector<256x128xf32>
    %36 = vector.extract_strided_slice %10 {offsets = [1, 1, 0], sizes = [16, 16, 128], strides = [1, 1, 1]} : vector<18x18x128xf32> to vector<16x16x128xf32>
    %37 = vector.shape_cast %36 : vector<16x16x128xf32> to vector<256x128xf32>
    %c4 = arith.constant 4 : index
    %c0_20 = arith.constant 0 : index
    %c0_21 = arith.constant 0 : index
    %38 = vector.load %arg2[%c4, %c0_20, %c0_21] : memref<9x128x128xf32, #tpu.memory_space<vmem>>, vector<1x128x128xf32>
    %39 = vector.shape_cast %38 : vector<1x128x128xf32> to vector<128x128xf32>
    %cst_22 = arith.constant dense<0.000000e+00> : vector<256x128xf32>
    %40 = tpu.matmul %37, %39, %cst_22 {dimension_numbers = #tpu.dot_dimension_numbers<[1], [0], [0], [1], [0, 0, 1, 1], [], []>} : vector<256x128xf32>, vector<128x128xf32>, vector<256x128xf32> -> vector<256x128xf32>
    %41 = arith.addf %35, %40 : vector<256x128xf32>
    %42 = vector.extract_strided_slice %10 {offsets = [1, 2, 0], sizes = [16, 16, 128], strides = [1, 1, 1]} : vector<18x18x128xf32> to vector<16x16x128xf32>
    %43 = vector.shape_cast %42 : vector<16x16x128xf32> to vector<256x128xf32>
    %c5 = arith.constant 5 : index
    %c0_23 = arith.constant 0 : index
    %c0_24 = arith.constant 0 : index
    %44 = vector.load %arg2[%c5, %c0_23, %c0_24] : memref<9x128x128xf32, #tpu.memory_space<vmem>>, vector<1x128x128xf32>
    %45 = vector.shape_cast %44 : vector<1x128x128xf32> to vector<128x128xf32>
    %cst_25 = arith.constant dense<0.000000e+00> : vector<256x128xf32>
    %46 = tpu.matmul %43, %45, %cst_25 {dimension_numbers = #tpu.dot_dimension_numbers<[1], [0], [0], [1], [0, 0, 1, 1], [], []>} : vector<256x128xf32>, vector<128x128xf32>, vector<256x128xf32> -> vector<256x128xf32>
    %47 = arith.addf %41, %46 : vector<256x128xf32>
    %48 = vector.extract_strided_slice %10 {offsets = [2, 0, 0], sizes = [16, 16, 128], strides = [1, 1, 1]} : vector<18x18x128xf32> to vector<16x16x128xf32>
    %49 = vector.shape_cast %48 : vector<16x16x128xf32> to vector<256x128xf32>
    %c6 = arith.constant 6 : index
    %c0_26 = arith.constant 0 : index
    %c0_27 = arith.constant 0 : index
    %50 = vector.load %arg2[%c6, %c0_26, %c0_27] : memref<9x128x128xf32, #tpu.memory_space<vmem>>, vector<1x128x128xf32>
    %51 = vector.shape_cast %50 : vector<1x128x128xf32> to vector<128x128xf32>
    %cst_28 = arith.constant dense<0.000000e+00> : vector<256x128xf32>
    %52 = tpu.matmul %49, %51, %cst_28 {dimension_numbers = #tpu.dot_dimension_numbers<[1], [0], [0], [1], [0, 0, 1, 1], [], []>} : vector<256x128xf32>, vector<128x128xf32>, vector<256x128xf32> -> vector<256x128xf32>
    %53 = arith.addf %47, %52 : vector<256x128xf32>
    %54 = vector.extract_strided_slice %10 {offsets = [2, 1, 0], sizes = [16, 16, 128], strides = [1, 1, 1]} : vector<18x18x128xf32> to vector<16x16x128xf32>
    %55 = vector.shape_cast %54 : vector<16x16x128xf32> to vector<256x128xf32>
    %c7 = arith.constant 7 : index
    %c0_29 = arith.constant 0 : index
    %c0_30 = arith.constant 0 : index
    %56 = vector.load %arg2[%c7, %c0_29, %c0_30] : memref<9x128x128xf32, #tpu.memory_space<vmem>>, vector<1x128x128xf32>
    %57 = vector.shape_cast %56 : vector<1x128x128xf32> to vector<128x128xf32>
    %cst_31 = arith.constant dense<0.000000e+00> : vector<256x128xf32>
    %58 = tpu.matmul %55, %57, %cst_31 {dimension_numbers = #tpu.dot_dimension_numbers<[1], [0], [0], [1], [0, 0, 1, 1], [], []>} : vector<256x128xf32>, vector<128x128xf32>, vector<256x128xf32> -> vector<256x128xf32>
    %59 = arith.addf %53, %58 : vector<256x128xf32>
    %60 = vector.extract_strided_slice %10 {offsets = [2, 2, 0], sizes = [16, 16, 128], strides = [1, 1, 1]} : vector<18x18x128xf32> to vector<16x16x128xf32>
    %61 = vector.shape_cast %60 : vector<16x16x128xf32> to vector<256x128xf32>
    %c8 = arith.constant 8 : index
    %c0_32 = arith.constant 0 : index
    %c0_33 = arith.constant 0 : index
    %62 = vector.load %arg2[%c8, %c0_32, %c0_33] : memref<9x128x128xf32, #tpu.memory_space<vmem>>, vector<1x128x128xf32>
    %63 = vector.shape_cast %62 : vector<1x128x128xf32> to vector<128x128xf32>
    %cst_34 = arith.constant dense<0.000000e+00> : vector<256x128xf32>
    %64 = tpu.matmul %61, %63, %cst_34 {dimension_numbers = #tpu.dot_dimension_numbers<[1], [0], [0], [1], [0, 0, 1, 1], [], []>} : vector<256x128xf32>, vector<128x128xf32>, vector<256x128xf32> -> vector<256x128xf32>
    %65 = arith.addf %59, %64 : vector<256x128xf32>
    %66 = vector.broadcast %3 : vector<1x128xf32> to vector<256x128xf32>
    %67 = arith.mulf %65, %66 : vector<256x128xf32>
    %68 = vector.broadcast %4 : vector<1x128xf32> to vector<256x128xf32>
    %69 = arith.addf %67, %68 : vector<256x128xf32>
    %cst_35 = arith.constant 0.000000e+00 : f32
    %70 = vector.broadcast %cst_35 : f32 to vector<256x128xf32>
    %71 = arith.maximumf %69, %70 : vector<256x128xf32>
    %72 = vector.shape_cast %71 : vector<256x128xf32> to vector<16x16x128xf32>
    %cst_36 = arith.constant 0.000000e+00 : f32
    %73 = vector.broadcast %cst_36 : f32 to vector<1x16x128xf32>
    %cst_37 = arith.constant 0.000000e+00 : f32
    %74 = vector.broadcast %cst_37 : f32 to vector<18x1x128xf32>
    %75 = tpu.concatenate %73, %72, %73 in 0 : vector<1x16x128xf32>, vector<16x16x128xf32>, vector<1x16x128xf32> -> vector<18x16x128xf32>
    %76 = tpu.concatenate %74, %75, %74 in 1 : vector<18x1x128xf32>, vector<18x16x128xf32>, vector<18x1x128xf32> -> vector<18x18x128xf32>
    %cst_38 = arith.constant 0.000000e+00 : f32
    %77 = vector.broadcast %cst_38 : f32 to vector<256x128xf32>
    %78 = vector.extract_strided_slice %76 {offsets = [0, 0, 0], sizes = [16, 16, 128], strides = [1, 1, 1]} : vector<18x18x128xf32> to vector<16x16x128xf32>
    %79 = vector.shape_cast %78 : vector<16x16x128xf32> to vector<256x128xf32>
    %c0_39 = arith.constant 0 : index
    %c0_40 = arith.constant 0 : index
    %c0_41 = arith.constant 0 : index
    %80 = vector.load %arg3[%c0_39, %c0_40, %c0_41] : memref<9x128x128xf32, #tpu.memory_space<vmem>>, vector<1x128x128xf32>
    %81 = vector.shape_cast %80 : vector<1x128x128xf32> to vector<128x128xf32>
    %cst_42 = arith.constant dense<0.000000e+00> : vector<256x128xf32>
    %82 = tpu.matmul %79, %81, %cst_42 {dimension_numbers = #tpu.dot_dimension_numbers<[1], [0], [0], [1], [0, 0, 1, 1], [], []>} : vector<256x128xf32>, vector<128x128xf32>, vector<256x128xf32> -> vector<256x128xf32>
    %83 = arith.addf %77, %82 : vector<256x128xf32>
    %84 = vector.extract_strided_slice %76 {offsets = [0, 1, 0], sizes = [16, 16, 128], strides = [1, 1, 1]} : vector<18x18x128xf32> to vector<16x16x128xf32>
    %85 = vector.shape_cast %84 : vector<16x16x128xf32> to vector<256x128xf32>
    %c1_43 = arith.constant 1 : index
    %c0_44 = arith.constant 0 : index
    %c0_45 = arith.constant 0 : index
    %86 = vector.load %arg3[%c1_43, %c0_44, %c0_45] : memref<9x128x128xf32, #tpu.memory_space<vmem>>, vector<1x128x128xf32>
    %87 = vector.shape_cast %86 : vector<1x128x128xf32> to vector<128x128xf32>
    %cst_46 = arith.constant dense<0.000000e+00> : vector<256x128xf32>
    %88 = tpu.matmul %85, %87, %cst_46 {dimension_numbers = #tpu.dot_dimension_numbers<[1], [0], [0], [1], [0, 0, 1, 1], [], []>} : vector<256x128xf32>, vector<128x128xf32>, vector<256x128xf32> -> vector<256x128xf32>
    %89 = arith.addf %83, %88 : vector<256x128xf32>
    %90 = vector.extract_strided_slice %76 {offsets = [0, 2, 0], sizes = [16, 16, 128], strides = [1, 1, 1]} : vector<18x18x128xf32> to vector<16x16x128xf32>
    %91 = vector.shape_cast %90 : vector<16x16x128xf32> to vector<256x128xf32>
    %c2_47 = arith.constant 2 : index
    %c0_48 = arith.constant 0 : index
    %c0_49 = arith.constant 0 : index
    %92 = vector.load %arg3[%c2_47, %c0_48, %c0_49] : memref<9x128x128xf32, #tpu.memory_space<vmem>>, vector<1x128x128xf32>
    %93 = vector.shape_cast %92 : vector<1x128x128xf32> to vector<128x128xf32>
    %cst_50 = arith.constant dense<0.000000e+00> : vector<256x128xf32>
    %94 = tpu.matmul %91, %93, %cst_50 {dimension_numbers = #tpu.dot_dimension_numbers<[1], [0], [0], [1], [0, 0, 1, 1], [], []>} : vector<256x128xf32>, vector<128x128xf32>, vector<256x128xf32> -> vector<256x128xf32>
    %95 = arith.addf %89, %94 : vector<256x128xf32>
    %96 = vector.extract_strided_slice %76 {offsets = [1, 0, 0], sizes = [16, 16, 128], strides = [1, 1, 1]} : vector<18x18x128xf32> to vector<16x16x128xf32>
    %97 = vector.shape_cast %96 : vector<16x16x128xf32> to vector<256x128xf32>
    %c3_51 = arith.constant 3 : index
    %c0_52 = arith.constant 0 : index
    %c0_53 = arith.constant 0 : index
    %98 = vector.load %arg3[%c3_51, %c0_52, %c0_53] : memref<9x128x128xf32, #tpu.memory_space<vmem>>, vector<1x128x128xf32>
    %99 = vector.shape_cast %98 : vector<1x128x128xf32> to vector<128x128xf32>
    %cst_54 = arith.constant dense<0.000000e+00> : vector<256x128xf32>
    %100 = tpu.matmul %97, %99, %cst_54 {dimension_numbers = #tpu.dot_dimension_numbers<[1], [0], [0], [1], [0, 0, 1, 1], [], []>} : vector<256x128xf32>, vector<128x128xf32>, vector<256x128xf32> -> vector<256x128xf32>
    %101 = arith.addf %95, %100 : vector<256x128xf32>
    %102 = vector.extract_strided_slice %76 {offsets = [1, 1, 0], sizes = [16, 16, 128], strides = [1, 1, 1]} : vector<18x18x128xf32> to vector<16x16x128xf32>
    %103 = vector.shape_cast %102 : vector<16x16x128xf32> to vector<256x128xf32>
    %c4_55 = arith.constant 4 : index
    %c0_56 = arith.constant 0 : index
    %c0_57 = arith.constant 0 : index
    %104 = vector.load %arg3[%c4_55, %c0_56, %c0_57] : memref<9x128x128xf32, #tpu.memory_space<vmem>>, vector<1x128x128xf32>
    %105 = vector.shape_cast %104 : vector<1x128x128xf32> to vector<128x128xf32>
    %cst_58 = arith.constant dense<0.000000e+00> : vector<256x128xf32>
    %106 = tpu.matmul %103, %105, %cst_58 {dimension_numbers = #tpu.dot_dimension_numbers<[1], [0], [0], [1], [0, 0, 1, 1], [], []>} : vector<256x128xf32>, vector<128x128xf32>, vector<256x128xf32> -> vector<256x128xf32>
    %107 = arith.addf %101, %106 : vector<256x128xf32>
    %108 = vector.extract_strided_slice %76 {offsets = [1, 2, 0], sizes = [16, 16, 128], strides = [1, 1, 1]} : vector<18x18x128xf32> to vector<16x16x128xf32>
    %109 = vector.shape_cast %108 : vector<16x16x128xf32> to vector<256x128xf32>
    %c5_59 = arith.constant 5 : index
    %c0_60 = arith.constant 0 : index
    %c0_61 = arith.constant 0 : index
    %110 = vector.load %arg3[%c5_59, %c0_60, %c0_61] : memref<9x128x128xf32, #tpu.memory_space<vmem>>, vector<1x128x128xf32>
    %111 = vector.shape_cast %110 : vector<1x128x128xf32> to vector<128x128xf32>
    %cst_62 = arith.constant dense<0.000000e+00> : vector<256x128xf32>
    %112 = tpu.matmul %109, %111, %cst_62 {dimension_numbers = #tpu.dot_dimension_numbers<[1], [0], [0], [1], [0, 0, 1, 1], [], []>} : vector<256x128xf32>, vector<128x128xf32>, vector<256x128xf32> -> vector<256x128xf32>
    %113 = arith.addf %107, %112 : vector<256x128xf32>
    %114 = vector.extract_strided_slice %76 {offsets = [2, 0, 0], sizes = [16, 16, 128], strides = [1, 1, 1]} : vector<18x18x128xf32> to vector<16x16x128xf32>
    %115 = vector.shape_cast %114 : vector<16x16x128xf32> to vector<256x128xf32>
    %c6_63 = arith.constant 6 : index
    %c0_64 = arith.constant 0 : index
    %c0_65 = arith.constant 0 : index
    %116 = vector.load %arg3[%c6_63, %c0_64, %c0_65] : memref<9x128x128xf32, #tpu.memory_space<vmem>>, vector<1x128x128xf32>
    %117 = vector.shape_cast %116 : vector<1x128x128xf32> to vector<128x128xf32>
    %cst_66 = arith.constant dense<0.000000e+00> : vector<256x128xf32>
    %118 = tpu.matmul %115, %117, %cst_66 {dimension_numbers = #tpu.dot_dimension_numbers<[1], [0], [0], [1], [0, 0, 1, 1], [], []>} : vector<256x128xf32>, vector<128x128xf32>, vector<256x128xf32> -> vector<256x128xf32>
    %119 = arith.addf %113, %118 : vector<256x128xf32>
    %120 = vector.extract_strided_slice %76 {offsets = [2, 1, 0], sizes = [16, 16, 128], strides = [1, 1, 1]} : vector<18x18x128xf32> to vector<16x16x128xf32>
    %121 = vector.shape_cast %120 : vector<16x16x128xf32> to vector<256x128xf32>
    %c7_67 = arith.constant 7 : index
    %c0_68 = arith.constant 0 : index
    %c0_69 = arith.constant 0 : index
    %122 = vector.load %arg3[%c7_67, %c0_68, %c0_69] : memref<9x128x128xf32, #tpu.memory_space<vmem>>, vector<1x128x128xf32>
    %123 = vector.shape_cast %122 : vector<1x128x128xf32> to vector<128x128xf32>
    %cst_70 = arith.constant dense<0.000000e+00> : vector<256x128xf32>
    %124 = tpu.matmul %121, %123, %cst_70 {dimension_numbers = #tpu.dot_dimension_numbers<[1], [0], [0], [1], [0, 0, 1, 1], [], []>} : vector<256x128xf32>, vector<128x128xf32>, vector<256x128xf32> -> vector<256x128xf32>
    %125 = arith.addf %119, %124 : vector<256x128xf32>
    %126 = vector.extract_strided_slice %76 {offsets = [2, 2, 0], sizes = [16, 16, 128], strides = [1, 1, 1]} : vector<18x18x128xf32> to vector<16x16x128xf32>
    %127 = vector.shape_cast %126 : vector<16x16x128xf32> to vector<256x128xf32>
    %c8_71 = arith.constant 8 : index
    %c0_72 = arith.constant 0 : index
    %c0_73 = arith.constant 0 : index
    %128 = vector.load %arg3[%c8_71, %c0_72, %c0_73] : memref<9x128x128xf32, #tpu.memory_space<vmem>>, vector<1x128x128xf32>
    %129 = vector.shape_cast %128 : vector<1x128x128xf32> to vector<128x128xf32>
    %cst_74 = arith.constant dense<0.000000e+00> : vector<256x128xf32>
    %130 = tpu.matmul %127, %129, %cst_74 {dimension_numbers = #tpu.dot_dimension_numbers<[1], [0], [0], [1], [0, 0, 1, 1], [], []>} : vector<256x128xf32>, vector<128x128xf32>, vector<256x128xf32> -> vector<256x128xf32>
    %131 = arith.addf %125, %130 : vector<256x128xf32>
    %132 = vector.broadcast %5 : vector<1x128xf32> to vector<256x128xf32>
    %133 = arith.mulf %131, %132 : vector<256x128xf32>
    %134 = vector.broadcast %6 : vector<1x128xf32> to vector<256x128xf32>
    %135 = arith.addf %133, %134 : vector<256x128xf32>
    %136 = vector.shape_cast %1 : vector<16x16x128xf32> to vector<256x128xf32>
    %137 = arith.addf %135, %136 : vector<256x128xf32>
    %cst_75 = arith.constant 0.000000e+00 : f32
    %138 = vector.broadcast %cst_75 : f32 to vector<256x128xf32>
    %139 = arith.maximumf %137, %138 : vector<256x128xf32>
    %c0_76 = arith.constant 0 : index
    %c0_77 = arith.constant 0 : index
    %c0_78 = arith.constant 0 : index
    %140 = vector.load %arg6[%c0_76, %c0_77, %c0_78] : memref<1x256x128xf32, #tpu.memory_space<vmem>>, vector<1x256x128xf32>
    %141 = vector.shape_cast %140 : vector<1x256x128xf32> to vector<256x128xf32>
    %142 = vector.shape_cast %139 : vector<256x128xf32> to vector<1x256x128xf32>
    tpu.vector_store %arg6[%c0_76, %c0_77, %c0_78], %142 {strides = array<i32>} : memref<1x256x128xf32, #tpu.memory_space<vmem>>, vector<1x256x128xf32>,
    return
  }
  func.func @transform_0(%arg0: i32) -> (i32, i32, i32, i32) {
    %c0_i32 = arith.constant 0 : i32
    %c0_i32_0 = arith.constant 0 : i32
    %c0_i32_1 = arith.constant 0 : i32
    %c0_i32_2 = arith.constant 0 : i32
    return %arg0, %c0_i32, %c0_i32_0, %c0_i32_1 : i32, i32, i32, i32
  }
  func.func @transform_1(%arg0: i32) -> (i32, i32, i32) {
    %c0_i32 = arith.constant 0 : i32
    %c0_i32_0 = arith.constant 0 : i32
    %c0_i32_1 = arith.constant 0 : i32
    %c0_i32_2 = arith.constant 0 : i32
    return %c0_i32, %c0_i32_0, %c0_i32_1 : i32, i32, i32
  }
  func.func @transform_2(%arg0: i32) -> (i32, i32, i32) {
    %c0_i32 = arith.constant 0 : i32
    %c0_i32_0 = arith.constant 0 : i32
    %c0_i32_1 = arith.constant 0 : i32
    %c0_i32_2 = arith.constant 0 : i32
    return %c0_i32, %c0_i32_0, %c0_i32_1 : i32, i32, i32
  }
  func.func @transform_3(%arg0: i32) -> (i32, i32) {
    %c0_i32 = arith.constant 0 : i32
    %c0_i32_0 = arith.constant 0 : i32
    %c0_i32_1 = arith.constant 0 : i32
    return %c0_i32, %c0_i32_0 : i32, i32
  }
  func.func @transform_4(%arg0: i32) -> (i32, i32) {
    %c0_i32 = arith.constant 0 : i32
    %c0_i32_0 = arith.constant 0 : i32
    %c0_i32_1 = arith.constant 0 : i32
    return %c0_i32, %c0_i32_0 : i32, i32
  }
  func.func @transform_5(%arg0: i32) -> (i32, i32, i32) {
    %c0_i32 = arith.constant 0 : i32
    %c0_i32_0 = arith.constant 0 : i32
    %c0_i32_1 = arith.constant 0 : i32
    return %arg0, %c0_i32, %c0_i32_0 : i32, i32, i32
  }
}

</mosaic_0001>

<llo_original>
// kernel: tpu_custom_call.1
$region0: #{tpu_custom_call.1}
  #allocation0 [shape = 'u32[]', space=smem, size = 0x4, offset = 0x4, fixed_abs, tag = 'smem constant byte address 0x4 - core index']
  #allocation1 [shape = 'u32[144,128]{1,0:T(1,128)}', space=vmem, size = 0x12000, scoped, tag = 'internal scratch']
  %s0 = inlined_call_operand.hbm [shape: f32[2,16,16,128], index: 0, kind: input, shape index: {}]
  %s1 = inlined_call_operand.hbm [shape: f32[9,128,128], index: 1, kind: input, shape index: {}]
  %s2 = inlined_call_operand.hbm [shape: f32[9,128,128], index: 2, kind: input, shape index: {}]
  %s3 = inlined_call_operand.hbm [shape: f32[128,128], index: 3, kind: input, shape index: {}]
  %s4 = inlined_call_operand.hbm [shape: f32[8,128], index: 4, kind: input, shape index: {}]
  %s5 = inlined_call_operand.hbm [shape: f32[2,256,128], index: 5, kind: output, shape index: {}]
  %s6 = sld [smem:[#allocation0]]
  $region73: #{tpu_custom_call.1} parent=0
    _
  %s8 = ssub.s32 1, %s6
  %s9 = scalar_select 0, %s8, %s6
  $region1: #{tpu_custom_call.1} parent=0
    #allocation2 [shape = 'u8[262144]{0}', space=vmem, size = 0x40000, scoped, tag = 'input window, operand 0']
    #allocation3 [shape = 's32[2]{0}', space=sflag, size = 0x8, scoped, tag = 'scoped memory for tpu_custom_call.1']
    #allocation4 [shape = 's32[2]{0}', space=sflag, size = 0x8, scoped, tag = 'scoped memory for tpu_custom_call.1']
    #allocation5 [shape = 'u8[589824]{0}', space=vmem, size = 0x90000, scoped, tag = 'input window, operand 1, single buffered']
    #allocation6 [shape = 's32[1]{0}', space=sflag, size = 0x4, scoped, tag = 'scoped memory for tpu_custom_call.1']
    #allocation7 [shape = 'u8[589824]{0}', space=vmem, size = 0x90000, scoped, tag = 'input window, operand 2, single buffered']
    #allocation8 [shape = 'u8[65536]{0}', space=vmem, size = 0x10000, scoped, tag = 'input window, operand 3, single buffered']
    #allocation9 [shape = 's32[1]{0}', space=sflag, size = 0x4, scoped, tag = 'scoped memory for tpu_custom_call.1']
    #allocation10 [shape = 'u8[4096]{0}', space=vmem, size = 0x1000, scoped, tag = 'input window, operand 4, single buffered']
    #allocation11 [shape = 'u8[262144]{0}', space=vmem, size = 0x40000, scoped, tag = 'output window, operand 0']
    %10 = vsyncpa [#allocation3], 0
    %s11 = scalar_lea.sflag [#allocation3], 1
    %12 = vsyncpa %s11, 0
    %13 = vsyncpa [#allocation6], 0
    %14 = vsyncpa [#allocation9], 0
    %15 = vsyncpa [#allocation4], 0
    %s16 = scalar_lea.sflag [#allocation4], 1
    %17 = vsyncpa %s16, 0
    loop: start=0, step=1, limit=4
    $region2: #{tpu_custom_call.1} parent=1 // loop_pre_header
      _
    $region3: #{tpu_custom_call.1} parent=1 // loop_header
      %s19 = sphi 0, %s23
      %p20 = scmp.ge.s32.totalorder %s19, 4
      %s29 = sphi 0, %s31
      %s32 = sphi 0, %s29
      %s33 = sphi 0, %s32
      %s49 = sphi 0, %s33
      %s53 = sphi 0, %s53
      %s55 = sphi 0, %s53
      %s56 = sphi 0, %s55
      %s70 = sphi 0, %s56
      %s74 = sphi 0, %s74
      %s76 = sphi 0, %s74
      %s77 = sphi 0, %s76
      %s91 = sphi 0, %s77
      %s95 = sphi 0, %s95
      %s97 = sphi 0, %s95
      %s98 = sphi 0, %s97
      %s112 = sphi 0, %s98
      %s116 = sphi 0, %s116
      %s118 = sphi 0, %s116
      %s119 = sphi 0, %s118
      %s133 = sphi 0, %s119
      %s139 = sphi 0, %s141
      %s142 = sphi 0, %s139
      %s143 = sphi 0, %s142
      %s159 = sphi 0, %s143
    $region4: #{tpu_custom_call.1} parent=1 // loop_header_branch
      %22 = sbr.rel (%p20) target = $region8
    $region5: #{tpu_custom_call.1} parent=1 // loop_body
      %s24 = ssub.s32 %s19, 1
      %s25 = ssub.s32 %s19, 2
      %s26 = sadd.s32 %s19, 1
      %s27 = ssub.s32 %s19, %s26
      %p28 = scmp.eq.s32.totalorder %s27, 0
      %s30 = sadd.s32 %s29, 1
      %s31 = scalar_select %p28, %s29, %s30
      %p34 = pneg %p28
      %p35 = scmp.eq.s32.totalorder %s19, 1
      %p36 = por %p34, %p35
      %p37 = scmp.ne.s32.totalorder %s29, %s32
      %p38 = scmp.eq.s32.totalorder %s19, 0
      %p39 = por %p37, %p38
      %p40 = scmp.ne.s32.totalorder %s29, %s32
      %p41 = scmp.eq.s32.totalorder %s24, 1
      %p42 = por %p40, %p41
      %p43 = scmp.ne.s32.totalorder %s32, %s33
      %p44 = scmp.eq.s32.totalorder %s24, 0
      %p45 = por %p43, %p44
      %p46 = scmp.ne.s32.totalorder %s32, %s33
      %p47 = scmp.eq.s32.totalorder %s25, 1
      %p48 = por %p46, %p47
      %p50 = scmp.ne.s32.totalorder %s33, %s49
      %p51 = scmp.eq.s32.totalorder %s25, 0
      %p52 = por %p50, %p51
      %s54 = sadd.s32 %s53, 1
      %p57 = scmp.eq.s32.totalorder %s19, 1
      %p58 = scmp.ne.s32.totalorder %s53, %s55
      %p59 = scmp.eq.s32.totalorder %s19, 0
      %p60 = por %p58, %p59
      %p61 = scmp.ne.s32.totalorder %s53, %s55
      %p62 = scmp.eq.s32.totalorder %s24, 1
      %p63 = por %p61, %p62
      %p64 = scmp.ne.s32.totalorder %s55, %s56
      %p65 = scmp.eq.s32.totalorder %s24, 0
      %p66 = por %p64, %p65
      %p67 = scmp.ne.s32.totalorder %s55, %s56
      %p68 = scmp.eq.s32.totalorder %s25, 1
      %p69 = por %p67, %p68
      %p71 = scmp.ne.s32.totalorder %s56, %s70
      %p72 = scmp.eq.s32.totalorder %s25, 0
      %p73 = por %p71, %p72
      %s75 = sadd.s32 %s74, 1
      %p78 = scmp.eq.s32.totalorder %s19, 1
      %p79 = scmp.ne.s32.totalorder %s74, %s76
      %p80 = scmp.eq.s32.totalorder %s19, 0
      %p81 = por %p79, %p80
      %p82 = scmp.ne.s32.totalorder %s74, %s76
      %p83 = scmp.eq.s32.totalorder %s24, 1
      %p84 = por %p82, %p83
      %p85 = scmp.ne.s32.totalorder %s76, %s77
      %p86 = scmp.eq.s32.totalorder %s24, 0
      %p87 = por %p85, %p86
      %p88 = scmp.ne.s32.totalorder %s76, %s77
      %p89 = scmp.eq.s32.totalorder %s25, 1
      %p90 = por %p88, %p89
      %p92 = scmp.ne.s32.totalorder %s77, %s91
      %p93 = scmp.eq.s32.totalorder %s25, 0
      %p94 = por %p92, %p93
      %s96 = sadd.s32 %s95, 1
      %p99 = scmp.eq.s32.totalorder %s19, 1
      %p100 = scmp.ne.s32.totalorder %s95, %s97
      %p101 = scmp.eq.s32.totalorder %s19, 0
      %p102 = por %p100, %p101
      %p103 = scmp.ne.s32.totalorder %s95, %s97
      %p104 = scmp.eq.s32.totalorder %s24, 1
      %p105 = por %p103, %p104
      %p106 = scmp.ne.s32.totalorder %s97, %s98
      %p107 = scmp.eq.s32.totalorder %s24, 0
      %p108 = por %p106, %p107
      %p109 = scmp.ne.s32.totalorder %s97, %s98
      %p110 = scmp.eq.s32.totalorder %s25, 1
      %p111 = por %p109, %p110
      %p113 = scmp.ne.s32.totalorder %s98, %s112
      %p114 = scmp.eq.s32.totalorder %s25, 0
      %p115 = por %p113, %p114
      %s117 = sadd.s32 %s116, 1
      %p120 = scmp.eq.s32.totalorder %s19, 1
      %p121 = scmp.ne.s32.totalorder %s116, %s118
      %p122 = scmp.eq.s32.totalorder %s19, 0
      %p123 = por %p121, %p122
      %p124 = scmp.ne.s32.totalorder %s116, %s118
      %p125 = scmp.eq.s32.totalorder %s24, 1
      %p126 = por %p124, %p125
      %p127 = scmp.ne.s32.totalorder %s118, %s119
      %p128 = scmp.eq.s32.totalorder %s24, 0
      %p129 = por %p127, %p128
      %p130 = scmp.ne.s32.totalorder %s118, %s119
      %p131 = scmp.eq.s32.totalorder %s25, 1
      %p132 = por %p130, %p131
      %p134 = scmp.ne.s32.totalorder %s119, %s133
      %p135 = scmp.eq.s32.totalorder %s25, 0
      %p136 = por %p134, %p135
      %s137 = ssub.s32 %s19, %s26
      %p138 = scmp.eq.s32.totalorder %s137, 0
      %s140 = sadd.s32 %s139, 1
      %s141 = scalar_select %p138, %s139, %s140
      %p144 = pneg %p138
      %p145 = scmp.eq.s32.totalorder %s19, 1
      %p146 = por %p144, %p145
      %p147 = scmp.ne.s32.totalorder %s139, %s142
      %p148 = scmp.eq.s32.totalorder %s19, 0
      %p149 = por %p147, %p148
      %p150 = scmp.ne.s32.totalorder %s139, %s142
      %p151 = scmp.eq.s32.totalorder %s24, 1
      %p152 = por %p150, %p151
      %p153 = scmp.ne.s32.totalorder %s142, %s143
      %p154 = scmp.eq.s32.totalorder %s24, 0
      %p155 = por %p153, %p154
      %p156 = scmp.ne.s32.totalorder %s142, %s143
      %p157 = scmp.eq.s32.totalorder %s25, 1
      %p158 = por %p156, %p157
      %p160 = scmp.ne.s32.totalorder %s143, %s159
      %p161 = scmp.eq.s32.totalorder %s25, 0
      %p162 = por %p160, %p161
      %p163 = scmp.le.s32.totalorder 1, %s19
      %p164 = scmp.lt.s32.totalorder %s19, 3
      %p165 = pnand %p163, %p164
      %p166 = pneg %p165
      // Predicated region
      $region9: #{tpu_custom_call.1} parent=5 // pred_check
        _
      $region10: #{tpu_custom_call.1} parent=5 // pred_check_branch
        %168 = sbr.rel (%p165) target = $region12
      $region11: #{tpu_custom_call.1} parent=5 // pred_region
        %s169 = ssub.s32 %s19, 1
        // Predicated region
        $region13: #{tpu_custom_call.1} parent=11 // pred_check
          %p170 = pneg %p66
        $region14: #{tpu_custom_call.1} parent=11 // pred_check_branch
          %172 = sbr.rel (%p170) target = $region16
        $region15: #{tpu_custom_call.1} parent=11 // pred_region
          %s174 = ssub.s32 18432, 18432
          %175 = vsyncadd [#allocation6], %s174
          %s176 = sshll.u32 [#allocation5], 4
          %s177 = int_to_ptr.vmem [resolvable:$true] %s176
          %182 = dma.hbm_to_vmem [thread:$0]  %s1, 18432, %s177, [#allocation6], 128, 128, 8
        $region16: #{tpu_custom_call.1} parent=11 // pred_fallthru
          _
        // Predicated region
        $region17: #{tpu_custom_call.1} parent=11 // pred_check
          %p183 = pneg %p87
        $region18: #{tpu_custom_call.1} parent=11 // pred_check_branch
          %185 = sbr.rel (%p183) target = $region20
        $region19: #{tpu_custom_call.1} parent=11 // pred_region
          %s187 = ssub.s32 18432, 18432
          %188 = vsyncadd [#allocation6], %s187
          %s189 = sshll.u32 [#allocation7], 4
          %s190 = int_to_ptr.vmem [resolvable:$true] %s189
          %195 = dma.hbm_to_vmem [thread:$0]  %s2, 18432, %s190, [#allocation6], 128, 128, 8
        $region20: #{tpu_custom_call.1} parent=11 // pred_fallthru
          _
        // Predicated region
        $region21: #{tpu_custom_call.1} parent=11 // pred_check
          %p196 = pneg %p108
        $region22: #{tpu_custom_call.1} parent=11 // pred_check_branch
          %198 = sbr.rel (%p196) target = $region24
        $region23: #{tpu_custom_call.1} parent=11 // pred_region
          %s200 = ssub.s32 2048, 2048
          %201 = vsyncadd [#allocation9], %s200
          %s202 = sshll.u32 [#allocation8], 4
          %s203 = int_to_ptr.vmem [resolvable:$true] %s202
          %208 = dma.hbm_to_vmem [thread:$0]  %s3, 2048, %s203, [#allocation9], 128, 128, 8
        $region24: #{tpu_custom_call.1} parent=11 // pred_fallthru
          _
        // Predicated region
        $region25: #{tpu_custom_call.1} parent=11 // pred_check
          %p209 = pneg %p129
        $region26: #{tpu_custom_call.1} parent=11 // pred_check_branch
          %211 = sbr.rel (%p209) target = $region28
        $region27: #{tpu_custom_call.1} parent=11 // pred_region
          %s213 = ssub.s32 128, 128
          %214 = vsyncadd [#allocation9], %s213
          %s216 = sshll.u32 [#allocation10], 4
          %s217 = int_to_ptr.vmem [resolvable:$true] %s216
          %219 = dma.hbm_to_vmem [thread:$0]  %s4, 128, %s217, [#allocation9]
        $region28: #{tpu_custom_call.1} parent=11 // pred_fallthru
          _
      $region12: #{tpu_custom_call.1} parent=5 // pred_fallthru
        _
      %p220 = scmp.lt.s32.totalorder %s19, 2
      // Predicated region
      $region29: #{tpu_custom_call.1} parent=5 // pred_check
        %p221 = pneg %p220
      $region30: #{tpu_custom_call.1} parent=5 // pred_check_branch
        %223 = sbr.rel (%p221) target = $region32
      $region31: #{tpu_custom_call.1} parent=5 // pred_region
        // Predicated region
        $region33: #{tpu_custom_call.1} parent=31 // pred_check
          %p224 = pneg %p39
        $region34: #{tpu_custom_call.1} parent=31 // pred_check_branch
          %226 = sbr.rel (%p224) target = $region36
        $region35: #{tpu_custom_call.1} parent=31 // pred_region
          %s227 = sand.u32 %s29, 1
          %s228 = scalar_lea.sflag [#allocation3], %s227
          %s229 = sand.u32 %s29, 1
          %s230 = smul.addr %s229, 256
          %s231 = scalar_lea.vmem [#allocation2], %s230
          %s233 = ssub.s32 4096, 4096
          %234 = vsyncadd %s228, %s233
          %s235 = smul.addr %s19, 32
          %s236 = smul.addr %s235, 128
          %s237 = scalar_lea.hbm %s0, %s236
          %s238 = sshll.u32 %s231, 4
          %s239 = int_to_ptr.vmem [resolvable:$true] %s238
          %244 = dma.hbm_to_vmem [thread:$0]  %s237, 4096, %s239, %s228, 128, 128, 8
        $region36: #{tpu_custom_call.1} parent=31 // pred_fallthru
          _
      $region32: #{tpu_custom_call.1} parent=5 // pred_fallthru
        _
      %p245 = scmp.le.s32.totalorder 1, %s19
      %p246 = scmp.lt.s32.totalorder %s19, 3
      %p247 = pnand %p245, %p246
      %p248 = pneg %p247
      // Predicated region
      $region37: #{tpu_custom_call.1} parent=5 // pred_check
        _
      $region38: #{tpu_custom_call.1} parent=5 // pred_check_branch
        %250 = sbr.rel (%p247) target = $region40
      $region39: #{tpu_custom_call.1} parent=5 // pred_region
        %s251 = ssub.s32 %s19, 1
        %s252 = sand.u32 %s32, 1
        %s253 = scalar_lea.sflag [#allocation3], %s252
        %s254 = sand.u32 %s32, 1
        %s255 = smul.addr %s254, 256
        %s256 = scalar_lea.vmem [#allocation2], %s255
        // Predicated region
        $region41: #{tpu_custom_call.1} parent=39 // pred_check
          %p257 = pneg %p45
        $region42: #{tpu_custom_call.1} parent=39 // pred_check_branch
          %259 = sbr.rel (%p257) target = $region44
        $region43: #{tpu_custom_call.1} parent=39 // pred_region
          %260 = dma.done %s253, 4096
        $region44: #{tpu_custom_call.1} parent=39 // pred_fallthru
          _
        // Predicated region
        $region45: #{tpu_custom_call.1} parent=39 // pred_check
          %p261 = pneg %p66
        $region46: #{tpu_custom_call.1} parent=39 // pred_check_branch
          %263 = sbr.rel (%p261) target = $region48
        $region47: #{tpu_custom_call.1} parent=39 // pred_region
          %264 = dma.done [#allocation6], 18432
        $region48: #{tpu_custom_call.1} parent=39 // pred_fallthru
          _
        // Predicated region
        $region49: #{tpu_custom_call.1} parent=39 // pred_check
          %p265 = pneg %p87
        $region50: #{tpu_custom_call.1} parent=39 // pred_check_branch
          %267 = sbr.rel (%p265) target = $region52
        $region51: #{tpu_custom_call.1} parent=39 // pred_region
          %268 = dma.done [#allocation6], 18432
        $region52: #{tpu_custom_call.1} parent=39 // pred_fallthru
          _
        // Predicated region
        $region53: #{tpu_custom_call.1} parent=39 // pred_check
          %p269 = pneg %p108
        $region54: #{tpu_custom_call.1} parent=39 // pred_check_branch
          %271 = sbr.rel (%p269) target = $region56
        $region55: #{tpu_custom_call.1} parent=39 // pred_region
          %272 = dma.done [#allocation9], 2048
        $region56: #{tpu_custom_call.1} parent=39 // pred_fallthru
          _
        // Predicated region
        $region57: #{tpu_custom_call.1} parent=39 // pred_check
          %p273 = pneg %p129
        $region58: #{tpu_custom_call.1} parent=39 // pred_check_branch
          %275 = sbr.rel (%p273) target = $region60
        $region59: #{tpu_custom_call.1} parent=39 // pred_region
          %276 = dma.done [#allocation9], 128
        $region60: #{tpu_custom_call.1} parent=39 // pred_fallthru
          _
        %s277 = sand.u32 %s32, 1
        %s278 = scalar_lea.sflag [#allocation3], %s277
        %s279 = sand.u32 %s32, 1
        %s280 = smul.addr %s279, 256
        %s281 = scalar_lea.vmem [#allocation2], %s280
        %p282 = pneg %p45
        %p283 = pneg %p42
        %p284 = pneg %p66
        %p285 = pneg %p63
        %p286 = pneg %p87
        %p287 = pneg %p84
        %p288 = pneg %p108
        %p289 = pneg %p105
        %p290 = pneg %p129
        %p291 = pneg %p126
        %p292 = pneg %p155
        %p293 = pneg %p152
        %s294 = sand.u32 %s142, 1
        %s295 = scalar_lea.sflag [#allocation4], %s294
        %s296 = sand.u32 %s142, 1
        %s297 = smul.addr %s296, 256
        %s298 = scalar_lea.vmem [#allocation11], %s297
        %v299 = vld [vmem:[%s256] sm:$0xff]
        %v300 = vld [vmem:[%s256 + $0x8] sm:$0xff]
        %v301 = vld [vmem:[%s256 + $0x10] sm:$0xff]
        %v302 = vld [vmem:[%s256 + $0x18] sm:$0xff]
        %v303 = vld [vmem:[%s256 + $0x20] sm:$0xff]
        %v304 = vld [vmem:[%s256 + $0x28] sm:$0xff]
        %v305 = vld [vmem:[%s256 + $0x30] sm:$0xff]
        %v306 = vld [vmem:[%s256 + $0x38] sm:$0xff]
        %v307 = vld [vmem:[%s256 + $0x40] sm:$0xff]
        %v308 = vld [vmem:[%s256 + $0x48] sm:$0xff]
        %v309 = vld [vmem:[%s256 + $0x50] sm:$0xff]
        %v310 = vld [vmem:[%s256 + $0x58] sm:$0xff]
        %v311 = vld [vmem:[%s256 + $0x60] sm:$0xff]
        %v312 = vld [vmem:[%s256 + $0x68] sm:$0xff]
        %v313 = vld [vmem:[%s256 + $0x70] sm:$0xff]
        %v314 = vld [vmem:[%s256 + $0x78] sm:$0xff]
        %v315 = vld [vmem:[%s256 + $0x80] sm:$0xff]
        %v316 = vld [vmem:[%s256 + $0x88] sm:$0xff]
        %v317 = vld [vmem:[%s256 + $0x90] sm:$0xff]
        %v318 = vld [vmem:[%s256 + $0x98] sm:$0xff]
        %v319 = vld [vmem:[%s256 + $0xa0] sm:$0xff]
        %v320 = vld [vmem:[%s256 + $0xa8] sm:$0xff]
        %v321 = vld [vmem:[%s256 + $0xb0] sm:$0xff]
        %v322 = vld [vmem:[%s256 + $0xb8] sm:$0xff]
        %v323 = vld [vmem:[%s256 + $0xc0] sm:$0xff]
        %v324 = vld [vmem:[%s256 + $0xc8] sm:$0xff]
        %v325 = vld [vmem:[%s256 + $0xd0] sm:$0xff]
        %v326 = vld [vmem:[%s256 + $0xd8] sm:$0xff]
        %v327 = vld [vmem:[%s256 + $0xe0] sm:$0xff]
        %v328 = vld [vmem:[%s256 + $0xe8] sm:$0xff]
        %v329 = vld [vmem:[%s256 + $0xf0] sm:$0xff]
        %v330 = vld [vmem:[%s256 + $0xf8] sm:$0xff]
        %v331 = vld [vmem:[#allocation10] sm:$0xff]
        %vm365 = vcmask 1040384
        %v366 = vrot.slane 0.0, 7
        %v367 = vsel %vm365, %v366, %v366
        %v368 = vrot.slane %v299, 7
        %v369 = vrot.slane %v300, 7
        %v370 = vsel %vm365, %v368, %v369
        %v371 = vrot.slane %v301, 7
        %v372 = vrot.slane %v302, 7
        %v373 = vsel %vm365, %v371, %v372
        %v374 = vrot.slane %v303, 7
        %v375 = vrot.slane %v304, 7
        %v376 = vsel %vm365, %v374, %v375
        %v377 = vrot.slane %v305, 7
        %v378 = vrot.slane %v306, 7
        %v379 = vsel %vm365, %v377, %v378
        %v380 = vrot.slane %v307, 7
        %v381 = vrot.slane %v308, 7
        %v382 = vsel %vm365, %v380, %v381
        %v383 = vrot.slane %v309, 7
        %v384 = vrot.slane %v310, 7
        %v385 = vsel %vm365, %v383, %v384
        %v386 = vrot.slane %v311, 7
        %v387 = vrot.slane %v312, 7
        %v388 = vsel %vm365, %v386, %v387
        %v389 = vrot.slane %v313, 7
        %v390 = vrot.slane %v314, 7
        %v391 = vsel %vm365, %v389, %v390
        %v392 = vrot.slane %v315, 7
        %v393 = vrot.slane %v316, 7
        %v394 = vsel %vm365, %v392, %v393
        %v395 = vrot.slane %v317, 7
        %v396 = vrot.slane %v318, 7
        %v397 = vsel %vm365, %v395, %v396
        %v398 = vrot.slane %v319, 7
        %v399 = vrot.slane %v320, 7
        %v400 = vsel %vm365, %v398, %v399
        %v401 = vrot.slane %v321, 7
        %v402 = vrot.slane %v322, 7
        %v403 = vsel %vm365, %v401, %v402
        %v404 = vrot.slane %v323, 7
        %v405 = vrot.slane %v324, 7
        %v406 = vsel %vm365, %v404, %v405
        %v407 = vrot.slane %v325, 7
        %v408 = vrot.slane %v326, 7
        %v409 = vsel %vm365, %v407, %v408
        %v410 = vrot.slane %v327, 7
        %v411 = vrot.slane %v328, 7
        %v412 = vsel %vm365, %v410, %v411
        %v413 = vrot.slane %v329, 7
        %v414 = vrot.slane %v330, 7
        %v415 = vsel %vm365, %v413, %v414
        %v466 = vsel %vm365, 0.0, %v366
        %v467 = vsel %vm365, 0.0, %v368
        %v468 = vsel %vm365, 0.0, %v371
        %v469 = vsel %vm365, 0.0, %v374
        %v470 = vsel %vm365, 0.0, %v377
        %v471 = vsel %vm365, 0.0, %v380
        %v472 = vsel %vm365, 0.0, %v383
        %v473 = vsel %vm365, 0.0, %v386
        %v474 = vsel %vm365, 0.0, %v389
        %v475 = vsel %vm365, 0.0, %v392
        %v476 = vsel %vm365, 0.0, %v395
        %v477 = vsel %vm365, 0.0, %v398
        %v478 = vsel %vm365, 0.0, %v401
        %v479 = vsel %vm365, 0.0, %v404
        %v480 = vsel %vm365, 0.0, %v407
        %v481 = vsel %vm365, 0.0, %v410
        %v482 = vsel %vm365, 0.0, %v413
        %v483 = vsel %vm365, %v366, 0.0
        %v484 = vsel %vm365, %v369, 0.0
        %v485 = vsel %vm365, %v372, 0.0
        %v486 = vsel %vm365, %v375, 0.0
        %v487 = vsel %vm365, %v378, 0.0
        %v488 = vsel %vm365, %v381, 0.0
        %v489 = vsel %vm365, %v384, 0.0
        %v490 = vsel %vm365, %v387, 0.0
        %v491 = vsel %vm365, %v390, 0.0
        %v492 = vsel %vm365, %v393, 0.0
        %v493 = vsel %vm365, %v396, 0.0
        %v494 = vsel %vm365, %v399, 0.0
        %v495 = vsel %vm365, %v402, 0.0
        %v496 = vsel %vm365, %v405, 0.0
        %v497 = vsel %vm365, %v408, 0.0
        %v498 = vsel %vm365, %v411, 0.0
        %v499 = vsel %vm365, %v414, 0.0
        %v500 = vld [vmem:[#allocation5] sm:$0xff]
        %v501 = vld [vmem:[#allocation5 + $0x8] sm:$0xff]
        %v502 = vld [vmem:[#allocation5 + $0x10] sm:$0xff]
        %v503 = vld [vmem:[#allocation5 + $0x18] sm:$0xff]
        %v504 = vld [vmem:[#allocation5 + $0x20] sm:$0xff]
        %v505 = vld [vmem:[#allocation5 + $0x28] sm:$0xff]
        %v506 = vld [vmem:[#allocation5 + $0x30] sm:$0xff]
        %v507 = vld [vmem:[#allocation5 + $0x38] sm:$0xff]
        %v508 = vld [vmem:[#allocation5 + $0x40] sm:$0xff]
        %v509 = vld [vmem:[#allocation5 + $0x48] sm:$0xff]
        %v510 = vld [vmem:[#allocation5 + $0x50] sm:$0xff]
        %v511 = vld [vmem:[#allocation5 + $0x58] sm:$0xff]
        %v512 = vld [vmem:[#allocation5 + $0x60] sm:$0xff]
        %v513 = vld [vmem:[#allocation5 + $0x68] sm:$0xff]
        %v514 = vld [vmem:[#allocation5 + $0x70] sm:$0xff]
        %v515 = vld [vmem:[#allocation5 + $0x78] sm:$0xff]
        %vm548 = vcmask 1046528
        %v549 = vrot.slane %v466, 1
        %v550 = vrot.slane %v367, 1
        %v551 = vsel %vm548, %v549, %v550
        %v552 = vrot.slane %v483, 1
        %v553 = vsel %vm548, %v550, %v552
        %v554 = vrot.slane %v467, 1
        %v555 = vrot.slane %v370, 1
        %v556 = vsel %vm548, %v554, %v555
        %v557 = vrot.slane %v484, 1
        %v558 = vsel %vm548, %v555, %v557
        %v559 = vrot.slane %v468, 1
        %v560 = vrot.slane %v373, 1
        %v561 = vsel %vm548, %v559, %v560
        %v562 = vrot.slane %v485, 1
        %v563 = vsel %vm548, %v560, %v562
        %v564 = vrot.slane %v469, 1
        %v565 = vrot.slane %v376, 1
        %v566 = vsel %vm548, %v564, %v565
        %v567 = vrot.slane %v486, 1
        %v568 = vsel %vm548, %v565, %v567
        %v569 = vrot.slane %v470, 1
        %v570 = vrot.slane %v379, 1
        %v571 = vsel %vm548, %v569, %v570
        %v572 = vrot.slane %v487, 1
        %v573 = vsel %vm548, %v570, %v572
        %v574 = vrot.slane %v471, 1
        %v575 = vrot.slane %v382, 1
        %v576 = vsel %vm548, %v574, %v575
        %v577 = vrot.slane %v488, 1
        %v578 = vsel %vm548, %v575, %v577
        %v579 = vrot.slane %v472, 1
        %v580 = vrot.slane %v385, 1
        %v581 = vsel %vm548, %v579, %v580
        %v582 = vrot.slane %v489, 1
        %v583 = vsel %vm548, %v580, %v582
        %v584 = vrot.slane %v473, 1
        %v585 = vrot.slane %v388, 1
        %v586 = vsel %vm548, %v584, %v585
        %v587 = vrot.slane %v490, 1
        %v588 = vsel %vm548, %v585, %v587
        %v589 = vrot.slane %v474, 1
        %v590 = vrot.slane %v391, 1
        %v591 = vsel %vm548, %v589, %v590
        %v592 = vrot.slane %v491, 1
        %v593 = vsel %vm548, %v590, %v592
        %v594 = vrot.slane %v475, 1
        %v595 = vrot.slane %v394, 1
        %v596 = vsel %vm548, %v594, %v595
        %v597 = vrot.slane %v492, 1
        %v598 = vsel %vm548, %v595, %v597
        %v599 = vrot.slane %v476, 1
        %v600 = vrot.slane %v397, 1
        %v601 = vsel %vm548, %v599, %v600
        %v602 = vrot.slane %v493, 1
        %v603 = vsel %vm548, %v600, %v602
        %v604 = vrot.slane %v477, 1
        %v605 = vrot.slane %v400, 1
        %v606 = vsel %vm548, %v604, %v605
        %v607 = vrot.slane %v494, 1
        %v608 = vsel %vm548, %v605, %v607
        %v609 = vrot.slane %v478, 1
        %v610 = vrot.slane %v403, 1
        %v611 = vsel %vm548, %v609, %v610
        %v612 = vrot.slane %v495, 1
        %v613 = vsel %vm548, %v610, %v612
        %v614 = vrot.slane %v479, 1
        %v615 = vrot.slane %v406, 1
        %v616 = vsel %vm548, %v614, %v615
        %v617 = vrot.slane %v496, 1
        %v618 = vsel %vm548, %v615, %v617
        %v619 = vrot.slane %v480, 1
        %v620 = vrot.slane %v409, 1
        %v621 = vsel %vm548, %v619, %v620
        %v622 = vrot.slane %v497, 1
        %v623 = vsel %vm548, %v620, %v622
        %v624 = vrot.slane %v481, 1
        %v625 = vrot.slane %v412, 1
        %v626 = vsel %vm548, %v624, %v625
        %v627 = vrot.slane %v498, 1
        %v628 = vsel %vm548, %v625, %v627
        %s661 = scalar_lea.vmem [#allocation5], 128
        %v662 = vld [vmem:[%s661] sm:$0xff]
        %v663 = vld [vmem:[%s661 + $0x8] sm:$0xff]
        %v664 = vld [vmem:[%s661 + $0x10] sm:$0xff]
        %v665 = vld [vmem:[%s661 + $0x18] sm:$0xff]
        %v666 = vld [vmem:[%s661 + $0x20] sm:$0xff]
        %v667 = vld [vmem:[%s661 + $0x28] sm:$0xff]
        %v668 = vld [vmem:[%s661 + $0x30] sm:$0xff]
        %v669 = vld [vmem:[%s661 + $0x38] sm:$0xff]
        %v670 = vld [vmem:[%s661 + $0x40] sm:$0xff]
        %v671 = vld [vmem:[%s661 + $0x48] sm:$0xff]
        %v672 = vld [vmem:[%s661 + $0x50] sm:$0xff]
        %v673 = vld [vmem:[%s661 + $0x58] sm:$0xff]
        %v674 = vld [vmem:[%s661 + $0x60] sm:$0xff]
        %v675 = vld [vmem:[%s661 + $0x68] sm:$0xff]
        %v676 = vld [vmem:[%s661 + $0x70] sm:$0xff]
        %v677 = vld [vmem:[%s661 + $0x78] sm:$0xff]
        %678 = vmatprep.subr.mxu0 0.0
        %679 = vmatpush1.msra.mxu0 %v677
        %680 = vmatprep.subr.mxu0 0.0
        %681 = vmatpush1.msra.mxu0 %v676
        %682 = vmatprep.subr.mxu0 0.0
        %683 = vmatpush1.msra.mxu0 %v675
        %684 = vmatprep.subr.mxu0 0.0
        %685 = vmatpush1.msra.mxu0 %v674
        %686 = vmatprep.subr.mxu0 0.0
        %687 = vmatpush1.msra.mxu0 %v673
        %688 = vmatprep.subr.mxu0 0.0
        %689 = vmatpush1.msra.mxu0 %v672
        %690 = vmatprep.subr.mxu0 0.0
        %691 = vmatpush1.msra.mxu0 %v671
        %692 = vmatprep.subr.mxu0 0.0
        %693 = vmatpush1.msra.mxu0 %v670
        %694 = vmatprep.subr.mxu0 0.0
        %695 = vmatpush1.msra.mxu0 %v669
        %696 = vmatprep.subr.mxu0 0.0
        %697 = vmatpush1.msra.mxu0 %v668
        %698 = vmatprep.subr.mxu0 0.0
        %699 = vmatpush1.msra.mxu0 %v667
        %700 = vmatprep.subr.mxu0 0.0
        %701 = vmatpush1.msra.mxu0 %v666
        %702 = vmatprep.subr.mxu0 0.0
        %703 = vmatpush1.msra.mxu0 %v665
        %704 = vmatprep.subr.mxu0 0.0
        %705 = vmatpush1.msra.mxu0 %v664
        %706 = vmatprep.subr.mxu0 0.0
        %707 = vmatpush1.msra.mxu0 %v663
        %708 = vmatprep.subr.mxu0 0.0
        %709 = vmatpush1.msra.mxu0 %v662
        %710 = vmatprep.subr.mxu0 0.0
        %711 = vmatpush2.msra.mxu0 0.0
        %712 = vmatprep.subr.mxu0 0.0
        %713 = vmatpush2.msra.mxu0 0.0
        %714 = vmatprep.subr.mxu0 0.0
        %715 = vmatpush2.msra.mxu0 0.0
        %716 = vmatprep.subr.mxu0 0.0
        %717 = vmatpush2.msra.mxu0 0.0
        %718 = vmatprep.subr.mxu0 0.0
        %719 = vmatpush2.msra.mxu0 0.0
        %720 = vmatprep.subr.mxu0 0.0
        %721 = vmatpush2.msra.mxu0 0.0
        %722 = vmatprep.subr.mxu0 0.0
        %723 = vmatpush2.msra.mxu0 0.0
        %724 = vmatprep.subr.mxu0 0.0
        %725 = vmatpush2.msra.mxu0 0.0
        %726 = vmatprep.subr.mxu0 0.0
        %727 = vmatpush2.msra.mxu0 0.0
        %728 = vmatprep.subr.mxu0 0.0
        %729 = vmatpush2.msra.mxu0 0.0
        %730 = vmatprep.subr.mxu0 0.0
        %731 = vmatpush2.msra.mxu0 0.0
        %732 = vmatprep.subr.mxu0 0.0
        %733 = vmatpush2.msra.mxu0 0.0
        %734 = vmatprep.subr.mxu0 0.0
        %735 = vmatpush2.msra.mxu0 0.0
        %736 = vmatprep.subr.mxu0 0.0
        %737 = vmatpush2.msra.mxu0 0.0
        %738 = vmatprep.subr.mxu0 0.0
        %739 = vmatpush2.msra.mxu0 0.0
        %740 = vmatprep.subr.mxu0 0.0
        %741 = vmatpush2.msra.mxu0 0.0
        %742 = vmatprep.mubr.f32.mxu0 0.0
        %743 = vmatmul.mubr.f32.gmra.mxu0 %v551
        %v744 = vpop.f32.mrf.mxu0
        %v745 = vadd.f32 0.0, %v744
        %v746 = vpop.f32.mrf.mxu0
        %747 = vmatprep.mubr.f32.mxu0 0.0
        %748 = vmatmul.mubr.f32.gmra.mxu0 %v553
        %v749 = vpop.f32.mrf.mxu0
        %v750 = vadd.f32 0.0, %v749
        %v751 = vpop.f32.mrf.mxu0
        %752 = vmatprep.mubr.f32.mxu0 0.0
        %753 = vmatmul.mubr.f32.gmra.mxu0 %v556
        %v754 = vpop.f32.mrf.mxu0
        %v755 = vadd.f32 0.0, %v754
        %v756 = vpop.f32.mrf.mxu0
        %757 = vmatprep.mubr.f32.mxu0 0.0
        %758 = vmatmul.mubr.f32.gmra.mxu0 %v558
        %v759 = vpop.f32.mrf.mxu0
        %v760 = vadd.f32 0.0, %v759
        %v761 = vpop.f32.mrf.mxu0
        %762 = vmatprep.mubr.f32.mxu0 0.0
        %763 = vmatmul.mubr.f32.gmra.mxu0 %v561
        %v764 = vpop.f32.mrf.mxu0
        %v765 = vadd.f32 0.0, %v764
        %v766 = vpop.f32.mrf.mxu0
        %767 = vmatprep.mubr.f32.mxu0 0.0
        %768 = vmatmul.mubr.f32.gmra.mxu0 %v563
        %v769 = vpop.f32.mrf.mxu0
        %v770 = vadd.f32 0.0, %v769
        %v771 = vpop.f32.mrf.mxu0
        %772 = vmatprep.mubr.f32.mxu0 0.0
        %773 = vmatmul.mubr.f32.gmra.mxu0 %v566
        %v774 = vpop.f32.mrf.mxu0
        %v775 = vadd.f32 0.0, %v774
        %v776 = vpop.f32.mrf.mxu0
        %777 = vmatprep.mubr.f32.mxu0 0.0
        %778 = vmatmul.mubr.f32.gmra.mxu0 %v568
        %v779 = vpop.f32.mrf.mxu0
        %v780 = vadd.f32 0.0, %v779
        %v781 = vpop.f32.mrf.mxu0
        %782 = vmatprep.mubr.f32.mxu0 0.0
        %783 = vmatmul.mubr.f32.gmra.mxu0 %v571
        %v784 = vpop.f32.mrf.mxu0
        %v785 = vadd.f32 0.0, %v784
        %v786 = vpop.f32.mrf.mxu0
        %787 = vmatprep.mubr.f32.mxu0 0.0
        %788 = vmatmul.mubr.f32.gmra.mxu0 %v573
        %v789 = vpop.f32.mrf.mxu0
        %v790 = vadd.f32 0.0, %v789
        %v791 = vpop.f32.mrf.mxu0
        %792 = vmatprep.mubr.f32.mxu0 0.0
        %793 = vmatmul.mubr.f32.gmra.mxu0 %v576
        %v794 = vpop.f32.mrf.mxu0
        %v795 = vadd.f32 0.0, %v794
        %v796 = vpop.f32.mrf.mxu0
        %797 = vmatprep.mubr.f32.mxu0 0.0
        %798 = vmatmul.mubr.f32.gmra.mxu0 %v578
        %v799 = vpop.f32.mrf.mxu0
        %v800 = vadd.f32 0.0, %v799
        %v801 = vpop.f32.mrf.mxu0
        %802 = vmatprep.mubr.f32.mxu0 0.0
        %803 = vmatmul.mubr.f32.gmra.mxu0 %v581
        %v804 = vpop.f32.mrf.mxu0
        %v805 = vadd.f32 0.0, %v804
        %v806 = vpop.f32.mrf.mxu0
        %807 = vmatprep.mubr.f32.mxu0 0.0
        %808 = vmatmul.mubr.f32.gmra.mxu0 %v583
        %v809 = vpop.f32.mrf.mxu0
        %v810 = vadd.f32 0.0, %v809
        %v811 = vpop.f32.mrf.mxu0
        %812 = vmatprep.mubr.f32.mxu0 0.0
        %813 = vmatmul.mubr.f32.gmra.mxu0 %v586
        %v814 = vpop.f32.mrf.mxu0
        %v815 = vadd.f32 0.0, %v814
        %v816 = vpop.f32.mrf.mxu0
        %817 = vmatprep.mubr.f32.mxu0 0.0
        %818 = vmatmul.mubr.f32.gmra.mxu0 %v588
        %v819 = vpop.f32.mrf.mxu0
        %v820 = vadd.f32 0.0, %v819
        %v821 = vpop.f32.mrf.mxu0
        %822 = vmatprep.mubr.f32.mxu0 0.0
        %823 = vmatmul.mubr.f32.gmra.mxu0 %v591
        %v824 = vpop.f32.mrf.mxu0
        %v825 = vadd.f32 0.0, %v824
        %v826 = vpop.f32.mrf.mxu0
        %827 = vmatprep.mubr.f32.mxu0 0.0
        %828 = vmatmul.mubr.f32.gmra.mxu0 %v593
        %v829 = vpop.f32.mrf.mxu0
        %v830 = vadd.f32 0.0, %v829
        %v831 = vpop.f32.mrf.mxu0
        %832 = vmatprep.mubr.f32.mxu0 0.0
        %833 = vmatmul.mubr.f32.gmra.mxu0 %v596
        %v834 = vpop.f32.mrf.mxu0
        %v835 = vadd.f32 0.0, %v834
        %v836 = vpop.f32.mrf.mxu0
        %837 = vmatprep.mubr.f32.mxu0 0.0
        %838 = vmatmul.mubr.f32.gmra.mxu0 %v598
        %v839 = vpop.f32.mrf.mxu0
        %v840 = vadd.f32 0.0, %v839
        %v841 = vpop.f32.mrf.mxu0
        %842 = vmatprep.mubr.f32.mxu0 0.0
        %843 = vmatmul.mubr.f32.gmra.mxu0 %v601
        %v844 = vpop.f32.mrf.mxu0
        %v845 = vadd.f32 0.0, %v844
        %v846 = vpop.f32.mrf.mxu0
        %847 = vmatprep.mubr.f32.mxu0 0.0
        %848 = vmatmul.mubr.f32.gmra.mxu0 %v603
        %v849 = vpop.f32.mrf.mxu0
        %v850 = vadd.f32 0.0, %v849
        %v851 = vpop.f32.mrf.mxu0
        %852 = vmatprep.mubr.f32.mxu0 0.0
        %853 = vmatmul.mubr.f32.gmra.mxu0 %v606
        %v854 = vpop.f32.mrf.mxu0
        %v855 = vadd.f32 0.0, %v854
        %v856 = vpop.f32.mrf.mxu0
        %857 = vmatprep.mubr.f32.mxu0 0.0
        %858 = vmatmul.mubr.f32.gmra.mxu0 %v608
        %v859 = vpop.f32.mrf.mxu0
        %v860 = vadd.f32 0.0, %v859
        %v861 = vpop.f32.mrf.mxu0
        %862 = vmatprep.mubr.f32.mxu0 0.0
        %863 = vmatmul.mubr.f32.gmra.mxu0 %v611
        %v864 = vpop.f32.mrf.mxu0
        %v865 = vadd.f32 0.0, %v864
        %v866 = vpop.f32.mrf.mxu0
        %867 = vmatprep.mubr.f32.mxu0 0.0
        %868 = vmatmul.mubr.f32.gmra.mxu0 %v613
        %v869 = vpop.f32.mrf.mxu0
        %v870 = vadd.f32 0.0, %v869
        %v871 = vpop.f32.mrf.mxu0
        %872 = vmatprep.mubr.f32.mxu0 0.0
        %873 = vmatmul.mubr.f32.gmra.mxu0 %v616
        %v874 = vpop.f32.mrf.mxu0
        %v875 = vadd.f32 0.0, %v874
        %v876 = vpop.f32.mrf.mxu0
        %877 = vmatprep.mubr.f32.mxu0 0.0
        %878 = vmatmul.mubr.f32.gmra.mxu0 %v618
        %v879 = vpop.f32.mrf.mxu0
        %v880 = vadd.f32 0.0, %v879
        %v881 = vpop.f32.mrf.mxu0
        %882 = vmatprep.mubr.f32.mxu0 0.0
        %883 = vmatmul.mubr.f32.gmra.mxu0 %v621
        %v884 = vpop.f32.mrf.mxu0
        %v885 = vadd.f32 0.0, %v884
        %v886 = vpop.f32.mrf.mxu0
        %887 = vmatprep.mubr.f32.mxu0 0.0
        %888 = vmatmul.mubr.f32.gmra.mxu0 %v623
        %v889 = vpop.f32.mrf.mxu0
        %v890 = vadd.f32 0.0, %v889
        %v891 = vpop.f32.mrf.mxu0
        %892 = vmatprep.mubr.f32.mxu0 0.0
        %893 = vmatmul.mubr.f32.gmra.mxu0 %v626
        %v894 = vpop.f32.mrf.mxu0
        %v895 = vadd.f32 0.0, %v894
        %v896 = vpop.f32.mrf.mxu0
        %897 = vmatprep.mubr.f32.mxu0 0.0
        %898 = vmatmul.mubr.f32.gmra.mxu0 %v628
        %v899 = vpop.f32.mrf.mxu0
        %v900 = vadd.f32 0.0, %v899
        %v901 = vpop.f32.mrf.mxu0
        %902 = vdwg.mxu0
        %903 = vmatprep.subr.mxu0 0.0
        %904 = vmatpush1.msra.mxu0 %v515
        %905 = vmatprep.subr.mxu0 0.0
        %906 = vmatpush1.msra.mxu0 %v514
        %907 = vmatprep.subr.mxu0 0.0
        %908 = vmatpush1.msra.mxu0 %v513
        %909 = vmatprep.subr.mxu0 0.0
        %910 = vmatpush1.msra.mxu0 %v512
        %911 = vmatprep.subr.mxu0 0.0
        %912 = vmatpush1.msra.mxu0 %v511
        %913 = vmatprep.subr.mxu0 0.0
        %914 = vmatpush1.msra.mxu0 %v510
        %915 = vmatprep.subr.mxu0 0.0
        %916 = vmatpush1.msra.mxu0 %v509
        %917 = vmatprep.subr.mxu0 0.0
        %918 = vmatpush1.msra.mxu0 %v508
        %919 = vmatprep.subr.mxu0 0.0
        %920 = vmatpush1.msra.mxu0 %v507
        %921 = vmatprep.subr.mxu0 0.0
        %922 = vmatpush1.msra.mxu0 %v506
        %923 = vmatprep.subr.mxu0 0.0
        %924 = vmatpush1.msra.mxu0 %v505
        %925 = vmatprep.subr.mxu0 0.0
        %926 = vmatpush1.msra.mxu0 %v504
        %927 = vmatprep.subr.mxu0 0.0
        %928 = vmatpush1.msra.mxu0 %v503
        %929 = vmatprep.subr.mxu0 0.0
        %930 = vmatpush1.msra.mxu0 %v502
        %931 = vmatprep.subr.mxu0 0.0
        %932 = vmatpush1.msra.mxu0 %v501
        %933 = vmatprep.subr.mxu0 0.0
        %934 = vmatpush1.msra.mxu0 %v500
        %935 = vmatprep.subr.mxu0 0.0
        %936 = vmatpush2.msra.mxu0 0.0
        %937 = vmatprep.subr.mxu0 0.0
        %938 = vmatpush2.msra.mxu0 0.0
        %939 = vmatprep.subr.mxu0 0.0
        %940 = vmatpush2.msra.mxu0 0.0
        %941 = vmatprep.subr.mxu0 0.0
        %942 = vmatpush2.msra.mxu0 0.0
        %943 = vmatprep.subr.mxu0 0.0
        %944 = vmatpush2.msra.mxu0 0.0
        %945 = vmatprep.subr.mxu0 0.0
        %946 = vmatpush2.msra.mxu0 0.0
        %947 = vmatprep.subr.mxu0 0.0
        %948 = vmatpush2.msra.mxu0 0.0
        %949 = vmatprep.subr.mxu0 0.0
        %950 = vmatpush2.msra.mxu0 0.0
        %951 = vmatprep.subr.mxu0 0.0
        %952 = vmatpush2.msra.mxu0 0.0
        %953 = vmatprep.subr.mxu0 0.0
        %954 = vmatpush2.msra.mxu0 0.0
        %955 = vmatprep.subr.mxu0 0.0
        %956 = vmatpush2.msra.mxu0 0.0
        %957 = vmatprep.subr.mxu0 0.0
        %958 = vmatpush2.msra.mxu0 0.0
        %959 = vmatprep.subr.mxu0 0.0
        %960 = vmatpush2.msra.mxu0 0.0
        %961 = vmatprep.subr.mxu0 0.0
        %962 = vmatpush2.msra.mxu0 0.0
        %963 = vmatprep.subr.mxu0 0.0
        %964 = vmatpush2.msra.mxu0 0.0
        %965 = vmatprep.subr.mxu0 0.0
        %966 = vmatpush2.msra.mxu0 0.0
        %967 = vmatprep.mubr.f32.mxu0 0.0
        %968 = vmatmul.mubr.f32.gmra.mxu0 %v466
        %v969 = vpop.f32.mrf.mxu0
        %v970 = vadd.f32 %v745, %v969
        %v971 = vpop.f32.mrf.mxu0
        %972 = vmatprep.mubr.f32.mxu0 0.0
        %973 = vmatmul.mubr.f32.gmra.mxu0 %v367
        %v974 = vpop.f32.mrf.mxu0
        %v975 = vadd.f32 %v750, %v974
        %v976 = vpop.f32.mrf.mxu0
        %977 = vmatprep.mubr.f32.mxu0 0.0
        %978 = vmatmul.mubr.f32.gmra.mxu0 %v467
        %v979 = vpop.f32.mrf.mxu0
        %v980 = vadd.f32 %v755, %v979
        %v981 = vpop.f32.mrf.mxu0
        %982 = vmatprep.mubr.f32.mxu0 0.0
        %983 = vmatmul.mubr.f32.gmra.mxu0 %v370
        %v984 = vpop.f32.mrf.mxu0
        %v985 = vadd.f32 %v760, %v984
        %v986 = vpop.f32.mrf.mxu0
        %987 = vmatprep.mubr.f32.mxu0 0.0
        %988 = vmatmul.mubr.f32.gmra.mxu0 %v468
        %v989 = vpop.f32.mrf.mxu0
        %v990 = vadd.f32 %v765, %v989
        %v991 = vpop.f32.mrf.mxu0
        %992 = vmatprep.mubr.f32.mxu0 0.0
        %993 = vmatmul.mubr.f32.gmra.mxu0 %v373
        %v994 = vpop.f32.mrf.mxu0
        %v995 = vadd.f32 %v770, %v994
        %v996 = vpop.f32.mrf.mxu0
        %997 = vmatprep.mubr.f32.mxu0 0.0
        %998 = vmatmul.mubr.f32.gmra.mxu0 %v469
        %v999 = vpop.f32.mrf.mxu0
        %v1000 = vadd.f32 %v775, %v999
        %v1001 = vpop.f32.mrf.mxu0
        %1002 = vmatprep.mubr.f32.mxu0 0.0
        %1003 = vmatmul.mubr.f32.gmra.mxu0 %v376
        %v1004 = vpop.f32.mrf.mxu0
        %v1005 = vadd.f32 %v780, %v1004
        %v1006 = vpop.f32.mrf.mxu0
        %1007 = vmatprep.mubr.f32.mxu0 0.0
        %1008 = vmatmul.mubr.f32.gmra.mxu0 %v470
        %v1009 = vpop.f32.mrf.mxu0
        %v1010 = vadd.f32 %v785, %v1009
        %v1011 = vpop.f32.mrf.mxu0
        %1012 = vmatprep.mubr.f32.mxu0 0.0
        %1013 = vmatmul.mubr.f32.gmra.mxu0 %v379
        %v1014 = vpop.f32.mrf.mxu0
        %v1015 = vadd.f32 %v790, %v1014
        %v1016 = vpop.f32.mrf.mxu0
        %1017 = vmatprep.mubr.f32.mxu0 0.0
        %1018 = vmatmul.mubr.f32.gmra.mxu0 %v471
        %v1019 = vpop.f32.mrf.mxu0
        %v1020 = vadd.f32 %v795, %v1019
        %v1021 = vpop.f32.mrf.mxu0
        %1022 = vmatprep.mubr.f32.mxu0 0.0
        %1023 = vmatmul.mubr.f32.gmra.mxu0 %v382
        %v1024 = vpop.f32.mrf.mxu0
        %v1025 = vadd.f32 %v800, %v1024
        %v1026 = vpop.f32.mrf.mxu0
        %1027 = vmatprep.mubr.f32.mxu0 0.0
        %1028 = vmatmul.mubr.f32.gmra.mxu0 %v472
        %v1029 = vpop.f32.mrf.mxu0
        %v1030 = vadd.f32 %v805, %v1029
        %v1031 = vpop.f32.mrf.mxu0
        %1032 = vmatprep.mubr.f32.mxu0 0.0
        %1033 = vmatmul.mubr.f32.gmra.mxu0 %v385
        %v1034 = vpop.f32.mrf.mxu0
        %v1035 = vadd.f32 %v810, %v1034
        %v1036 = vpop.f32.mrf.mxu0
        %1037 = vmatprep.mubr.f32.mxu0 0.0
        %1038 = vmatmul.mubr.f32.gmra.mxu0 %v473
        %v1039 = vpop.f32.mrf.mxu0
        %v1040 = vadd.f32 %v815, %v1039
        %v1041 = vpop.f32.mrf.mxu0
        %1042 = vmatprep.mubr.f32.mxu0 0.0
        %1043 = vmatmul.mubr.f32.gmra.mxu0 %v388
        %v1044 = vpop.f32.mrf.mxu0
        %v1045 = vadd.f32 %v820, %v1044
        %v1046 = vpop.f32.mrf.mxu0
        %1047 = vmatprep.mubr.f32.mxu0 0.0
        %1048 = vmatmul.mubr.f32.gmra.mxu0 %v474
        %v1049 = vpop.f32.mrf.mxu0
        %v1050 = vadd.f32 %v825, %v1049
        %v1051 = vpop.f32.mrf.mxu0
        %1052 = vmatprep.mubr.f32.mxu0 0.0
        %1053 = vmatmul.mubr.f32.gmra.mxu0 %v391
        %v1054 = vpop.f32.mrf.mxu0
        %v1055 = vadd.f32 %v830, %v1054
        %v1056 = vpop.f32.mrf.mxu0
        %1057 = vmatprep.mubr.f32.mxu0 0.0
        %1058 = vmatmul.mubr.f32.gmra.mxu0 %v475
        %v1059 = vpop.f32.mrf.mxu0
        %v1060 = vadd.f32 %v835, %v1059
        %v1061 = vpop.f32.mrf.mxu0
        %1062 = vmatprep.mubr.f32.mxu0 0.0
        %1063 = vmatmul.mubr.f32.gmra.mxu0 %v394
        %v1064 = vpop.f32.mrf.mxu0
        %v1065 = vadd.f32 %v840, %v1064
        %v1066 = vpop.f32.mrf.mxu0
        %1067 = vmatprep.mubr.f32.mxu0 0.0
        %1068 = vmatmul.mubr.f32.gmra.mxu0 %v476
        %v1069 = vpop.f32.mrf.mxu0
        %v1070 = vadd.f32 %v845, %v1069
        %v1071 = vpop.f32.mrf.mxu0
        %1072 = vmatprep.mubr.f32.mxu0 0.0
        %1073 = vmatmul.mubr.f32.gmra.mxu0 %v397
        %v1074 = vpop.f32.mrf.mxu0
        %v1075 = vadd.f32 %v850, %v1074
        %v1076 = vpop.f32.mrf.mxu0
        %1077 = vmatprep.mubr.f32.mxu0 0.0
        %1078 = vmatmul.mubr.f32.gmra.mxu0 %v477
        %v1079 = vpop.f32.mrf.mxu0
        %v1080 = vadd.f32 %v855, %v1079
        %v1081 = vpop.f32.mrf.mxu0
        %1082 = vmatprep.mubr.f32.mxu0 0.0
        %1083 = vmatmul.mubr.f32.gmra.mxu0 %v400
        %v1084 = vpop.f32.mrf.mxu0
        %v1085 = vadd.f32 %v860, %v1084
        %v1086 = vpop.f32.mrf.mxu0
        %1087 = vmatprep.mubr.f32.mxu0 0.0
        %1088 = vmatmul.mubr.f32.gmra.mxu0 %v478
        %v1089 = vpop.f32.mrf.mxu0
        %v1090 = vadd.f32 %v865, %v1089
        %v1091 = vpop.f32.mrf.mxu0
        %1092 = vmatprep.mubr.f32.mxu0 0.0
        %1093 = vmatmul.mubr.f32.gmra.mxu0 %v403
        %v1094 = vpop.f32.mrf.mxu0
        %v1095 = vadd.f32 %v870, %v1094
        %v1096 = vpop.f32.mrf.mxu0
        %1097 = vmatprep.mubr.f32.mxu0 0.0
        %1098 = vmatmul.mubr.f32.gmra.mxu0 %v479
        %v1099 = vpop.f32.mrf.mxu0
        %v1100 = vadd.f32 %v875, %v1099
        %v1101 = vpop.f32.mrf.mxu0
        %1102 = vmatprep.mubr.f32.mxu0 0.0
        %1103 = vmatmul.mubr.f32.gmra.mxu0 %v406
        %v1104 = vpop.f32.mrf.mxu0
        %v1105 = vadd.f32 %v880, %v1104
        %v1106 = vpop.f32.mrf.mxu0
        %1107 = vmatprep.mubr.f32.mxu0 0.0
        %1108 = vmatmul.mubr.f32.gmra.mxu0 %v480
        %v1109 = vpop.f32.mrf.mxu0
        %v1110 = vadd.f32 %v885, %v1109
        %v1111 = vpop.f32.mrf.mxu0
        %1112 = vmatprep.mubr.f32.mxu0 0.0
        %1113 = vmatmul.mubr.f32.gmra.mxu0 %v409
        %v1114 = vpop.f32.mrf.mxu0
        %v1115 = vadd.f32 %v890, %v1114
        %v1116 = vpop.f32.mrf.mxu0
        %1117 = vmatprep.mubr.f32.mxu0 0.0
        %1118 = vmatmul.mubr.f32.gmra.mxu0 %v481
        %v1119 = vpop.f32.mrf.mxu0
        %v1120 = vadd.f32 %v895, %v1119
        %v1121 = vpop.f32.mrf.mxu0
        %1122 = vmatprep.mubr.f32.mxu0 0.0
        %1123 = vmatmul.mubr.f32.gmra.mxu0 %v412
        %v1124 = vpop.f32.mrf.mxu0
        %v1125 = vadd.f32 %v900, %v1124
        %v1126 = vpop.f32.mrf.mxu0
        %1127 = vdwg.mxu0
        %vm1128 = vcmask 1045504
        %v1129 = vrot.slane %v466, 2
        %v1130 = vrot.slane %v367, 2
        %v1131 = vsel %vm1128, %v1129, %v1130
        %v1132 = vrot.slane %v483, 2
        %v1133 = vsel %vm1128, %v1130, %v1132
        %v1134 = vrot.slane %v467, 2
        %v1135 = vrot.slane %v370, 2
        %v1136 = vsel %vm1128, %v1134, %v1135
        %v1137 = vrot.slane %v484, 2
        %v1138 = vsel %vm1128, %v1135, %v1137
        %v1139 = vrot.slane %v468, 2
        %v1140 = vrot.slane %v373, 2
        %v1141 = vsel %vm1128, %v1139, %v1140
        %v1142 = vrot.slane %v485, 2
        %v1143 = vsel %vm1128, %v1140, %v1142
        %v1144 = vrot.slane %v469, 2
        %v1145 = vrot.slane %v376, 2
        %v1146 = vsel %vm1128, %v1144, %v1145
        %v1147 = vrot.slane %v486, 2
        %v1148 = vsel %vm1128, %v1145, %v1147
        %v1149 = vrot.slane %v470, 2
        %v1150 = vrot.slane %v379, 2
        %v1151 = vsel %vm1128, %v1149, %v1150
        %v1152 = vrot.slane %v487, 2
        %v1153 = vsel %vm1128, %v1150, %v1152
        %v1154 = vrot.slane %v471, 2
        %v1155 = vrot.slane %v382, 2
        %v1156 = vsel %vm1128, %v1154, %v1155
        %v1157 = vrot.slane %v488, 2
        %v1158 = vsel %vm1128, %v1155, %v1157
        %v1159 = vrot.slane %v472, 2
        %v1160 = vrot.slane %v385, 2
        %v1161 = vsel %vm1128, %v1159, %v1160
        %v1162 = vrot.slane %v489, 2
        %v1163 = vsel %vm1128, %v1160, %v1162
        %v1164 = vrot.slane %v473, 2
        %v1165 = vrot.slane %v388, 2
        %v1166 = vsel %vm1128, %v1164, %v1165
        %v1167 = vrot.slane %v490, 2
        %v1168 = vsel %vm1128, %v1165, %v1167
        %v1169 = vrot.slane %v474, 2
        %v1170 = vrot.slane %v391, 2
        %v1171 = vsel %vm1128, %v1169, %v1170
        %v1172 = vrot.slane %v491, 2
        %v1173 = vsel %vm1128, %v1170, %v1172
        %v1174 = vrot.slane %v475, 2
        %v1175 = vrot.slane %v394, 2
        %v1176 = vsel %vm1128, %v1174, %v1175
        %v1177 = vrot.slane %v492, 2
        %v1178 = vsel %vm1128, %v1175, %v1177
        %v1179 = vrot.slane %v476, 2
        %v1180 = vrot.slane %v397, 2
        %v1181 = vsel %vm1128, %v1179, %v1180
        %v1182 = vrot.slane %v493, 2
        %v1183 = vsel %vm1128, %v1180, %v1182
        %v1184 = vrot.slane %v477, 2
        %v1185 = vrot.slane %v400, 2
        %v1186 = vsel %vm1128, %v1184, %v1185
        %v1187 = vrot.slane %v494, 2
        %v1188 = vsel %vm1128, %v1185, %v1187
        %v1189 = vrot.slane %v478, 2
        %v1190 = vrot.slane %v403, 2
        %v1191 = vsel %vm1128, %v1189, %v1190
        %v1192 = vrot.slane %v495, 2
        %v1193 = vsel %vm1128, %v1190, %v1192
        %v1194 = vrot.slane %v479, 2
        %v1195 = vrot.slane %v406, 2
        %v1196 = vsel %vm1128, %v1194, %v1195
        %v1197 = vrot.slane %v496, 2
        %v1198 = vsel %vm1128, %v1195, %v1197
        %v1199 = vrot.slane %v480, 2
        %v1200 = vrot.slane %v409, 2
        %v1201 = vsel %vm1128, %v1199, %v1200
        %v1202 = vrot.slane %v497, 2
        %v1203 = vsel %vm1128, %v1200, %v1202
        %v1204 = vrot.slane %v481, 2
        %v1205 = vrot.slane %v412, 2
        %v1206 = vsel %vm1128, %v1204, %v1205
        %v1207 = vrot.slane %v498, 2
        %v1208 = vsel %vm1128, %v1205, %v1207
        %s1241 = scalar_lea.vmem [#allocation5], 256
        %v1242 = vld [vmem:[%s1241] sm:$0xff]
        %v1243 = vld [vmem:[%s1241 + $0x8] sm:$0xff]
        %v1244 = vld [vmem:[%s1241 + $0x10] sm:$0xff]
        %v1245 = vld [vmem:[%s1241 + $0x18] sm:$0xff]
        %v1246 = vld [vmem:[%s1241 + $0x20] sm:$0xff]
        %v1247 = vld [vmem:[%s1241 + $0x28] sm:$0xff]
        %v1248 = vld [vmem:[%s1241 + $0x30] sm:$0xff]
        %v1249 = vld [vmem:[%s1241 + $0x38] sm:$0xff]
        %v1250 = vld [vmem:[%s1241 + $0x40] sm:$0xff]
        %v1251 = vld [vmem:[%s1241 + $0x48] sm:$0xff]
        %v1252 = vld [vmem:[%s1241 + $0x50] sm:$0xff]
        %v1253 = vld [vmem:[%s1241 + $0x58] sm:$0xff]
        %v1254 = vld [vmem:[%s1241 + $0x60] sm:$0xff]
        %v1255 = vld [vmem:[%s1241 + $0x68] sm:$0xff]
        %v1256 = vld [vmem:[%s1241 + $0x70] sm:$0xff]
        %v1257 = vld [vmem:[%s1241 + $0x78] sm:$0xff]
        %1258 = vmatprep.subr.mxu0 0.0
        %1259 = vmatpush1.msra.mxu0 %v1257
        %1260 = vmatprep.subr.mxu0 0.0
        %1261 = vmatpush1.msra.mxu0 %v1256
        %1262 = vmatprep.subr.mxu0 0.0
        %1263 = vmatpush1.msra.mxu0 %v1255
        %1264 = vmatprep.subr.mxu0 0.0
        %1265 = vmatpush1.msra.mxu0 %v1254
        %1266 = vmatprep.subr.mxu0 0.0
        %1267 = vmatpush1.msra.mxu0 %v1253
        %1268 = vmatprep.subr.mxu0 0.0
        %1269 = vmatpush1.msra.mxu0 %v1252
        %1270 = vmatprep.subr.mxu0 0.0
        %1271 = vmatpush1.msra.mxu0 %v1251
        %1272 = vmatprep.subr.mxu0 0.0
        %1273 = vmatpush1.msra.mxu0 %v1250
        %1274 = vmatprep.subr.mxu0 0.0
        %1275 = vmatpush1.msra.mxu0 %v1249
        %1276 = vmatprep.subr.mxu0 0.0
        %1277 = vmatpush1.msra.mxu0 %v1248
        %1278 = vmatprep.subr.mxu0 0.0
        %1279 = vmatpush1.msra.mxu0 %v1247
        %1280 = vmatprep.subr.mxu0 0.0
        %1281 = vmatpush1.msra.mxu0 %v1246
        %1282 = vmatprep.subr.mxu0 0.0
        %1283 = vmatpush1.msra.mxu0 %v1245
        %1284 = vmatprep.subr.mxu0 0.0
        %1285 = vmatpush1.msra.mxu0 %v1244
        %1286 = vmatprep.subr.mxu0 0.0
        %1287 = vmatpush1.msra.mxu0 %v1243
        %1288 = vmatprep.subr.mxu0 0.0
        %1289 = vmatpush1.msra.mxu0 %v1242
        %1290 = vmatprep.subr.mxu0 0.0
        %1291 = vmatpush2.msra.mxu0 0.0
        %1292 = vmatprep.subr.mxu0 0.0
        %1293 = vmatpush2.msra.mxu0 0.0
        %1294 = vmatprep.subr.mxu0 0.0
        %1295 = vmatpush2.msra.mxu0 0.0
        %1296 = vmatprep.subr.mxu0 0.0
        %1297 = vmatpush2.msra.mxu0 0.0
        %1298 = vmatprep.subr.mxu0 0.0
        %1299 = vmatpush2.msra.mxu0 0.0
        %1300 = vmatprep.subr.mxu0 0.0
        %1301 = vmatpush2.msra.mxu0 0.0
        %1302 = vmatprep.subr.mxu0 0.0
        %1303 = vmatpush2.msra.mxu0 0.0
        %1304 = vmatprep.subr.mxu0 0.0
        %1305 = vmatpush2.msra.mxu0 0.0
        %1306 = vmatprep.subr.mxu0 0.0
        %1307 = vmatpush2.msra.mxu0 0.0
        %1308 = vmatprep.subr.mxu0 0.0
        %1309 = vmatpush2.msra.mxu0 0.0
        %1310 = vmatprep.subr.mxu0 0.0
        %1311 = vmatpush2.msra.mxu0 0.0
        %1312 = vmatprep.subr.mxu0 0.0
        %1313 = vmatpush2.msra.mxu0 0.0
        %1314 = vmatprep.subr.mxu0 0.0
        %1315 = vmatpush2.msra.mxu0 0.0
        %1316 = vmatprep.subr.mxu0 0.0
        %1317 = vmatpush2.msra.mxu0 0.0
        %1318 = vmatprep.subr.mxu0 0.0
        %1319 = vmatpush2.msra.mxu0 0.0
        %1320 = vmatprep.subr.mxu0 0.0
        %1321 = vmatpush2.msra.mxu0 0.0
        %1322 = vmatprep.mubr.f32.mxu0 0.0
        %1323 = vmatmul.mubr.f32.gmra.mxu0 %v1131
        %v1324 = vpop.f32.mrf.mxu0
        %v1325 = vadd.f32 0.0, %v1324
        %v1326 = vpop.f32.mrf.mxu0
        %1327 = vmatprep.mubr.f32.mxu0 0.0
        %1328 = vmatmul.mubr.f32.gmra.mxu0 %v1133
        %v1329 = vpop.f32.mrf.mxu0
        %v1330 = vadd.f32 0.0, %v1329
        %v1331 = vpop.f32.mrf.mxu0
        %1332 = vmatprep.mubr.f32.mxu0 0.0
        %1333 = vmatmul.mubr.f32.gmra.mxu0 %v1136
        %v1334 = vpop.f32.mrf.mxu0
        %v1335 = vadd.f32 0.0, %v1334
        %v1336 = vpop.f32.mrf.mxu0
        %1337 = vmatprep.mubr.f32.mxu0 0.0
        %1338 = vmatmul.mubr.f32.gmra.mxu0 %v1138
        %v1339 = vpop.f32.mrf.mxu0
        %v1340 = vadd.f32 0.0, %v1339
        %v1341 = vpop.f32.mrf.mxu0
        %1342 = vmatprep.mubr.f32.mxu0 0.0
        %1343 = vmatmul.mubr.f32.gmra.mxu0 %v1141
        %v1344 = vpop.f32.mrf.mxu0
        %v1345 = vadd.f32 0.0, %v1344
        %v1346 = vpop.f32.mrf.mxu0
        %1347 = vmatprep.mubr.f32.mxu0 0.0
        %1348 = vmatmul.mubr.f32.gmra.mxu0 %v1143
        %v1349 = vpop.f32.mrf.mxu0
        %v1350 = vadd.f32 0.0, %v1349
        %v1351 = vpop.f32.mrf.mxu0
        %1352 = vmatprep.mubr.f32.mxu0 0.0
        %1353 = vmatmul.mubr.f32.gmra.mxu0 %v1146
        %v1354 = vpop.f32.mrf.mxu0
        %v1355 = vadd.f32 0.0, %v1354
        %v1356 = vpop.f32.mrf.mxu0
        %1357 = vmatprep.mubr.f32.mxu0 0.0
        %1358 = vmatmul.mubr.f32.gmra.mxu0 %v1148
        %v1359 = vpop.f32.mrf.mxu0
        %v1360 = vadd.f32 0.0, %v1359
        %v1361 = vpop.f32.mrf.mxu0
        %1362 = vmatprep.mubr.f32.mxu0 0.0
        %1363 = vmatmul.mubr.f32.gmra.mxu0 %v1151
        %v1364 = vpop.f32.mrf.mxu0
        %v1365 = vadd.f32 0.0, %v1364
        %v1366 = vpop.f32.mrf.mxu0
        %1367 = vmatprep.mubr.f32.mxu0 0.0
        %1368 = vmatmul.mubr.f32.gmra.mxu0 %v1153
        %v1369 = vpop.f32.mrf.mxu0
        %v1370 = vadd.f32 0.0, %v1369
        %v1371 = vpop.f32.mrf.mxu0
        %1372 = vmatprep.mubr.f32.mxu0 0.0
        %1373 = vmatmul.mubr.f32.gmra.mxu0 %v1156
        %v1374 = vpop.f32.mrf.mxu0
        %v1375 = vadd.f32 0.0, %v1374
        %v1376 = vpop.f32.mrf.mxu0
        %1377 = vmatprep.mubr.f32.mxu0 0.0
        %1378 = vmatmul.mubr.f32.gmra.mxu0 %v1158
        %v1379 = vpop.f32.mrf.mxu0
        %v1380 = vadd.f32 0.0, %v1379
        %v1381 = vpop.f32.mrf.mxu0
        %1382 = vmatprep.mubr.f32.mxu0 0.0
        %1383 = vmatmul.mubr.f32.gmra.mxu0 %v1161
        %v1384 = vpop.f32.mrf.mxu0
        %v1385 = vadd.f32 0.0, %v1384
        %v1386 = vpop.f32.mrf.mxu0
        %1387 = vmatprep.mubr.f32.mxu0 0.0
        %1388 = vmatmul.mubr.f32.gmra.mxu0 %v1163
        %v1389 = vpop.f32.mrf.mxu0
        %v1390 = vadd.f32 0.0, %v1389
        %v1391 = vpop.f32.mrf.mxu0
        %1392 = vmatprep.mubr.f32.mxu0 0.0
        %1393 = vmatmul.mubr.f32.gmra.mxu0 %v1166
        %v1394 = vpop.f32.mrf.mxu0
        %v1395 = vadd.f32 0.0, %v1394
        %v1396 = vpop.f32.mrf.mxu0
        %1397 = vmatprep.mubr.f32.mxu0 0.0
        %1398 = vmatmul.mubr.f32.gmra.mxu0 %v1168
        %v1399 = vpop.f32.mrf.mxu0
        %v1400 = vadd.f32 0.0, %v1399
        %v1401 = vpop.f32.mrf.mxu0
        %1402 = vmatprep.mubr.f32.mxu0 0.0
        %1403 = vmatmul.mubr.f32.gmra.mxu0 %v1171
        %v1404 = vpop.f32.mrf.mxu0
        %v1405 = vadd.f32 0.0, %v1404
        %v1406 = vpop.f32.mrf.mxu0
        %1407 = vmatprep.mubr.f32.mxu0 0.0
        %1408 = vmatmul.mubr.f32.gmra.mxu0 %v1173
        %v1409 = vpop.f32.mrf.mxu0
        %v1410 = vadd.f32 0.0, %v1409
        %v1411 = vpop.f32.mrf.mxu0
        %1412 = vmatprep.mubr.f32.mxu0 0.0
        %1413 = vmatmul.mubr.f32.gmra.mxu0 %v1176
        %v1414 = vpop.f32.mrf.mxu0
        %v1415 = vadd.f32 0.0, %v1414
        %v1416 = vpop.f32.mrf.mxu0
        %1417 = vmatprep.mubr.f32.mxu0 0.0
        %1418 = vmatmul.mubr.f32.gmra.mxu0 %v1178
        %v1419 = vpop.f32.mrf.mxu0
        %v1420 = vadd.f32 0.0, %v1419
        %v1421 = vpop.f32.mrf.mxu0
        %1422 = vmatprep.mubr.f32.mxu0 0.0
        %1423 = vmatmul.mubr.f32.gmra.mxu0 %v1181
        %v1424 = vpop.f32.mrf.mxu0
        %v1425 = vadd.f32 0.0, %v1424
        %v1426 = vpop.f32.mrf.mxu0
        %1427 = vmatprep.mubr.f32.mxu0 0.0
        %1428 = vmatmul.mubr.f32.gmra.mxu0 %v1183
        %v1429 = vpop.f32.mrf.mxu0
        %v1430 = vadd.f32 0.0, %v1429
        %v1431 = vpop.f32.mrf.mxu0
        %1432 = vmatprep.mubr.f32.mxu0 0.0
        %1433 = vmatmul.mubr.f32.gmra.mxu0 %v1186
        %v1434 = vpop.f32.mrf.mxu0
        %v1435 = vadd.f32 0.0, %v1434
        %v1436 = vpop.f32.mrf.mxu0
        %1437 = vmatprep.mubr.f32.mxu0 0.0
        %1438 = vmatmul.mubr.f32.gmra.mxu0 %v1188
        %v1439 = vpop.f32.mrf.mxu0
        %v1440 = vadd.f32 0.0, %v1439
        %v1441 = vpop.f32.mrf.mxu0
        %1442 = vmatprep.mubr.f32.mxu0 0.0
        %1443 = vmatmul.mubr.f32.gmra.mxu0 %v1191
        %v1444 = vpop.f32.mrf.mxu0
        %v1445 = vadd.f32 0.0, %v1444
        %v1446 = vpop.f32.mrf.mxu0
        %1447 = vmatprep.mubr.f32.mxu0 0.0
        %1448 = vmatmul.mubr.f32.gmra.mxu0 %v1193
        %v1449 = vpop.f32.mrf.mxu0
        %v1450 = vadd.f32 0.0, %v1449
        %v1451 = vpop.f32.mrf.mxu0
        %1452 = vmatprep.mubr.f32.mxu0 0.0
        %1453 = vmatmul.mubr.f32.gmra.mxu0 %v1196
        %v1454 = vpop.f32.mrf.mxu0
        %v1455 = vadd.f32 0.0, %v1454
        %v1456 = vpop.f32.mrf.mxu0
        %1457 = vmatprep.mubr.f32.mxu0 0.0
        %1458 = vmatmul.mubr.f32.gmra.mxu0 %v1198
        %v1459 = vpop.f32.mrf.mxu0
        %v1460 = vadd.f32 0.0, %v1459
        %v1461 = vpop.f32.mrf.mxu0
        %1462 = vmatprep.mubr.f32.mxu0 0.0
        %1463 = vmatmul.mubr.f32.gmra.mxu0 %v1201
        %v1464 = vpop.f32.mrf.mxu0
        %v1465 = vadd.f32 0.0, %v1464
        %v1466 = vpop.f32.mrf.mxu0
        %1467 = vmatprep.mubr.f32.mxu0 0.0
        %1468 = vmatmul.mubr.f32.gmra.mxu0 %v1203
        %v1469 = vpop.f32.mrf.mxu0
        %v1470 = vadd.f32 0.0, %v1469
        %v1471 = vpop.f32.mrf.mxu0
        %1472 = vmatprep.mubr.f32.mxu0 0.0
        %1473 = vmatmul.mubr.f32.gmra.mxu0 %v1206
        %v1474 = vpop.f32.mrf.mxu0
        %v1475 = vadd.f32 0.0, %v1474
        %v1476 = vpop.f32.mrf.mxu0
        %1477 = vmatprep.mubr.f32.mxu0 0.0
        %1478 = vmatmul.mubr.f32.gmra.mxu0 %v1208
        %v1479 = vpop.f32.mrf.mxu0
        %v1480 = vadd.f32 0.0, %v1479
        %v1481 = vpop.f32.mrf.mxu0
        %1482 = vdwg.mxu0
        %v1483 = vadd.f32 %v970, %v1325
        %v1484 = vadd.f32 %v975, %v1330
        %v1485 = vadd.f32 %v980, %v1335
        %v1486 = vadd.f32 %v985, %v1340
        %v1487 = vadd.f32 %v990, %v1345
        %v1488 = vadd.f32 %v995, %v1350
        %v1489 = vadd.f32 %v1000, %v1355
        %v1490 = vadd.f32 %v1005, %v1360
        %v1491 = vadd.f32 %v1010, %v1365
        %v1492 = vadd.f32 %v1015, %v1370
        %v1493 = vadd.f32 %v1020, %v1375
        %v1494 = vadd.f32 %v1025, %v1380
        %v1495 = vadd.f32 %v1030, %v1385
        %v1496 = vadd.f32 %v1035, %v1390
        %v1497 = vadd.f32 %v1040, %v1395
        %v1498 = vadd.f32 %v1045, %v1400
        %v1499 = vadd.f32 %v1050, %v1405
        %v1500 = vadd.f32 %v1055, %v1410
        %v1501 = vadd.f32 %v1060, %v1415
        %v1502 = vadd.f32 %v1065, %v1420
        %v1503 = vadd.f32 %v1070, %v1425
        %v1504 = vadd.f32 %v1075, %v1430
        %v1505 = vadd.f32 %v1080, %v1435
        %v1506 = vadd.f32 %v1085, %v1440
        %v1507 = vadd.f32 %v1090, %v1445
        %v1508 = vadd.f32 %v1095, %v1450
        %v1509 = vadd.f32 %v1100, %v1455
        %v1510 = vadd.f32 %v1105, %v1460
        %v1511 = vadd.f32 %v1110, %v1465
        %v1512 = vadd.f32 %v1115, %v1470
        %v1513 = vadd.f32 %v1120, %v1475
        %v1514 = vadd.f32 %v1125, %v1480
        %s1515 = scalar_lea.vmem [#allocation5], 384
        %v1516 = vld [vmem:[%s1515] sm:$0xff]
        %v1517 = vld [vmem:[%s1515 + $0x8] sm:$0xff]
        %v1518 = vld [vmem:[%s1515 + $0x10] sm:$0xff]
        %v1519 = vld [vmem:[%s1515 + $0x18] sm:$0xff]
        %v1520 = vld [vmem:[%s1515 + $0x20] sm:$0xff]
        %v1521 = vld [vmem:[%s1515 + $0x28] sm:$0xff]
        %v1522 = vld [vmem:[%s1515 + $0x30] sm:$0xff]
        %v1523 = vld [vmem:[%s1515 + $0x38] sm:$0xff]
        %v1524 = vld [vmem:[%s1515 + $0x40] sm:$0xff]
        %v1525 = vld [vmem:[%s1515 + $0x48] sm:$0xff]
        %v1526 = vld [vmem:[%s1515 + $0x50] sm:$0xff]
        %v1527 = vld [vmem:[%s1515 + $0x58] sm:$0xff]
        %v1528 = vld [vmem:[%s1515 + $0x60] sm:$0xff]
        %v1529 = vld [vmem:[%s1515 + $0x68] sm:$0xff]
        %v1530 = vld [vmem:[%s1515 + $0x70] sm:$0xff]
        %v1531 = vld [vmem:[%s1515 + $0x78] sm:$0xff]
        %1532 = vmatprep.subr.mxu0 0.0
        %1533 = vmatpush1.msra.mxu0 %v1531
        %1534 = vmatprep.subr.mxu0 0.0
        %1535 = vmatpush1.msra.mxu0 %v1530
        %1536 = vmatprep.subr.mxu0 0.0
        %1537 = vmatpush1.msra.mxu0 %v1529
        %1538 = vmatprep.subr.mxu0 0.0
        %1539 = vmatpush1.msra.mxu0 %v1528
        %1540 = vmatprep.subr.mxu0 0.0
        %1541 = vmatpush1.msra.mxu0 %v1527
        %1542 = vmatprep.subr.mxu0 0.0
        %1543 = vmatpush1.msra.mxu0 %v1526
        %1544 = vmatprep.subr.mxu0 0.0
        %1545 = vmatpush1.msra.mxu0 %v1525
        %1546 = vmatprep.subr.mxu0 0.0
        %1547 = vmatpush1.msra.mxu0 %v1524
        %1548 = vmatprep.subr.mxu0 0.0
        %1549 = vmatpush1.msra.mxu0 %v1523
        %1550 = vmatprep.subr.mxu0 0.0
        %1551 = vmatpush1.msra.mxu0 %v1522
        %1552 = vmatprep.subr.mxu0 0.0
        %1553 = vmatpush1.msra.mxu0 %v1521
        %1554 = vmatprep.subr.mxu0 0.0
        %1555 = vmatpush1.msra.mxu0 %v1520
        %1556 = vmatprep.subr.mxu0 0.0
        %1557 = vmatpush1.msra.mxu0 %v1519
        %1558 = vmatprep.subr.mxu0 0.0
        %1559 = vmatpush1.msra.mxu0 %v1518
        %1560 = vmatprep.subr.mxu0 0.0
        %1561 = vmatpush1.msra.mxu0 %v1517
        %1562 = vmatprep.subr.mxu0 0.0
        %1563 = vmatpush1.msra.mxu0 %v1516
        %1564 = vmatprep.subr.mxu0 0.0
        %1565 = vmatpush2.msra.mxu0 0.0
        %1566 = vmatprep.subr.mxu0 0.0
        %1567 = vmatpush2.msra.mxu0 0.0
        %1568 = vmatprep.subr.mxu0 0.0
        %1569 = vmatpush2.msra.mxu0 0.0
        %1570 = vmatprep.subr.mxu0 0.0
        %1571 = vmatpush2.msra.mxu0 0.0
        %1572 = vmatprep.subr.mxu0 0.0
        %1573 = vmatpush2.msra.mxu0 0.0
        %1574 = vmatprep.subr.mxu0 0.0
        %1575 = vmatpush2.msra.mxu0 0.0
        %1576 = vmatprep.subr.mxu0 0.0
        %1577 = vmatpush2.msra.mxu0 0.0
        %1578 = vmatprep.subr.mxu0 0.0
        %1579 = vmatpush2.msra.mxu0 0.0
        %1580 = vmatprep.subr.mxu0 0.0
        %1581 = vmatpush2.msra.mxu0 0.0
        %1582 = vmatprep.subr.mxu0 0.0
        %1583 = vmatpush2.msra.mxu0 0.0
        %1584 = vmatprep.subr.mxu0 0.0
        %1585 = vmatpush2.msra.mxu0 0.0
        %1586 = vmatprep.subr.mxu0 0.0
        %1587 = vmatpush2.msra.mxu0 0.0
        %1588 = vmatprep.subr.mxu0 0.0
        %1589 = vmatpush2.msra.mxu0 0.0
        %1590 = vmatprep.subr.mxu0 0.0
        %1591 = vmatpush2.msra.mxu0 0.0
        %1592 = vmatprep.subr.mxu0 0.0
        %1593 = vmatpush2.msra.mxu0 0.0
        %1594 = vmatprep.subr.mxu0 0.0
        %1595 = vmatpush2.msra.mxu0 0.0
        %1596 = vmatprep.mubr.f32.mxu0 0.0
        %1597 = vmatmul.mubr.f32.gmra.mxu0 %v467
        %v1598 = vpop.f32.mrf.mxu0
        %v1599 = vadd.f32 0.0, %v1598
        %v1600 = vpop.f32.mrf.mxu0
        %1601 = vmatprep.mubr.f32.mxu0 0.0
        %1602 = vmatmul.mubr.f32.gmra.mxu0 %v370
        %v1603 = vpop.f32.mrf.mxu0
        %v1604 = vadd.f32 0.0, %v1603
        %v1605 = vpop.f32.mrf.mxu0
        %1606 = vmatprep.mubr.f32.mxu0 0.0
        %1607 = vmatmul.mubr.f32.gmra.mxu0 %v468
        %v1608 = vpop.f32.mrf.mxu0
        %v1609 = vadd.f32 0.0, %v1608
        %v1610 = vpop.f32.mrf.mxu0
        %1611 = vmatprep.mubr.f32.mxu0 0.0
        %1612 = vmatmul.mubr.f32.gmra.mxu0 %v373
        %v1613 = vpop.f32.mrf.mxu0
        %v1614 = vadd.f32 0.0, %v1613
        %v1615 = vpop.f32.mrf.mxu0
        %1616 = vmatprep.mubr.f32.mxu0 0.0
        %1617 = vmatmul.mubr.f32.gmra.mxu0 %v469
        %v1618 = vpop.f32.mrf.mxu0
        %v1619 = vadd.f32 0.0, %v1618
        %v1620 = vpop.f32.mrf.mxu0
        %1621 = vmatprep.mubr.f32.mxu0 0.0
        %1622 = vmatmul.mubr.f32.gmra.mxu0 %v376
        %v1623 = vpop.f32.mrf.mxu0
        %v1624 = vadd.f32 0.0, %v1623
        %v1625 = vpop.f32.mrf.mxu0
        %1626 = vmatprep.mubr.f32.mxu0 0.0
        %1627 = vmatmul.mubr.f32.gmra.mxu0 %v470
        %v1628 = vpop.f32.mrf.mxu0
        %v1629 = vadd.f32 0.0, %v1628
        %v1630 = vpop.f32.mrf.mxu0
        %1631 = vmatprep.mubr.f32.mxu0 0.0
        %1632 = vmatmul.mubr.f32.gmra.mxu0 %v379
        %v1633 = vpop.f32.mrf.mxu0
        %v1634 = vadd.f32 0.0, %v1633
        %v1635 = vpop.f32.mrf.mxu0
        %1636 = vmatprep.mubr.f32.mxu0 0.0
        %1637 = vmatmul.mubr.f32.gmra.mxu0 %v471
        %v1638 = vpop.f32.mrf.mxu0
        %v1639 = vadd.f32 0.0, %v1638
        %v1640 = vpop.f32.mrf.mxu0
        %1641 = vmatprep.mubr.f32.mxu0 0.0
        %1642 = vmatmul.mubr.f32.gmra.mxu0 %v382
        %v1643 = vpop.f32.mrf.mxu0
        %v1644 = vadd.f32 0.0, %v1643
        %v1645 = vpop.f32.mrf.mxu0
        %1646 = vmatprep.mubr.f32.mxu0 0.0
        %1647 = vmatmul.mubr.f32.gmra.mxu0 %v472
        %v1648 = vpop.f32.mrf.mxu0
        %v1649 = vadd.f32 0.0, %v1648
        %v1650 = vpop.f32.mrf.mxu0
        %1651 = vmatprep.mubr.f32.mxu0 0.0
        %1652 = vmatmul.mubr.f32.gmra.mxu0 %v385
        %v1653 = vpop.f32.mrf.mxu0
        %v1654 = vadd.f32 0.0, %v1653
        %v1655 = vpop.f32.mrf.mxu0
        %1656 = vmatprep.mubr.f32.mxu0 0.0
        %1657 = vmatmul.mubr.f32.gmra.mxu0 %v473
        %v1658 = vpop.f32.mrf.mxu0
        %v1659 = vadd.f32 0.0, %v1658
        %v1660 = vpop.f32.mrf.mxu0
        %1661 = vmatprep.mubr.f32.mxu0 0.0
        %1662 = vmatmul.mubr.f32.gmra.mxu0 %v388
        %v1663 = vpop.f32.mrf.mxu0
        %v1664 = vadd.f32 0.0, %v1663
        %v1665 = vpop.f32.mrf.mxu0
        %1666 = vmatprep.mubr.f32.mxu0 0.0
        %1667 = vmatmul.mubr.f32.gmra.mxu0 %v474
        %v1668 = vpop.f32.mrf.mxu0
        %v1669 = vadd.f32 0.0, %v1668
        %v1670 = vpop.f32.mrf.mxu0
        %1671 = vmatprep.mubr.f32.mxu0 0.0
        %1672 = vmatmul.mubr.f32.gmra.mxu0 %v391
        %v1673 = vpop.f32.mrf.mxu0
        %v1674 = vadd.f32 0.0, %v1673
        %v1675 = vpop.f32.mrf.mxu0
        %1676 = vmatprep.mubr.f32.mxu0 0.0
        %1677 = vmatmul.mubr.f32.gmra.mxu0 %v475
        %v1678 = vpop.f32.mrf.mxu0
        %v1679 = vadd.f32 0.0, %v1678
        %v1680 = vpop.f32.mrf.mxu0
        %1681 = vmatprep.mubr.f32.mxu0 0.0
        %1682 = vmatmul.mubr.f32.gmra.mxu0 %v394
        %v1683 = vpop.f32.mrf.mxu0
        %v1684 = vadd.f32 0.0, %v1683
        %v1685 = vpop.f32.mrf.mxu0
        %1686 = vmatprep.mubr.f32.mxu0 0.0
        %1687 = vmatmul.mubr.f32.gmra.mxu0 %v476
        %v1688 = vpop.f32.mrf.mxu0
        %v1689 = vadd.f32 0.0, %v1688
        %v1690 = vpop.f32.mrf.mxu0
        %1691 = vmatprep.mubr.f32.mxu0 0.0
        %1692 = vmatmul.mubr.f32.gmra.mxu0 %v397
        %v1693 = vpop.f32.mrf.mxu0
        %v1694 = vadd.f32 0.0, %v1693
        %v1695 = vpop.f32.mrf.mxu0
        %1696 = vmatprep.mubr.f32.mxu0 0.0
        %1697 = vmatmul.mubr.f32.gmra.mxu0 %v477
        %v1698 = vpop.f32.mrf.mxu0
        %v1699 = vadd.f32 0.0, %v1698
        %v1700 = vpop.f32.mrf.mxu0
        %1701 = vmatprep.mubr.f32.mxu0 0.0
        %1702 = vmatmul.mubr.f32.gmra.mxu0 %v400
        %v1703 = vpop.f32.mrf.mxu0
        %v1704 = vadd.f32 0.0, %v1703
        %v1705 = vpop.f32.mrf.mxu0
        %1706 = vmatprep.mubr.f32.mxu0 0.0
        %1707 = vmatmul.mubr.f32.gmra.mxu0 %v478
        %v1708 = vpop.f32.mrf.mxu0
        %v1709 = vadd.f32 0.0, %v1708
        %v1710 = vpop.f32.mrf.mxu0
        %1711 = vmatprep.mubr.f32.mxu0 0.0
        %1712 = vmatmul.mubr.f32.gmra.mxu0 %v403
        %v1713 = vpop.f32.mrf.mxu0
        %v1714 = vadd.f32 0.0, %v1713
        %v1715 = vpop.f32.mrf.mxu0
        %1716 = vmatprep.mubr.f32.mxu0 0.0
        %1717 = vmatmul.mubr.f32.gmra.mxu0 %v479
        %v1718 = vpop.f32.mrf.mxu0
        %v1719 = vadd.f32 0.0, %v1718
        %v1720 = vpop.f32.mrf.mxu0
        %1721 = vmatprep.mubr.f32.mxu0 0.0
        %1722 = vmatmul.mubr.f32.gmra.mxu0 %v406
        %v1723 = vpop.f32.mrf.mxu0
        %v1724 = vadd.f32 0.0, %v1723
        %v1725 = vpop.f32.mrf.mxu0
        %1726 = vmatprep.mubr.f32.mxu0 0.0
        %1727 = vmatmul.mubr.f32.gmra.mxu0 %v480
        %v1728 = vpop.f32.mrf.mxu0
        %v1729 = vadd.f32 0.0, %v1728
        %v1730 = vpop.f32.mrf.mxu0
        %1731 = vmatprep.mubr.f32.mxu0 0.0
        %1732 = vmatmul.mubr.f32.gmra.mxu0 %v409
        %v1733 = vpop.f32.mrf.mxu0
        %v1734 = vadd.f32 0.0, %v1733
        %v1735 = vpop.f32.mrf.mxu0
        %1736 = vmatprep.mubr.f32.mxu0 0.0
        %1737 = vmatmul.mubr.f32.gmra.mxu0 %v481
        %v1738 = vpop.f32.mrf.mxu0
        %v1739 = vadd.f32 0.0, %v1738
        %v1740 = vpop.f32.mrf.mxu0
        %1741 = vmatprep.mubr.f32.mxu0 0.0
        %1742 = vmatmul.mubr.f32.gmra.mxu0 %v412
        %v1743 = vpop.f32.mrf.mxu0
        %v1744 = vadd.f32 0.0, %v1743
        %v1745 = vpop.f32.mrf.mxu0
        %1746 = vmatprep.mubr.f32.mxu0 0.0
        %1747 = vmatmul.mubr.f32.gmra.mxu0 %v482
        %v1748 = vpop.f32.mrf.mxu0
        %v1749 = vadd.f32 0.0, %v1748
        %v1750 = vpop.f32.mrf.mxu0
        %1751 = vmatprep.mubr.f32.mxu0 0.0
        %1752 = vmatmul.mubr.f32.gmra.mxu0 %v415
        %v1753 = vpop.f32.mrf.mxu0
        %v1754 = vadd.f32 0.0, %v1753
        %v1755 = vpop.f32.mrf.mxu0
        %1756 = vdwg.mxu0
        %v1757 = vadd.f32 %v1483, %v1599
        %v1758 = vadd.f32 %v1484, %v1604
        %v1759 = vadd.f32 %v1485, %v1609
        %v1760 = vadd.f32 %v1486, %v1614
        %v1761 = vadd.f32 %v1487, %v1619
        %v1762 = vadd.f32 %v1488, %v1624
        %v1763 = vadd.f32 %v1489, %v1629
        %v1764 = vadd.f32 %v1490, %v1634
        %v1765 = vadd.f32 %v1491, %v1639
        %v1766 = vadd.f32 %v1492, %v1644
        %v1767 = vadd.f32 %v1493, %v1649
        %v1768 = vadd.f32 %v1494, %v1654
        %v1769 = vadd.f32 %v1495, %v1659
        %v1770 = vadd.f32 %v1496, %v1664
        %v1771 = vadd.f32 %v1497, %v1669
        %v1772 = vadd.f32 %v1498, %v1674
        %v1773 = vadd.f32 %v1499, %v1679
        %v1774 = vadd.f32 %v1500, %v1684
        %v1775 = vadd.f32 %v1501, %v1689
        %v1776 = vadd.f32 %v1502, %v1694
        %v1777 = vadd.f32 %v1503, %v1699
        %v1778 = vadd.f32 %v1504, %v1704
        %v1779 = vadd.f32 %v1505, %v1709
        %v1780 = vadd.f32 %v1506, %v1714
        %v1781 = vadd.f32 %v1507, %v1719
        %v1782 = vadd.f32 %v1508, %v1724
        %v1783 = vadd.f32 %v1509, %v1729
        %v1784 = vadd.f32 %v1510, %v1734
        %v1785 = vadd.f32 %v1511, %v1739
        %v1786 = vadd.f32 %v1512, %v1744
        %v1787 = vadd.f32 %v1513, %v1749
        %v1788 = vadd.f32 %v1514, %v1754
        %v1791 = vrot.slane %v482, 1
        %v1792 = vrot.slane %v415, 1
        %v1793 = vsel %vm548, %v1791, %v1792
        %v1794 = vrot.slane %v499, 1
        %v1795 = vsel %vm548, %v1792, %v1794
        %s1798 = scalar_lea.vmem [#allocation5], 512
        %v1799 = vld [vmem:[%s1798] sm:$0xff]
        %v1800 = vld [vmem:[%s1798 + $0x8] sm:$0xff]
        %v1801 = vld [vmem:[%s1798 + $0x10] sm:$0xff]
        %v1802 = vld [vmem:[%s1798 + $0x18] sm:$0xff]
        %v1803 = vld [vmem:[%s1798 + $0x20] sm:$0xff]
        %v1804 = vld [vmem:[%s1798 + $0x28] sm:$0xff]
        %v1805 = vld [vmem:[%s1798 + $0x30] sm:$0xff]
        %v1806 = vld [vmem:[%s1798 + $0x38] sm:$0xff]
        %v1807 = vld [vmem:[%s1798 + $0x40] sm:$0xff]
        %v1808 = vld [vmem:[%s1798 + $0x48] sm:$0xff]
        %v1809 = vld [vmem:[%s1798 + $0x50] sm:$0xff]
        %v1810 = vld [vmem:[%s1798 + $0x58] sm:$0xff]
        %v1811 = vld [vmem:[%s1798 + $0x60] sm:$0xff]
        %v1812 = vld [vmem:[%s1798 + $0x68] sm:$0xff]
        %v1813 = vld [vmem:[%s1798 + $0x70] sm:$0xff]
        %v1814 = vld [vmem:[%s1798 + $0x78] sm:$0xff]
        %1815 = vmatprep.subr.mxu0 0.0
        %1816 = vmatpush1.msra.mxu0 %v1814
        %1817 = vmatprep.subr.mxu0 0.0
        %1818 = vmatpush1.msra.mxu0 %v1813
        %1819 = vmatprep.subr.mxu0 0.0
        %1820 = vmatpush1.msra.mxu0 %v1812
        %1821 = vmatprep.subr.mxu0 0.0
        %1822 = vmatpush1.msra.mxu0 %v1811
        %1823 = vmatprep.subr.mxu0 0.0
        %1824 = vmatpush1.msra.mxu0 %v1810
        %1825 = vmatprep.subr.mxu0 0.0
        %1826 = vmatpush1.msra.mxu0 %v1809
        %1827 = vmatprep.subr.mxu0 0.0
        %1828 = vmatpush1.msra.mxu0 %v1808
        %1829 = vmatprep.subr.mxu0 0.0
        %1830 = vmatpush1.msra.mxu0 %v1807
        %1831 = vmatprep.subr.mxu0 0.0
        %1832 = vmatpush1.msra.mxu0 %v1806
        %1833 = vmatprep.subr.mxu0 0.0
        %1834 = vmatpush1.msra.mxu0 %v1805
        %1835 = vmatprep.subr.mxu0 0.0
        %1836 = vmatpush1.msra.mxu0 %v1804
        %1837 = vmatprep.subr.mxu0 0.0
        %1838 = vmatpush1.msra.mxu0 %v1803
        %1839 = vmatprep.subr.mxu0 0.0
        %1840 = vmatpush1.msra.mxu0 %v1802
        %1841 = vmatprep.subr.mxu0 0.0
        %1842 = vmatpush1.msra.mxu0 %v1801
        %1843 = vmatprep.subr.mxu0 0.0
        %1844 = vmatpush1.msra.mxu0 %v1800
        %1845 = vmatprep.subr.mxu0 0.0
        %1846 = vmatpush1.msra.mxu0 %v1799
        %1847 = vmatprep.subr.mxu0 0.0
        %1848 = vmatpush2.msra.mxu0 0.0
        %1849 = vmatprep.subr.mxu0 0.0
        %1850 = vmatpush2.msra.mxu0 0.0
        %1851 = vmatprep.subr.mxu0 0.0
        %1852 = vmatpush2.msra.mxu0 0.0
        %1853 = vmatprep.subr.mxu0 0.0
        %1854 = vmatpush2.msra.mxu0 0.0
        %1855 = vmatprep.subr.mxu0 0.0
        %1856 = vmatpush2.msra.mxu0 0.0
        %1857 = vmatprep.subr.mxu0 0.0
        %1858 = vmatpush2.msra.mxu0 0.0
        %1859 = vmatprep.subr.mxu0 0.0
        %1860 = vmatpush2.msra.mxu0 0.0
        %1861 = vmatprep.subr.mxu0 0.0
        %1862 = vmatpush2.msra.mxu0 0.0
        %1863 = vmatprep.subr.mxu0 0.0
        %1864 = vmatpush2.msra.mxu0 0.0
        %1865 = vmatprep.subr.mxu0 0.0
        %1866 = vmatpush2.msra.mxu0 0.0
        %1867 = vmatprep.subr.mxu0 0.0
        %1868 = vmatpush2.msra.mxu0 0.0
        %1869 = vmatprep.subr.mxu0 0.0
        %1870 = vmatpush2.msra.mxu0 0.0
        %1871 = vmatprep.subr.mxu0 0.0
        %1872 = vmatpush2.msra.mxu0 0.0
        %1873 = vmatprep.subr.mxu0 0.0
        %1874 = vmatpush2.msra.mxu0 0.0
        %1875 = vmatprep.subr.mxu0 0.0
        %1876 = vmatpush2.msra.mxu0 0.0
        %1877 = vmatprep.subr.mxu0 0.0
        %1878 = vmatpush2.msra.mxu0 0.0
        %1879 = vmatprep.mubr.f32.mxu0 0.0
        %1880 = vmatmul.mubr.f32.gmra.mxu0 %v556
        %v1881 = vpop.f32.mrf.mxu0
        %v1882 = vadd.f32 0.0, %v1881
        %v1883 = vpop.f32.mrf.mxu0
        %1884 = vmatprep.mubr.f32.mxu0 0.0
        %1885 = vmatmul.mubr.f32.gmra.mxu0 %v558
        %v1886 = vpop.f32.mrf.mxu0
        %v1887 = vadd.f32 0.0, %v1886
        %v1888 = vpop.f32.mrf.mxu0
        %1889 = vmatprep.mubr.f32.mxu0 0.0
        %1890 = vmatmul.mubr.f32.gmra.mxu0 %v561
        %v1891 = vpop.f32.mrf.mxu0
        %v1892 = vadd.f32 0.0, %v1891
        %v1893 = vpop.f32.mrf.mxu0
        %1894 = vmatprep.mubr.f32.mxu0 0.0
        %1895 = vmatmul.mubr.f32.gmra.mxu0 %v563
        %v1896 = vpop.f32.mrf.mxu0
        %v1897 = vadd.f32 0.0, %v1896
        %v1898 = vpop.f32.mrf.mxu0
        %1899 = vmatprep.mubr.f32.mxu0 0.0
        %1900 = vmatmul.mubr.f32.gmra.mxu0 %v566
        %v1901 = vpop.f32.mrf.mxu0
        %v1902 = vadd.f32 0.0, %v1901
        %v1903 = vpop.f32.mrf.mxu0
        %1904 = vmatprep.mubr.f32.mxu0 0.0
        %1905 = vmatmul.mubr.f32.gmra.mxu0 %v568
        %v1906 = vpop.f32.mrf.mxu0
        %v1907 = vadd.f32 0.0, %v1906
        %v1908 = vpop.f32.mrf.mxu0
        %1909 = vmatprep.mubr.f32.mxu0 0.0
        %1910 = vmatmul.mubr.f32.gmra.mxu0 %v571
        %v1911 = vpop.f32.mrf.mxu0
        %v1912 = vadd.f32 0.0, %v1911
        %v1913 = vpop.f32.mrf.mxu0
        %1914 = vmatprep.mubr.f32.mxu0 0.0
        %1915 = vmatmul.mubr.f32.gmra.mxu0 %v573
        %v1916 = vpop.f32.mrf.mxu0
        %v1917 = vadd.f32 0.0, %v1916
        %v1918 = vpop.f32.mrf.mxu0
        %1919 = vmatprep.mubr.f32.mxu0 0.0
        %1920 = vmatmul.mubr.f32.gmra.mxu0 %v576
        %v1921 = vpop.f32.mrf.mxu0
        %v1922 = vadd.f32 0.0, %v1921
        %v1923 = vpop.f32.mrf.mxu0
        %1924 = vmatprep.mubr.f32.mxu0 0.0
        %1925 = vmatmul.mubr.f32.gmra.mxu0 %v578
        %v1926 = vpop.f32.mrf.mxu0
        %v1927 = vadd.f32 0.0, %v1926
        %v1928 = vpop.f32.mrf.mxu0
        %1929 = vmatprep.mubr.f32.mxu0 0.0
        %1930 = vmatmul.mubr.f32.gmra.mxu0 %v581
        %v1931 = vpop.f32.mrf.mxu0
        %v1932 = vadd.f32 0.0, %v1931
        %v1933 = vpop.f32.mrf.mxu0
        %1934 = vmatprep.mubr.f32.mxu0 0.0
        %1935 = vmatmul.mubr.f32.gmra.mxu0 %v583
        %v1936 = vpop.f32.mrf.mxu0
        %v1937 = vadd.f32 0.0, %v1936
        %v1938 = vpop.f32.mrf.mxu0
        %1939 = vmatprep.mubr.f32.mxu0 0.0
        %1940 = vmatmul.mubr.f32.gmra.mxu0 %v586
        %v1941 = vpop.f32.mrf.mxu0
        %v1942 = vadd.f32 0.0, %v1941
        %v1943 = vpop.f32.mrf.mxu0
        %1944 = vmatprep.mubr.f32.mxu0 0.0
        %1945 = vmatmul.mubr.f32.gmra.mxu0 %v588
        %v1946 = vpop.f32.mrf.mxu0
        %v1947 = vadd.f32 0.0, %v1946
        %v1948 = vpop.f32.mrf.mxu0
        %1949 = vmatprep.mubr.f32.mxu0 0.0
        %1950 = vmatmul.mubr.f32.gmra.mxu0 %v591
        %v1951 = vpop.f32.mrf.mxu0
        %v1952 = vadd.f32 0.0, %v1951
        %v1953 = vpop.f32.mrf.mxu0
        %1954 = vmatprep.mubr.f32.mxu0 0.0
        %1955 = vmatmul.mubr.f32.gmra.mxu0 %v593
        %v1956 = vpop.f32.mrf.mxu0
        %v1957 = vadd.f32 0.0, %v1956
        %v1958 = vpop.f32.mrf.mxu0
        %1959 = vmatprep.mubr.f32.mxu0 0.0
        %1960 = vmatmul.mubr.f32.gmra.mxu0 %v596
        %v1961 = vpop.f32.mrf.mxu0
        %v1962 = vadd.f32 0.0, %v1961
        %v1963 = vpop.f32.mrf.mxu0
        %1964 = vmatprep.mubr.f32.mxu0 0.0
        %1965 = vmatmul.mubr.f32.gmra.mxu0 %v598
        %v1966 = vpop.f32.mrf.mxu0
        %v1967 = vadd.f32 0.0, %v1966
        %v1968 = vpop.f32.mrf.mxu0
        %1969 = vmatprep.mubr.f32.mxu0 0.0
        %1970 = vmatmul.mubr.f32.gmra.mxu0 %v601
        %v1971 = vpop.f32.mrf.mxu0
        %v1972 = vadd.f32 0.0, %v1971
        %v1973 = vpop.f32.mrf.mxu0
        %1974 = vmatprep.mubr.f32.mxu0 0.0
        %1975 = vmatmul.mubr.f32.gmra.mxu0 %v603
        %v1976 = vpop.f32.mrf.mxu0
        %v1977 = vadd.f32 0.0, %v1976
        %v1978 = vpop.f32.mrf.mxu0
        %1979 = vmatprep.mubr.f32.mxu0 0.0
        %1980 = vmatmul.mubr.f32.gmra.mxu0 %v606
        %v1981 = vpop.f32.mrf.mxu0
        %v1982 = vadd.f32 0.0, %v1981
        %v1983 = vpop.f32.mrf.mxu0
        %1984 = vmatprep.mubr.f32.mxu0 0.0
        %1985 = vmatmul.mubr.f32.gmra.mxu0 %v608
        %v1986 = vpop.f32.mrf.mxu0
        %v1987 = vadd.f32 0.0, %v1986
        %v1988 = vpop.f32.mrf.mxu0
        %1989 = vmatprep.mubr.f32.mxu0 0.0
        %1990 = vmatmul.mubr.f32.gmra.mxu0 %v611
        %v1991 = vpop.f32.mrf.mxu0
        %v1992 = vadd.f32 0.0, %v1991
        %v1993 = vpop.f32.mrf.mxu0
        %1994 = vmatprep.mubr.f32.mxu0 0.0
        %1995 = vmatmul.mubr.f32.gmra.mxu0 %v613
        %v1996 = vpop.f32.mrf.mxu0
        %v1997 = vadd.f32 0.0, %v1996
        %v1998 = vpop.f32.mrf.mxu0
        %1999 = vmatprep.mubr.f32.mxu0 0.0
        %2000 = vmatmul.mubr.f32.gmra.mxu0 %v616
        %v2001 = vpop.f32.mrf.mxu0
        %v2002 = vadd.f32 0.0, %v2001
        %v2003 = vpop.f32.mrf.mxu0
        %2004 = vmatprep.mubr.f32.mxu0 0.0
        %2005 = vmatmul.mubr.f32.gmra.mxu0 %v618
        %v2006 = vpop.f32.mrf.mxu0
        %v2007 = vadd.f32 0.0, %v2006
        %v2008 = vpop.f32.mrf.mxu0
        %2009 = vmatprep.mubr.f32.mxu0 0.0
        %2010 = vmatmul.mubr.f32.gmra.mxu0 %v621
        %v2011 = vpop.f32.mrf.mxu0
        %v2012 = vadd.f32 0.0, %v2011
        %v2013 = vpop.f32.mrf.mxu0
        %2014 = vmatprep.mubr.f32.mxu0 0.0
        %2015 = vmatmul.mubr.f32.gmra.mxu0 %v623
        %v2016 = vpop.f32.mrf.mxu0
        %v2017 = vadd.f32 0.0, %v2016
        %v2018 = vpop.f32.mrf.mxu0
        %2019 = vmatprep.mubr.f32.mxu0 0.0
        %2020 = vmatmul.mubr.f32.gmra.mxu0 %v626
        %v2021 = vpop.f32.mrf.mxu0
        %v2022 = vadd.f32 0.0, %v2021
        %v2023 = vpop.f32.mrf.mxu0
        %2024 = vmatprep.mubr.f32.mxu0 0.0
        %2025 = vmatmul.mubr.f32.gmra.mxu0 %v628
        %v2026 = vpop.f32.mrf.mxu0
        %v2027 = vadd.f32 0.0, %v2026
        %v2028 = vpop.f32.mrf.mxu0
        %2029 = vmatprep.mubr.f32.mxu0 0.0
        %2030 = vmatmul.mubr.f32.gmra.mxu0 %v1793
        %v2031 = vpop.f32.mrf.mxu0
        %v2032 = vadd.f32 0.0, %v2031
        %v2033 = vpop.f32.mrf.mxu0
        %2034 = vmatprep.mubr.f32.mxu0 0.0
        %2035 = vmatmul.mubr.f32.gmra.mxu0 %v1795
        %v2036 = vpop.f32.mrf.mxu0
        %v2037 = vadd.f32 0.0, %v2036
        %v2038 = vpop.f32.mrf.mxu0
        %2039 = vdwg.mxu0
        %v2040 = vadd.f32 %v1757, %v1882
        %v2041 = vadd.f32 %v1758, %v1887
        %v2042 = vadd.f32 %v1759, %v1892
        %v2043 = vadd.f32 %v1760, %v1897
        %v2044 = vadd.f32 %v1761, %v1902
        %v2045 = vadd.f32 %v1762, %v1907
        %v2046 = vadd.f32 %v1763, %v1912
        %v2047 = vadd.f32 %v1764, %v1917
        %v2048 = vadd.f32 %v1765, %v1922
        %v2049 = vadd.f32 %v1766, %v1927
        %v2050 = vadd.f32 %v1767, %v1932
        %v2051 = vadd.f32 %v1768, %v1937
        %v2052 = vadd.f32 %v1769, %v1942
        %v2053 = vadd.f32 %v1770, %v1947
        %v2054 = vadd.f32 %v1771, %v1952
        %v2055 = vadd.f32 %v1772, %v1957
        %v2056 = vadd.f32 %v1773, %v1962
        %v2057 = vadd.f32 %v1774, %v1967
        %v2058 = vadd.f32 %v1775, %v1972
        %v2059 = vadd.f32 %v1776, %v1977
        %v2060 = vadd.f32 %v1777, %v1982
        %v2061 = vadd.f32 %v1778, %v1987
        %v2062 = vadd.f32 %v1779, %v1992
        %v2063 = vadd.f32 %v1780, %v1997
        %v2064 = vadd.f32 %v1781, %v2002
        %v2065 = vadd.f32 %v1782, %v2007
        %v2066 = vadd.f32 %v1783, %v2012
        %v2067 = vadd.f32 %v1784, %v2017
        %v2068 = vadd.f32 %v1785, %v2022
        %v2069 = vadd.f32 %v1786, %v2027
        %v2070 = vadd.f32 %v1787, %v2032
        %v2071 = vadd.f32 %v1788, %v2037
        %v2072 = vrot.slane %v482, 2
        %v2073 = vrot.slane %v415, 2
        %v2074 = vsel %vm1128, %v2072, %v2073
        %v2075 = vrot.slane %v499, 2
        %v2076 = vsel %vm1128, %v2073, %v2075
        %s2079 = scalar_lea.vmem [#allocation5], 640
        %v2080 = vld [vmem:[%s2079] sm:$0xff]
        %v2081 = vld [vmem:[%s2079 + $0x8] sm:$0xff]
        %v2082 = vld [vmem:[%s2079 + $0x10] sm:$0xff]
        %v2083 = vld [vmem:[%s2079 + $0x18] sm:$0xff]
        %v2084 = vld [vmem:[%s2079 + $0x20] sm:$0xff]
        %v2085 = vld [vmem:[%s2079 + $0x28] sm:$0xff]
        %v2086 = vld [vmem:[%s2079 + $0x30] sm:$0xff]
        %v2087 = vld [vmem:[%s2079 + $0x38] sm:$0xff]
        %v2088 = vld [vmem:[%s2079 + $0x40] sm:$0xff]
        %v2089 = vld [vmem:[%s2079 + $0x48] sm:$0xff]
        %v2090 = vld [vmem:[%s2079 + $0x50] sm:$0xff]
        %v2091 = vld [vmem:[%s2079 + $0x58] sm:$0xff]
        %v2092 = vld [vmem:[%s2079 + $0x60] sm:$0xff]
        %v2093 = vld [vmem:[%s2079 + $0x68] sm:$0xff]
        %v2094 = vld [vmem:[%s2079 + $0x70] sm:$0xff]
        %v2095 = vld [vmem:[%s2079 + $0x78] sm:$0xff]
        %2096 = vmatprep.subr.mxu0 0.0
        %2097 = vmatpush1.msra.mxu0 %v2095
        %2098 = vmatprep.subr.mxu0 0.0
        %2099 = vmatpush1.msra.mxu0 %v2094
        %2100 = vmatprep.subr.mxu0 0.0
        %2101 = vmatpush1.msra.mxu0 %v2093
        %2102 = vmatprep.subr.mxu0 0.0
        %2103 = vmatpush1.msra.mxu0 %v2092
        %2104 = vmatprep.subr.mxu0 0.0
        %2105 = vmatpush1.msra.mxu0 %v2091
        %2106 = vmatprep.subr.mxu0 0.0
        %2107 = vmatpush1.msra.mxu0 %v2090
        %2108 = vmatprep.subr.mxu0 0.0
        %2109 = vmatpush1.msra.mxu0 %v2089
        %2110 = vmatprep.subr.mxu0 0.0
        %2111 = vmatpush1.msra.mxu0 %v2088
        %2112 = vmatprep.subr.mxu0 0.0
        %2113 = vmatpush1.msra.mxu0 %v2087
        %2114 = vmatprep.subr.mxu0 0.0
        %2115 = vmatpush1.msra.mxu0 %v2086
        %2116 = vmatprep.subr.mxu0 0.0
        %2117 = vmatpush1.msra.mxu0 %v2085
        %2118 = vmatprep.subr.mxu0 0.0
        %2119 = vmatpush1.msra.mxu0 %v2084
        %2120 = vmatprep.subr.mxu0 0.0
        %2121 = vmatpush1.msra.mxu0 %v2083
        %2122 = vmatprep.subr.mxu0 0.0
        %2123 = vmatpush1.msra.mxu0 %v2082
        %2124 = vmatprep.subr.mxu0 0.0
        %2125 = vmatpush1.msra.mxu0 %v2081
        %2126 = vmatprep.subr.mxu0 0.0
        %2127 = vmatpush1.msra.mxu0 %v2080
        %2128 = vmatprep.subr.mxu0 0.0
        %2129 = vmatpush2.msra.mxu0 0.0
        %2130 = vmatprep.subr.mxu0 0.0
        %2131 = vmatpush2.msra.mxu0 0.0
        %2132 = vmatprep.subr.mxu0 0.0
        %2133 = vmatpush2.msra.mxu0 0.0
        %2134 = vmatprep.subr.mxu0 0.0
        %2135 = vmatpush2.msra.mxu0 0.0
        %2136 = vmatprep.subr.mxu0 0.0
        %2137 = vmatpush2.msra.mxu0 0.0
        %2138 = vmatprep.subr.mxu0 0.0
        %2139 = vmatpush2.msra.mxu0 0.0
        %2140 = vmatprep.subr.mxu0 0.0
        %2141 = vmatpush2.msra.mxu0 0.0
        %2142 = vmatprep.subr.mxu0 0.0
        %2143 = vmatpush2.msra.mxu0 0.0
        %2144 = vmatprep.subr.mxu0 0.0
        %2145 = vmatpush2.msra.mxu0 0.0
        %2146 = vmatprep.subr.mxu0 0.0
        %2147 = vmatpush2.msra.mxu0 0.0
        %2148 = vmatprep.subr.mxu0 0.0
        %2149 = vmatpush2.msra.mxu0 0.0
        %2150 = vmatprep.subr.mxu0 0.0
        %2151 = vmatpush2.msra.mxu0 0.0
        %2152 = vmatprep.subr.mxu0 0.0
        %2153 = vmatpush2.msra.mxu0 0.0
        %2154 = vmatprep.subr.mxu0 0.0
        %2155 = vmatpush2.msra.mxu0 0.0
        %2156 = vmatprep.subr.mxu0 0.0
        %2157 = vmatpush2.msra.mxu0 0.0
        %2158 = vmatprep.subr.mxu0 0.0
        %2159 = vmatpush2.msra.mxu0 0.0
        %2160 = vmatprep.mubr.f32.mxu0 0.0
        %2161 = vmatmul.mubr.f32.gmra.mxu0 %v1136
        %v2162 = vpop.f32.mrf.mxu0
        %v2163 = vadd.f32 0.0, %v2162
        %v2164 = vpop.f32.mrf.mxu0
        %2165 = vmatprep.mubr.f32.mxu0 0.0
        %2166 = vmatmul.mubr.f32.gmra.mxu0 %v1138
        %v2167 = vpop.f32.mrf.mxu0
        %v2168 = vadd.f32 0.0, %v2167
        %v2169 = vpop.f32.mrf.mxu0
        %2170 = vmatprep.mubr.f32.mxu0 0.0
        %2171 = vmatmul.mubr.f32.gmra.mxu0 %v1141
        %v2172 = vpop.f32.mrf.mxu0
        %v2173 = vadd.f32 0.0, %v2172
        %v2174 = vpop.f32.mrf.mxu0
        %2175 = vmatprep.mubr.f32.mxu0 0.0
        %2176 = vmatmul.mubr.f32.gmra.mxu0 %v1143
        %v2177 = vpop.f32.mrf.mxu0
        %v2178 = vadd.f32 0.0, %v2177
        %v2179 = vpop.f32.mrf.mxu0
        %2180 = vmatprep.mubr.f32.mxu0 0.0
        %2181 = vmatmul.mubr.f32.gmra.mxu0 %v1146
        %v2182 = vpop.f32.mrf.mxu0
        %v2183 = vadd.f32 0.0, %v2182
        %v2184 = vpop.f32.mrf.mxu0
        %2185 = vmatprep.mubr.f32.mxu0 0.0
        %2186 = vmatmul.mubr.f32.gmra.mxu0 %v1148
        %v2187 = vpop.f32.mrf.mxu0
        %v2188 = vadd.f32 0.0, %v2187
        %v2189 = vpop.f32.mrf.mxu0
        %2190 = vmatprep.mubr.f32.mxu0 0.0
        %2191 = vmatmul.mubr.f32.gmra.mxu0 %v1151
        %v2192 = vpop.f32.mrf.mxu0
        %v2193 = vadd.f32 0.0, %v2192
        %v2194 = vpop.f32.mrf.mxu0
        %2195 = vmatprep.mubr.f32.mxu0 0.0
        %2196 = vmatmul.mubr.f32.gmra.mxu0 %v1153
        %v2197 = vpop.f32.mrf.mxu0
        %v2198 = vadd.f32 0.0, %v2197
        %v2199 = vpop.f32.mrf.mxu0
        %2200 = vmatprep.mubr.f32.mxu0 0.0
        %2201 = vmatmul.mubr.f32.gmra.mxu0 %v1156
        %v2202 = vpop.f32.mrf.mxu0
        %v2203 = vadd.f32 0.0, %v2202
        %v2204 = vpop.f32.mrf.mxu0
        %2205 = vmatprep.mubr.f32.mxu0 0.0
        %2206 = vmatmul.mubr.f32.gmra.mxu0 %v1158
        %v2207 = vpop.f32.mrf.mxu0
        %v2208 = vadd.f32 0.0, %v2207
        %v2209 = vpop.f32.mrf.mxu0
        %2210 = vmatprep.mubr.f32.mxu0 0.0
        %2211 = vmatmul.mubr.f32.gmra.mxu0 %v1161
        %v2212 = vpop.f32.mrf.mxu0
        %v2213 = vadd.f32 0.0, %v2212
        %v2214 = vpop.f32.mrf.mxu0
        %2215 = vmatprep.mubr.f32.mxu0 0.0
        %2216 = vmatmul.mubr.f32.gmra.mxu0 %v1163
        %v2217 = vpop.f32.mrf.mxu0
        %v2218 = vadd.f32 0.0, %v2217
        %v2219 = vpop.f32.mrf.mxu0
        %2220 = vmatprep.mubr.f32.mxu0 0.0
        %2221 = vmatmul.mubr.f32.gmra.mxu0 %v1166
        %v2222 = vpop.f32.mrf.mxu0
        %v2223 = vadd.f32 0.0, %v2222
        %v2224 = vpop.f32.mrf.mxu0
        %2225 = vmatprep.mubr.f32.mxu0 0.0
        %2226 = vmatmul.mubr.f32.gmra.mxu0 %v1168
        %v2227 = vpop.f32.mrf.mxu0
        %v2228 = vadd.f32 0.0, %v2227
        %v2229 = vpop.f32.mrf.mxu0
        %2230 = vmatprep.mubr.f32.mxu0 0.0
        %2231 = vmatmul.mubr.f32.gmra.mxu0 %v1171
        %v2232 = vpop.f32.mrf.mxu0
        %v2233 = vadd.f32 0.0, %v2232
        %v2234 = vpop.f32.mrf.mxu0
        %2235 = vmatprep.mubr.f32.mxu0 0.0
        %2236 = vmatmul.mubr.f32.gmra.mxu0 %v1173
        %v2237 = vpop.f32.mrf.mxu0
        %v2238 = vadd.f32 0.0, %v2237
        %v2239 = vpop.f32.mrf.mxu0
        %2240 = vmatprep.mubr.f32.mxu0 0.0
        %2241 = vmatmul.mubr.f32.gmra.mxu0 %v1176
        %v2242 = vpop.f32.mrf.mxu0
        %v2243 = vadd.f32 0.0, %v2242
        %v2244 = vpop.f32.mrf.mxu0
        %2245 = vmatprep.mubr.f32.mxu0 0.0
        %2246 = vmatmul.mubr.f32.gmra.mxu0 %v1178
        %v2247 = vpop.f32.mrf.mxu0
        %v2248 = vadd.f32 0.0, %v2247
        %v2249 = vpop.f32.mrf.mxu0
        %2250 = vmatprep.mubr.f32.mxu0 0.0
        %2251 = vmatmul.mubr.f32.gmra.mxu0 %v1181
        %v2252 = vpop.f32.mrf.mxu0
        %v2253 = vadd.f32 0.0, %v2252
        %v2254 = vpop.f32.mrf.mxu0
        %2255 = vmatprep.mubr.f32.mxu0 0.0
        %2256 = vmatmul.mubr.f32.gmra.mxu0 %v1183
        %v2257 = vpop.f32.mrf.mxu0
        %v2258 = vadd.f32 0.0, %v2257
        %v2259 = vpop.f32.mrf.mxu0
        %2260 = vmatprep.mubr.f32.mxu0 0.0
        %2261 = vmatmul.mubr.f32.gmra.mxu0 %v1186
        %v2262 = vpop.f32.mrf.mxu0
        %v2263 = vadd.f32 0.0, %v2262
        %v2264 = vpop.f32.mrf.mxu0
        %2265 = vmatprep.mubr.f32.mxu0 0.0
        %2266 = vmatmul.mubr.f32.gmra.mxu0 %v1188
        %v2267 = vpop.f32.mrf.mxu0
        %v2268 = vadd.f32 0.0, %v2267
        %v2269 = vpop.f32.mrf.mxu0
        %2270 = vmatprep.mubr.f32.mxu0 0.0
        %2271 = vmatmul.mubr.f32.gmra.mxu0 %v1191
        %v2272 = vpop.f32.mrf.mxu0
        %v2273 = vadd.f32 0.0, %v2272
        %v2274 = vpop.f32.mrf.mxu0
        %2275 = vmatprep.mubr.f32.mxu0 0.0
        %2276 = vmatmul.mubr.f32.gmra.mxu0 %v1193
        %v2277 = vpop.f32.mrf.mxu0
        %v2278 = vadd.f32 0.0, %v2277
        %v2279 = vpop.f32.mrf.mxu0
        %2280 = vmatprep.mubr.f32.mxu0 0.0
        %2281 = vmatmul.mubr.f32.gmra.mxu0 %v1196
        %v2282 = vpop.f32.mrf.mxu0
        %v2283 = vadd.f32 0.0, %v2282
        %v2284 = vpop.f32.mrf.mxu0
        %2285 = vmatprep.mubr.f32.mxu0 0.0
        %2286 = vmatmul.mubr.f32.gmra.mxu0 %v1198
        %v2287 = vpop.f32.mrf.mxu0
        %v2288 = vadd.f32 0.0, %v2287
        %v2289 = vpop.f32.mrf.mxu0
        %2290 = vmatprep.mubr.f32.mxu0 0.0
        %2291 = vmatmul.mubr.f32.gmra.mxu0 %v1201
        %v2292 = vpop.f32.mrf.mxu0
        %v2293 = vadd.f32 0.0, %v2292
        %v2294 = vpop.f32.mrf.mxu0
        %2295 = vmatprep.mubr.f32.mxu0 0.0
        %2296 = vmatmul.mubr.f32.gmra.mxu0 %v1203
        %v2297 = vpop.f32.mrf.mxu0
        %v2298 = vadd.f32 0.0, %v2297
        %v2299 = vpop.f32.mrf.mxu0
        %2300 = vmatprep.mubr.f32.mxu0 0.0
        %2301 = vmatmul.mubr.f32.gmra.mxu0 %v1206
        %v2302 = vpop.f32.mrf.mxu0
        %v2303 = vadd.f32 0.0, %v2302
        %v2304 = vpop.f32.mrf.mxu0
        %2305 = vmatprep.mubr.f32.mxu0 0.0
        %2306 = vmatmul.mubr.f32.gmra.mxu0 %v1208
        %v2307 = vpop.f32.mrf.mxu0
        %v2308 = vadd.f32 0.0, %v2307
        %v2309 = vpop.f32.mrf.mxu0
        %2310 = vmatprep.mubr.f32.mxu0 0.0
        %2311 = vmatmul.mubr.f32.gmra.mxu0 %v2074
        %v2312 = vpop.f32.mrf.mxu0
        %v2313 = vadd.f32 0.0, %v2312
        %v2314 = vpop.f32.mrf.mxu0
        %2315 = vmatprep.mubr.f32.mxu0 0.0
        %2316 = vmatmul.mubr.f32.gmra.mxu0 %v2076
        %v2317 = vpop.f32.mrf.mxu0
        %v2318 = vadd.f32 0.0, %v2317
        %v2319 = vpop.f32.mrf.mxu0
        %2320 = vdwg.mxu0
        %v2321 = vadd.f32 %v2040, %v2163
        %v2322 = vadd.f32 %v2041, %v2168
        %v2323 = vadd.f32 %v2042, %v2173
        %v2324 = vadd.f32 %v2043, %v2178
        %v2325 = vadd.f32 %v2044, %v2183
        %v2326 = vadd.f32 %v2045, %v2188
        %v2327 = vadd.f32 %v2046, %v2193
        %v2328 = vadd.f32 %v2047, %v2198
        %v2329 = vadd.f32 %v2048, %v2203
        %v2330 = vadd.f32 %v2049, %v2208
        %v2331 = vadd.f32 %v2050, %v2213
        %v2332 = vadd.f32 %v2051, %v2218
        %v2333 = vadd.f32 %v2052, %v2223
        %v2334 = vadd.f32 %v2053, %v2228
        %v2335 = vadd.f32 %v2054, %v2233
        %v2336 = vadd.f32 %v2055, %v2238
        %v2337 = vadd.f32 %v2056, %v2243
        %v2338 = vadd.f32 %v2057, %v2248
        %v2339 = vadd.f32 %v2058, %v2253
        %v2340 = vadd.f32 %v2059, %v2258
        %v2341 = vadd.f32 %v2060, %v2263
        %v2342 = vadd.f32 %v2061, %v2268
        %v2343 = vadd.f32 %v2062, %v2273
        %v2344 = vadd.f32 %v2063, %v2278
        %v2345 = vadd.f32 %v2064, %v2283
        %v2346 = vadd.f32 %v2065, %v2288
        %v2347 = vadd.f32 %v2066, %v2293
        %v2348 = vadd.f32 %v2067, %v2298
        %v2349 = vadd.f32 %v2068, %v2303
        %v2350 = vadd.f32 %v2069, %v2308
        %v2351 = vadd.f32 %v2070, %v2313
        %v2352 = vadd.f32 %v2071, %v2318
        %s2353 = scalar_lea.vmem [#allocation5], 768
        %v2354 = vld [vmem:[%s2353] sm:$0xff]
        %v2355 = vld [vmem:[%s2353 + $0x8] sm:$0xff]
        %v2356 = vld [vmem:[%s2353 + $0x10] sm:$0xff]
        %v2357 = vld [vmem:[%s2353 + $0x18] sm:$0xff]
        %v2358 = vld [vmem:[%s2353 + $0x20] sm:$0xff]
        %v2359 = vld [vmem:[%s2353 + $0x28] sm:$0xff]
        %v2360 = vld [vmem:[%s2353 + $0x30] sm:$0xff]
        %v2361 = vld [vmem:[%s2353 + $0x38] sm:$0xff]
        %v2362 = vld [vmem:[%s2353 + $0x40] sm:$0xff]
        %v2363 = vld [vmem:[%s2353 + $0x48] sm:$0xff]
        %v2364 = vld [vmem:[%s2353 + $0x50] sm:$0xff]
        %v2365 = vld [vmem:[%s2353 + $0x58] sm:$0xff]
        %v2366 = vld [vmem:[%s2353 + $0x60] sm:$0xff]
        %v2367 = vld [vmem:[%s2353 + $0x68] sm:$0xff]
        %v2368 = vld [vmem:[%s2353 + $0x70] sm:$0xff]
        %v2369 = vld [vmem:[%s2353 + $0x78] sm:$0xff]
        %2370 = vmatprep.subr.mxu0 0.0
        %2371 = vmatpush1.msra.mxu0 %v2369
        %2372 = vmatprep.subr.mxu0 0.0
        %2373 = vmatpush1.msra.mxu0 %v2368
        %2374 = vmatprep.subr.mxu0 0.0
        %2375 = vmatpush1.msra.mxu0 %v2367
        %2376 = vmatprep.subr.mxu0 0.0
        %2377 = vmatpush1.msra.mxu0 %v2366
        %2378 = vmatprep.subr.mxu0 0.0
        %2379 = vmatpush1.msra.mxu0 %v2365
        %2380 = vmatprep.subr.mxu0 0.0
        %2381 = vmatpush1.msra.mxu0 %v2364
        %2382 = vmatprep.subr.mxu0 0.0
        %2383 = vmatpush1.msra.mxu0 %v2363
        %2384 = vmatprep.subr.mxu0 0.0
        %2385 = vmatpush1.msra.mxu0 %v2362
        %2386 = vmatprep.subr.mxu0 0.0
        %2387 = vmatpush1.msra.mxu0 %v2361
        %2388 = vmatprep.subr.mxu0 0.0
        %2389 = vmatpush1.msra.mxu0 %v2360
        %2390 = vmatprep.subr.mxu0 0.0
        %2391 = vmatpush1.msra.mxu0 %v2359
        %2392 = vmatprep.subr.mxu0 0.0
        %2393 = vmatpush1.msra.mxu0 %v2358
        %2394 = vmatprep.subr.mxu0 0.0
        %2395 = vmatpush1.msra.mxu0 %v2357
        %2396 = vmatprep.subr.mxu0 0.0
        %2397 = vmatpush1.msra.mxu0 %v2356
        %2398 = vmatprep.subr.mxu0 0.0
        %2399 = vmatpush1.msra.mxu0 %v2355
        %2400 = vmatprep.subr.mxu0 0.0
        %2401 = vmatpush1.msra.mxu0 %v2354
        %2402 = vmatprep.subr.mxu0 0.0
        %2403 = vmatpush2.msra.mxu0 0.0
        %2404 = vmatprep.subr.mxu0 0.0
        %2405 = vmatpush2.msra.mxu0 0.0
        %2406 = vmatprep.subr.mxu0 0.0
        %2407 = vmatpush2.msra.mxu0 0.0
        %2408 = vmatprep.subr.mxu0 0.0
        %2409 = vmatpush2.msra.mxu0 0.0
        %2410 = vmatprep.subr.mxu0 0.0
        %2411 = vmatpush2.msra.mxu0 0.0
        %2412 = vmatprep.subr.mxu0 0.0
        %2413 = vmatpush2.msra.mxu0 0.0
        %2414 = vmatprep.subr.mxu0 0.0
        %2415 = vmatpush2.msra.mxu0 0.0
        %2416 = vmatprep.subr.mxu0 0.0
        %2417 = vmatpush2.msra.mxu0 0.0
        %2418 = vmatprep.subr.mxu0 0.0
        %2419 = vmatpush2.msra.mxu0 0.0
        %2420 = vmatprep.subr.mxu0 0.0
        %2421 = vmatpush2.msra.mxu0 0.0
        %2422 = vmatprep.subr.mxu0 0.0
        %2423 = vmatpush2.msra.mxu0 0.0
        %2424 = vmatprep.subr.mxu0 0.0
        %2425 = vmatpush2.msra.mxu0 0.0
        %2426 = vmatprep.subr.mxu0 0.0
        %2427 = vmatpush2.msra.mxu0 0.0
        %2428 = vmatprep.subr.mxu0 0.0
        %2429 = vmatpush2.msra.mxu0 0.0
        %2430 = vmatprep.subr.mxu0 0.0
        %2431 = vmatpush2.msra.mxu0 0.0
        %2432 = vmatprep.subr.mxu0 0.0
        %2433 = vmatpush2.msra.mxu0 0.0
        %2434 = vmatprep.mubr.f32.mxu0 0.0
        %2435 = vmatmul.mubr.f32.gmra.mxu0 %v468
        %v2436 = vpop.f32.mrf.mxu0
        %v2437 = vadd.f32 0.0, %v2436
        %v2438 = vpop.f32.mrf.mxu0
        %2439 = vmatprep.mubr.f32.mxu0 0.0
        %2440 = vmatmul.mubr.f32.gmra.mxu0 %v373
        %v2441 = vpop.f32.mrf.mxu0
        %v2442 = vadd.f32 0.0, %v2441
        %v2443 = vpop.f32.mrf.mxu0
        %2444 = vmatprep.mubr.f32.mxu0 0.0
        %2445 = vmatmul.mubr.f32.gmra.mxu0 %v469
        %v2446 = vpop.f32.mrf.mxu0
        %v2447 = vadd.f32 0.0, %v2446
        %v2448 = vpop.f32.mrf.mxu0
        %2449 = vmatprep.mubr.f32.mxu0 0.0
        %2450 = vmatmul.mubr.f32.gmra.mxu0 %v376
        %v2451 = vpop.f32.mrf.mxu0
        %v2452 = vadd.f32 0.0, %v2451
        %v2453 = vpop.f32.mrf.mxu0
        %2454 = vmatprep.mubr.f32.mxu0 0.0
        %2455 = vmatmul.mubr.f32.gmra.mxu0 %v470
        %v2456 = vpop.f32.mrf.mxu0
        %v2457 = vadd.f32 0.0, %v2456
        %v2458 = vpop.f32.mrf.mxu0
        %2459 = vmatprep.mubr.f32.mxu0 0.0
        %2460 = vmatmul.mubr.f32.gmra.mxu0 %v379
        %v2461 = vpop.f32.mrf.mxu0
        %v2462 = vadd.f32 0.0, %v2461
        %v2463 = vpop.f32.mrf.mxu0
        %2464 = vmatprep.mubr.f32.mxu0 0.0
        %2465 = vmatmul.mubr.f32.gmra.mxu0 %v471
        %v2466 = vpop.f32.mrf.mxu0
        %v2467 = vadd.f32 0.0, %v2466
        %v2468 = vpop.f32.mrf.mxu0
        %2469 = vmatprep.mubr.f32.mxu0 0.0
        %2470 = vmatmul.mubr.f32.gmra.mxu0 %v382
        %v2471 = vpop.f32.mrf.mxu0
        %v2472 = vadd.f32 0.0, %v2471
        %v2473 = vpop.f32.mrf.mxu0
        %2474 = vmatprep.mubr.f32.mxu0 0.0
        %2475 = vmatmul.mubr.f32.gmra.mxu0 %v472
        %v2476 = vpop.f32.mrf.mxu0
        %v2477 = vadd.f32 0.0, %v2476
        %v2478 = vpop.f32.mrf.mxu0
        %2479 = vmatprep.mubr.f32.mxu0 0.0
        %2480 = vmatmul.mubr.f32.gmra.mxu0 %v385
        %v2481 = vpop.f32.mrf.mxu0
        %v2482 = vadd.f32 0.0, %v2481
        %v2483 = vpop.f32.mrf.mxu0
        %2484 = vmatprep.mubr.f32.mxu0 0.0
        %2485 = vmatmul.mubr.f32.gmra.mxu0 %v473
        %v2486 = vpop.f32.mrf.mxu0
        %v2487 = vadd.f32 0.0, %v2486
        %v2488 = vpop.f32.mrf.mxu0
        %2489 = vmatprep.mubr.f32.mxu0 0.0
        %2490 = vmatmul.mubr.f32.gmra.mxu0 %v388
        %v2491 = vpop.f32.mrf.mxu0
        %v2492 = vadd.f32 0.0, %v2491
        %v2493 = vpop.f32.mrf.mxu0
        %2494 = vmatprep.mubr.f32.mxu0 0.0
        %2495 = vmatmul.mubr.f32.gmra.mxu0 %v474
        %v2496 = vpop.f32.mrf.mxu0
        %v2497 = vadd.f32 0.0, %v2496
        %v2498 = vpop.f32.mrf.mxu0
        %2499 = vmatprep.mubr.f32.mxu0 0.0
        %2500 = vmatmul.mubr.f32.gmra.mxu0 %v391
        %v2501 = vpop.f32.mrf.mxu0
        %v2502 = vadd.f32 0.0, %v2501
        %v2503 = vpop.f32.mrf.mxu0
        %2504 = vmatprep.mubr.f32.mxu0 0.0
        %2505 = vmatmul.mubr.f32.gmra.mxu0 %v475
        %v2506 = vpop.f32.mrf.mxu0
        %v2507 = vadd.f32 0.0, %v2506
        %v2508 = vpop.f32.mrf.mxu0
        %2509 = vmatprep.mubr.f32.mxu0 0.0
        %2510 = vmatmul.mubr.f32.gmra.mxu0 %v394
        %v2511 = vpop.f32.mrf.mxu0
        %v2512 = vadd.f32 0.0, %v2511
        %v2513 = vpop.f32.mrf.mxu0
        %2514 = vmatprep.mubr.f32.mxu0 0.0
        %2515 = vmatmul.mubr.f32.gmra.mxu0 %v476
        %v2516 = vpop.f32.mrf.mxu0
        %v2517 = vadd.f32 0.0, %v2516
        %v2518 = vpop.f32.mrf.mxu0
        %2519 = vmatprep.mubr.f32.mxu0 0.0
        %2520 = vmatmul.mubr.f32.gmra.mxu0 %v397
        %v2521 = vpop.f32.mrf.mxu0
        %v2522 = vadd.f32 0.0, %v2521
        %v2523 = vpop.f32.mrf.mxu0
        %2524 = vmatprep.mubr.f32.mxu0 0.0
        %2525 = vmatmul.mubr.f32.gmra.mxu0 %v477
        %v2526 = vpop.f32.mrf.mxu0
        %v2527 = vadd.f32 0.0, %v2526
        %v2528 = vpop.f32.mrf.mxu0
        %2529 = vmatprep.mubr.f32.mxu0 0.0
        %2530 = vmatmul.mubr.f32.gmra.mxu0 %v400
        %v2531 = vpop.f32.mrf.mxu0
        %v2532 = vadd.f32 0.0, %v2531
        %v2533 = vpop.f32.mrf.mxu0
        %2534 = vmatprep.mubr.f32.mxu0 0.0
        %2535 = vmatmul.mubr.f32.gmra.mxu0 %v478
        %v2536 = vpop.f32.mrf.mxu0
        %v2537 = vadd.f32 0.0, %v2536
        %v2538 = vpop.f32.mrf.mxu0
        %2539 = vmatprep.mubr.f32.mxu0 0.0
        %2540 = vmatmul.mubr.f32.gmra.mxu0 %v403
        %v2541 = vpop.f32.mrf.mxu0
        %v2542 = vadd.f32 0.0, %v2541
        %v2543 = vpop.f32.mrf.mxu0
        %2544 = vmatprep.mubr.f32.mxu0 0.0
        %2545 = vmatmul.mubr.f32.gmra.mxu0 %v479
        %v2546 = vpop.f32.mrf.mxu0
        %v2547 = vadd.f32 0.0, %v2546
        %v2548 = vpop.f32.mrf.mxu0
        %2549 = vmatprep.mubr.f32.mxu0 0.0
        %2550 = vmatmul.mubr.f32.gmra.mxu0 %v406
        %v2551 = vpop.f32.mrf.mxu0
        %v2552 = vadd.f32 0.0, %v2551
        %v2553 = vpop.f32.mrf.mxu0
        %2554 = vmatprep.mubr.f32.mxu0 0.0
        %2555 = vmatmul.mubr.f32.gmra.mxu0 %v480
        %v2556 = vpop.f32.mrf.mxu0
        %v2557 = vadd.f32 0.0, %v2556
        %v2558 = vpop.f32.mrf.mxu0
        %2559 = vmatprep.mubr.f32.mxu0 0.0
        %2560 = vmatmul.mubr.f32.gmra.mxu0 %v409
        %v2561 = vpop.f32.mrf.mxu0
        %v2562 = vadd.f32 0.0, %v2561
        %v2563 = vpop.f32.mrf.mxu0
        %2564 = vmatprep.mubr.f32.mxu0 0.0
        %2565 = vmatmul.mubr.f32.gmra.mxu0 %v481
        %v2566 = vpop.f32.mrf.mxu0
        %v2567 = vadd.f32 0.0, %v2566
        %v2568 = vpop.f32.mrf.mxu0
        %2569 = vmatprep.mubr.f32.mxu0 0.0
        %2570 = vmatmul.mubr.f32.gmra.mxu0 %v412
        %v2571 = vpop.f32.mrf.mxu0
        %v2572 = vadd.f32 0.0, %v2571
        %v2573 = vpop.f32.mrf.mxu0
        %2574 = vmatprep.mubr.f32.mxu0 0.0
        %2575 = vmatmul.mubr.f32.gmra.mxu0 %v482
        %v2576 = vpop.f32.mrf.mxu0
        %v2577 = vadd.f32 0.0, %v2576
        %v2578 = vpop.f32.mrf.mxu0
        %2579 = vmatprep.mubr.f32.mxu0 0.0
        %2580 = vmatmul.mubr.f32.gmra.mxu0 %v415
        %v2581 = vpop.f32.mrf.mxu0
        %v2582 = vadd.f32 0.0, %v2581
        %v2583 = vpop.f32.mrf.mxu0
        %2584 = vmatprep.mubr.f32.mxu0 0.0
        %2585 = vmatmul.mubr.f32.gmra.mxu0 %v466
        %v2586 = vpop.f32.mrf.mxu0
        %v2587 = vadd.f32 0.0, %v2586
        %v2588 = vpop.f32.mrf.mxu0
        %2589 = vmatprep.mubr.f32.mxu0 0.0
        %2590 = vmatmul.mubr.f32.gmra.mxu0 %v367
        %v2591 = vpop.f32.mrf.mxu0
        %v2592 = vadd.f32 0.0, %v2591
        %v2593 = vpop.f32.mrf.mxu0
        %2594 = vdwg.mxu0
        %v2595 = vadd.f32 %v2321, %v2437
        %v2596 = vadd.f32 %v2322, %v2442
        %v2597 = vadd.f32 %v2323, %v2447
        %v2598 = vadd.f32 %v2324, %v2452
        %v2599 = vadd.f32 %v2325, %v2457
        %v2600 = vadd.f32 %v2326, %v2462
        %v2601 = vadd.f32 %v2327, %v2467
        %v2602 = vadd.f32 %v2328, %v2472
        %v2603 = vadd.f32 %v2329, %v2477
        %v2604 = vadd.f32 %v2330, %v2482
        %v2605 = vadd.f32 %v2331, %v2487
        %v2606 = vadd.f32 %v2332, %v2492
        %v2607 = vadd.f32 %v2333, %v2497
        %v2608 = vadd.f32 %v2334, %v2502
        %v2609 = vadd.f32 %v2335, %v2507
        %v2610 = vadd.f32 %v2336, %v2512
        %v2611 = vadd.f32 %v2337, %v2517
        %v2612 = vadd.f32 %v2338, %v2522
        %v2613 = vadd.f32 %v2339, %v2527
        %v2614 = vadd.f32 %v2340, %v2532
        %v2615 = vadd.f32 %v2341, %v2537
        %v2616 = vadd.f32 %v2342, %v2542
        %v2617 = vadd.f32 %v2343, %v2547
        %v2618 = vadd.f32 %v2344, %v2552
        %v2619 = vadd.f32 %v2345, %v2557
        %v2620 = vadd.f32 %v2346, %v2562
        %v2621 = vadd.f32 %v2347, %v2567
        %v2622 = vadd.f32 %v2348, %v2572
        %v2623 = vadd.f32 %v2349, %v2577
        %v2624 = vadd.f32 %v2350, %v2582
        %v2625 = vadd.f32 %v2351, %v2587
        %v2626 = vadd.f32 %v2352, %v2592
        %s2627 = scalar_lea.vmem [#allocation5], 896
        %v2628 = vld [vmem:[%s2627] sm:$0xff]
        %v2629 = vld [vmem:[%s2627 + $0x8] sm:$0xff]
        %v2630 = vld [vmem:[%s2627 + $0x10] sm:$0xff]
        %v2631 = vld [vmem:[%s2627 + $0x18] sm:$0xff]
        %v2632 = vld [vmem:[%s2627 + $0x20] sm:$0xff]
        %v2633 = vld [vmem:[%s2627 + $0x28] sm:$0xff]
        %v2634 = vld [vmem:[%s2627 + $0x30] sm:$0xff]
        %v2635 = vld [vmem:[%s2627 + $0x38] sm:$0xff]
        %v2636 = vld [vmem:[%s2627 + $0x40] sm:$0xff]
        %v2637 = vld [vmem:[%s2627 + $0x48] sm:$0xff]
        %v2638 = vld [vmem:[%s2627 + $0x50] sm:$0xff]
        %v2639 = vld [vmem:[%s2627 + $0x58] sm:$0xff]
        %v2640 = vld [vmem:[%s2627 + $0x60] sm:$0xff]
        %v2641 = vld [vmem:[%s2627 + $0x68] sm:$0xff]
        %v2642 = vld [vmem:[%s2627 + $0x70] sm:$0xff]
        %v2643 = vld [vmem:[%s2627 + $0x78] sm:$0xff]
        %2644 = vmatprep.subr.mxu0 0.0
        %2645 = vmatpush1.msra.mxu0 %v2643
        %2646 = vmatprep.subr.mxu0 0.0
        %2647 = vmatpush1.msra.mxu0 %v2642
        %2648 = vmatprep.subr.mxu0 0.0
        %2649 = vmatpush1.msra.mxu0 %v2641
        %2650 = vmatprep.subr.mxu0 0.0
        %2651 = vmatpush1.msra.mxu0 %v2640
        %2652 = vmatprep.subr.mxu0 0.0
        %2653 = vmatpush1.msra.mxu0 %v2639
        %2654 = vmatprep.subr.mxu0 0.0
        %2655 = vmatpush1.msra.mxu0 %v2638
        %2656 = vmatprep.subr.mxu0 0.0
        %2657 = vmatpush1.msra.mxu0 %v2637
        %2658 = vmatprep.subr.mxu0 0.0
        %2659 = vmatpush1.msra.mxu0 %v2636
        %2660 = vmatprep.subr.mxu0 0.0
        %2661 = vmatpush1.msra.mxu0 %v2635
        %2662 = vmatprep.subr.mxu0 0.0
        %2663 = vmatpush1.msra.mxu0 %v2634
        %2664 = vmatprep.subr.mxu0 0.0
        %2665 = vmatpush1.msra.mxu0 %v2633
        %2666 = vmatprep.subr.mxu0 0.0
        %2667 = vmatpush1.msra.mxu0 %v2632
        %2668 = vmatprep.subr.mxu0 0.0
        %2669 = vmatpush1.msra.mxu0 %v2631
        %2670 = vmatprep.subr.mxu0 0.0
        %2671 = vmatpush1.msra.mxu0 %v2630
        %2672 = vmatprep.subr.mxu0 0.0
        %2673 = vmatpush1.msra.mxu0 %v2629
        %2674 = vmatprep.subr.mxu0 0.0
        %2675 = vmatpush1.msra.mxu0 %v2628
        %2676 = vmatprep.subr.mxu0 0.0
        %2677 = vmatpush2.msra.mxu0 0.0
        %2678 = vmatprep.subr.mxu0 0.0
        %2679 = vmatpush2.msra.mxu0 0.0
        %2680 = vmatprep.subr.mxu0 0.0
        %2681 = vmatpush2.msra.mxu0 0.0
        %2682 = vmatprep.subr.mxu0 0.0
        %2683 = vmatpush2.msra.mxu0 0.0
        %2684 = vmatprep.subr.mxu0 0.0
        %2685 = vmatpush2.msra.mxu0 0.0
        %2686 = vmatprep.subr.mxu0 0.0
        %2687 = vmatpush2.msra.mxu0 0.0
        %2688 = vmatprep.subr.mxu0 0.0
        %2689 = vmatpush2.msra.mxu0 0.0
        %2690 = vmatprep.subr.mxu0 0.0
        %2691 = vmatpush2.msra.mxu0 0.0
        %2692 = vmatprep.subr.mxu0 0.0
        %2693 = vmatpush2.msra.mxu0 0.0
        %2694 = vmatprep.subr.mxu0 0.0
        %2695 = vmatpush2.msra.mxu0 0.0
        %2696 = vmatprep.subr.mxu0 0.0
        %2697 = vmatpush2.msra.mxu0 0.0
        %2698 = vmatprep.subr.mxu0 0.0
        %2699 = vmatpush2.msra.mxu0 0.0
        %2700 = vmatprep.subr.mxu0 0.0
        %2701 = vmatpush2.msra.mxu0 0.0
        %2702 = vmatprep.subr.mxu0 0.0
        %2703 = vmatpush2.msra.mxu0 0.0
        %2704 = vmatprep.subr.mxu0 0.0
        %2705 = vmatpush2.msra.mxu0 0.0
        %2706 = vmatprep.subr.mxu0 0.0
        %2707 = vmatpush2.msra.mxu0 0.0
        %2708 = vmatprep.mubr.f32.mxu0 0.0
        %2709 = vmatmul.mubr.f32.gmra.mxu0 %v561
        %v2710 = vpop.f32.mrf.mxu0
        %v2711 = vadd.f32 0.0, %v2710
        %v2712 = vpop.f32.mrf.mxu0
        %2713 = vmatprep.mubr.f32.mxu0 0.0
        %2714 = vmatmul.mubr.f32.gmra.mxu0 %v563
        %v2715 = vpop.f32.mrf.mxu0
        %v2716 = vadd.f32 0.0, %v2715
        %v2717 = vpop.f32.mrf.mxu0
        %2718 = vmatprep.mubr.f32.mxu0 0.0
        %2719 = vmatmul.mubr.f32.gmra.mxu0 %v566
        %v2720 = vpop.f32.mrf.mxu0
        %v2721 = vadd.f32 0.0, %v2720
        %v2722 = vpop.f32.mrf.mxu0
        %2723 = vmatprep.mubr.f32.mxu0 0.0
        %2724 = vmatmul.mubr.f32.gmra.mxu0 %v568
        %v2725 = vpop.f32.mrf.mxu0
        %v2726 = vadd.f32 0.0, %v2725
        %v2727 = vpop.f32.mrf.mxu0
        %2728 = vmatprep.mubr.f32.mxu0 0.0
        %2729 = vmatmul.mubr.f32.gmra.mxu0 %v571
        %v2730 = vpop.f32.mrf.mxu0
        %v2731 = vadd.f32 0.0, %v2730
        %v2732 = vpop.f32.mrf.mxu0
        %2733 = vmatprep.mubr.f32.mxu0 0.0
        %2734 = vmatmul.mubr.f32.gmra.mxu0 %v573
        %v2735 = vpop.f32.mrf.mxu0
        %v2736 = vadd.f32 0.0, %v2735
        %v2737 = vpop.f32.mrf.mxu0
        %2738 = vmatprep.mubr.f32.mxu0 0.0
        %2739 = vmatmul.mubr.f32.gmra.mxu0 %v576
        %v2740 = vpop.f32.mrf.mxu0
        %v2741 = vadd.f32 0.0, %v2740
        %v2742 = vpop.f32.mrf.mxu0
        %2743 = vmatprep.mubr.f32.mxu0 0.0
        %2744 = vmatmul.mubr.f32.gmra.mxu0 %v578
        %v2745 = vpop.f32.mrf.mxu0
        %v2746 = vadd.f32 0.0, %v2745
        %v2747 = vpop.f32.mrf.mxu0
        %2748 = vmatprep.mubr.f32.mxu0 0.0
        %2749 = vmatmul.mubr.f32.gmra.mxu0 %v581
        %v2750 = vpop.f32.mrf.mxu0
        %v2751 = vadd.f32 0.0, %v2750
        %v2752 = vpop.f32.mrf.mxu0
        %2753 = vmatprep.mubr.f32.mxu0 0.0
        %2754 = vmatmul.mubr.f32.gmra.mxu0 %v583
        %v2755 = vpop.f32.mrf.mxu0
        %v2756 = vadd.f32 0.0, %v2755
        %v2757 = vpop.f32.mrf.mxu0
        %2758 = vmatprep.mubr.f32.mxu0 0.0
        %2759 = vmatmul.mubr.f32.gmra.mxu0 %v586
        %v2760 = vpop.f32.mrf.mxu0
        %v2761 = vadd.f32 0.0, %v2760
        %v2762 = vpop.f32.mrf.mxu0
        %2763 = vmatprep.mubr.f32.mxu0 0.0
        %2764 = vmatmul.mubr.f32.gmra.mxu0 %v588
        %v2765 = vpop.f32.mrf.mxu0
        %v2766 = vadd.f32 0.0, %v2765
        %v2767 = vpop.f32.mrf.mxu0
        %2768 = vmatprep.mubr.f32.mxu0 0.0
        %2769 = vmatmul.mubr.f32.gmra.mxu0 %v591
        %v2770 = vpop.f32.mrf.mxu0
        %v2771 = vadd.f32 0.0, %v2770
        %v2772 = vpop.f32.mrf.mxu0
        %2773 = vmatprep.mubr.f32.mxu0 0.0
        %2774 = vmatmul.mubr.f32.gmra.mxu0 %v593
        %v2775 = vpop.f32.mrf.mxu0
        %v2776 = vadd.f32 0.0, %v2775
        %v2777 = vpop.f32.mrf.mxu0
        %2778 = vmatprep.mubr.f32.mxu0 0.0
        %2779 = vmatmul.mubr.f32.gmra.mxu0 %v596
        %v2780 = vpop.f32.mrf.mxu0
        %v2781 = vadd.f32 0.0, %v2780
        %v2782 = vpop.f32.mrf.mxu0
        %2783 = vmatprep.mubr.f32.mxu0 0.0
        %2784 = vmatmul.mubr.f32.gmra.mxu0 %v598
        %v2785 = vpop.f32.mrf.mxu0
        %v2786 = vadd.f32 0.0, %v2785
        %v2787 = vpop.f32.mrf.mxu0
        %2788 = vmatprep.mubr.f32.mxu0 0.0
        %2789 = vmatmul.mubr.f32.gmra.mxu0 %v601
        %v2790 = vpop.f32.mrf.mxu0
        %v2791 = vadd.f32 0.0, %v2790
        %v2792 = vpop.f32.mrf.mxu0
        %2793 = vmatprep.mubr.f32.mxu0 0.0
        %2794 = vmatmul.mubr.f32.gmra.mxu0 %v603
        %v2795 = vpop.f32.mrf.mxu0
        %v2796 = vadd.f32 0.0, %v2795
        %v2797 = vpop.f32.mrf.mxu0
        %2798 = vmatprep.mubr.f32.mxu0 0.0
        %2799 = vmatmul.mubr.f32.gmra.mxu0 %v606
        %v2800 = vpop.f32.mrf.mxu0
        %v2801 = vadd.f32 0.0, %v2800
        %v2802 = vpop.f32.mrf.mxu0
        %2803 = vmatprep.mubr.f32.mxu0 0.0
        %2804 = vmatmul.mubr.f32.gmra.mxu0 %v608
        %v2805 = vpop.f32.mrf.mxu0
        %v2806 = vadd.f32 0.0, %v2805
        %v2807 = vpop.f32.mrf.mxu0
        %2808 = vmatprep.mubr.f32.mxu0 0.0
        %2809 = vmatmul.mubr.f32.gmra.mxu0 %v611
        %v2810 = vpop.f32.mrf.mxu0
        %v2811 = vadd.f32 0.0, %v2810
        %v2812 = vpop.f32.mrf.mxu0
        %2813 = vmatprep.mubr.f32.mxu0 0.0
        %2814 = vmatmul.mubr.f32.gmra.mxu0 %v613
        %v2815 = vpop.f32.mrf.mxu0
        %v2816 = vadd.f32 0.0, %v2815
        %v2817 = vpop.f32.mrf.mxu0
        %2818 = vmatprep.mubr.f32.mxu0 0.0
        %2819 = vmatmul.mubr.f32.gmra.mxu0 %v616
        %v2820 = vpop.f32.mrf.mxu0
        %v2821 = vadd.f32 0.0, %v2820
        %v2822 = vpop.f32.mrf.mxu0
        %2823 = vmatprep.mubr.f32.mxu0 0.0
        %2824 = vmatmul.mubr.f32.gmra.mxu0 %v618
        %v2825 = vpop.f32.mrf.mxu0
        %v2826 = vadd.f32 0.0, %v2825
        %v2827 = vpop.f32.mrf.mxu0
        %2828 = vmatprep.mubr.f32.mxu0 0.0
        %2829 = vmatmul.mubr.f32.gmra.mxu0 %v621
        %v2830 = vpop.f32.mrf.mxu0
        %v2831 = vadd.f32 0.0, %v2830
        %v2832 = vpop.f32.mrf.mxu0
        %2833 = vmatprep.mubr.f32.mxu0 0.0
        %2834 = vmatmul.mubr.f32.gmra.mxu0 %v623
        %v2835 = vpop.f32.mrf.mxu0
        %v2836 = vadd.f32 0.0, %v2835
        %v2837 = vpop.f32.mrf.mxu0
        %2838 = vmatprep.mubr.f32.mxu0 0.0
        %2839 = vmatmul.mubr.f32.gmra.mxu0 %v626
        %v2840 = vpop.f32.mrf.mxu0
        %v2841 = vadd.f32 0.0, %v2840
        %v2842 = vpop.f32.mrf.mxu0
        %2843 = vmatprep.mubr.f32.mxu0 0.0
        %2844 = vmatmul.mubr.f32.gmra.mxu0 %v628
        %v2845 = vpop.f32.mrf.mxu0
        %v2846 = vadd.f32 0.0, %v2845
        %v2847 = vpop.f32.mrf.mxu0
        %2848 = vmatprep.mubr.f32.mxu0 0.0
        %2849 = vmatmul.mubr.f32.gmra.mxu0 %v1793
        %v2850 = vpop.f32.mrf.mxu0
        %v2851 = vadd.f32 0.0, %v2850
        %v2852 = vpop.f32.mrf.mxu0
        %2853 = vmatprep.mubr.f32.mxu0 0.0
        %2854 = vmatmul.mubr.f32.gmra.mxu0 %v1795
        %v2855 = vpop.f32.mrf.mxu0
        %v2856 = vadd.f32 0.0, %v2855
        %v2857 = vpop.f32.mrf.mxu0
        %2858 = vmatprep.mubr.f32.mxu0 0.0
        %2859 = vmatmul.mubr.f32.gmra.mxu0 %v551
        %v2860 = vpop.f32.mrf.mxu0
        %v2861 = vadd.f32 0.0, %v2860
        %v2862 = vpop.f32.mrf.mxu0
        %2863 = vmatprep.mubr.f32.mxu0 0.0
        %2864 = vmatmul.mubr.f32.gmra.mxu0 %v553
        %v2865 = vpop.f32.mrf.mxu0
        %v2866 = vadd.f32 0.0, %v2865
        %v2867 = vpop.f32.mrf.mxu0
        %2868 = vdwg.mxu0
        %v2869 = vadd.f32 %v2595, %v2711
        %v2870 = vadd.f32 %v2596, %v2716
        %v2871 = vadd.f32 %v2597, %v2721
        %v2872 = vadd.f32 %v2598, %v2726
        %v2873 = vadd.f32 %v2599, %v2731
        %v2874 = vadd.f32 %v2600, %v2736
        %v2875 = vadd.f32 %v2601, %v2741
        %v2876 = vadd.f32 %v2602, %v2746
        %v2877 = vadd.f32 %v2603, %v2751
        %v2878 = vadd.f32 %v2604, %v2756
        %v2879 = vadd.f32 %v2605, %v2761
        %v2880 = vadd.f32 %v2606, %v2766
        %v2881 = vadd.f32 %v2607, %v2771
        %v2882 = vadd.f32 %v2608, %v2776
        %v2883 = vadd.f32 %v2609, %v2781
        %v2884 = vadd.f32 %v2610, %v2786
        %v2885 = vadd.f32 %v2611, %v2791
        %v2886 = vadd.f32 %v2612, %v2796
        %v2887 = vadd.f32 %v2613, %v2801
        %v2888 = vadd.f32 %v2614, %v2806
        %v2889 = vadd.f32 %v2615, %v2811
        %v2890 = vadd.f32 %v2616, %v2816
        %v2891 = vadd.f32 %v2617, %v2821
        %v2892 = vadd.f32 %v2618, %v2826
        %v2893 = vadd.f32 %v2619, %v2831
        %v2894 = vadd.f32 %v2620, %v2836
        %v2895 = vadd.f32 %v2621, %v2841
        %v2896 = vadd.f32 %v2622, %v2846
        %v2897 = vadd.f32 %v2623, %v2851
        %v2898 = vadd.f32 %v2624, %v2856
        %v2899 = vadd.f32 %v2625, %v2861
        %v2900 = vadd.f32 %v2626, %v2866
        %s2901 = scalar_lea.vmem [#allocation5], 1024
        %v2902 = vld [vmem:[%s2901] sm:$0xff]
        %v2903 = vld [vmem:[%s2901 + $0x8] sm:$0xff]
        %v2904 = vld [vmem:[%s2901 + $0x10] sm:$0xff]
        %v2905 = vld [vmem:[%s2901 + $0x18] sm:$0xff]
        %v2906 = vld [vmem:[%s2901 + $0x20] sm:$0xff]
        %v2907 = vld [vmem:[%s2901 + $0x28] sm:$0xff]
        %v2908 = vld [vmem:[%s2901 + $0x30] sm:$0xff]
        %v2909 = vld [vmem:[%s2901 + $0x38] sm:$0xff]
        %v2910 = vld [vmem:[%s2901 + $0x40] sm:$0xff]
        %v2911 = vld [vmem:[%s2901 + $0x48] sm:$0xff]
        %v2912 = vld [vmem:[%s2901 + $0x50] sm:$0xff]
        %v2913 = vld [vmem:[%s2901 + $0x58] sm:$0xff]
        %v2914 = vld [vmem:[%s2901 + $0x60] sm:$0xff]
        %v2915 = vld [vmem:[%s2901 + $0x68] sm:$0xff]
        %v2916 = vld [vmem:[%s2901 + $0x70] sm:$0xff]
        %v2917 = vld [vmem:[%s2901 + $0x78] sm:$0xff]
        %2918 = vmatprep.subr.mxu0 0.0
        %2919 = vmatpush1.msra.mxu0 %v2917
        %2920 = vmatprep.subr.mxu0 0.0
        %2921 = vmatpush1.msra.mxu0 %v2916
        %2922 = vmatprep.subr.mxu0 0.0
        %2923 = vmatpush1.msra.mxu0 %v2915
        %2924 = vmatprep.subr.mxu0 0.0
        %2925 = vmatpush1.msra.mxu0 %v2914
        %2926 = vmatprep.subr.mxu0 0.0
        %2927 = vmatpush1.msra.mxu0 %v2913
        %2928 = vmatprep.subr.mxu0 0.0
        %2929 = vmatpush1.msra.mxu0 %v2912
        %2930 = vmatprep.subr.mxu0 0.0
        %2931 = vmatpush1.msra.mxu0 %v2911
        %2932 = vmatprep.subr.mxu0 0.0
        %2933 = vmatpush1.msra.mxu0 %v2910
        %2934 = vmatprep.subr.mxu0 0.0
        %2935 = vmatpush1.msra.mxu0 %v2909
        %2936 = vmatprep.subr.mxu0 0.0
        %2937 = vmatpush1.msra.mxu0 %v2908
        %2938 = vmatprep.subr.mxu0 0.0
        %2939 = vmatpush1.msra.mxu0 %v2907
        %2940 = vmatprep.subr.mxu0 0.0
        %2941 = vmatpush1.msra.mxu0 %v2906
        %2942 = vmatprep.subr.mxu0 0.0
        %2943 = vmatpush1.msra.mxu0 %v2905
        %2944 = vmatprep.subr.mxu0 0.0
        %2945 = vmatpush1.msra.mxu0 %v2904
        %2946 = vmatprep.subr.mxu0 0.0
        %2947 = vmatpush1.msra.mxu0 %v2903
        %2948 = vmatprep.subr.mxu0 0.0
        %2949 = vmatpush1.msra.mxu0 %v2902
        %2950 = vmatprep.subr.mxu0 0.0
        %2951 = vmatpush2.msra.mxu0 0.0
        %2952 = vmatprep.subr.mxu0 0.0
        %2953 = vmatpush2.msra.mxu0 0.0
        %2954 = vmatprep.subr.mxu0 0.0
        %2955 = vmatpush2.msra.mxu0 0.0
        %2956 = vmatprep.subr.mxu0 0.0
        %2957 = vmatpush2.msra.mxu0 0.0
        %2958 = vmatprep.subr.mxu0 0.0
        %2959 = vmatpush2.msra.mxu0 0.0
        %2960 = vmatprep.subr.mxu0 0.0
        %2961 = vmatpush2.msra.mxu0 0.0
        %2962 = vmatprep.subr.mxu0 0.0
        %2963 = vmatpush2.msra.mxu0 0.0
        %2964 = vmatprep.subr.mxu0 0.0
        %2965 = vmatpush2.msra.mxu0 0.0
        %2966 = vmatprep.subr.mxu0 0.0
        %2967 = vmatpush2.msra.mxu0 0.0
        %2968 = vmatprep.subr.mxu0 0.0
        %2969 = vmatpush2.msra.mxu0 0.0
        %2970 = vmatprep.subr.mxu0 0.0
        %2971 = vmatpush2.msra.mxu0 0.0
        %2972 = vmatprep.subr.mxu0 0.0
        %2973 = vmatpush2.msra.mxu0 0.0
        %2974 = vmatprep.subr.mxu0 0.0
        %2975 = vmatpush2.msra.mxu0 0.0
        %2976 = vmatprep.subr.mxu0 0.0
        %2977 = vmatpush2.msra.mxu0 0.0
        %2978 = vmatprep.subr.mxu0 0.0
        %2979 = vmatpush2.msra.mxu0 0.0
        %2980 = vmatprep.subr.mxu0 0.0
        %2981 = vmatpush2.msra.mxu0 0.0
        %2982 = vmatprep.mubr.f32.mxu0 0.0
        %2983 = vmatmul.mubr.f32.gmra.mxu0 %v1141
        %v2984 = vpop.f32.mrf.mxu0
        %v2985 = vadd.f32 0.0, %v2984
        %v2986 = vpop.f32.mrf.mxu0
        %2987 = vmatprep.mubr.f32.mxu0 0.0
        %2988 = vmatmul.mubr.f32.gmra.mxu0 %v1143
        %v2989 = vpop.f32.mrf.mxu0
        %v2990 = vadd.f32 0.0, %v2989
        %v2991 = vpop.f32.mrf.mxu0
        %2992 = vmatprep.mubr.f32.mxu0 0.0
        %2993 = vmatmul.mubr.f32.gmra.mxu0 %v1146
        %v2994 = vpop.f32.mrf.mxu0
        %v2995 = vadd.f32 0.0, %v2994
        %v2996 = vpop.f32.mrf.mxu0
        %2997 = vmatprep.mubr.f32.mxu0 0.0
        %2998 = vmatmul.mubr.f32.gmra.mxu0 %v1148
        %v2999 = vpop.f32.mrf.mxu0
        %v3000 = vadd.f32 0.0, %v2999
        %v3001 = vpop.f32.mrf.mxu0
        %3002 = vmatprep.mubr.f32.mxu0 0.0
        %3003 = vmatmul.mubr.f32.gmra.mxu0 %v1151
        %v3004 = vpop.f32.mrf.mxu0
        %v3005 = vadd.f32 0.0, %v3004
        %v3006 = vpop.f32.mrf.mxu0
        %3007 = vmatprep.mubr.f32.mxu0 0.0
        %3008 = vmatmul.mubr.f32.gmra.mxu0 %v1153
        %v3009 = vpop.f32.mrf.mxu0
        %v3010 = vadd.f32 0.0, %v3009
        %v3011 = vpop.f32.mrf.mxu0
        %3012 = vmatprep.mubr.f32.mxu0 0.0
        %3013 = vmatmul.mubr.f32.gmra.mxu0 %v1156
        %v3014 = vpop.f32.mrf.mxu0
        %v3015 = vadd.f32 0.0, %v3014
        %v3016 = vpop.f32.mrf.mxu0
        %3017 = vmatprep.mubr.f32.mxu0 0.0
        %3018 = vmatmul.mubr.f32.gmra.mxu0 %v1158
        %v3019 = vpop.f32.mrf.mxu0
        %v3020 = vadd.f32 0.0, %v3019
        %v3021 = vpop.f32.mrf.mxu0
        %3022 = vmatprep.mubr.f32.mxu0 0.0
        %3023 = vmatmul.mubr.f32.gmra.mxu0 %v1161
        %v3024 = vpop.f32.mrf.mxu0
        %v3025 = vadd.f32 0.0, %v3024
        %v3026 = vpop.f32.mrf.mxu0
        %3027 = vmatprep.mubr.f32.mxu0 0.0
        %3028 = vmatmul.mubr.f32.gmra.mxu0 %v1163
        %v3029 = vpop.f32.mrf.mxu0
        %v3030 = vadd.f32 0.0, %v3029
        %v3031 = vpop.f32.mrf.mxu0
        %3032 = vmatprep.mubr.f32.mxu0 0.0
        %3033 = vmatmul.mubr.f32.gmra.mxu0 %v1166
        %v3034 = vpop.f32.mrf.mxu0
        %v3035 = vadd.f32 0.0, %v3034
        %v3036 = vpop.f32.mrf.mxu0
        %3037 = vmatprep.mubr.f32.mxu0 0.0
        %3038 = vmatmul.mubr.f32.gmra.mxu0 %v1168
        %v3039 = vpop.f32.mrf.mxu0
        %v3040 = vadd.f32 0.0, %v3039
        %v3041 = vpop.f32.mrf.mxu0
        %3042 = vmatprep.mubr.f32.mxu0 0.0
        %3043 = vmatmul.mubr.f32.gmra.mxu0 %v1171
        %v3044 = vpop.f32.mrf.mxu0
        %v3045 = vadd.f32 0.0, %v3044
        %v3046 = vpop.f32.mrf.mxu0
        %3047 = vmatprep.mubr.f32.mxu0 0.0
        %3048 = vmatmul.mubr.f32.gmra.mxu0 %v1173
        %v3049 = vpop.f32.mrf.mxu0
        %v3050 = vadd.f32 0.0, %v3049
        %v3051 = vpop.f32.mrf.mxu0
        %3052 = vmatprep.mubr.f32.mxu0 0.0
        %3053 = vmatmul.mubr.f32.gmra.mxu0 %v1176
        %v3054 = vpop.f32.mrf.mxu0
        %v3055 = vadd.f32 0.0, %v3054
        %v3056 = vpop.f32.mrf.mxu0
        %3057 = vmatprep.mubr.f32.mxu0 0.0
        %3058 = vmatmul.mubr.f32.gmra.mxu0 %v1178
        %v3059 = vpop.f32.mrf.mxu0
        %v3060 = vadd.f32 0.0, %v3059
        %v3061 = vpop.f32.mrf.mxu0
        %3062 = vmatprep.mubr.f32.mxu0 0.0
        %3063 = vmatmul.mubr.f32.gmra.mxu0 %v1181
        %v3064 = vpop.f32.mrf.mxu0
        %v3065 = vadd.f32 0.0, %v3064
        %v3066 = vpop.f32.mrf.mxu0
        %3067 = vmatprep.mubr.f32.mxu0 0.0
        %3068 = vmatmul.mubr.f32.gmra.mxu0 %v1183
        %v3069 = vpop.f32.mrf.mxu0
        %v3070 = vadd.f32 0.0, %v3069
        %v3071 = vpop.f32.mrf.mxu0
        %3072 = vmatprep.mubr.f32.mxu0 0.0
        %3073 = vmatmul.mubr.f32.gmra.mxu0 %v1186
        %v3074 = vpop.f32.mrf.mxu0
        %v3075 = vadd.f32 0.0, %v3074
        %v3076 = vpop.f32.mrf.mxu0
        %3077 = vmatprep.mubr.f32.mxu0 0.0
        %3078 = vmatmul.mubr.f32.gmra.mxu0 %v1188
        %v3079 = vpop.f32.mrf.mxu0
        %v3080 = vadd.f32 0.0, %v3079
        %v3081 = vpop.f32.mrf.mxu0
        %3082 = vmatprep.mubr.f32.mxu0 0.0
        %3083 = vmatmul.mubr.f32.gmra.mxu0 %v1191
        %v3084 = vpop.f32.mrf.mxu0
        %v3085 = vadd.f32 0.0, %v3084
        %v3086 = vpop.f32.mrf.mxu0
        %3087 = vmatprep.mubr.f32.mxu0 0.0
        %3088 = vmatmul.mubr.f32.gmra.mxu0 %v1193
        %v3089 = vpop.f32.mrf.mxu0
        %v3090 = vadd.f32 0.0, %v3089
        %v3091 = vpop.f32.mrf.mxu0
        %3092 = vmatprep.mubr.f32.mxu0 0.0
        %3093 = vmatmul.mubr.f32.gmra.mxu0 %v1196
        %v3094 = vpop.f32.mrf.mxu0
        %v3095 = vadd.f32 0.0, %v3094
        %v3096 = vpop.f32.mrf.mxu0
        %3097 = vmatprep.mubr.f32.mxu0 0.0
        %3098 = vmatmul.mubr.f32.gmra.mxu0 %v1198
        %v3099 = vpop.f32.mrf.mxu0
        %v3100 = vadd.f32 0.0, %v3099
        %v3101 = vpop.f32.mrf.mxu0
        %3102 = vmatprep.mubr.f32.mxu0 0.0
        %3103 = vmatmul.mubr.f32.gmra.mxu0 %v1201
        %v3104 = vpop.f32.mrf.mxu0
        %v3105 = vadd.f32 0.0, %v3104
        %v3106 = vpop.f32.mrf.mxu0
        %3107 = vmatprep.mubr.f32.mxu0 0.0
        %3108 = vmatmul.mubr.f32.gmra.mxu0 %v1203
        %v3109 = vpop.f32.mrf.mxu0
        %v3110 = vadd.f32 0.0, %v3109
        %v3111 = vpop.f32.mrf.mxu0
        %3112 = vmatprep.mubr.f32.mxu0 0.0
        %3113 = vmatmul.mubr.f32.gmra.mxu0 %v1206
        %v3114 = vpop.f32.mrf.mxu0
        %v3115 = vadd.f32 0.0, %v3114
        %v3116 = vpop.f32.mrf.mxu0
        %3117 = vmatprep.mubr.f32.mxu0 0.0
        %3118 = vmatmul.mubr.f32.gmra.mxu0 %v1208
        %v3119 = vpop.f32.mrf.mxu0
        %v3120 = vadd.f32 0.0, %v3119
        %v3121 = vpop.f32.mrf.mxu0
        %3122 = vmatprep.mubr.f32.mxu0 0.0
        %3123 = vmatmul.mubr.f32.gmra.mxu0 %v2074
        %v3124 = vpop.f32.mrf.mxu0
        %v3125 = vadd.f32 0.0, %v3124
        %v3126 = vpop.f32.mrf.mxu0
        %3127 = vmatprep.mubr.f32.mxu0 0.0
        %3128 = vmatmul.mubr.f32.gmra.mxu0 %v2076
        %v3129 = vpop.f32.mrf.mxu0
        %v3130 = vadd.f32 0.0, %v3129
        %v3131 = vpop.f32.mrf.mxu0
        %3132 = vmatprep.mubr.f32.mxu0 0.0
        %3133 = vmatmul.mubr.f32.gmra.mxu0 %v1131
        %v3134 = vpop.f32.mrf.mxu0
        %v3135 = vadd.f32 0.0, %v3134
        %v3136 = vpop.f32.mrf.mxu0
        %3137 = vmatprep.mubr.f32.mxu0 0.0
        %3138 = vmatmul.mubr.f32.gmra.mxu0 %v1133
        %v3139 = vpop.f32.mrf.mxu0
        %v3140 = vadd.f32 0.0, %v3139
        %v3141 = vpop.f32.mrf.mxu0
        %3142 = vdwg.mxu0
        %v3143 = vadd.f32 %v2869, %v2985
        %v3144 = vadd.f32 %v2870, %v2990
        %v3145 = vadd.f32 %v2871, %v2995
        %v3146 = vadd.f32 %v2872, %v3000
        %v3147 = vadd.f32 %v2873, %v3005
        %v3148 = vadd.f32 %v2874, %v3010
        %v3149 = vadd.f32 %v2875, %v3015
        %v3150 = vadd.f32 %v2876, %v3020
        %v3151 = vadd.f32 %v2877, %v3025
        %v3152 = vadd.f32 %v2878, %v3030
        %v3153 = vadd.f32 %v2879, %v3035
        %v3154 = vadd.f32 %v2880, %v3040
        %v3155 = vadd.f32 %v2881, %v3045
        %v3156 = vadd.f32 %v2882, %v3050
        %v3157 = vadd.f32 %v2883, %v3055
        %v3158 = vadd.f32 %v2884, %v3060
        %v3159 = vadd.f32 %v2885, %v3065
        %v3160 = vadd.f32 %v2886, %v3070
        %v3161 = vadd.f32 %v2887, %v3075
        %v3162 = vadd.f32 %v2888, %v3080
        %v3163 = vadd.f32 %v2889, %v3085
        %v3164 = vadd.f32 %v2890, %v3090
        %v3165 = vadd.f32 %v2891, %v3095
        %v3166 = vadd.f32 %v2892, %v3100
        %v3167 = vadd.f32 %v2893, %v3105
        %v3168 = vadd.f32 %v2894, %v3110
        %v3169 = vadd.f32 %v2895, %v3115
        %v3170 = vadd.f32 %v2896, %v3120
        %v3171 = vadd.f32 %v2897, %v3125
        %v3172 = vadd.f32 %v2898, %v3130
        %v3173 = vadd.f32 %v2899, %v3135
        %v3174 = vadd.f32 %v2900, %v3140
        %v3175 = vlaneseq
        %v3176 = vshrl.u32 %v3175, 7
        %v3177 = vsub.s32 0, %v3176
        %v3178 = vrot.slane %v331, %v3177
        %v3179 = vmul.f32 %v3143, %v3178
        %v3180 = vmul.f32 %v3144, %v3178
        %v3181 = vmul.f32 %v3145, %v3178
        %v3182 = vmul.f32 %v3146, %v3178
        %v3183 = vmul.f32 %v3147, %v3178
        %v3184 = vmul.f32 %v3148, %v3178
        %v3185 = vmul.f32 %v3149, %v3178
        %v3186 = vmul.f32 %v3150, %v3178
        %v3187 = vmul.f32 %v3151, %v3178
        %v3188 = vmul.f32 %v3152, %v3178
        %v3189 = vmul.f32 %v3153, %v3178
        %v3190 = vmul.f32 %v3154, %v3178
        %v3191 = vmul.f32 %v3155, %v3178
        %v3192 = vmul.f32 %v3156, %v3178
        %v3193 = vmul.f32 %v3157, %v3178
        %v3194 = vmul.f32 %v3158, %v3178
        %v3195 = vmul.f32 %v3159, %v3178
        %v3196 = vmul.f32 %v3160, %v3178
        %v3197 = vmul.f32 %v3161, %v3178
        %v3198 = vmul.f32 %v3162, %v3178
        %v3199 = vmul.f32 %v3163, %v3178
        %v3200 = vmul.f32 %v3164, %v3178
        %v3201 = vmul.f32 %v3165, %v3178
        %v3202 = vmul.f32 %v3166, %v3178
        %v3203 = vmul.f32 %v3167, %v3178
        %v3204 = vmul.f32 %v3168, %v3178
        %v3205 = vmul.f32 %v3169, %v3178
        %v3206 = vmul.f32 %v3170, %v3178
        %v3207 = vmul.f32 %v3171, %v3178
        %v3208 = vmul.f32 %v3172, %v3178
        %v3209 = vmul.f32 %v3173, %v3178
        %v3210 = vmul.f32 %v3174, %v3178
        %v3211 = vlaneseq
        %v3212 = vshrl.u32 %v3211, 7
        %v3213 = vsub.s32 1, %v3212
        %v3214 = vrot.slane %v331, %v3213
        %v3215 = vadd.f32 %v3179, %v3214
        %v3216 = vadd.f32 %v3180, %v3214
        %v3217 = vadd.f32 %v3181, %v3214
        %v3218 = vadd.f32 %v3182, %v3214
        %v3219 = vadd.f32 %v3183, %v3214
        %v3220 = vadd.f32 %v3184, %v3214
        %v3221 = vadd.f32 %v3185, %v3214
        %v3222 = vadd.f32 %v3186, %v3214
        %v3223 = vadd.f32 %v3187, %v3214
        %v3224 = vadd.f32 %v3188, %v3214
        %v3225 = vadd.f32 %v3189, %v3214
        %v3226 = vadd.f32 %v3190, %v3214
        %v3227 = vadd.f32 %v3191, %v3214
        %v3228 = vadd.f32 %v3192, %v3214
        %v3229 = vadd.f32 %v3193, %v3214
        %v3230 = vadd.f32 %v3194, %v3214
        %v3231 = vadd.f32 %v3195, %v3214
        %v3232 = vadd.f32 %v3196, %v3214
        %v3233 = vadd.f32 %v3197, %v3214
        %v3234 = vadd.f32 %v3198, %v3214
        %v3235 = vadd.f32 %v3199, %v3214
        %v3236 = vadd.f32 %v3200, %v3214
        %v3237 = vadd.f32 %v3201, %v3214
        %v3238 = vadd.f32 %v3202, %v3214
        %v3239 = vadd.f32 %v3203, %v3214
        %v3240 = vadd.f32 %v3204, %v3214
        %v3241 = vadd.f32 %v3205, %v3214
        %v3242 = vadd.f32 %v3206, %v3214
        %v3243 = vadd.f32 %v3207, %v3214
        %v3244 = vadd.f32 %v3208, %v3214
        %v3245 = vadd.f32 %v3209, %v3214
        %v3246 = vadd.f32 %v3210, %v3214
        %v3247 = vmax.f32 %v3215, 0.0
        %v3248 = vmax.f32 %v3216, 0.0
        %v3249 = vmax.f32 %v3217, 0.0
        %v3250 = vmax.f32 %v3218, 0.0
        %v3251 = vmax.f32 %v3219, 0.0
        %v3252 = vmax.f32 %v3220, 0.0
        %v3253 = vmax.f32 %v3221, 0.0
        %v3254 = vmax.f32 %v3222, 0.0
        %v3255 = vmax.f32 %v3223, 0.0
        %v3256 = vmax.f32 %v3224, 0.0
        %v3257 = vmax.f32 %v3225, 0.0
        %v3258 = vmax.f32 %v3226, 0.0
        %v3259 = vmax.f32 %v3227, 0.0
        %v3260 = vmax.f32 %v3228, 0.0
        %v3261 = vmax.f32 %v3229, 0.0
        %v3262 = vmax.f32 %v3230, 0.0
        %v3263 = vmax.f32 %v3231, 0.0
        %v3264 = vmax.f32 %v3232, 0.0
        %v3265 = vmax.f32 %v3233, 0.0
        %v3266 = vmax.f32 %v3234, 0.0
        %v3267 = vmax.f32 %v3235, 0.0
        %v3268 = vmax.f32 %v3236, 0.0
        %v3269 = vmax.f32 %v3237, 0.0
        %v3270 = vmax.f32 %v3238, 0.0
        %v3271 = vmax.f32 %v3239, 0.0
        %v3272 = vmax.f32 %v3240, 0.0
        %v3273 = vmax.f32 %v3241, 0.0
        %v3274 = vmax.f32 %v3242, 0.0
        %v3275 = vmax.f32 %v3243, 0.0
        %v3276 = vmax.f32 %v3244, 0.0
        %v3277 = vmax.f32 %v3245, 0.0
        %v3278 = vmax.f32 %v3246, 0.0
        %v3311 = vrot.slane %v3247, 7
        %v3312 = vrot.slane %v3248, 7
        %v3313 = vsel %vm365, %v3311, %v3312
        %v3314 = vrot.slane %v3249, 7
        %v3315 = vrot.slane %v3250, 7
        %v3316 = vsel %vm365, %v3314, %v3315
        %v3317 = vrot.slane %v3251, 7
        %v3318 = vrot.slane %v3252, 7
        %v3319 = vsel %vm365, %v3317, %v3318
        %v3320 = vrot.slane %v3253, 7
        %v3321 = vrot.slane %v3254, 7
        %v3322 = vsel %vm365, %v3320, %v3321
        %v3323 = vrot.slane %v3255, 7
        %v3324 = vrot.slane %v3256, 7
        %v3325 = vsel %vm365, %v3323, %v3324
        %v3326 = vrot.slane %v3257, 7
        %v3327 = vrot.slane %v3258, 7
        %v3328 = vsel %vm365, %v3326, %v3327
        %v3329 = vrot.slane %v3259, 7
        %v3330 = vrot.slane %v3260, 7
        %v3331 = vsel %vm365, %v3329, %v3330
        %v3332 = vrot.slane %v3261, 7
        %v3333 = vrot.slane %v3262, 7
        %v3334 = vsel %vm365, %v3332, %v3333
        %v3335 = vrot.slane %v3263, 7
        %v3336 = vrot.slane %v3264, 7
        %v3337 = vsel %vm365, %v3335, %v3336
        %v3338 = vrot.slane %v3265, 7
        %v3339 = vrot.slane %v3266, 7
        %v3340 = vsel %vm365, %v3338, %v3339
        %v3341 = vrot.slane %v3267, 7
        %v3342 = vrot.slane %v3268, 7
        %v3343 = vsel %vm365, %v3341, %v3342
        %v3344 = vrot.slane %v3269, 7
        %v3345 = vrot.slane %v3270, 7
        %v3346 = vsel %vm365, %v3344, %v3345
        %v3347 = vrot.slane %v3271, 7
        %v3348 = vrot.slane %v3272, 7
        %v3349 = vsel %vm365, %v3347, %v3348
        %v3350 = vrot.slane %v3273, 7
        %v3351 = vrot.slane %v3274, 7
        %v3352 = vsel %vm365, %v3350, %v3351
        %v3353 = vrot.slane %v3275, 7
        %v3354 = vrot.slane %v3276, 7
        %v3355 = vsel %vm365, %v3353, %v3354
        %v3356 = vrot.slane %v3277, 7
        %v3357 = vrot.slane %v3278, 7
        %v3358 = vsel %vm365, %v3356, %v3357
        %v3407 = vsel %vm365, 0.0, %v3311
        %v3408 = vsel %vm365, 0.0, %v3314
        %v3409 = vsel %vm365, 0.0, %v3317
        %v3410 = vsel %vm365, 0.0, %v3320
        %v3411 = vsel %vm365, 0.0, %v3323
        %v3412 = vsel %vm365, 0.0, %v3326
        %v3413 = vsel %vm365, 0.0, %v3329
        %v3414 = vsel %vm365, 0.0, %v3332
        %v3415 = vsel %vm365, 0.0, %v3335
        %v3416 = vsel %vm365, 0.0, %v3338
        %v3417 = vsel %vm365, 0.0, %v3341
        %v3418 = vsel %vm365, 0.0, %v3344
        %v3419 = vsel %vm365, 0.0, %v3347
        %v3420 = vsel %vm365, 0.0, %v3350
        %v3421 = vsel %vm365, 0.0, %v3353
        %v3422 = vsel %vm365, 0.0, %v3356
        %v3423 = vsel %vm365, %v3312, 0.0
        %v3424 = vsel %vm365, %v3315, 0.0
        %v3425 = vsel %vm365, %v3318, 0.0
        %v3426 = vsel %vm365, %v3321, 0.0
        %v3427 = vsel %vm365, %v3324, 0.0
        %v3428 = vsel %vm365, %v3327, 0.0
        %v3429 = vsel %vm365, %v3330, 0.0
        %v3430 = vsel %vm365, %v3333, 0.0
        %v3431 = vsel %vm365, %v3336, 0.0
        %v3432 = vsel %vm365, %v3339, 0.0
        %v3433 = vsel %vm365, %v3342, 0.0
        %v3434 = vsel %vm365, %v3345, 0.0
        %v3435 = vsel %vm365, %v3348, 0.0
        %v3436 = vsel %vm365, %v3351, 0.0
        %v3437 = vsel %vm365, %v3354, 0.0
        %v3438 = vsel %vm365, %v3357, 0.0
        %v3439 = vld [vmem:[#allocation7] sm:$0xff]
        %v3440 = vld [vmem:[#allocation7 + $0x8] sm:$0xff]
        %v3441 = vld [vmem:[#allocation7 + $0x10] sm:$0xff]
        %v3442 = vld [vmem:[#allocation7 + $0x18] sm:$0xff]
        %v3443 = vld [vmem:[#allocation7 + $0x20] sm:$0xff]
        %v3444 = vld [vmem:[#allocation7 + $0x28] sm:$0xff]
        %v3445 = vld [vmem:[#allocation7 + $0x30] sm:$0xff]
        %v3446 = vld [vmem:[#allocation7 + $0x38] sm:$0xff]
        %v3447 = vld [vmem:[#allocation7 + $0x40] sm:$0xff]
        %v3448 = vld [vmem:[#allocation7 + $0x48] sm:$0xff]
        %v3449 = vld [vmem:[#allocation7 + $0x50] sm:$0xff]
        %v3450 = vld [vmem:[#allocation7 + $0x58] sm:$0xff]
        %v3451 = vld [vmem:[#allocation7 + $0x60] sm:$0xff]
        %v3452 = vld [vmem:[#allocation7 + $0x68] sm:$0xff]
        %v3453 = vld [vmem:[#allocation7 + $0x70] sm:$0xff]
        %v3454 = vld [vmem:[#allocation7 + $0x78] sm:$0xff]
        %v3485 = vrot.slane %v3407, 1
        %v3486 = vrot.slane %v3313, 1
        %v3487 = vsel %vm548, %v3485, %v3486
        %v3488 = vrot.slane %v3423, 1
        %v3489 = vsel %vm548, %v3486, %v3488
        %v3490 = vrot.slane %v3408, 1
        %v3491 = vrot.slane %v3316, 1
        %v3492 = vsel %vm548, %v3490, %v3491
        %v3493 = vrot.slane %v3424, 1
        %v3494 = vsel %vm548, %v3491, %v3493
        %v3495 = vrot.slane %v3409, 1
        %v3496 = vrot.slane %v3319, 1
        %v3497 = vsel %vm548, %v3495, %v3496
        %v3498 = vrot.slane %v3425, 1
        %v3499 = vsel %vm548, %v3496, %v3498
        %v3500 = vrot.slane %v3410, 1
        %v3501 = vrot.slane %v3322, 1
        %v3502 = vsel %vm548, %v3500, %v3501
        %v3503 = vrot.slane %v3426, 1
        %v3504 = vsel %vm548, %v3501, %v3503
        %v3505 = vrot.slane %v3411, 1
        %v3506 = vrot.slane %v3325, 1
        %v3507 = vsel %vm548, %v3505, %v3506
        %v3508 = vrot.slane %v3427, 1
        %v3509 = vsel %vm548, %v3506, %v3508
        %v3510 = vrot.slane %v3412, 1
        %v3511 = vrot.slane %v3328, 1
        %v3512 = vsel %vm548, %v3510, %v3511
        %v3513 = vrot.slane %v3428, 1
        %v3514 = vsel %vm548, %v3511, %v3513
        %v3515 = vrot.slane %v3413, 1
        %v3516 = vrot.slane %v3331, 1
        %v3517 = vsel %vm548, %v3515, %v3516
        %v3518 = vrot.slane %v3429, 1
        %v3519 = vsel %vm548, %v3516, %v3518
        %v3520 = vrot.slane %v3414, 1
        %v3521 = vrot.slane %v3334, 1
        %v3522 = vsel %vm548, %v3520, %v3521
        %v3523 = vrot.slane %v3430, 1
        %v3524 = vsel %vm548, %v3521, %v3523
        %v3525 = vrot.slane %v3415, 1
        %v3526 = vrot.slane %v3337, 1
        %v3527 = vsel %vm548, %v3525, %v3526
        %v3528 = vrot.slane %v3431, 1
        %v3529 = vsel %vm548, %v3526, %v3528
        %v3530 = vrot.slane %v3416, 1
        %v3531 = vrot.slane %v3340, 1
        %v3532 = vsel %vm548, %v3530, %v3531
        %v3533 = vrot.slane %v3432, 1
        %v3534 = vsel %vm548, %v3531, %v3533
        %v3535 = vrot.slane %v3417, 1
        %v3536 = vrot.slane %v3343, 1
        %v3537 = vsel %vm548, %v3535, %v3536
        %v3538 = vrot.slane %v3433, 1
        %v3539 = vsel %vm548, %v3536, %v3538
        %v3540 = vrot.slane %v3418, 1
        %v3541 = vrot.slane %v3346, 1
        %v3542 = vsel %vm548, %v3540, %v3541
        %v3543 = vrot.slane %v3434, 1
        %v3544 = vsel %vm548, %v3541, %v3543
        %v3545 = vrot.slane %v3419, 1
        %v3546 = vrot.slane %v3349, 1
        %v3547 = vsel %vm548, %v3545, %v3546
        %v3548 = vrot.slane %v3435, 1
        %v3549 = vsel %vm548, %v3546, %v3548
        %v3550 = vrot.slane %v3420, 1
        %v3551 = vrot.slane %v3352, 1
        %v3552 = vsel %vm548, %v3550, %v3551
        %v3553 = vrot.slane %v3436, 1
        %v3554 = vsel %vm548, %v3551, %v3553
        %v3555 = vrot.slane %v3421, 1
        %v3556 = vrot.slane %v3355, 1
        %v3557 = vsel %vm548, %v3555, %v3556
        %v3558 = vrot.slane %v3437, 1
        %v3559 = vsel %vm548, %v3556, %v3558
        %s3590 = scalar_lea.vmem [#allocation7], 128
        %v3591 = vld [vmem:[%s3590] sm:$0xff]
        %v3592 = vld [vmem:[%s3590 + $0x8] sm:$0xff]
        %v3593 = vld [vmem:[%s3590 + $0x10] sm:$0xff]
        %v3594 = vld [vmem:[%s3590 + $0x18] sm:$0xff]
        %v3595 = vld [vmem:[%s3590 + $0x20] sm:$0xff]
        %v3596 = vld [vmem:[%s3590 + $0x28] sm:$0xff]
        %v3597 = vld [vmem:[%s3590 + $0x30] sm:$0xff]
        %v3598 = vld [vmem:[%s3590 + $0x38] sm:$0xff]
        %v3599 = vld [vmem:[%s3590 + $0x40] sm:$0xff]
        %v3600 = vld [vmem:[%s3590 + $0x48] sm:$0xff]
        %v3601 = vld [vmem:[%s3590 + $0x50] sm:$0xff]
        %v3602 = vld [vmem:[%s3590 + $0x58] sm:$0xff]
        %v3603 = vld [vmem:[%s3590 + $0x60] sm:$0xff]
        %v3604 = vld [vmem:[%s3590 + $0x68] sm:$0xff]
        %v3605 = vld [vmem:[%s3590 + $0x70] sm:$0xff]
        %v3606 = vld [vmem:[%s3590 + $0x78] sm:$0xff]
        %3607 = vmatprep.subr.mxu0 0.0
        %3608 = vmatpush1.msra.mxu0 %v3606
        %3609 = vmatprep.subr.mxu0 0.0
        %3610 = vmatpush1.msra.mxu0 %v3605
        %3611 = vmatprep.subr.mxu0 0.0
        %3612 = vmatpush1.msra.mxu0 %v3604
        %3613 = vmatprep.subr.mxu0 0.0
        %3614 = vmatpush1.msra.mxu0 %v3603
        %3615 = vmatprep.subr.mxu0 0.0
        %3616 = vmatpush1.msra.mxu0 %v3602
        %3617 = vmatprep.subr.mxu0 0.0
        %3618 = vmatpush1.msra.mxu0 %v3601
        %3619 = vmatprep.subr.mxu0 0.0
        %3620 = vmatpush1.msra.mxu0 %v3600
        %3621 = vmatprep.subr.mxu0 0.0
        %3622 = vmatpush1.msra.mxu0 %v3599
        %3623 = vmatprep.subr.mxu0 0.0
        %3624 = vmatpush1.msra.mxu0 %v3598
        %3625 = vmatprep.subr.mxu0 0.0
        %3626 = vmatpush1.msra.mxu0 %v3597
        %3627 = vmatprep.subr.mxu0 0.0
        %3628 = vmatpush1.msra.mxu0 %v3596
        %3629 = vmatprep.subr.mxu0 0.0
        %3630 = vmatpush1.msra.mxu0 %v3595
        %3631 = vmatprep.subr.mxu0 0.0
        %3632 = vmatpush1.msra.mxu0 %v3594
        %3633 = vmatprep.subr.mxu0 0.0
        %3634 = vmatpush1.msra.mxu0 %v3593
        %3635 = vmatprep.subr.mxu0 0.0
        %3636 = vmatpush1.msra.mxu0 %v3592
        %3637 = vmatprep.subr.mxu0 0.0
        %3638 = vmatpush1.msra.mxu0 %v3591
        %3639 = vmatprep.subr.mxu0 0.0
        %3640 = vmatpush2.msra.mxu0 0.0
        %3641 = vmatprep.subr.mxu0 0.0
        %3642 = vmatpush2.msra.mxu0 0.0
        %3643 = vmatprep.subr.mxu0 0.0
        %3644 = vmatpush2.msra.mxu0 0.0
        %3645 = vmatprep.subr.mxu0 0.0
        %3646 = vmatpush2.msra.mxu0 0.0
        %3647 = vmatprep.subr.mxu0 0.0
        %3648 = vmatpush2.msra.mxu0 0.0
        %3649 = vmatprep.subr.mxu0 0.0
        %3650 = vmatpush2.msra.mxu0 0.0
        %3651 = vmatprep.subr.mxu0 0.0
        %3652 = vmatpush2.msra.mxu0 0.0
        %3653 = vmatprep.subr.mxu0 0.0
        %3654 = vmatpush2.msra.mxu0 0.0
        %3655 = vmatprep.subr.mxu0 0.0
        %3656 = vmatpush2.msra.mxu0 0.0
        %3657 = vmatprep.subr.mxu0 0.0
        %3658 = vmatpush2.msra.mxu0 0.0
        %3659 = vmatprep.subr.mxu0 0.0
        %3660 = vmatpush2.msra.mxu0 0.0
        %3661 = vmatprep.subr.mxu0 0.0
        %3662 = vmatpush2.msra.mxu0 0.0
        %3663 = vmatprep.subr.mxu0 0.0
        %3664 = vmatpush2.msra.mxu0 0.0
        %3665 = vmatprep.subr.mxu0 0.0
        %3666 = vmatpush2.msra.mxu0 0.0
        %3667 = vmatprep.subr.mxu0 0.0
        %3668 = vmatpush2.msra.mxu0 0.0
        %3669 = vmatprep.subr.mxu0 0.0
        %3670 = vmatpush2.msra.mxu0 0.0
        %3671 = vmatprep.mubr.f32.mxu0 0.0
        %3672 = vmatmul.mubr.f32.gmra.mxu0 %v551
        %v3673 = vpop.f32.mrf.mxu0
        %v3674 = vadd.f32 0.0, %v3673
        %v3675 = vpop.f32.mrf.mxu0
        %3676 = vmatprep.mubr.f32.mxu0 0.0
        %3677 = vmatmul.mubr.f32.gmra.mxu0 %v553
        %v3678 = vpop.f32.mrf.mxu0
        %v3679 = vadd.f32 0.0, %v3678
        %v3680 = vpop.f32.mrf.mxu0
        %3681 = vmatprep.mubr.f32.mxu0 0.0
        %3682 = vmatmul.mubr.f32.gmra.mxu0 %v3487
        %v3683 = vpop.f32.mrf.mxu0
        %v3684 = vadd.f32 0.0, %v3683
        %v3685 = vpop.f32.mrf.mxu0
        %3686 = vmatprep.mubr.f32.mxu0 0.0
        %3687 = vmatmul.mubr.f32.gmra.mxu0 %v3489
        %v3688 = vpop.f32.mrf.mxu0
        %v3689 = vadd.f32 0.0, %v3688
        %v3690 = vpop.f32.mrf.mxu0
        %3691 = vmatprep.mubr.f32.mxu0 0.0
        %3692 = vmatmul.mubr.f32.gmra.mxu0 %v3492
        %v3693 = vpop.f32.mrf.mxu0
        %v3694 = vadd.f32 0.0, %v3693
        %v3695 = vpop.f32.mrf.mxu0
        %3696 = vmatprep.mubr.f32.mxu0 0.0
        %3697 = vmatmul.mubr.f32.gmra.mxu0 %v3494
        %v3698 = vpop.f32.mrf.mxu0
        %v3699 = vadd.f32 0.0, %v3698
        %v3700 = vpop.f32.mrf.mxu0
        %3701 = vmatprep.mubr.f32.mxu0 0.0
        %3702 = vmatmul.mubr.f32.gmra.mxu0 %v3497
        %v3703 = vpop.f32.mrf.mxu0
        %v3704 = vadd.f32 0.0, %v3703
        %v3705 = vpop.f32.mrf.mxu0
        %3706 = vmatprep.mubr.f32.mxu0 0.0
        %3707 = vmatmul.mubr.f32.gmra.mxu0 %v3499
        %v3708 = vpop.f32.mrf.mxu0
        %v3709 = vadd.f32 0.0, %v3708
        %v3710 = vpop.f32.mrf.mxu0
        %3711 = vmatprep.mubr.f32.mxu0 0.0
        %3712 = vmatmul.mubr.f32.gmra.mxu0 %v3502
        %v3713 = vpop.f32.mrf.mxu0
        %v3714 = vadd.f32 0.0, %v3713
        %v3715 = vpop.f32.mrf.mxu0
        %3716 = vmatprep.mubr.f32.mxu0 0.0
        %3717 = vmatmul.mubr.f32.gmra.mxu0 %v3504
        %v3718 = vpop.f32.mrf.mxu0
        %v3719 = vadd.f32 0.0, %v3718
        %v3720 = vpop.f32.mrf.mxu0
        %3721 = vmatprep.mubr.f32.mxu0 0.0
        %3722 = vmatmul.mubr.f32.gmra.mxu0 %v3507
        %v3723 = vpop.f32.mrf.mxu0
        %v3724 = vadd.f32 0.0, %v3723
        %v3725 = vpop.f32.mrf.mxu0
        %3726 = vmatprep.mubr.f32.mxu0 0.0
        %3727 = vmatmul.mubr.f32.gmra.mxu0 %v3509
        %v3728 = vpop.f32.mrf.mxu0
        %v3729 = vadd.f32 0.0, %v3728
        %v3730 = vpop.f32.mrf.mxu0
        %3731 = vmatprep.mubr.f32.mxu0 0.0
        %3732 = vmatmul.mubr.f32.gmra.mxu0 %v3512
        %v3733 = vpop.f32.mrf.mxu0
        %v3734 = vadd.f32 0.0, %v3733
        %v3735 = vpop.f32.mrf.mxu0
        %3736 = vmatprep.mubr.f32.mxu0 0.0
        %3737 = vmatmul.mubr.f32.gmra.mxu0 %v3514
        %v3738 = vpop.f32.mrf.mxu0
        %v3739 = vadd.f32 0.0, %v3738
        %v3740 = vpop.f32.mrf.mxu0
        %3741 = vmatprep.mubr.f32.mxu0 0.0
        %3742 = vmatmul.mubr.f32.gmra.mxu0 %v3517
        %v3743 = vpop.f32.mrf.mxu0
        %v3744 = vadd.f32 0.0, %v3743
        %v3745 = vpop.f32.mrf.mxu0
        %3746 = vmatprep.mubr.f32.mxu0 0.0
        %3747 = vmatmul.mubr.f32.gmra.mxu0 %v3519
        %v3748 = vpop.f32.mrf.mxu0
        %v3749 = vadd.f32 0.0, %v3748
        %v3750 = vpop.f32.mrf.mxu0
        %3751 = vmatprep.mubr.f32.mxu0 0.0
        %3752 = vmatmul.mubr.f32.gmra.mxu0 %v3522
        %v3753 = vpop.f32.mrf.mxu0
        %v3754 = vadd.f32 0.0, %v3753
        %v3755 = vpop.f32.mrf.mxu0
        %3756 = vmatprep.mubr.f32.mxu0 0.0
        %3757 = vmatmul.mubr.f32.gmra.mxu0 %v3524
        %v3758 = vpop.f32.mrf.mxu0
        %v3759 = vadd.f32 0.0, %v3758
        %v3760 = vpop.f32.mrf.mxu0
        %3761 = vmatprep.mubr.f32.mxu0 0.0
        %3762 = vmatmul.mubr.f32.gmra.mxu0 %v3527
        %v3763 = vpop.f32.mrf.mxu0
        %v3764 = vadd.f32 0.0, %v3763
        %v3765 = vpop.f32.mrf.mxu0
        %3766 = vmatprep.mubr.f32.mxu0 0.0
        %3767 = vmatmul.mubr.f32.gmra.mxu0 %v3529
        %v3768 = vpop.f32.mrf.mxu0
        %v3769 = vadd.f32 0.0, %v3768
        %v3770 = vpop.f32.mrf.mxu0
        %3771 = vmatprep.mubr.f32.mxu0 0.0
        %3772 = vmatmul.mubr.f32.gmra.mxu0 %v3532
        %v3773 = vpop.f32.mrf.mxu0
        %v3774 = vadd.f32 0.0, %v3773
        %v3775 = vpop.f32.mrf.mxu0
        %3776 = vmatprep.mubr.f32.mxu0 0.0
        %3777 = vmatmul.mubr.f32.gmra.mxu0 %v3534
        %v3778 = vpop.f32.mrf.mxu0
        %v3779 = vadd.f32 0.0, %v3778
        %v3780 = vpop.f32.mrf.mxu0
        %3781 = vmatprep.mubr.f32.mxu0 0.0
        %3782 = vmatmul.mubr.f32.gmra.mxu0 %v3537
        %v3783 = vpop.f32.mrf.mxu0
        %v3784 = vadd.f32 0.0, %v3783
        %v3785 = vpop.f32.mrf.mxu0
        %3786 = vmatprep.mubr.f32.mxu0 0.0
        %3787 = vmatmul.mubr.f32.gmra.mxu0 %v3539
        %v3788 = vpop.f32.mrf.mxu0
        %v3789 = vadd.f32 0.0, %v3788
        %v3790 = vpop.f32.mrf.mxu0
        %3791 = vmatprep.mubr.f32.mxu0 0.0
        %3792 = vmatmul.mubr.f32.gmra.mxu0 %v3542
        %v3793 = vpop.f32.mrf.mxu0
        %v3794 = vadd.f32 0.0, %v3793
        %v3795 = vpop.f32.mrf.mxu0
        %3796 = vmatprep.mubr.f32.mxu0 0.0
        %3797 = vmatmul.mubr.f32.gmra.mxu0 %v3544
        %v3798 = vpop.f32.mrf.mxu0
        %v3799 = vadd.f32 0.0, %v3798
        %v3800 = vpop.f32.mrf.mxu0
        %3801 = vmatprep.mubr.f32.mxu0 0.0
        %3802 = vmatmul.mubr.f32.gmra.mxu0 %v3547
        %v3803 = vpop.f32.mrf.mxu0
        %v3804 = vadd.f32 0.0, %v3803
        %v3805 = vpop.f32.mrf.mxu0
        %3806 = vmatprep.mubr.f32.mxu0 0.0
        %3807 = vmatmul.mubr.f32.gmra.mxu0 %v3549
        %v3808 = vpop.f32.mrf.mxu0
        %v3809 = vadd.f32 0.0, %v3808
        %v3810 = vpop.f32.mrf.mxu0
        %3811 = vmatprep.mubr.f32.mxu0 0.0
        %3812 = vmatmul.mubr.f32.gmra.mxu0 %v3552
        %v3813 = vpop.f32.mrf.mxu0
        %v3814 = vadd.f32 0.0, %v3813
        %v3815 = vpop.f32.mrf.mxu0
        %3816 = vmatprep.mubr.f32.mxu0 0.0
        %3817 = vmatmul.mubr.f32.gmra.mxu0 %v3554
        %v3818 = vpop.f32.mrf.mxu0
        %v3819 = vadd.f32 0.0, %v3818
        %v3820 = vpop.f32.mrf.mxu0
        %3821 = vmatprep.mubr.f32.mxu0 0.0
        %3822 = vmatmul.mubr.f32.gmra.mxu0 %v3557
        %v3823 = vpop.f32.mrf.mxu0
        %v3824 = vadd.f32 0.0, %v3823
        %v3825 = vpop.f32.mrf.mxu0
        %3826 = vmatprep.mubr.f32.mxu0 0.0
        %3827 = vmatmul.mubr.f32.gmra.mxu0 %v3559
        %v3828 = vpop.f32.mrf.mxu0
        %v3829 = vadd.f32 0.0, %v3828
        %v3830 = vpop.f32.mrf.mxu0
        %3831 = vdwg.mxu0
        %3832 = vmatprep.subr.mxu0 0.0
        %3833 = vmatpush1.msra.mxu0 %v3454
        %3834 = vmatprep.subr.mxu0 0.0
        %3835 = vmatpush1.msra.mxu0 %v3453
        %3836 = vmatprep.subr.mxu0 0.0
        %3837 = vmatpush1.msra.mxu0 %v3452
        %3838 = vmatprep.subr.mxu0 0.0
        %3839 = vmatpush1.msra.mxu0 %v3451
        %3840 = vmatprep.subr.mxu0 0.0
        %3841 = vmatpush1.msra.mxu0 %v3450
        %3842 = vmatprep.subr.mxu0 0.0
        %3843 = vmatpush1.msra.mxu0 %v3449
        %3844 = vmatprep.subr.mxu0 0.0
        %3845 = vmatpush1.msra.mxu0 %v3448
        %3846 = vmatprep.subr.mxu0 0.0
        %3847 = vmatpush1.msra.mxu0 %v3447
        %3848 = vmatprep.subr.mxu0 0.0
        %3849 = vmatpush1.msra.mxu0 %v3446
        %3850 = vmatprep.subr.mxu0 0.0
        %3851 = vmatpush1.msra.mxu0 %v3445
        %3852 = vmatprep.subr.mxu0 0.0
        %3853 = vmatpush1.msra.mxu0 %v3444
        %3854 = vmatprep.subr.mxu0 0.0
        %3855 = vmatpush1.msra.mxu0 %v3443
        %3856 = vmatprep.subr.mxu0 0.0
        %3857 = vmatpush1.msra.mxu0 %v3442
        %3858 = vmatprep.subr.mxu0 0.0
        %3859 = vmatpush1.msra.mxu0 %v3441
        %3860 = vmatprep.subr.mxu0 0.0
        %3861 = vmatpush1.msra.mxu0 %v3440
        %3862 = vmatprep.subr.mxu0 0.0
        %3863 = vmatpush1.msra.mxu0 %v3439
        %3864 = vmatprep.subr.mxu0 0.0
        %3865 = vmatpush2.msra.mxu0 0.0
        %3866 = vmatprep.subr.mxu0 0.0
        %3867 = vmatpush2.msra.mxu0 0.0
        %3868 = vmatprep.subr.mxu0 0.0
        %3869 = vmatpush2.msra.mxu0 0.0
        %3870 = vmatprep.subr.mxu0 0.0
        %3871 = vmatpush2.msra.mxu0 0.0
        %3872 = vmatprep.subr.mxu0 0.0
        %3873 = vmatpush2.msra.mxu0 0.0
        %3874 = vmatprep.subr.mxu0 0.0
        %3875 = vmatpush2.msra.mxu0 0.0
        %3876 = vmatprep.subr.mxu0 0.0
        %3877 = vmatpush2.msra.mxu0 0.0
        %3878 = vmatprep.subr.mxu0 0.0
        %3879 = vmatpush2.msra.mxu0 0.0
        %3880 = vmatprep.subr.mxu0 0.0
        %3881 = vmatpush2.msra.mxu0 0.0
        %3882 = vmatprep.subr.mxu0 0.0
        %3883 = vmatpush2.msra.mxu0 0.0
        %3884 = vmatprep.subr.mxu0 0.0
        %3885 = vmatpush2.msra.mxu0 0.0
        %3886 = vmatprep.subr.mxu0 0.0
        %3887 = vmatpush2.msra.mxu0 0.0
        %3888 = vmatprep.subr.mxu0 0.0
        %3889 = vmatpush2.msra.mxu0 0.0
        %3890 = vmatprep.subr.mxu0 0.0
        %3891 = vmatpush2.msra.mxu0 0.0
        %3892 = vmatprep.subr.mxu0 0.0
        %3893 = vmatpush2.msra.mxu0 0.0
        %3894 = vmatprep.subr.mxu0 0.0
        %3895 = vmatpush2.msra.mxu0 0.0
        %3896 = vmatprep.mubr.f32.mxu0 0.0
        %3897 = vmatmul.mubr.f32.gmra.mxu0 %v466
        %v3898 = vpop.f32.mrf.mxu0
        %v3899 = vadd.f32 %v3674, %v3898
        %v3900 = vpop.f32.mrf.mxu0
        %3901 = vmatprep.mubr.f32.mxu0 0.0
        %3902 = vmatmul.mubr.f32.gmra.mxu0 %v367
        %v3903 = vpop.f32.mrf.mxu0
        %v3904 = vadd.f32 %v3679, %v3903
        %v3905 = vpop.f32.mrf.mxu0
        %3906 = vmatprep.mubr.f32.mxu0 0.0
        %3907 = vmatmul.mubr.f32.gmra.mxu0 %v3407
        %v3908 = vpop.f32.mrf.mxu0
        %v3909 = vadd.f32 %v3684, %v3908
        %v3910 = vpop.f32.mrf.mxu0
        %3911 = vmatprep.mubr.f32.mxu0 0.0
        %3912 = vmatmul.mubr.f32.gmra.mxu0 %v3313
        %v3913 = vpop.f32.mrf.mxu0
        %v3914 = vadd.f32 %v3689, %v3913
        %v3915 = vpop.f32.mrf.mxu0
        %3916 = vmatprep.mubr.f32.mxu0 0.0
        %3917 = vmatmul.mubr.f32.gmra.mxu0 %v3408
        %v3918 = vpop.f32.mrf.mxu0
        %v3919 = vadd.f32 %v3694, %v3918
        %v3920 = vpop.f32.mrf.mxu0
        %3921 = vmatprep.mubr.f32.mxu0 0.0
        %3922 = vmatmul.mubr.f32.gmra.mxu0 %v3316
        %v3923 = vpop.f32.mrf.mxu0
        %v3924 = vadd.f32 %v3699, %v3923
        %v3925 = vpop.f32.mrf.mxu0
        %3926 = vmatprep.mubr.f32.mxu0 0.0
        %3927 = vmatmul.mubr.f32.gmra.mxu0 %v3409
        %v3928 = vpop.f32.mrf.mxu0
        %v3929 = vadd.f32 %v3704, %v3928
        %v3930 = vpop.f32.mrf.mxu0
        %3931 = vmatprep.mubr.f32.mxu0 0.0
        %3932 = vmatmul.mubr.f32.gmra.mxu0 %v3319
        %v3933 = vpop.f32.mrf.mxu0
        %v3934 = vadd.f32 %v3709, %v3933
        %v3935 = vpop.f32.mrf.mxu0
        %3936 = vmatprep.mubr.f32.mxu0 0.0
        %3937 = vmatmul.mubr.f32.gmra.mxu0 %v3410
        %v3938 = vpop.f32.mrf.mxu0
        %v3939 = vadd.f32 %v3714, %v3938
        %v3940 = vpop.f32.mrf.mxu0
        %3941 = vmatprep.mubr.f32.mxu0 0.0
        %3942 = vmatmul.mubr.f32.gmra.mxu0 %v3322
        %v3943 = vpop.f32.mrf.mxu0
        %v3944 = vadd.f32 %v3719, %v3943
        %v3945 = vpop.f32.mrf.mxu0
        %3946 = vmatprep.mubr.f32.mxu0 0.0
        %3947 = vmatmul.mubr.f32.gmra.mxu0 %v3411
        %v3948 = vpop.f32.mrf.mxu0
        %v3949 = vadd.f32 %v3724, %v3948
        %v3950 = vpop.f32.mrf.mxu0
        %3951 = vmatprep.mubr.f32.mxu0 0.0
        %3952 = vmatmul.mubr.f32.gmra.mxu0 %v3325
        %v3953 = vpop.f32.mrf.mxu0
        %v3954 = vadd.f32 %v3729, %v3953
        %v3955 = vpop.f32.mrf.mxu0
        %3956 = vmatprep.mubr.f32.mxu0 0.0
        %3957 = vmatmul.mubr.f32.gmra.mxu0 %v3412
        %v3958 = vpop.f32.mrf.mxu0
        %v3959 = vadd.f32 %v3734, %v3958
        %v3960 = vpop.f32.mrf.mxu0
        %3961 = vmatprep.mubr.f32.mxu0 0.0
        %3962 = vmatmul.mubr.f32.gmra.mxu0 %v3328
        %v3963 = vpop.f32.mrf.mxu0
        %v3964 = vadd.f32 %v3739, %v3963
        %v3965 = vpop.f32.mrf.mxu0
        %3966 = vmatprep.mubr.f32.mxu0 0.0
        %3967 = vmatmul.mubr.f32.gmra.mxu0 %v3413
        %v3968 = vpop.f32.mrf.mxu0
        %v3969 = vadd.f32 %v3744, %v3968
        %v3970 = vpop.f32.mrf.mxu0
        %3971 = vmatprep.mubr.f32.mxu0 0.0
        %3972 = vmatmul.mubr.f32.gmra.mxu0 %v3331
        %v3973 = vpop.f32.mrf.mxu0
        %v3974 = vadd.f32 %v3749, %v3973
        %v3975 = vpop.f32.mrf.mxu0
        %3976 = vmatprep.mubr.f32.mxu0 0.0
        %3977 = vmatmul.mubr.f32.gmra.mxu0 %v3414
        %v3978 = vpop.f32.mrf.mxu0
        %v3979 = vadd.f32 %v3754, %v3978
        %v3980 = vpop.f32.mrf.mxu0
        %3981 = vmatprep.mubr.f32.mxu0 0.0
        %3982 = vmatmul.mubr.f32.gmra.mxu0 %v3334
        %v3983 = vpop.f32.mrf.mxu0
        %v3984 = vadd.f32 %v3759, %v3983
        %v3985 = vpop.f32.mrf.mxu0
        %3986 = vmatprep.mubr.f32.mxu0 0.0
        %3987 = vmatmul.mubr.f32.gmra.mxu0 %v3415
        %v3988 = vpop.f32.mrf.mxu0
        %v3989 = vadd.f32 %v3764, %v3988
        %v3990 = vpop.f32.mrf.mxu0
        %3991 = vmatprep.mubr.f32.mxu0 0.0
        %3992 = vmatmul.mubr.f32.gmra.mxu0 %v3337
        %v3993 = vpop.f32.mrf.mxu0
        %v3994 = vadd.f32 %v3769, %v3993
        %v3995 = vpop.f32.mrf.mxu0
        %3996 = vmatprep.mubr.f32.mxu0 0.0
        %3997 = vmatmul.mubr.f32.gmra.mxu0 %v3416
        %v3998 = vpop.f32.mrf.mxu0
        %v3999 = vadd.f32 %v3774, %v3998
        %v4000 = vpop.f32.mrf.mxu0
        %4001 = vmatprep.mubr.f32.mxu0 0.0
        %4002 = vmatmul.mubr.f32.gmra.mxu0 %v3340
        %v4003 = vpop.f32.mrf.mxu0
        %v4004 = vadd.f32 %v3779, %v4003
        %v4005 = vpop.f32.mrf.mxu0
        %4006 = vmatprep.mubr.f32.mxu0 0.0
        %4007 = vmatmul.mubr.f32.gmra.mxu0 %v3417
        %v4008 = vpop.f32.mrf.mxu0
        %v4009 = vadd.f32 %v3784, %v4008
        %v4010 = vpop.f32.mrf.mxu0
        %4011 = vmatprep.mubr.f32.mxu0 0.0
        %4012 = vmatmul.mubr.f32.gmra.mxu0 %v3343
        %v4013 = vpop.f32.mrf.mxu0
        %v4014 = vadd.f32 %v3789, %v4013
        %v4015 = vpop.f32.mrf.mxu0
        %4016 = vmatprep.mubr.f32.mxu0 0.0
        %4017 = vmatmul.mubr.f32.gmra.mxu0 %v3418
        %v4018 = vpop.f32.mrf.mxu0
        %v4019 = vadd.f32 %v3794, %v4018
        %v4020 = vpop.f32.mrf.mxu0
        %4021 = vmatprep.mubr.f32.mxu0 0.0
        %4022 = vmatmul.mubr.f32.gmra.mxu0 %v3346
        %v4023 = vpop.f32.mrf.mxu0
        %v4024 = vadd.f32 %v3799, %v4023
        %v4025 = vpop.f32.mrf.mxu0
        %4026 = vmatprep.mubr.f32.mxu0 0.0
        %4027 = vmatmul.mubr.f32.gmra.mxu0 %v3419
        %v4028 = vpop.f32.mrf.mxu0
        %v4029 = vadd.f32 %v3804, %v4028
        %v4030 = vpop.f32.mrf.mxu0
        %4031 = vmatprep.mubr.f32.mxu0 0.0
        %4032 = vmatmul.mubr.f32.gmra.mxu0 %v3349
        %v4033 = vpop.f32.mrf.mxu0
        %v4034 = vadd.f32 %v3809, %v4033
        %v4035 = vpop.f32.mrf.mxu0
        %4036 = vmatprep.mubr.f32.mxu0 0.0
        %4037 = vmatmul.mubr.f32.gmra.mxu0 %v3420
        %v4038 = vpop.f32.mrf.mxu0
        %v4039 = vadd.f32 %v3814, %v4038
        %v4040 = vpop.f32.mrf.mxu0
        %4041 = vmatprep.mubr.f32.mxu0 0.0
        %4042 = vmatmul.mubr.f32.gmra.mxu0 %v3352
        %v4043 = vpop.f32.mrf.mxu0
        %v4044 = vadd.f32 %v3819, %v4043
        %v4045 = vpop.f32.mrf.mxu0
        %4046 = vmatprep.mubr.f32.mxu0 0.0
        %4047 = vmatmul.mubr.f32.gmra.mxu0 %v3421
        %v4048 = vpop.f32.mrf.mxu0
        %v4049 = vadd.f32 %v3824, %v4048
        %v4050 = vpop.f32.mrf.mxu0
        %4051 = vmatprep.mubr.f32.mxu0 0.0
        %4052 = vmatmul.mubr.f32.gmra.mxu0 %v3355
        %v4053 = vpop.f32.mrf.mxu0
        %v4054 = vadd.f32 %v3829, %v4053
        %v4055 = vpop.f32.mrf.mxu0
        %4056 = vdwg.mxu0
        %v4057 = vrot.slane %v3407, 2
        %v4058 = vrot.slane %v3313, 2
        %v4059 = vsel %vm1128, %v4057, %v4058
        %v4060 = vrot.slane %v3423, 2
        %v4061 = vsel %vm1128, %v4058, %v4060
        %v4062 = vrot.slane %v3408, 2
        %v4063 = vrot.slane %v3316, 2
        %v4064 = vsel %vm1128, %v4062, %v4063
        %v4065 = vrot.slane %v3424, 2
        %v4066 = vsel %vm1128, %v4063, %v4065
        %v4067 = vrot.slane %v3409, 2
        %v4068 = vrot.slane %v3319, 2
        %v4069 = vsel %vm1128, %v4067, %v4068
        %v4070 = vrot.slane %v3425, 2
        %v4071 = vsel %vm1128, %v4068, %v4070
        %v4072 = vrot.slane %v3410, 2
        %v4073 = vrot.slane %v3322, 2
        %v4074 = vsel %vm1128, %v4072, %v4073
        %v4075 = vrot.slane %v3426, 2
        %v4076 = vsel %vm1128, %v4073, %v4075
        %v4077 = vrot.slane %v3411, 2
        %v4078 = vrot.slane %v3325, 2
        %v4079 = vsel %vm1128, %v4077, %v4078
        %v4080 = vrot.slane %v3427, 2
        %v4081 = vsel %vm1128, %v4078, %v4080
        %v4082 = vrot.slane %v3412, 2
        %v4083 = vrot.slane %v3328, 2
        %v4084 = vsel %vm1128, %v4082, %v4083
        %v4085 = vrot.slane %v3428, 2
        %v4086 = vsel %vm1128, %v4083, %v4085
        %v4087 = vrot.slane %v3413, 2
        %v4088 = vrot.slane %v3331, 2
        %v4089 = vsel %vm1128, %v4087, %v4088
        %v4090 = vrot.slane %v3429, 2
        %v4091 = vsel %vm1128, %v4088, %v4090
        %v4092 = vrot.slane %v3414, 2
        %v4093 = vrot.slane %v3334, 2
        %v4094 = vsel %vm1128, %v4092, %v4093
        %v4095 = vrot.slane %v3430, 2
        %v4096 = vsel %vm1128, %v4093, %v4095
        %v4097 = vrot.slane %v3415, 2
        %v4098 = vrot.slane %v3337, 2
        %v4099 = vsel %vm1128, %v4097, %v4098
        %v4100 = vrot.slane %v3431, 2
        %v4101 = vsel %vm1128, %v4098, %v4100
        %v4102 = vrot.slane %v3416, 2
        %v4103 = vrot.slane %v3340, 2
        %v4104 = vsel %vm1128, %v4102, %v4103
        %v4105 = vrot.slane %v3432, 2
        %v4106 = vsel %vm1128, %v4103, %v4105
        %v4107 = vrot.slane %v3417, 2
        %v4108 = vrot.slane %v3343, 2
        %v4109 = vsel %vm1128, %v4107, %v4108
        %v4110 = vrot.slane %v3433, 2
        %v4111 = vsel %vm1128, %v4108, %v4110
        %v4112 = vrot.slane %v3418, 2
        %v4113 = vrot.slane %v3346, 2
        %v4114 = vsel %vm1128, %v4112, %v4113
        %v4115 = vrot.slane %v3434, 2
        %v4116 = vsel %vm1128, %v4113, %v4115
        %v4117 = vrot.slane %v3419, 2
        %v4118 = vrot.slane %v3349, 2
        %v4119 = vsel %vm1128, %v4117, %v4118
        %v4120 = vrot.slane %v3435, 2
        %v4121 = vsel %vm1128, %v4118, %v4120
        %v4122 = vrot.slane %v3420, 2
        %v4123 = vrot.slane %v3352, 2
        %v4124 = vsel %vm1128, %v4122, %v4123
        %v4125 = vrot.slane %v3436, 2
        %v4126 = vsel %vm1128, %v4123, %v4125
        %v4127 = vrot.slane %v3421, 2
        %v4128 = vrot.slane %v3355, 2
        %v4129 = vsel %vm1128, %v4127, %v4128
        %v4130 = vrot.slane %v3437, 2
        %v4131 = vsel %vm1128, %v4128, %v4130
        %s4162 = scalar_lea.vmem [#allocation7], 256
        %v4163 = vld [vmem:[%s4162] sm:$0xff]
        %v4164 = vld [vmem:[%s4162 + $0x8] sm:$0xff]
        %v4165 = vld [vmem:[%s4162 + $0x10] sm:$0xff]
        %v4166 = vld [vmem:[%s4162 + $0x18] sm:$0xff]
        %v4167 = vld [vmem:[%s4162 + $0x20] sm:$0xff]
        %v4168 = vld [vmem:[%s4162 + $0x28] sm:$0xff]
        %v4169 = vld [vmem:[%s4162 + $0x30] sm:$0xff]
        %v4170 = vld [vmem:[%s4162 + $0x38] sm:$0xff]
        %v4171 = vld [vmem:[%s4162 + $0x40] sm:$0xff]
        %v4172 = vld [vmem:[%s4162 + $0x48] sm:$0xff]
        %v4173 = vld [vmem:[%s4162 + $0x50] sm:$0xff]
        %v4174 = vld [vmem:[%s4162 + $0x58] sm:$0xff]
        %v4175 = vld [vmem:[%s4162 + $0x60] sm:$0xff]
        %v4176 = vld [vmem:[%s4162 + $0x68] sm:$0xff]
        %v4177 = vld [vmem:[%s4162 + $0x70] sm:$0xff]
        %v4178 = vld [vmem:[%s4162 + $0x78] sm:$0xff]
        %4179 = vmatprep.subr.mxu0 0.0
        %4180 = vmatpush1.msra.mxu0 %v4178
        %4181 = vmatprep.subr.mxu0 0.0
        %4182 = vmatpush1.msra.mxu0 %v4177
        %4183 = vmatprep.subr.mxu0 0.0
        %4184 = vmatpush1.msra.mxu0 %v4176
        %4185 = vmatprep.subr.mxu0 0.0
        %4186 = vmatpush1.msra.mxu0 %v4175
        %4187 = vmatprep.subr.mxu0 0.0
        %4188 = vmatpush1.msra.mxu0 %v4174
        %4189 = vmatprep.subr.mxu0 0.0
        %4190 = vmatpush1.msra.mxu0 %v4173
        %4191 = vmatprep.subr.mxu0 0.0
        %4192 = vmatpush1.msra.mxu0 %v4172
        %4193 = vmatprep.subr.mxu0 0.0
        %4194 = vmatpush1.msra.mxu0 %v4171
        %4195 = vmatprep.subr.mxu0 0.0
        %4196 = vmatpush1.msra.mxu0 %v4170
        %4197 = vmatprep.subr.mxu0 0.0
        %4198 = vmatpush1.msra.mxu0 %v4169
        %4199 = vmatprep.subr.mxu0 0.0
        %4200 = vmatpush1.msra.mxu0 %v4168
        %4201 = vmatprep.subr.mxu0 0.0
        %4202 = vmatpush1.msra.mxu0 %v4167
        %4203 = vmatprep.subr.mxu0 0.0
        %4204 = vmatpush1.msra.mxu0 %v4166
        %4205 = vmatprep.subr.mxu0 0.0
        %4206 = vmatpush1.msra.mxu0 %v4165
        %4207 = vmatprep.subr.mxu0 0.0
        %4208 = vmatpush1.msra.mxu0 %v4164
        %4209 = vmatprep.subr.mxu0 0.0
        %4210 = vmatpush1.msra.mxu0 %v4163
        %4211 = vmatprep.subr.mxu0 0.0
        %4212 = vmatpush2.msra.mxu0 0.0
        %4213 = vmatprep.subr.mxu0 0.0
        %4214 = vmatpush2.msra.mxu0 0.0
        %4215 = vmatprep.subr.mxu0 0.0
        %4216 = vmatpush2.msra.mxu0 0.0
        %4217 = vmatprep.subr.mxu0 0.0
        %4218 = vmatpush2.msra.mxu0 0.0
        %4219 = vmatprep.subr.mxu0 0.0
        %4220 = vmatpush2.msra.mxu0 0.0
        %4221 = vmatprep.subr.mxu0 0.0
        %4222 = vmatpush2.msra.mxu0 0.0
        %4223 = vmatprep.subr.mxu0 0.0
        %4224 = vmatpush2.msra.mxu0 0.0
        %4225 = vmatprep.subr.mxu0 0.0
        %4226 = vmatpush2.msra.mxu0 0.0
        %4227 = vmatprep.subr.mxu0 0.0
        %4228 = vmatpush2.msra.mxu0 0.0
        %4229 = vmatprep.subr.mxu0 0.0
        %4230 = vmatpush2.msra.mxu0 0.0
        %4231 = vmatprep.subr.mxu0 0.0
        %4232 = vmatpush2.msra.mxu0 0.0
        %4233 = vmatprep.subr.mxu0 0.0
        %4234 = vmatpush2.msra.mxu0 0.0
        %4235 = vmatprep.subr.mxu0 0.0
        %4236 = vmatpush2.msra.mxu0 0.0
        %4237 = vmatprep.subr.mxu0 0.0
        %4238 = vmatpush2.msra.mxu0 0.0
        %4239 = vmatprep.subr.mxu0 0.0
        %4240 = vmatpush2.msra.mxu0 0.0
        %4241 = vmatprep.subr.mxu0 0.0
        %4242 = vmatpush2.msra.mxu0 0.0
        %4243 = vmatprep.mubr.f32.mxu0 0.0
        %4244 = vmatmul.mubr.f32.gmra.mxu0 %v1131
        %v4245 = vpop.f32.mrf.mxu0
        %v4246 = vadd.f32 0.0, %v4245
        %v4247 = vpop.f32.mrf.mxu0
        %4248 = vmatprep.mubr.f32.mxu0 0.0
        %4249 = vmatmul.mubr.f32.gmra.mxu0 %v1133
        %v4250 = vpop.f32.mrf.mxu0
        %v4251 = vadd.f32 0.0, %v4250
        %v4252 = vpop.f32.mrf.mxu0
        %4253 = vmatprep.mubr.f32.mxu0 0.0
        %4254 = vmatmul.mubr.f32.gmra.mxu0 %v4059
        %v4255 = vpop.f32.mrf.mxu0
        %v4256 = vadd.f32 0.0, %v4255
        %v4257 = vpop.f32.mrf.mxu0
        %4258 = vmatprep.mubr.f32.mxu0 0.0
        %4259 = vmatmul.mubr.f32.gmra.mxu0 %v4061
        %v4260 = vpop.f32.mrf.mxu0
        %v4261 = vadd.f32 0.0, %v4260
        %v4262 = vpop.f32.mrf.mxu0
        %4263 = vmatprep.mubr.f32.mxu0 0.0
        %4264 = vmatmul.mubr.f32.gmra.mxu0 %v4064
        %v4265 = vpop.f32.mrf.mxu0
        %v4266 = vadd.f32 0.0, %v4265
        %v4267 = vpop.f32.mrf.mxu0
        %4268 = vmatprep.mubr.f32.mxu0 0.0
        %4269 = vmatmul.mubr.f32.gmra.mxu0 %v4066
        %v4270 = vpop.f32.mrf.mxu0
        %v4271 = vadd.f32 0.0, %v4270
        %v4272 = vpop.f32.mrf.mxu0
        %4273 = vmatprep.mubr.f32.mxu0 0.0
        %4274 = vmatmul.mubr.f32.gmra.mxu0 %v4069
        %v4275 = vpop.f32.mrf.mxu0
        %v4276 = vadd.f32 0.0, %v4275
        %v4277 = vpop.f32.mrf.mxu0
        %4278 = vmatprep.mubr.f32.mxu0 0.0
        %4279 = vmatmul.mubr.f32.gmra.mxu0 %v4071
        %v4280 = vpop.f32.mrf.mxu0
        %v4281 = vadd.f32 0.0, %v4280
        %v4282 = vpop.f32.mrf.mxu0
        %4283 = vmatprep.mubr.f32.mxu0 0.0
        %4284 = vmatmul.mubr.f32.gmra.mxu0 %v4074
        %v4285 = vpop.f32.mrf.mxu0
        %v4286 = vadd.f32 0.0, %v4285
        %v4287 = vpop.f32.mrf.mxu0
        %4288 = vmatprep.mubr.f32.mxu0 0.0
        %4289 = vmatmul.mubr.f32.gmra.mxu0 %v4076
        %v4290 = vpop.f32.mrf.mxu0
        %v4291 = vadd.f32 0.0, %v4290
        %v4292 = vpop.f32.mrf.mxu0
        %4293 = vmatprep.mubr.f32.mxu0 0.0
        %4294 = vmatmul.mubr.f32.gmra.mxu0 %v4079
        %v4295 = vpop.f32.mrf.mxu0
        %v4296 = vadd.f32 0.0, %v4295
        %v4297 = vpop.f32.mrf.mxu0
        %4298 = vmatprep.mubr.f32.mxu0 0.0
        %4299 = vmatmul.mubr.f32.gmra.mxu0 %v4081
        %v4300 = vpop.f32.mrf.mxu0
        %v4301 = vadd.f32 0.0, %v4300
        %v4302 = vpop.f32.mrf.mxu0
        %4303 = vmatprep.mubr.f32.mxu0 0.0
        %4304 = vmatmul.mubr.f32.gmra.mxu0 %v4084
        %v4305 = vpop.f32.mrf.mxu0
        %v4306 = vadd.f32 0.0, %v4305
        %v4307 = vpop.f32.mrf.mxu0
        %4308 = vmatprep.mubr.f32.mxu0 0.0
        %4309 = vmatmul.mubr.f32.gmra.mxu0 %v4086
        %v4310 = vpop.f32.mrf.mxu0
        %v4311 = vadd.f32 0.0, %v4310
        %v4312 = vpop.f32.mrf.mxu0
        %4313 = vmatprep.mubr.f32.mxu0 0.0
        %4314 = vmatmul.mubr.f32.gmra.mxu0 %v4089
        %v4315 = vpop.f32.mrf.mxu0
        %v4316 = vadd.f32 0.0, %v4315
        %v4317 = vpop.f32.mrf.mxu0
        %4318 = vmatprep.mubr.f32.mxu0 0.0
        %4319 = vmatmul.mubr.f32.gmra.mxu0 %v4091
        %v4320 = vpop.f32.mrf.mxu0
        %v4321 = vadd.f32 0.0, %v4320
        %v4322 = vpop.f32.mrf.mxu0
        %4323 = vmatprep.mubr.f32.mxu0 0.0
        %4324 = vmatmul.mubr.f32.gmra.mxu0 %v4094
        %v4325 = vpop.f32.mrf.mxu0
        %v4326 = vadd.f32 0.0, %v4325
        %v4327 = vpop.f32.mrf.mxu0
        %4328 = vmatprep.mubr.f32.mxu0 0.0
        %4329 = vmatmul.mubr.f32.gmra.mxu0 %v4096
        %v4330 = vpop.f32.mrf.mxu0
        %v4331 = vadd.f32 0.0, %v4330
        %v4332 = vpop.f32.mrf.mxu0
        %4333 = vmatprep.mubr.f32.mxu0 0.0
        %4334 = vmatmul.mubr.f32.gmra.mxu0 %v4099
        %v4335 = vpop.f32.mrf.mxu0
        %v4336 = vadd.f32 0.0, %v4335
        %v4337 = vpop.f32.mrf.mxu0
        %4338 = vmatprep.mubr.f32.mxu0 0.0
        %4339 = vmatmul.mubr.f32.gmra.mxu0 %v4101
        %v4340 = vpop.f32.mrf.mxu0
        %v4341 = vadd.f32 0.0, %v4340
        %v4342 = vpop.f32.mrf.mxu0
        %4343 = vmatprep.mubr.f32.mxu0 0.0
        %4344 = vmatmul.mubr.f32.gmra.mxu0 %v4104
        %v4345 = vpop.f32.mrf.mxu0
        %v4346 = vadd.f32 0.0, %v4345
        %v4347 = vpop.f32.mrf.mxu0
        %4348 = vmatprep.mubr.f32.mxu0 0.0
        %4349 = vmatmul.mubr.f32.gmra.mxu0 %v4106
        %v4350 = vpop.f32.mrf.mxu0
        %v4351 = vadd.f32 0.0, %v4350
        %v4352 = vpop.f32.mrf.mxu0
        %4353 = vmatprep.mubr.f32.mxu0 0.0
        %4354 = vmatmul.mubr.f32.gmra.mxu0 %v4109
        %v4355 = vpop.f32.mrf.mxu0
        %v4356 = vadd.f32 0.0, %v4355
        %v4357 = vpop.f32.mrf.mxu0
        %4358 = vmatprep.mubr.f32.mxu0 0.0
        %4359 = vmatmul.mubr.f32.gmra.mxu0 %v4111
        %v4360 = vpop.f32.mrf.mxu0
        %v4361 = vadd.f32 0.0, %v4360
        %v4362 = vpop.f32.mrf.mxu0
        %4363 = vmatprep.mubr.f32.mxu0 0.0
        %4364 = vmatmul.mubr.f32.gmra.mxu0 %v4114
        %v4365 = vpop.f32.mrf.mxu0
        %v4366 = vadd.f32 0.0, %v4365
        %v4367 = vpop.f32.mrf.mxu0
        %4368 = vmatprep.mubr.f32.mxu0 0.0
        %4369 = vmatmul.mubr.f32.gmra.mxu0 %v4116
        %v4370 = vpop.f32.mrf.mxu0
        %v4371 = vadd.f32 0.0, %v4370
        %v4372 = vpop.f32.mrf.mxu0
        %4373 = vmatprep.mubr.f32.mxu0 0.0
        %4374 = vmatmul.mubr.f32.gmra.mxu0 %v4119
        %v4375 = vpop.f32.mrf.mxu0
        %v4376 = vadd.f32 0.0, %v4375
        %v4377 = vpop.f32.mrf.mxu0
        %4378 = vmatprep.mubr.f32.mxu0 0.0
        %4379 = vmatmul.mubr.f32.gmra.mxu0 %v4121
        %v4380 = vpop.f32.mrf.mxu0
        %v4381 = vadd.f32 0.0, %v4380
        %v4382 = vpop.f32.mrf.mxu0
        %4383 = vmatprep.mubr.f32.mxu0 0.0
        %4384 = vmatmul.mubr.f32.gmra.mxu0 %v4124
        %v4385 = vpop.f32.mrf.mxu0
        %v4386 = vadd.f32 0.0, %v4385
        %v4387 = vpop.f32.mrf.mxu0
        %4388 = vmatprep.mubr.f32.mxu0 0.0
        %4389 = vmatmul.mubr.f32.gmra.mxu0 %v4126
        %v4390 = vpop.f32.mrf.mxu0
        %v4391 = vadd.f32 0.0, %v4390
        %v4392 = vpop.f32.mrf.mxu0
        %4393 = vmatprep.mubr.f32.mxu0 0.0
        %4394 = vmatmul.mubr.f32.gmra.mxu0 %v4129
        %v4395 = vpop.f32.mrf.mxu0
        %v4396 = vadd.f32 0.0, %v4395
        %v4397 = vpop.f32.mrf.mxu0
        %4398 = vmatprep.mubr.f32.mxu0 0.0
        %4399 = vmatmul.mubr.f32.gmra.mxu0 %v4131
        %v4400 = vpop.f32.mrf.mxu0
        %v4401 = vadd.f32 0.0, %v4400
        %v4402 = vpop.f32.mrf.mxu0
        %4403 = vdwg.mxu0
        %v4404 = vadd.f32 %v3899, %v4246
        %v4405 = vadd.f32 %v3904, %v4251
        %v4406 = vadd.f32 %v3909, %v4256
        %v4407 = vadd.f32 %v3914, %v4261
        %v4408 = vadd.f32 %v3919, %v4266
        %v4409 = vadd.f32 %v3924, %v4271
        %v4410 = vadd.f32 %v3929, %v4276
        %v4411 = vadd.f32 %v3934, %v4281
        %v4412 = vadd.f32 %v3939, %v4286
        %v4413 = vadd.f32 %v3944, %v4291
        %v4414 = vadd.f32 %v3949, %v4296
        %v4415 = vadd.f32 %v3954, %v4301
        %v4416 = vadd.f32 %v3959, %v4306
        %v4417 = vadd.f32 %v3964, %v4311
        %v4418 = vadd.f32 %v3969, %v4316
        %v4419 = vadd.f32 %v3974, %v4321
        %v4420 = vadd.f32 %v3979, %v4326
        %v4421 = vadd.f32 %v3984, %v4331
        %v4422 = vadd.f32 %v3989, %v4336
        %v4423 = vadd.f32 %v3994, %v4341
        %v4424 = vadd.f32 %v3999, %v4346
        %v4425 = vadd.f32 %v4004, %v4351
        %v4426 = vadd.f32 %v4009, %v4356
        %v4427 = vadd.f32 %v4014, %v4361
        %v4428 = vadd.f32 %v4019, %v4366
        %v4429 = vadd.f32 %v4024, %v4371
        %v4430 = vadd.f32 %v4029, %v4376
        %v4431 = vadd.f32 %v4034, %v4381
        %v4432 = vadd.f32 %v4039, %v4386
        %v4433 = vadd.f32 %v4044, %v4391
        %v4434 = vadd.f32 %v4049, %v4396
        %v4435 = vadd.f32 %v4054, %v4401
        %s4436 = scalar_lea.vmem [#allocation7], 384
        %v4437 = vld [vmem:[%s4436] sm:$0xff]
        %v4438 = vld [vmem:[%s4436 + $0x8] sm:$0xff]
        %v4439 = vld [vmem:[%s4436 + $0x10] sm:$0xff]
        %v4440 = vld [vmem:[%s4436 + $0x18] sm:$0xff]
        %v4441 = vld [vmem:[%s4436 + $0x20] sm:$0xff]
        %v4442 = vld [vmem:[%s4436 + $0x28] sm:$0xff]
        %v4443 = vld [vmem:[%s4436 + $0x30] sm:$0xff]
        %v4444 = vld [vmem:[%s4436 + $0x38] sm:$0xff]
        %v4445 = vld [vmem:[%s4436 + $0x40] sm:$0xff]
        %v4446 = vld [vmem:[%s4436 + $0x48] sm:$0xff]
        %v4447 = vld [vmem:[%s4436 + $0x50] sm:$0xff]
        %v4448 = vld [vmem:[%s4436 + $0x58] sm:$0xff]
        %v4449 = vld [vmem:[%s4436 + $0x60] sm:$0xff]
        %v4450 = vld [vmem:[%s4436 + $0x68] sm:$0xff]
        %v4451 = vld [vmem:[%s4436 + $0x70] sm:$0xff]
        %v4452 = vld [vmem:[%s4436 + $0x78] sm:$0xff]
        %4453 = vmatprep.subr.mxu0 0.0
        %4454 = vmatpush1.msra.mxu0 %v4452
        %4455 = vmatprep.subr.mxu0 0.0
        %4456 = vmatpush1.msra.mxu0 %v4451
        %4457 = vmatprep.subr.mxu0 0.0
        %4458 = vmatpush1.msra.mxu0 %v4450
        %4459 = vmatprep.subr.mxu0 0.0
        %4460 = vmatpush1.msra.mxu0 %v4449
        %4461 = vmatprep.subr.mxu0 0.0
        %4462 = vmatpush1.msra.mxu0 %v4448
        %4463 = vmatprep.subr.mxu0 0.0
        %4464 = vmatpush1.msra.mxu0 %v4447
        %4465 = vmatprep.subr.mxu0 0.0
        %4466 = vmatpush1.msra.mxu0 %v4446
        %4467 = vmatprep.subr.mxu0 0.0
        %4468 = vmatpush1.msra.mxu0 %v4445
        %4469 = vmatprep.subr.mxu0 0.0
        %4470 = vmatpush1.msra.mxu0 %v4444
        %4471 = vmatprep.subr.mxu0 0.0
        %4472 = vmatpush1.msra.mxu0 %v4443
        %4473 = vmatprep.subr.mxu0 0.0
        %4474 = vmatpush1.msra.mxu0 %v4442
        %4475 = vmatprep.subr.mxu0 0.0
        %4476 = vmatpush1.msra.mxu0 %v4441
        %4477 = vmatprep.subr.mxu0 0.0
        %4478 = vmatpush1.msra.mxu0 %v4440
        %4479 = vmatprep.subr.mxu0 0.0
        %4480 = vmatpush1.msra.mxu0 %v4439
        %4481 = vmatprep.subr.mxu0 0.0
        %4482 = vmatpush1.msra.mxu0 %v4438
        %4483 = vmatprep.subr.mxu0 0.0
        %4484 = vmatpush1.msra.mxu0 %v4437
        %4485 = vmatprep.subr.mxu0 0.0
        %4486 = vmatpush2.msra.mxu0 0.0
        %4487 = vmatprep.subr.mxu0 0.0
        %4488 = vmatpush2.msra.mxu0 0.0
        %4489 = vmatprep.subr.mxu0 0.0
        %4490 = vmatpush2.msra.mxu0 0.0
        %4491 = vmatprep.subr.mxu0 0.0
        %4492 = vmatpush2.msra.mxu0 0.0
        %4493 = vmatprep.subr.mxu0 0.0
        %4494 = vmatpush2.msra.mxu0 0.0
        %4495 = vmatprep.subr.mxu0 0.0
        %4496 = vmatpush2.msra.mxu0 0.0
        %4497 = vmatprep.subr.mxu0 0.0
        %4498 = vmatpush2.msra.mxu0 0.0
        %4499 = vmatprep.subr.mxu0 0.0
        %4500 = vmatpush2.msra.mxu0 0.0
        %4501 = vmatprep.subr.mxu0 0.0
        %4502 = vmatpush2.msra.mxu0 0.0
        %4503 = vmatprep.subr.mxu0 0.0
        %4504 = vmatpush2.msra.mxu0 0.0
        %4505 = vmatprep.subr.mxu0 0.0
        %4506 = vmatpush2.msra.mxu0 0.0
        %4507 = vmatprep.subr.mxu0 0.0
        %4508 = vmatpush2.msra.mxu0 0.0
        %4509 = vmatprep.subr.mxu0 0.0
        %4510 = vmatpush2.msra.mxu0 0.0
        %4511 = vmatprep.subr.mxu0 0.0
        %4512 = vmatpush2.msra.mxu0 0.0
        %4513 = vmatprep.subr.mxu0 0.0
        %4514 = vmatpush2.msra.mxu0 0.0
        %4515 = vmatprep.subr.mxu0 0.0
        %4516 = vmatpush2.msra.mxu0 0.0
        %4517 = vmatprep.mubr.f32.mxu0 0.0
        %4518 = vmatmul.mubr.f32.gmra.mxu0 %v3407
        %v4519 = vpop.f32.mrf.mxu0
        %v4520 = vadd.f32 0.0, %v4519
        %v4521 = vpop.f32.mrf.mxu0
        %4522 = vmatprep.mubr.f32.mxu0 0.0
        %4523 = vmatmul.mubr.f32.gmra.mxu0 %v3313
        %v4524 = vpop.f32.mrf.mxu0
        %v4525 = vadd.f32 0.0, %v4524
        %v4526 = vpop.f32.mrf.mxu0
        %4527 = vmatprep.mubr.f32.mxu0 0.0
        %4528 = vmatmul.mubr.f32.gmra.mxu0 %v3408
        %v4529 = vpop.f32.mrf.mxu0
        %v4530 = vadd.f32 0.0, %v4529
        %v4531 = vpop.f32.mrf.mxu0
        %4532 = vmatprep.mubr.f32.mxu0 0.0
        %4533 = vmatmul.mubr.f32.gmra.mxu0 %v3316
        %v4534 = vpop.f32.mrf.mxu0
        %v4535 = vadd.f32 0.0, %v4534
        %v4536 = vpop.f32.mrf.mxu0
        %4537 = vmatprep.mubr.f32.mxu0 0.0
        %4538 = vmatmul.mubr.f32.gmra.mxu0 %v3409
        %v4539 = vpop.f32.mrf.mxu0
        %v4540 = vadd.f32 0.0, %v4539
        %v4541 = vpop.f32.mrf.mxu0
        %4542 = vmatprep.mubr.f32.mxu0 0.0
        %4543 = vmatmul.mubr.f32.gmra.mxu0 %v3319
        %v4544 = vpop.f32.mrf.mxu0
        %v4545 = vadd.f32 0.0, %v4544
        %v4546 = vpop.f32.mrf.mxu0
        %4547 = vmatprep.mubr.f32.mxu0 0.0
        %4548 = vmatmul.mubr.f32.gmra.mxu0 %v3410
        %v4549 = vpop.f32.mrf.mxu0
        %v4550 = vadd.f32 0.0, %v4549
        %v4551 = vpop.f32.mrf.mxu0
        %4552 = vmatprep.mubr.f32.mxu0 0.0
        %4553 = vmatmul.mubr.f32.gmra.mxu0 %v3322
        %v4554 = vpop.f32.mrf.mxu0
        %v4555 = vadd.f32 0.0, %v4554
        %v4556 = vpop.f32.mrf.mxu0
        %4557 = vmatprep.mubr.f32.mxu0 0.0
        %4558 = vmatmul.mubr.f32.gmra.mxu0 %v3411
        %v4559 = vpop.f32.mrf.mxu0
        %v4560 = vadd.f32 0.0, %v4559
        %v4561 = vpop.f32.mrf.mxu0
        %4562 = vmatprep.mubr.f32.mxu0 0.0
        %4563 = vmatmul.mubr.f32.gmra.mxu0 %v3325
        %v4564 = vpop.f32.mrf.mxu0
        %v4565 = vadd.f32 0.0, %v4564
        %v4566 = vpop.f32.mrf.mxu0
        %4567 = vmatprep.mubr.f32.mxu0 0.0
        %4568 = vmatmul.mubr.f32.gmra.mxu0 %v3412
        %v4569 = vpop.f32.mrf.mxu0
        %v4570 = vadd.f32 0.0, %v4569
        %v4571 = vpop.f32.mrf.mxu0
        %4572 = vmatprep.mubr.f32.mxu0 0.0
        %4573 = vmatmul.mubr.f32.gmra.mxu0 %v3328
        %v4574 = vpop.f32.mrf.mxu0
        %v4575 = vadd.f32 0.0, %v4574
        %v4576 = vpop.f32.mrf.mxu0
        %4577 = vmatprep.mubr.f32.mxu0 0.0
        %4578 = vmatmul.mubr.f32.gmra.mxu0 %v3413
        %v4579 = vpop.f32.mrf.mxu0
        %v4580 = vadd.f32 0.0, %v4579
        %v4581 = vpop.f32.mrf.mxu0
        %4582 = vmatprep.mubr.f32.mxu0 0.0
        %4583 = vmatmul.mubr.f32.gmra.mxu0 %v3331
        %v4584 = vpop.f32.mrf.mxu0
        %v4585 = vadd.f32 0.0, %v4584
        %v4586 = vpop.f32.mrf.mxu0
        %4587 = vmatprep.mubr.f32.mxu0 0.0
        %4588 = vmatmul.mubr.f32.gmra.mxu0 %v3414
        %v4589 = vpop.f32.mrf.mxu0
        %v4590 = vadd.f32 0.0, %v4589
        %v4591 = vpop.f32.mrf.mxu0
        %4592 = vmatprep.mubr.f32.mxu0 0.0
        %4593 = vmatmul.mubr.f32.gmra.mxu0 %v3334
        %v4594 = vpop.f32.mrf.mxu0
        %v4595 = vadd.f32 0.0, %v4594
        %v4596 = vpop.f32.mrf.mxu0
        %4597 = vmatprep.mubr.f32.mxu0 0.0
        %4598 = vmatmul.mubr.f32.gmra.mxu0 %v3415
        %v4599 = vpop.f32.mrf.mxu0
        %v4600 = vadd.f32 0.0, %v4599
        %v4601 = vpop.f32.mrf.mxu0
        %4602 = vmatprep.mubr.f32.mxu0 0.0
        %4603 = vmatmul.mubr.f32.gmra.mxu0 %v3337
        %v4604 = vpop.f32.mrf.mxu0
        %v4605 = vadd.f32 0.0, %v4604
        %v4606 = vpop.f32.mrf.mxu0
        %4607 = vmatprep.mubr.f32.mxu0 0.0
        %4608 = vmatmul.mubr.f32.gmra.mxu0 %v3416
        %v4609 = vpop.f32.mrf.mxu0
        %v4610 = vadd.f32 0.0, %v4609
        %v4611 = vpop.f32.mrf.mxu0
        %4612 = vmatprep.mubr.f32.mxu0 0.0
        %4613 = vmatmul.mubr.f32.gmra.mxu0 %v3340
        %v4614 = vpop.f32.mrf.mxu0
        %v4615 = vadd.f32 0.0, %v4614
        %v4616 = vpop.f32.mrf.mxu0
        %4617 = vmatprep.mubr.f32.mxu0 0.0
        %4618 = vmatmul.mubr.f32.gmra.mxu0 %v3417
        %v4619 = vpop.f32.mrf.mxu0
        %v4620 = vadd.f32 0.0, %v4619
        %v4621 = vpop.f32.mrf.mxu0
        %4622 = vmatprep.mubr.f32.mxu0 0.0
        %4623 = vmatmul.mubr.f32.gmra.mxu0 %v3343
        %v4624 = vpop.f32.mrf.mxu0
        %v4625 = vadd.f32 0.0, %v4624
        %v4626 = vpop.f32.mrf.mxu0
        %4627 = vmatprep.mubr.f32.mxu0 0.0
        %4628 = vmatmul.mubr.f32.gmra.mxu0 %v3418
        %v4629 = vpop.f32.mrf.mxu0
        %v4630 = vadd.f32 0.0, %v4629
        %v4631 = vpop.f32.mrf.mxu0
        %4632 = vmatprep.mubr.f32.mxu0 0.0
        %4633 = vmatmul.mubr.f32.gmra.mxu0 %v3346
        %v4634 = vpop.f32.mrf.mxu0
        %v4635 = vadd.f32 0.0, %v4634
        %v4636 = vpop.f32.mrf.mxu0
        %4637 = vmatprep.mubr.f32.mxu0 0.0
        %4638 = vmatmul.mubr.f32.gmra.mxu0 %v3419
        %v4639 = vpop.f32.mrf.mxu0
        %v4640 = vadd.f32 0.0, %v4639
        %v4641 = vpop.f32.mrf.mxu0
        %4642 = vmatprep.mubr.f32.mxu0 0.0
        %4643 = vmatmul.mubr.f32.gmra.mxu0 %v3349
        %v4644 = vpop.f32.mrf.mxu0
        %v4645 = vadd.f32 0.0, %v4644
        %v4646 = vpop.f32.mrf.mxu0
        %4647 = vmatprep.mubr.f32.mxu0 0.0
        %4648 = vmatmul.mubr.f32.gmra.mxu0 %v3420
        %v4649 = vpop.f32.mrf.mxu0
        %v4650 = vadd.f32 0.0, %v4649
        %v4651 = vpop.f32.mrf.mxu0
        %4652 = vmatprep.mubr.f32.mxu0 0.0
        %4653 = vmatmul.mubr.f32.gmra.mxu0 %v3352
        %v4654 = vpop.f32.mrf.mxu0
        %v4655 = vadd.f32 0.0, %v4654
        %v4656 = vpop.f32.mrf.mxu0
        %4657 = vmatprep.mubr.f32.mxu0 0.0
        %4658 = vmatmul.mubr.f32.gmra.mxu0 %v3421
        %v4659 = vpop.f32.mrf.mxu0
        %v4660 = vadd.f32 0.0, %v4659
        %v4661 = vpop.f32.mrf.mxu0
        %4662 = vmatprep.mubr.f32.mxu0 0.0
        %4663 = vmatmul.mubr.f32.gmra.mxu0 %v3355
        %v4664 = vpop.f32.mrf.mxu0
        %v4665 = vadd.f32 0.0, %v4664
        %v4666 = vpop.f32.mrf.mxu0
        %4667 = vmatprep.mubr.f32.mxu0 0.0
        %4668 = vmatmul.mubr.f32.gmra.mxu0 %v3422
        %v4669 = vpop.f32.mrf.mxu0
        %v4670 = vadd.f32 0.0, %v4669
        %v4671 = vpop.f32.mrf.mxu0
        %4672 = vmatprep.mubr.f32.mxu0 0.0
        %4673 = vmatmul.mubr.f32.gmra.mxu0 %v3358
        %v4674 = vpop.f32.mrf.mxu0
        %v4675 = vadd.f32 0.0, %v4674
        %v4676 = vpop.f32.mrf.mxu0
        %4677 = vdwg.mxu0
        %v4678 = vadd.f32 %v4404, %v4520
        %v4679 = vadd.f32 %v4405, %v4525
        %v4680 = vadd.f32 %v4406, %v4530
        %v4681 = vadd.f32 %v4407, %v4535
        %v4682 = vadd.f32 %v4408, %v4540
        %v4683 = vadd.f32 %v4409, %v4545
        %v4684 = vadd.f32 %v4410, %v4550
        %v4685 = vadd.f32 %v4411, %v4555
        %v4686 = vadd.f32 %v4412, %v4560
        %v4687 = vadd.f32 %v4413, %v4565
        %v4688 = vadd.f32 %v4414, %v4570
        %v4689 = vadd.f32 %v4415, %v4575
        %v4690 = vadd.f32 %v4416, %v4580
        %v4691 = vadd.f32 %v4417, %v4585
        %v4692 = vadd.f32 %v4418, %v4590
        %v4693 = vadd.f32 %v4419, %v4595
        %v4694 = vadd.f32 %v4420, %v4600
        %v4695 = vadd.f32 %v4421, %v4605
        %v4696 = vadd.f32 %v4422, %v4610
        %v4697 = vadd.f32 %v4423, %v4615
        %v4698 = vadd.f32 %v4424, %v4620
        %v4699 = vadd.f32 %v4425, %v4625
        %v4700 = vadd.f32 %v4426, %v4630
        %v4701 = vadd.f32 %v4427, %v4635
        %v4702 = vadd.f32 %v4428, %v4640
        %v4703 = vadd.f32 %v4429, %v4645
        %v4704 = vadd.f32 %v4430, %v4650
        %v4705 = vadd.f32 %v4431, %v4655
        %v4706 = vadd.f32 %v4432, %v4660
        %v4707 = vadd.f32 %v4433, %v4665
        %v4708 = vadd.f32 %v4434, %v4670
        %v4709 = vadd.f32 %v4435, %v4675
        %v4712 = vrot.slane %v3422, 1
        %v4713 = vrot.slane %v3358, 1
        %v4714 = vsel %vm548, %v4712, %v4713
        %v4715 = vrot.slane %v3438, 1
        %v4716 = vsel %vm548, %v4713, %v4715
        %s4719 = scalar_lea.vmem [#allocation7], 512
        %v4720 = vld [vmem:[%s4719] sm:$0xff]
        %v4721 = vld [vmem:[%s4719 + $0x8] sm:$0xff]
        %v4722 = vld [vmem:[%s4719 + $0x10] sm:$0xff]
        %v4723 = vld [vmem:[%s4719 + $0x18] sm:$0xff]
        %v4724 = vld [vmem:[%s4719 + $0x20] sm:$0xff]
        %v4725 = vld [vmem:[%s4719 + $0x28] sm:$0xff]
        %v4726 = vld [vmem:[%s4719 + $0x30] sm:$0xff]
        %v4727 = vld [vmem:[%s4719 + $0x38] sm:$0xff]
        %v4728 = vld [vmem:[%s4719 + $0x40] sm:$0xff]
        %v4729 = vld [vmem:[%s4719 + $0x48] sm:$0xff]
        %v4730 = vld [vmem:[%s4719 + $0x50] sm:$0xff]
        %v4731 = vld [vmem:[%s4719 + $0x58] sm:$0xff]
        %v4732 = vld [vmem:[%s4719 + $0x60] sm:$0xff]
        %v4733 = vld [vmem:[%s4719 + $0x68] sm:$0xff]
        %v4734 = vld [vmem:[%s4719 + $0x70] sm:$0xff]
        %v4735 = vld [vmem:[%s4719 + $0x78] sm:$0xff]
        %4736 = vmatprep.subr.mxu0 0.0
        %4737 = vmatpush1.msra.mxu0 %v4735
        %4738 = vmatprep.subr.mxu0 0.0
        %4739 = vmatpush1.msra.mxu0 %v4734
        %4740 = vmatprep.subr.mxu0 0.0
        %4741 = vmatpush1.msra.mxu0 %v4733
        %4742 = vmatprep.subr.mxu0 0.0
        %4743 = vmatpush1.msra.mxu0 %v4732
        %4744 = vmatprep.subr.mxu0 0.0
        %4745 = vmatpush1.msra.mxu0 %v4731
        %4746 = vmatprep.subr.mxu0 0.0
        %4747 = vmatpush1.msra.mxu0 %v4730
        %4748 = vmatprep.subr.mxu0 0.0
        %4749 = vmatpush1.msra.mxu0 %v4729
        %4750 = vmatprep.subr.mxu0 0.0
        %4751 = vmatpush1.msra.mxu0 %v4728
        %4752 = vmatprep.subr.mxu0 0.0
        %4753 = vmatpush1.msra.mxu0 %v4727
        %4754 = vmatprep.subr.mxu0 0.0
        %4755 = vmatpush1.msra.mxu0 %v4726
        %4756 = vmatprep.subr.mxu0 0.0
        %4757 = vmatpush1.msra.mxu0 %v4725
        %4758 = vmatprep.subr.mxu0 0.0
        %4759 = vmatpush1.msra.mxu0 %v4724
        %4760 = vmatprep.subr.mxu0 0.0
        %4761 = vmatpush1.msra.mxu0 %v4723
        %4762 = vmatprep.subr.mxu0 0.0
        %4763 = vmatpush1.msra.mxu0 %v4722
        %4764 = vmatprep.subr.mxu0 0.0
        %4765 = vmatpush1.msra.mxu0 %v4721
        %4766 = vmatprep.subr.mxu0 0.0
        %4767 = vmatpush1.msra.mxu0 %v4720
        %4768 = vmatprep.subr.mxu0 0.0
        %4769 = vmatpush2.msra.mxu0 0.0
        %4770 = vmatprep.subr.mxu0 0.0
        %4771 = vmatpush2.msra.mxu0 0.0
        %4772 = vmatprep.subr.mxu0 0.0
        %4773 = vmatpush2.msra.mxu0 0.0
        %4774 = vmatprep.subr.mxu0 0.0
        %4775 = vmatpush2.msra.mxu0 0.0
        %4776 = vmatprep.subr.mxu0 0.0
        %4777 = vmatpush2.msra.mxu0 0.0
        %4778 = vmatprep.subr.mxu0 0.0
        %4779 = vmatpush2.msra.mxu0 0.0
        %4780 = vmatprep.subr.mxu0 0.0
        %4781 = vmatpush2.msra.mxu0 0.0
        %4782 = vmatprep.subr.mxu0 0.0
        %4783 = vmatpush2.msra.mxu0 0.0
        %4784 = vmatprep.subr.mxu0 0.0
        %4785 = vmatpush2.msra.mxu0 0.0
        %4786 = vmatprep.subr.mxu0 0.0
        %4787 = vmatpush2.msra.mxu0 0.0
        %4788 = vmatprep.subr.mxu0 0.0
        %4789 = vmatpush2.msra.mxu0 0.0
        %4790 = vmatprep.subr.mxu0 0.0
        %4791 = vmatpush2.msra.mxu0 0.0
        %4792 = vmatprep.subr.mxu0 0.0
        %4793 = vmatpush2.msra.mxu0 0.0
        %4794 = vmatprep.subr.mxu0 0.0
        %4795 = vmatpush2.msra.mxu0 0.0
        %4796 = vmatprep.subr.mxu0 0.0
        %4797 = vmatpush2.msra.mxu0 0.0
        %4798 = vmatprep.subr.mxu0 0.0
        %4799 = vmatpush2.msra.mxu0 0.0
        %4800 = vmatprep.mubr.f32.mxu0 0.0
        %4801 = vmatmul.mubr.f32.gmra.mxu0 %v3487
        %v4802 = vpop.f32.mrf.mxu0
        %v4803 = vadd.f32 0.0, %v4802
        %v4804 = vpop.f32.mrf.mxu0
        %4805 = vmatprep.mubr.f32.mxu0 0.0
        %4806 = vmatmul.mubr.f32.gmra.mxu0 %v3489
        %v4807 = vpop.f32.mrf.mxu0
        %v4808 = vadd.f32 0.0, %v4807
        %v4809 = vpop.f32.mrf.mxu0
        %4810 = vmatprep.mubr.f32.mxu0 0.0
        %4811 = vmatmul.mubr.f32.gmra.mxu0 %v3492
        %v4812 = vpop.f32.mrf.mxu0
        %v4813 = vadd.f32 0.0, %v4812
        %v4814 = vpop.f32.mrf.mxu0
        %4815 = vmatprep.mubr.f32.mxu0 0.0
        %4816 = vmatmul.mubr.f32.gmra.mxu0 %v3494
        %v4817 = vpop.f32.mrf.mxu0
        %v4818 = vadd.f32 0.0, %v4817
        %v4819 = vpop.f32.mrf.mxu0
        %4820 = vmatprep.mubr.f32.mxu0 0.0
        %4821 = vmatmul.mubr.f32.gmra.mxu0 %v3497
        %v4822 = vpop.f32.mrf.mxu0
        %v4823 = vadd.f32 0.0, %v4822
        %v4824 = vpop.f32.mrf.mxu0
        %4825 = vmatprep.mubr.f32.mxu0 0.0
        %4826 = vmatmul.mubr.f32.gmra.mxu0 %v3499
        %v4827 = vpop.f32.mrf.mxu0
        %v4828 = vadd.f32 0.0, %v4827
        %v4829 = vpop.f32.mrf.mxu0
        %4830 = vmatprep.mubr.f32.mxu0 0.0
        %4831 = vmatmul.mubr.f32.gmra.mxu0 %v3502
        %v4832 = vpop.f32.mrf.mxu0
        %v4833 = vadd.f32 0.0, %v4832
        %v4834 = vpop.f32.mrf.mxu0
        %4835 = vmatprep.mubr.f32.mxu0 0.0
        %4836 = vmatmul.mubr.f32.gmra.mxu0 %v3504
        %v4837 = vpop.f32.mrf.mxu0
        %v4838 = vadd.f32 0.0, %v4837
        %v4839 = vpop.f32.mrf.mxu0
        %4840 = vmatprep.mubr.f32.mxu0 0.0
        %4841 = vmatmul.mubr.f32.gmra.mxu0 %v3507
        %v4842 = vpop.f32.mrf.mxu0
        %v4843 = vadd.f32 0.0, %v4842
        %v4844 = vpop.f32.mrf.mxu0
        %4845 = vmatprep.mubr.f32.mxu0 0.0
        %4846 = vmatmul.mubr.f32.gmra.mxu0 %v3509
        %v4847 = vpop.f32.mrf.mxu0
        %v4848 = vadd.f32 0.0, %v4847
        %v4849 = vpop.f32.mrf.mxu0
        %4850 = vmatprep.mubr.f32.mxu0 0.0
        %4851 = vmatmul.mubr.f32.gmra.mxu0 %v3512
        %v4852 = vpop.f32.mrf.mxu0
        %v4853 = vadd.f32 0.0, %v4852
        %v4854 = vpop.f32.mrf.mxu0
        %4855 = vmatprep.mubr.f32.mxu0 0.0
        %4856 = vmatmul.mubr.f32.gmra.mxu0 %v3514
        %v4857 = vpop.f32.mrf.mxu0
        %v4858 = vadd.f32 0.0, %v4857
        %v4859 = vpop.f32.mrf.mxu0
        %4860 = vmatprep.mubr.f32.mxu0 0.0
        %4861 = vmatmul.mubr.f32.gmra.mxu0 %v3517
        %v4862 = vpop.f32.mrf.mxu0
        %v4863 = vadd.f32 0.0, %v4862
        %v4864 = vpop.f32.mrf.mxu0
        %4865 = vmatprep.mubr.f32.mxu0 0.0
        %4866 = vmatmul.mubr.f32.gmra.mxu0 %v3519
        %v4867 = vpop.f32.mrf.mxu0
        %v4868 = vadd.f32 0.0, %v4867
        %v4869 = vpop.f32.mrf.mxu0
        %4870 = vmatprep.mubr.f32.mxu0 0.0
        %4871 = vmatmul.mubr.f32.gmra.mxu0 %v3522
        %v4872 = vpop.f32.mrf.mxu0
        %v4873 = vadd.f32 0.0, %v4872
        %v4874 = vpop.f32.mrf.mxu0
        %4875 = vmatprep.mubr.f32.mxu0 0.0
        %4876 = vmatmul.mubr.f32.gmra.mxu0 %v3524
        %v4877 = vpop.f32.mrf.mxu0
        %v4878 = vadd.f32 0.0, %v4877
        %v4879 = vpop.f32.mrf.mxu0
        %4880 = vmatprep.mubr.f32.mxu0 0.0
        %4881 = vmatmul.mubr.f32.gmra.mxu0 %v3527
        %v4882 = vpop.f32.mrf.mxu0
        %v4883 = vadd.f32 0.0, %v4882
        %v4884 = vpop.f32.mrf.mxu0
        %4885 = vmatprep.mubr.f32.mxu0 0.0
        %4886 = vmatmul.mubr.f32.gmra.mxu0 %v3529
        %v4887 = vpop.f32.mrf.mxu0
        %v4888 = vadd.f32 0.0, %v4887
        %v4889 = vpop.f32.mrf.mxu0
        %4890 = vmatprep.mubr.f32.mxu0 0.0
        %4891 = vmatmul.mubr.f32.gmra.mxu0 %v3532
        %v4892 = vpop.f32.mrf.mxu0
        %v4893 = vadd.f32 0.0, %v4892
        %v4894 = vpop.f32.mrf.mxu0
        %4895 = vmatprep.mubr.f32.mxu0 0.0
        %4896 = vmatmul.mubr.f32.gmra.mxu0 %v3534
        %v4897 = vpop.f32.mrf.mxu0
        %v4898 = vadd.f32 0.0, %v4897
        %v4899 = vpop.f32.mrf.mxu0
        %4900 = vmatprep.mubr.f32.mxu0 0.0
        %4901 = vmatmul.mubr.f32.gmra.mxu0 %v3537
        %v4902 = vpop.f32.mrf.mxu0
        %v4903 = vadd.f32 0.0, %v4902
        %v4904 = vpop.f32.mrf.mxu0
        %4905 = vmatprep.mubr.f32.mxu0 0.0
        %4906 = vmatmul.mubr.f32.gmra.mxu0 %v3539
        %v4907 = vpop.f32.mrf.mxu0
        %v4908 = vadd.f32 0.0, %v4907
        %v4909 = vpop.f32.mrf.mxu0
        %4910 = vmatprep.mubr.f32.mxu0 0.0
        %4911 = vmatmul.mubr.f32.gmra.mxu0 %v3542
        %v4912 = vpop.f32.mrf.mxu0
        %v4913 = vadd.f32 0.0, %v4912
        %v4914 = vpop.f32.mrf.mxu0
        %4915 = vmatprep.mubr.f32.mxu0 0.0
        %4916 = vmatmul.mubr.f32.gmra.mxu0 %v3544
        %v4917 = vpop.f32.mrf.mxu0
        %v4918 = vadd.f32 0.0, %v4917
        %v4919 = vpop.f32.mrf.mxu0
        %4920 = vmatprep.mubr.f32.mxu0 0.0
        %4921 = vmatmul.mubr.f32.gmra.mxu0 %v3547
        %v4922 = vpop.f32.mrf.mxu0
        %v4923 = vadd.f32 0.0, %v4922
        %v4924 = vpop.f32.mrf.mxu0
        %4925 = vmatprep.mubr.f32.mxu0 0.0
        %4926 = vmatmul.mubr.f32.gmra.mxu0 %v3549
        %v4927 = vpop.f32.mrf.mxu0
        %v4928 = vadd.f32 0.0, %v4927
        %v4929 = vpop.f32.mrf.mxu0
        %4930 = vmatprep.mubr.f32.mxu0 0.0
        %4931 = vmatmul.mubr.f32.gmra.mxu0 %v3552
        %v4932 = vpop.f32.mrf.mxu0
        %v4933 = vadd.f32 0.0, %v4932
        %v4934 = vpop.f32.mrf.mxu0
        %4935 = vmatprep.mubr.f32.mxu0 0.0
        %4936 = vmatmul.mubr.f32.gmra.mxu0 %v3554
        %v4937 = vpop.f32.mrf.mxu0
        %v4938 = vadd.f32 0.0, %v4937
        %v4939 = vpop.f32.mrf.mxu0
        %4940 = vmatprep.mubr.f32.mxu0 0.0
        %4941 = vmatmul.mubr.f32.gmra.mxu0 %v3557
        %v4942 = vpop.f32.mrf.mxu0
        %v4943 = vadd.f32 0.0, %v4942
        %v4944 = vpop.f32.mrf.mxu0
        %4945 = vmatprep.mubr.f32.mxu0 0.0
        %4946 = vmatmul.mubr.f32.gmra.mxu0 %v3559
        %v4947 = vpop.f32.mrf.mxu0
        %v4948 = vadd.f32 0.0, %v4947
        %v4949 = vpop.f32.mrf.mxu0
        %4950 = vmatprep.mubr.f32.mxu0 0.0
        %4951 = vmatmul.mubr.f32.gmra.mxu0 %v4714
        %v4952 = vpop.f32.mrf.mxu0
        %v4953 = vadd.f32 0.0, %v4952
        %v4954 = vpop.f32.mrf.mxu0
        %4955 = vmatprep.mubr.f32.mxu0 0.0
        %4956 = vmatmul.mubr.f32.gmra.mxu0 %v4716
        %v4957 = vpop.f32.mrf.mxu0
        %v4958 = vadd.f32 0.0, %v4957
        %v4959 = vpop.f32.mrf.mxu0
        %4960 = vdwg.mxu0
        %v4961 = vadd.f32 %v4678, %v4803
        %v4962 = vadd.f32 %v4679, %v4808
        %v4963 = vadd.f32 %v4680, %v4813
        %v4964 = vadd.f32 %v4681, %v4818
        %v4965 = vadd.f32 %v4682, %v4823
        %v4966 = vadd.f32 %v4683, %v4828
        %v4967 = vadd.f32 %v4684, %v4833
        %v4968 = vadd.f32 %v4685, %v4838
        %v4969 = vadd.f32 %v4686, %v4843
        %v4970 = vadd.f32 %v4687, %v4848
        %v4971 = vadd.f32 %v4688, %v4853
        %v4972 = vadd.f32 %v4689, %v4858
        %v4973 = vadd.f32 %v4690, %v4863
        %v4974 = vadd.f32 %v4691, %v4868
        %v4975 = vadd.f32 %v4692, %v4873
        %v4976 = vadd.f32 %v4693, %v4878
        %v4977 = vadd.f32 %v4694, %v4883
        %v4978 = vadd.f32 %v4695, %v4888
        %v4979 = vadd.f32 %v4696, %v4893
        %v4980 = vadd.f32 %v4697, %v4898
        %v4981 = vadd.f32 %v4698, %v4903
        %v4982 = vadd.f32 %v4699, %v4908
        %v4983 = vadd.f32 %v4700, %v4913
        %v4984 = vadd.f32 %v4701, %v4918
        %v4985 = vadd.f32 %v4702, %v4923
        %v4986 = vadd.f32 %v4703, %v4928
        %v4987 = vadd.f32 %v4704, %v4933
        %v4988 = vadd.f32 %v4705, %v4938
        %v4989 = vadd.f32 %v4706, %v4943
        %v4990 = vadd.f32 %v4707, %v4948
        %v4991 = vadd.f32 %v4708, %v4953
        %v4992 = vadd.f32 %v4709, %v4958
        %v4993 = vrot.slane %v3422, 2
        %v4994 = vrot.slane %v3358, 2
        %v4995 = vsel %vm1128, %v4993, %v4994
        %v4996 = vrot.slane %v3438, 2
        %v4997 = vsel %vm1128, %v4994, %v4996
        %s5000 = scalar_lea.vmem [#allocation7], 640
        %v5001 = vld [vmem:[%s5000] sm:$0xff]
        %v5002 = vld [vmem:[%s5000 + $0x8] sm:$0xff]
        %v5003 = vld [vmem:[%s5000 + $0x10] sm:$0xff]
        %v5004 = vld [vmem:[%s5000 + $0x18] sm:$0xff]
        %v5005 = vld [vmem:[%s5000 + $0x20] sm:$0xff]
        %v5006 = vld [vmem:[%s5000 + $0x28] sm:$0xff]
        %v5007 = vld [vmem:[%s5000 + $0x30] sm:$0xff]
        %v5008 = vld [vmem:[%s5000 + $0x38] sm:$0xff]
        %v5009 = vld [vmem:[%s5000 + $0x40] sm:$0xff]
        %v5010 = vld [vmem:[%s5000 + $0x48] sm:$0xff]
        %v5011 = vld [vmem:[%s5000 + $0x50] sm:$0xff]
        %v5012 = vld [vmem:[%s5000 + $0x58] sm:$0xff]
        %v5013 = vld [vmem:[%s5000 + $0x60] sm:$0xff]
        %v5014 = vld [vmem:[%s5000 + $0x68] sm:$0xff]
        %v5015 = vld [vmem:[%s5000 + $0x70] sm:$0xff]
        %v5016 = vld [vmem:[%s5000 + $0x78] sm:$0xff]
        %5017 = vmatprep.subr.mxu0 0.0
        %5018 = vmatpush1.msra.mxu0 %v5016
        %5019 = vmatprep.subr.mxu0 0.0
        %5020 = vmatpush1.msra.mxu0 %v5015
        %5021 = vmatprep.subr.mxu0 0.0
        %5022 = vmatpush1.msra.mxu0 %v5014
        %5023 = vmatprep.subr.mxu0 0.0
        %5024 = vmatpush1.msra.mxu0 %v5013
        %5025 = vmatprep.subr.mxu0 0.0
        %5026 = vmatpush1.msra.mxu0 %v5012
        %5027 = vmatprep.subr.mxu0 0.0
        %5028 = vmatpush1.msra.mxu0 %v5011
        %5029 = vmatprep.subr.mxu0 0.0
        %5030 = vmatpush1.msra.mxu0 %v5010
        %5031 = vmatprep.subr.mxu0 0.0
        %5032 = vmatpush1.msra.mxu0 %v5009
        %5033 = vmatprep.subr.mxu0 0.0
        %5034 = vmatpush1.msra.mxu0 %v5008
        %5035 = vmatprep.subr.mxu0 0.0
        %5036 = vmatpush1.msra.mxu0 %v5007
        %5037 = vmatprep.subr.mxu0 0.0
        %5038 = vmatpush1.msra.mxu0 %v5006
        %5039 = vmatprep.subr.mxu0 0.0
        %5040 = vmatpush1.msra.mxu0 %v5005
        %5041 = vmatprep.subr.mxu0 0.0
        %5042 = vmatpush1.msra.mxu0 %v5004
        %5043 = vmatprep.subr.mxu0 0.0
        %5044 = vmatpush1.msra.mxu0 %v5003
        %5045 = vmatprep.subr.mxu0 0.0
        %5046 = vmatpush1.msra.mxu0 %v5002
        %5047 = vmatprep.subr.mxu0 0.0
        %5048 = vmatpush1.msra.mxu0 %v5001
        %5049 = vmatprep.subr.mxu0 0.0
        %5050 = vmatpush2.msra.mxu0 0.0
        %5051 = vmatprep.subr.mxu0 0.0
        %5052 = vmatpush2.msra.mxu0 0.0
        %5053 = vmatprep.subr.mxu0 0.0
        %5054 = vmatpush2.msra.mxu0 0.0
        %5055 = vmatprep.subr.mxu0 0.0
        %5056 = vmatpush2.msra.mxu0 0.0
        %5057 = vmatprep.subr.mxu0 0.0
        %5058 = vmatpush2.msra.mxu0 0.0
        %5059 = vmatprep.subr.mxu0 0.0
        %5060 = vmatpush2.msra.mxu0 0.0
        %5061 = vmatprep.subr.mxu0 0.0
        %5062 = vmatpush2.msra.mxu0 0.0
        %5063 = vmatprep.subr.mxu0 0.0
        %5064 = vmatpush2.msra.mxu0 0.0
        %5065 = vmatprep.subr.mxu0 0.0
        %5066 = vmatpush2.msra.mxu0 0.0
        %5067 = vmatprep.subr.mxu0 0.0
        %5068 = vmatpush2.msra.mxu0 0.0
        %5069 = vmatprep.subr.mxu0 0.0
        %5070 = vmatpush2.msra.mxu0 0.0
        %5071 = vmatprep.subr.mxu0 0.0
        %5072 = vmatpush2.msra.mxu0 0.0
        %5073 = vmatprep.subr.mxu0 0.0
        %5074 = vmatpush2.msra.mxu0 0.0
        %5075 = vmatprep.subr.mxu0 0.0
        %5076 = vmatpush2.msra.mxu0 0.0
        %5077 = vmatprep.subr.mxu0 0.0
        %5078 = vmatpush2.msra.mxu0 0.0
        %5079 = vmatprep.subr.mxu0 0.0
        %5080 = vmatpush2.msra.mxu0 0.0
        %5081 = vmatprep.mubr.f32.mxu0 0.0
        %5082 = vmatmul.mubr.f32.gmra.mxu0 %v4059
        %v5083 = vpop.f32.mrf.mxu0
        %v5084 = vadd.f32 0.0, %v5083
        %v5085 = vpop.f32.mrf.mxu0
        %5086 = vmatprep.mubr.f32.mxu0 0.0
        %5087 = vmatmul.mubr.f32.gmra.mxu0 %v4061
        %v5088 = vpop.f32.mrf.mxu0
        %v5089 = vadd.f32 0.0, %v5088
        %v5090 = vpop.f32.mrf.mxu0
        %5091 = vmatprep.mubr.f32.mxu0 0.0
        %5092 = vmatmul.mubr.f32.gmra.mxu0 %v4064
        %v5093 = vpop.f32.mrf.mxu0
        %v5094 = vadd.f32 0.0, %v5093
        %v5095 = vpop.f32.mrf.mxu0
        %5096 = vmatprep.mubr.f32.mxu0 0.0
        %5097 = vmatmul.mubr.f32.gmra.mxu0 %v4066
        %v5098 = vpop.f32.mrf.mxu0
        %v5099 = vadd.f32 0.0, %v5098
        %v5100 = vpop.f32.mrf.mxu0
        %5101 = vmatprep.mubr.f32.mxu0 0.0
        %5102 = vmatmul.mubr.f32.gmra.mxu0 %v4069
        %v5103 = vpop.f32.mrf.mxu0
        %v5104 = vadd.f32 0.0, %v5103
        %v5105 = vpop.f32.mrf.mxu0
        %5106 = vmatprep.mubr.f32.mxu0 0.0
        %5107 = vmatmul.mubr.f32.gmra.mxu0 %v4071
        %v5108 = vpop.f32.mrf.mxu0
        %v5109 = vadd.f32 0.0, %v5108
        %v5110 = vpop.f32.mrf.mxu0
        %5111 = vmatprep.mubr.f32.mxu0 0.0
        %5112 = vmatmul.mubr.f32.gmra.mxu0 %v4074
        %v5113 = vpop.f32.mrf.mxu0
        %v5114 = vadd.f32 0.0, %v5113
        %v5115 = vpop.f32.mrf.mxu0
        %5116 = vmatprep.mubr.f32.mxu0 0.0
        %5117 = vmatmul.mubr.f32.gmra.mxu0 %v4076
        %v5118 = vpop.f32.mrf.mxu0
        %v5119 = vadd.f32 0.0, %v5118
        %v5120 = vpop.f32.mrf.mxu0
        %5121 = vmatprep.mubr.f32.mxu0 0.0
        %5122 = vmatmul.mubr.f32.gmra.mxu0 %v4079
        %v5123 = vpop.f32.mrf.mxu0
        %v5124 = vadd.f32 0.0, %v5123
        %v5125 = vpop.f32.mrf.mxu0
        %5126 = vmatprep.mubr.f32.mxu0 0.0
        %5127 = vmatmul.mubr.f32.gmra.mxu0 %v4081
        %v5128 = vpop.f32.mrf.mxu0
        %v5129 = vadd.f32 0.0, %v5128
        %v5130 = vpop.f32.mrf.mxu0
        %5131 = vmatprep.mubr.f32.mxu0 0.0
        %5132 = vmatmul.mubr.f32.gmra.mxu0 %v4084
        %v5133 = vpop.f32.mrf.mxu0
        %v5134 = vadd.f32 0.0, %v5133
        %v5135 = vpop.f32.mrf.mxu0
        %5136 = vmatprep.mubr.f32.mxu0 0.0
        %5137 = vmatmul.mubr.f32.gmra.mxu0 %v4086
        %v5138 = vpop.f32.mrf.mxu0
        %v5139 = vadd.f32 0.0, %v5138
        %v5140 = vpop.f32.mrf.mxu0
        %5141 = vmatprep.mubr.f32.mxu0 0.0
        %5142 = vmatmul.mubr.f32.gmra.mxu0 %v4089
        %v5143 = vpop.f32.mrf.mxu0
        %v5144 = vadd.f32 0.0, %v5143
        %v5145 = vpop.f32.mrf.mxu0
        %5146 = vmatprep.mubr.f32.mxu0 0.0
        %5147 = vmatmul.mubr.f32.gmra.mxu0 %v4091
        %v5148 = vpop.f32.mrf.mxu0
        %v5149 = vadd.f32 0.0, %v5148
        %v5150 = vpop.f32.mrf.mxu0
        %5151 = vmatprep.mubr.f32.mxu0 0.0
        %5152 = vmatmul.mubr.f32.gmra.mxu0 %v4094
        %v5153 = vpop.f32.mrf.mxu0
        %v5154 = vadd.f32 0.0, %v5153
        %v5155 = vpop.f32.mrf.mxu0
        %5156 = vmatprep.mubr.f32.mxu0 0.0
        %5157 = vmatmul.mubr.f32.gmra.mxu0 %v4096
        %v5158 = vpop.f32.mrf.mxu0
        %v5159 = vadd.f32 0.0, %v5158
        %v5160 = vpop.f32.mrf.mxu0
        %5161 = vmatprep.mubr.f32.mxu0 0.0
        %5162 = vmatmul.mubr.f32.gmra.mxu0 %v4099
        %v5163 = vpop.f32.mrf.mxu0
        %v5164 = vadd.f32 0.0, %v5163
        %v5165 = vpop.f32.mrf.mxu0
        %5166 = vmatprep.mubr.f32.mxu0 0.0
        %5167 = vmatmul.mubr.f32.gmra.mxu0 %v4101
        %v5168 = vpop.f32.mrf.mxu0
        %v5169 = vadd.f32 0.0, %v5168
        %v5170 = vpop.f32.mrf.mxu0
        %5171 = vmatprep.mubr.f32.mxu0 0.0
        %5172 = vmatmul.mubr.f32.gmra.mxu0 %v4104
        %v5173 = vpop.f32.mrf.mxu0
        %v5174 = vadd.f32 0.0, %v5173
        %v5175 = vpop.f32.mrf.mxu0
        %5176 = vmatprep.mubr.f32.mxu0 0.0
        %5177 = vmatmul.mubr.f32.gmra.mxu0 %v4106
        %v5178 = vpop.f32.mrf.mxu0
        %v5179 = vadd.f32 0.0, %v5178
        %v5180 = vpop.f32.mrf.mxu0
        %5181 = vmatprep.mubr.f32.mxu0 0.0
        %5182 = vmatmul.mubr.f32.gmra.mxu0 %v4109
        %v5183 = vpop.f32.mrf.mxu0
        %v5184 = vadd.f32 0.0, %v5183
        %v5185 = vpop.f32.mrf.mxu0
        %5186 = vmatprep.mubr.f32.mxu0 0.0
        %5187 = vmatmul.mubr.f32.gmra.mxu0 %v4111
        %v5188 = vpop.f32.mrf.mxu0
        %v5189 = vadd.f32 0.0, %v5188
        %v5190 = vpop.f32.mrf.mxu0
        %5191 = vmatprep.mubr.f32.mxu0 0.0
        %5192 = vmatmul.mubr.f32.gmra.mxu0 %v4114
        %v5193 = vpop.f32.mrf.mxu0
        %v5194 = vadd.f32 0.0, %v5193
        %v5195 = vpop.f32.mrf.mxu0
        %5196 = vmatprep.mubr.f32.mxu0 0.0
        %5197 = vmatmul.mubr.f32.gmra.mxu0 %v4116
        %v5198 = vpop.f32.mrf.mxu0
        %v5199 = vadd.f32 0.0, %v5198
        %v5200 = vpop.f32.mrf.mxu0
        %5201 = vmatprep.mubr.f32.mxu0 0.0
        %5202 = vmatmul.mubr.f32.gmra.mxu0 %v4119
        %v5203 = vpop.f32.mrf.mxu0
        %v5204 = vadd.f32 0.0, %v5203
        %v5205 = vpop.f32.mrf.mxu0
        %5206 = vmatprep.mubr.f32.mxu0 0.0
        %5207 = vmatmul.mubr.f32.gmra.mxu0 %v4121
        %v5208 = vpop.f32.mrf.mxu0
        %v5209 = vadd.f32 0.0, %v5208
        %v5210 = vpop.f32.mrf.mxu0
        %5211 = vmatprep.mubr.f32.mxu0 0.0
        %5212 = vmatmul.mubr.f32.gmra.mxu0 %v4124
        %v5213 = vpop.f32.mrf.mxu0
        %v5214 = vadd.f32 0.0, %v5213
        %v5215 = vpop.f32.mrf.mxu0
        %5216 = vmatprep.mubr.f32.mxu0 0.0
        %5217 = vmatmul.mubr.f32.gmra.mxu0 %v4126
        %v5218 = vpop.f32.mrf.mxu0
        %v5219 = vadd.f32 0.0, %v5218
        %v5220 = vpop.f32.mrf.mxu0
        %5221 = vmatprep.mubr.f32.mxu0 0.0
        %5222 = vmatmul.mubr.f32.gmra.mxu0 %v4129
        %v5223 = vpop.f32.mrf.mxu0
        %v5224 = vadd.f32 0.0, %v5223
        %v5225 = vpop.f32.mrf.mxu0
        %5226 = vmatprep.mubr.f32.mxu0 0.0
        %5227 = vmatmul.mubr.f32.gmra.mxu0 %v4131
        %v5228 = vpop.f32.mrf.mxu0
        %v5229 = vadd.f32 0.0, %v5228
        %v5230 = vpop.f32.mrf.mxu0
        %5231 = vmatprep.mubr.f32.mxu0 0.0
        %5232 = vmatmul.mubr.f32.gmra.mxu0 %v4995
        %v5233 = vpop.f32.mrf.mxu0
        %v5234 = vadd.f32 0.0, %v5233
        %v5235 = vpop.f32.mrf.mxu0
        %5236 = vmatprep.mubr.f32.mxu0 0.0
        %5237 = vmatmul.mubr.f32.gmra.mxu0 %v4997
        %v5238 = vpop.f32.mrf.mxu0
        %v5239 = vadd.f32 0.0, %v5238
        %v5240 = vpop.f32.mrf.mxu0
        %5241 = vdwg.mxu0
        %v5242 = vadd.f32 %v4961, %v5084
        %v5243 = vadd.f32 %v4962, %v5089
        %v5244 = vadd.f32 %v4963, %v5094
        %v5245 = vadd.f32 %v4964, %v5099
        %v5246 = vadd.f32 %v4965, %v5104
        %v5247 = vadd.f32 %v4966, %v5109
        %v5248 = vadd.f32 %v4967, %v5114
        %v5249 = vadd.f32 %v4968, %v5119
        %v5250 = vadd.f32 %v4969, %v5124
        %v5251 = vadd.f32 %v4970, %v5129
        %v5252 = vadd.f32 %v4971, %v5134
        %v5253 = vadd.f32 %v4972, %v5139
        %v5254 = vadd.f32 %v4973, %v5144
        %v5255 = vadd.f32 %v4974, %v5149
        %v5256 = vadd.f32 %v4975, %v5154
        %v5257 = vadd.f32 %v4976, %v5159
        %v5258 = vadd.f32 %v4977, %v5164
        %v5259 = vadd.f32 %v4978, %v5169
        %v5260 = vadd.f32 %v4979, %v5174
        %v5261 = vadd.f32 %v4980, %v5179
        %v5262 = vadd.f32 %v4981, %v5184
        %v5263 = vadd.f32 %v4982, %v5189
        %v5264 = vadd.f32 %v4983, %v5194
        %v5265 = vadd.f32 %v4984, %v5199
        %v5266 = vadd.f32 %v4985, %v5204
        %v5267 = vadd.f32 %v4986, %v5209
        %v5268 = vadd.f32 %v4987, %v5214
        %v5269 = vadd.f32 %v4988, %v5219
        %v5270 = vadd.f32 %v4989, %v5224
        %v5271 = vadd.f32 %v4990, %v5229
        %v5272 = vadd.f32 %v4991, %v5234
        %v5273 = vadd.f32 %v4992, %v5239
        %s5274 = scalar_lea.vmem [#allocation7], 768
        %v5275 = vld [vmem:[%s5274] sm:$0xff]
        %v5276 = vld [vmem:[%s5274 + $0x8] sm:$0xff]
        %v5277 = vld [vmem:[%s5274 + $0x10] sm:$0xff]
        %v5278 = vld [vmem:[%s5274 + $0x18] sm:$0xff]
        %v5279 = vld [vmem:[%s5274 + $0x20] sm:$0xff]
        %v5280 = vld [vmem:[%s5274 + $0x28] sm:$0xff]
        %v5281 = vld [vmem:[%s5274 + $0x30] sm:$0xff]
        %v5282 = vld [vmem:[%s5274 + $0x38] sm:$0xff]
        %v5283 = vld [vmem:[%s5274 + $0x40] sm:$0xff]
        %v5284 = vld [vmem:[%s5274 + $0x48] sm:$0xff]
        %v5285 = vld [vmem:[%s5274 + $0x50] sm:$0xff]
        %v5286 = vld [vmem:[%s5274 + $0x58] sm:$0xff]
        %v5287 = vld [vmem:[%s5274 + $0x60] sm:$0xff]
        %v5288 = vld [vmem:[%s5274 + $0x68] sm:$0xff]
        %v5289 = vld [vmem:[%s5274 + $0x70] sm:$0xff]
        %v5290 = vld [vmem:[%s5274 + $0x78] sm:$0xff]
        %5291 = vmatprep.subr.mxu0 0.0
        %5292 = vmatpush1.msra.mxu0 %v5290
        %5293 = vmatprep.subr.mxu0 0.0
        %5294 = vmatpush1.msra.mxu0 %v5289
        %5295 = vmatprep.subr.mxu0 0.0
        %5296 = vmatpush1.msra.mxu0 %v5288
        %5297 = vmatprep.subr.mxu0 0.0
        %5298 = vmatpush1.msra.mxu0 %v5287
        %5299 = vmatprep.subr.mxu0 0.0
        %5300 = vmatpush1.msra.mxu0 %v5286
        %5301 = vmatprep.subr.mxu0 0.0
        %5302 = vmatpush1.msra.mxu0 %v5285
        %5303 = vmatprep.subr.mxu0 0.0
        %5304 = vmatpush1.msra.mxu0 %v5284
        %5305 = vmatprep.subr.mxu0 0.0
        %5306 = vmatpush1.msra.mxu0 %v5283
        %5307 = vmatprep.subr.mxu0 0.0
        %5308 = vmatpush1.msra.mxu0 %v5282
        %5309 = vmatprep.subr.mxu0 0.0
        %5310 = vmatpush1.msra.mxu0 %v5281
        %5311 = vmatprep.subr.mxu0 0.0
        %5312 = vmatpush1.msra.mxu0 %v5280
        %5313 = vmatprep.subr.mxu0 0.0
        %5314 = vmatpush1.msra.mxu0 %v5279
        %5315 = vmatprep.subr.mxu0 0.0
        %5316 = vmatpush1.msra.mxu0 %v5278
        %5317 = vmatprep.subr.mxu0 0.0
        %5318 = vmatpush1.msra.mxu0 %v5277
        %5319 = vmatprep.subr.mxu0 0.0
        %5320 = vmatpush1.msra.mxu0 %v5276
        %5321 = vmatprep.subr.mxu0 0.0
        %5322 = vmatpush1.msra.mxu0 %v5275
        %5323 = vmatprep.subr.mxu0 0.0
        %5324 = vmatpush2.msra.mxu0 0.0
        %5325 = vmatprep.subr.mxu0 0.0
        %5326 = vmatpush2.msra.mxu0 0.0
        %5327 = vmatprep.subr.mxu0 0.0
        %5328 = vmatpush2.msra.mxu0 0.0
        %5329 = vmatprep.subr.mxu0 0.0
        %5330 = vmatpush2.msra.mxu0 0.0
        %5331 = vmatprep.subr.mxu0 0.0
        %5332 = vmatpush2.msra.mxu0 0.0
        %5333 = vmatprep.subr.mxu0 0.0
        %5334 = vmatpush2.msra.mxu0 0.0
        %5335 = vmatprep.subr.mxu0 0.0
        %5336 = vmatpush2.msra.mxu0 0.0
        %5337 = vmatprep.subr.mxu0 0.0
        %5338 = vmatpush2.msra.mxu0 0.0
        %5339 = vmatprep.subr.mxu0 0.0
        %5340 = vmatpush2.msra.mxu0 0.0
        %5341 = vmatprep.subr.mxu0 0.0
        %5342 = vmatpush2.msra.mxu0 0.0
        %5343 = vmatprep.subr.mxu0 0.0
        %5344 = vmatpush2.msra.mxu0 0.0
        %5345 = vmatprep.subr.mxu0 0.0
        %5346 = vmatpush2.msra.mxu0 0.0
        %5347 = vmatprep.subr.mxu0 0.0
        %5348 = vmatpush2.msra.mxu0 0.0
        %5349 = vmatprep.subr.mxu0 0.0
        %5350 = vmatpush2.msra.mxu0 0.0
        %5351 = vmatprep.subr.mxu0 0.0
        %5352 = vmatpush2.msra.mxu0 0.0
        %5353 = vmatprep.subr.mxu0 0.0
        %5354 = vmatpush2.msra.mxu0 0.0
        %5355 = vmatprep.mubr.f32.mxu0 0.0
        %5356 = vmatmul.mubr.f32.gmra.mxu0 %v3408
        %v5357 = vpop.f32.mrf.mxu0
        %v5358 = vadd.f32 0.0, %v5357
        %v5359 = vpop.f32.mrf.mxu0
        %5360 = vmatprep.mubr.f32.mxu0 0.0
        %5361 = vmatmul.mubr.f32.gmra.mxu0 %v3316
        %v5362 = vpop.f32.mrf.mxu0
        %v5363 = vadd.f32 0.0, %v5362
        %v5364 = vpop.f32.mrf.mxu0
        %5365 = vmatprep.mubr.f32.mxu0 0.0
        %5366 = vmatmul.mubr.f32.gmra.mxu0 %v3409
        %v5367 = vpop.f32.mrf.mxu0
        %v5368 = vadd.f32 0.0, %v5367
        %v5369 = vpop.f32.mrf.mxu0
        %5370 = vmatprep.mubr.f32.mxu0 0.0
        %5371 = vmatmul.mubr.f32.gmra.mxu0 %v3319
        %v5372 = vpop.f32.mrf.mxu0
        %v5373 = vadd.f32 0.0, %v5372
        %v5374 = vpop.f32.mrf.mxu0
        %5375 = vmatprep.mubr.f32.mxu0 0.0
        %5376 = vmatmul.mubr.f32.gmra.mxu0 %v3410
        %v5377 = vpop.f32.mrf.mxu0
        %v5378 = vadd.f32 0.0, %v5377
        %v5379 = vpop.f32.mrf.mxu0
        %5380 = vmatprep.mubr.f32.mxu0 0.0
        %5381 = vmatmul.mubr.f32.gmra.mxu0 %v3322
        %v5382 = vpop.f32.mrf.mxu0
        %v5383 = vadd.f32 0.0, %v5382
        %v5384 = vpop.f32.mrf.mxu0
        %5385 = vmatprep.mubr.f32.mxu0 0.0
        %5386 = vmatmul.mubr.f32.gmra.mxu0 %v3411
        %v5387 = vpop.f32.mrf.mxu0
        %v5388 = vadd.f32 0.0, %v5387
        %v5389 = vpop.f32.mrf.mxu0
        %5390 = vmatprep.mubr.f32.mxu0 0.0
        %5391 = vmatmul.mubr.f32.gmra.mxu0 %v3325
        %v5392 = vpop.f32.mrf.mxu0
        %v5393 = vadd.f32 0.0, %v5392
        %v5394 = vpop.f32.mrf.mxu0
        %5395 = vmatprep.mubr.f32.mxu0 0.0
        %5396 = vmatmul.mubr.f32.gmra.mxu0 %v3412
        %v5397 = vpop.f32.mrf.mxu0
        %v5398 = vadd.f32 0.0, %v5397
        %v5399 = vpop.f32.mrf.mxu0
        %5400 = vmatprep.mubr.f32.mxu0 0.0
        %5401 = vmatmul.mubr.f32.gmra.mxu0 %v3328
        %v5402 = vpop.f32.mrf.mxu0
        %v5403 = vadd.f32 0.0, %v5402
        %v5404 = vpop.f32.mrf.mxu0
        %5405 = vmatprep.mubr.f32.mxu0 0.0
        %5406 = vmatmul.mubr.f32.gmra.mxu0 %v3413
        %v5407 = vpop.f32.mrf.mxu0
        %v5408 = vadd.f32 0.0, %v5407
        %v5409 = vpop.f32.mrf.mxu0
        %5410 = vmatprep.mubr.f32.mxu0 0.0
        %5411 = vmatmul.mubr.f32.gmra.mxu0 %v3331
        %v5412 = vpop.f32.mrf.mxu0
        %v5413 = vadd.f32 0.0, %v5412
        %v5414 = vpop.f32.mrf.mxu0
        %5415 = vmatprep.mubr.f32.mxu0 0.0
        %5416 = vmatmul.mubr.f32.gmra.mxu0 %v3414
        %v5417 = vpop.f32.mrf.mxu0
        %v5418 = vadd.f32 0.0, %v5417
        %v5419 = vpop.f32.mrf.mxu0
        %5420 = vmatprep.mubr.f32.mxu0 0.0
        %5421 = vmatmul.mubr.f32.gmra.mxu0 %v3334
        %v5422 = vpop.f32.mrf.mxu0
        %v5423 = vadd.f32 0.0, %v5422
        %v5424 = vpop.f32.mrf.mxu0
        %5425 = vmatprep.mubr.f32.mxu0 0.0
        %5426 = vmatmul.mubr.f32.gmra.mxu0 %v3415
        %v5427 = vpop.f32.mrf.mxu0
        %v5428 = vadd.f32 0.0, %v5427
        %v5429 = vpop.f32.mrf.mxu0
        %5430 = vmatprep.mubr.f32.mxu0 0.0
        %5431 = vmatmul.mubr.f32.gmra.mxu0 %v3337
        %v5432 = vpop.f32.mrf.mxu0
        %v5433 = vadd.f32 0.0, %v5432
        %v5434 = vpop.f32.mrf.mxu0
        %5435 = vmatprep.mubr.f32.mxu0 0.0
        %5436 = vmatmul.mubr.f32.gmra.mxu0 %v3416
        %v5437 = vpop.f32.mrf.mxu0
        %v5438 = vadd.f32 0.0, %v5437
        %v5439 = vpop.f32.mrf.mxu0
        %5440 = vmatprep.mubr.f32.mxu0 0.0
        %5441 = vmatmul.mubr.f32.gmra.mxu0 %v3340
        %v5442 = vpop.f32.mrf.mxu0
        %v5443 = vadd.f32 0.0, %v5442
        %v5444 = vpop.f32.mrf.mxu0
        %5445 = vmatprep.mubr.f32.mxu0 0.0
        %5446 = vmatmul.mubr.f32.gmra.mxu0 %v3417
        %v5447 = vpop.f32.mrf.mxu0
        %v5448 = vadd.f32 0.0, %v5447
        %v5449 = vpop.f32.mrf.mxu0
        %5450 = vmatprep.mubr.f32.mxu0 0.0
        %5451 = vmatmul.mubr.f32.gmra.mxu0 %v3343
        %v5452 = vpop.f32.mrf.mxu0
        %v5453 = vadd.f32 0.0, %v5452
        %v5454 = vpop.f32.mrf.mxu0
        %5455 = vmatprep.mubr.f32.mxu0 0.0
        %5456 = vmatmul.mubr.f32.gmra.mxu0 %v3418
        %v5457 = vpop.f32.mrf.mxu0
        %v5458 = vadd.f32 0.0, %v5457
        %v5459 = vpop.f32.mrf.mxu0
        %5460 = vmatprep.mubr.f32.mxu0 0.0
        %5461 = vmatmul.mubr.f32.gmra.mxu0 %v3346
        %v5462 = vpop.f32.mrf.mxu0
        %v5463 = vadd.f32 0.0, %v5462
        %v5464 = vpop.f32.mrf.mxu0
        %5465 = vmatprep.mubr.f32.mxu0 0.0
        %5466 = vmatmul.mubr.f32.gmra.mxu0 %v3419
        %v5467 = vpop.f32.mrf.mxu0
        %v5468 = vadd.f32 0.0, %v5467
        %v5469 = vpop.f32.mrf.mxu0
        %5470 = vmatprep.mubr.f32.mxu0 0.0
        %5471 = vmatmul.mubr.f32.gmra.mxu0 %v3349
        %v5472 = vpop.f32.mrf.mxu0
        %v5473 = vadd.f32 0.0, %v5472
        %v5474 = vpop.f32.mrf.mxu0
        %5475 = vmatprep.mubr.f32.mxu0 0.0
        %5476 = vmatmul.mubr.f32.gmra.mxu0 %v3420
        %v5477 = vpop.f32.mrf.mxu0
        %v5478 = vadd.f32 0.0, %v5477
        %v5479 = vpop.f32.mrf.mxu0
        %5480 = vmatprep.mubr.f32.mxu0 0.0
        %5481 = vmatmul.mubr.f32.gmra.mxu0 %v3352
        %v5482 = vpop.f32.mrf.mxu0
        %v5483 = vadd.f32 0.0, %v5482
        %v5484 = vpop.f32.mrf.mxu0
        %5485 = vmatprep.mubr.f32.mxu0 0.0
        %5486 = vmatmul.mubr.f32.gmra.mxu0 %v3421
        %v5487 = vpop.f32.mrf.mxu0
        %v5488 = vadd.f32 0.0, %v5487
        %v5489 = vpop.f32.mrf.mxu0
        %5490 = vmatprep.mubr.f32.mxu0 0.0
        %5491 = vmatmul.mubr.f32.gmra.mxu0 %v3355
        %v5492 = vpop.f32.mrf.mxu0
        %v5493 = vadd.f32 0.0, %v5492
        %v5494 = vpop.f32.mrf.mxu0
        %5495 = vmatprep.mubr.f32.mxu0 0.0
        %5496 = vmatmul.mubr.f32.gmra.mxu0 %v3422
        %v5497 = vpop.f32.mrf.mxu0
        %v5498 = vadd.f32 0.0, %v5497
        %v5499 = vpop.f32.mrf.mxu0
        %5500 = vmatprep.mubr.f32.mxu0 0.0
        %5501 = vmatmul.mubr.f32.gmra.mxu0 %v3358
        %v5502 = vpop.f32.mrf.mxu0
        %v5503 = vadd.f32 0.0, %v5502
        %v5504 = vpop.f32.mrf.mxu0
        %5505 = vmatprep.mubr.f32.mxu0 0.0
        %5506 = vmatmul.mubr.f32.gmra.mxu0 %v466
        %v5507 = vpop.f32.mrf.mxu0
        %v5508 = vadd.f32 0.0, %v5507
        %v5509 = vpop.f32.mrf.mxu0
        %5510 = vmatprep.mubr.f32.mxu0 0.0
        %5511 = vmatmul.mubr.f32.gmra.mxu0 %v367
        %v5512 = vpop.f32.mrf.mxu0
        %v5513 = vadd.f32 0.0, %v5512
        %v5514 = vpop.f32.mrf.mxu0
        %5515 = vdwg.mxu0
        %v5516 = vadd.f32 %v5242, %v5358
        %v5517 = vadd.f32 %v5243, %v5363
        %v5518 = vadd.f32 %v5244, %v5368
        %v5519 = vadd.f32 %v5245, %v5373
        %v5520 = vadd.f32 %v5246, %v5378
        %v5521 = vadd.f32 %v5247, %v5383
        %v5522 = vadd.f32 %v5248, %v5388
        %v5523 = vadd.f32 %v5249, %v5393
        %v5524 = vadd.f32 %v5250, %v5398
        %v5525 = vadd.f32 %v5251, %v5403
        %v5526 = vadd.f32 %v5252, %v5408
        %v5527 = vadd.f32 %v5253, %v5413
        %v5528 = vadd.f32 %v5254, %v5418
        %v5529 = vadd.f32 %v5255, %v5423
        %v5530 = vadd.f32 %v5256, %v5428
        %v5531 = vadd.f32 %v5257, %v5433
        %v5532 = vadd.f32 %v5258, %v5438
        %v5533 = vadd.f32 %v5259, %v5443
        %v5534 = vadd.f32 %v5260, %v5448
        %v5535 = vadd.f32 %v5261, %v5453
        %v5536 = vadd.f32 %v5262, %v5458
        %v5537 = vadd.f32 %v5263, %v5463
        %v5538 = vadd.f32 %v5264, %v5468
        %v5539 = vadd.f32 %v5265, %v5473
        %v5540 = vadd.f32 %v5266, %v5478
        %v5541 = vadd.f32 %v5267, %v5483
        %v5542 = vadd.f32 %v5268, %v5488
        %v5543 = vadd.f32 %v5269, %v5493
        %v5544 = vadd.f32 %v5270, %v5498
        %v5545 = vadd.f32 %v5271, %v5503
        %v5546 = vadd.f32 %v5272, %v5508
        %v5547 = vadd.f32 %v5273, %v5513
        %s5548 = scalar_lea.vmem [#allocation7], 896
        %v5549 = vld [vmem:[%s5548] sm:$0xff]
        %v5550 = vld [vmem:[%s5548 + $0x8] sm:$0xff]
        %v5551 = vld [vmem:[%s5548 + $0x10] sm:$0xff]
        %v5552 = vld [vmem:[%s5548 + $0x18] sm:$0xff]
        %v5553 = vld [vmem:[%s5548 + $0x20] sm:$0xff]
        %v5554 = vld [vmem:[%s5548 + $0x28] sm:$0xff]
        %v5555 = vld [vmem:[%s5548 + $0x30] sm:$0xff]
        %v5556 = vld [vmem:[%s5548 + $0x38] sm:$0xff]
        %v5557 = vld [vmem:[%s5548 + $0x40] sm:$0xff]
        %v5558 = vld [vmem:[%s5548 + $0x48] sm:$0xff]
        %v5559 = vld [vmem:[%s5548 + $0x50] sm:$0xff]
        %v5560 = vld [vmem:[%s5548 + $0x58] sm:$0xff]
        %v5561 = vld [vmem:[%s5548 + $0x60] sm:$0xff]
        %v5562 = vld [vmem:[%s5548 + $0x68] sm:$0xff]
        %v5563 = vld [vmem:[%s5548 + $0x70] sm:$0xff]
        %v5564 = vld [vmem:[%s5548 + $0x78] sm:$0xff]
        %5565 = vmatprep.subr.mxu0 0.0
        %5566 = vmatpush1.msra.mxu0 %v5564
        %5567 = vmatprep.subr.mxu0 0.0
        %5568 = vmatpush1.msra.mxu0 %v5563
        %5569 = vmatprep.subr.mxu0 0.0
        %5570 = vmatpush1.msra.mxu0 %v5562
        %5571 = vmatprep.subr.mxu0 0.0
        %5572 = vmatpush1.msra.mxu0 %v5561
        %5573 = vmatprep.subr.mxu0 0.0
        %5574 = vmatpush1.msra.mxu0 %v5560
        %5575 = vmatprep.subr.mxu0 0.0
        %5576 = vmatpush1.msra.mxu0 %v5559
        %5577 = vmatprep.subr.mxu0 0.0
        %5578 = vmatpush1.msra.mxu0 %v5558
        %5579 = vmatprep.subr.mxu0 0.0
        %5580 = vmatpush1.msra.mxu0 %v5557
        %5581 = vmatprep.subr.mxu0 0.0
        %5582 = vmatpush1.msra.mxu0 %v5556
        %5583 = vmatprep.subr.mxu0 0.0
        %5584 = vmatpush1.msra.mxu0 %v5555
        %5585 = vmatprep.subr.mxu0 0.0
        %5586 = vmatpush1.msra.mxu0 %v5554
        %5587 = vmatprep.subr.mxu0 0.0
        %5588 = vmatpush1.msra.mxu0 %v5553
        %5589 = vmatprep.subr.mxu0 0.0
        %5590 = vmatpush1.msra.mxu0 %v5552
        %5591 = vmatprep.subr.mxu0 0.0
        %5592 = vmatpush1.msra.mxu0 %v5551
        %5593 = vmatprep.subr.mxu0 0.0
        %5594 = vmatpush1.msra.mxu0 %v5550
        %5595 = vmatprep.subr.mxu0 0.0
        %5596 = vmatpush1.msra.mxu0 %v5549
        %5597 = vmatprep.subr.mxu0 0.0
        %5598 = vmatpush2.msra.mxu0 0.0
        %5599 = vmatprep.subr.mxu0 0.0
        %5600 = vmatpush2.msra.mxu0 0.0
        %5601 = vmatprep.subr.mxu0 0.0
        %5602 = vmatpush2.msra.mxu0 0.0
        %5603 = vmatprep.subr.mxu0 0.0
        %5604 = vmatpush2.msra.mxu0 0.0
        %5605 = vmatprep.subr.mxu0 0.0
        %5606 = vmatpush2.msra.mxu0 0.0
        %5607 = vmatprep.subr.mxu0 0.0
        %5608 = vmatpush2.msra.mxu0 0.0
        %5609 = vmatprep.subr.mxu0 0.0
        %5610 = vmatpush2.msra.mxu0 0.0
        %5611 = vmatprep.subr.mxu0 0.0
        %5612 = vmatpush2.msra.mxu0 0.0
        %5613 = vmatprep.subr.mxu0 0.0
        %5614 = vmatpush2.msra.mxu0 0.0
        %5615 = vmatprep.subr.mxu0 0.0
        %5616 = vmatpush2.msra.mxu0 0.0
        %5617 = vmatprep.subr.mxu0 0.0
        %5618 = vmatpush2.msra.mxu0 0.0
        %5619 = vmatprep.subr.mxu0 0.0
        %5620 = vmatpush2.msra.mxu0 0.0
        %5621 = vmatprep.subr.mxu0 0.0
        %5622 = vmatpush2.msra.mxu0 0.0
        %5623 = vmatprep.subr.mxu0 0.0
        %5624 = vmatpush2.msra.mxu0 0.0
        %5625 = vmatprep.subr.mxu0 0.0
        %5626 = vmatpush2.msra.mxu0 0.0
        %5627 = vmatprep.subr.mxu0 0.0
        %5628 = vmatpush2.msra.mxu0 0.0
        %5629 = vmatprep.mubr.f32.mxu0 0.0
        %5630 = vmatmul.mubr.f32.gmra.mxu0 %v3492
        %v5631 = vpop.f32.mrf.mxu0
        %v5632 = vadd.f32 0.0, %v5631
        %v5633 = vpop.f32.mrf.mxu0
        %5634 = vmatprep.mubr.f32.mxu0 0.0
        %5635 = vmatmul.mubr.f32.gmra.mxu0 %v3494
        %v5636 = vpop.f32.mrf.mxu0
        %v5637 = vadd.f32 0.0, %v5636
        %v5638 = vpop.f32.mrf.mxu0
        %5639 = vmatprep.mubr.f32.mxu0 0.0
        %5640 = vmatmul.mubr.f32.gmra.mxu0 %v3497
        %v5641 = vpop.f32.mrf.mxu0
        %v5642 = vadd.f32 0.0, %v5641
        %v5643 = vpop.f32.mrf.mxu0
        %5644 = vmatprep.mubr.f32.mxu0 0.0
        %5645 = vmatmul.mubr.f32.gmra.mxu0 %v3499
        %v5646 = vpop.f32.mrf.mxu0
        %v5647 = vadd.f32 0.0, %v5646
        %v5648 = vpop.f32.mrf.mxu0
        %5649 = vmatprep.mubr.f32.mxu0 0.0
        %5650 = vmatmul.mubr.f32.gmra.mxu0 %v3502
        %v5651 = vpop.f32.mrf.mxu0
        %v5652 = vadd.f32 0.0, %v5651
        %v5653 = vpop.f32.mrf.mxu0
        %5654 = vmatprep.mubr.f32.mxu0 0.0
        %5655 = vmatmul.mubr.f32.gmra.mxu0 %v3504
        %v5656 = vpop.f32.mrf.mxu0
        %v5657 = vadd.f32 0.0, %v5656
        %v5658 = vpop.f32.mrf.mxu0
        %5659 = vmatprep.mubr.f32.mxu0 0.0
        %5660 = vmatmul.mubr.f32.gmra.mxu0 %v3507
        %v5661 = vpop.f32.mrf.mxu0
        %v5662 = vadd.f32 0.0, %v5661
        %v5663 = vpop.f32.mrf.mxu0
        %5664 = vmatprep.mubr.f32.mxu0 0.0
        %5665 = vmatmul.mubr.f32.gmra.mxu0 %v3509
        %v5666 = vpop.f32.mrf.mxu0
        %v5667 = vadd.f32 0.0, %v5666
        %v5668 = vpop.f32.mrf.mxu0
        %5669 = vmatprep.mubr.f32.mxu0 0.0
        %5670 = vmatmul.mubr.f32.gmra.mxu0 %v3512
        %v5671 = vpop.f32.mrf.mxu0
        %v5672 = vadd.f32 0.0, %v5671
        %v5673 = vpop.f32.mrf.mxu0
        %5674 = vmatprep.mubr.f32.mxu0 0.0
        %5675 = vmatmul.mubr.f32.gmra.mxu0 %v3514
        %v5676 = vpop.f32.mrf.mxu0
        %v5677 = vadd.f32 0.0, %v5676
        %v5678 = vpop.f32.mrf.mxu0
        %5679 = vmatprep.mubr.f32.mxu0 0.0
        %5680 = vmatmul.mubr.f32.gmra.mxu0 %v3517
        %v5681 = vpop.f32.mrf.mxu0
        %v5682 = vadd.f32 0.0, %v5681
        %v5683 = vpop.f32.mrf.mxu0
        %5684 = vmatprep.mubr.f32.mxu0 0.0
        %5685 = vmatmul.mubr.f32.gmra.mxu0 %v3519
        %v5686 = vpop.f32.mrf.mxu0
        %v5687 = vadd.f32 0.0, %v5686
        %v5688 = vpop.f32.mrf.mxu0
        %5689 = vmatprep.mubr.f32.mxu0 0.0
        %5690 = vmatmul.mubr.f32.gmra.mxu0 %v3522
        %v5691 = vpop.f32.mrf.mxu0
        %v5692 = vadd.f32 0.0, %v5691
        %v5693 = vpop.f32.mrf.mxu0
        %5694 = vmatprep.mubr.f32.mxu0 0.0
        %5695 = vmatmul.mubr.f32.gmra.mxu0 %v3524
        %v5696 = vpop.f32.mrf.mxu0
        %v5697 = vadd.f32 0.0, %v5696
        %v5698 = vpop.f32.mrf.mxu0
        %5699 = vmatprep.mubr.f32.mxu0 0.0
        %5700 = vmatmul.mubr.f32.gmra.mxu0 %v3527
        %v5701 = vpop.f32.mrf.mxu0
        %v5702 = vadd.f32 0.0, %v5701
        %v5703 = vpop.f32.mrf.mxu0
        %5704 = vmatprep.mubr.f32.mxu0 0.0
        %5705 = vmatmul.mubr.f32.gmra.mxu0 %v3529
        %v5706 = vpop.f32.mrf.mxu0
        %v5707 = vadd.f32 0.0, %v5706
        %v5708 = vpop.f32.mrf.mxu0
        %5709 = vmatprep.mubr.f32.mxu0 0.0
        %5710 = vmatmul.mubr.f32.gmra.mxu0 %v3532
        %v5711 = vpop.f32.mrf.mxu0
        %v5712 = vadd.f32 0.0, %v5711
        %v5713 = vpop.f32.mrf.mxu0
        %5714 = vmatprep.mubr.f32.mxu0 0.0
        %5715 = vmatmul.mubr.f32.gmra.mxu0 %v3534
        %v5716 = vpop.f32.mrf.mxu0
        %v5717 = vadd.f32 0.0, %v5716
        %v5718 = vpop.f32.mrf.mxu0
        %5719 = vmatprep.mubr.f32.mxu0 0.0
        %5720 = vmatmul.mubr.f32.gmra.mxu0 %v3537
        %v5721 = vpop.f32.mrf.mxu0
        %v5722 = vadd.f32 0.0, %v5721
        %v5723 = vpop.f32.mrf.mxu0
        %5724 = vmatprep.mubr.f32.mxu0 0.0
        %5725 = vmatmul.mubr.f32.gmra.mxu0 %v3539
        %v5726 = vpop.f32.mrf.mxu0
        %v5727 = vadd.f32 0.0, %v5726
        %v5728 = vpop.f32.mrf.mxu0
        %5729 = vmatprep.mubr.f32.mxu0 0.0
        %5730 = vmatmul.mubr.f32.gmra.mxu0 %v3542
        %v5731 = vpop.f32.mrf.mxu0
        %v5732 = vadd.f32 0.0, %v5731
        %v5733 = vpop.f32.mrf.mxu0
        %5734 = vmatprep.mubr.f32.mxu0 0.0
        %5735 = vmatmul.mubr.f32.gmra.mxu0 %v3544
        %v5736 = vpop.f32.mrf.mxu0
        %v5737 = vadd.f32 0.0, %v5736
        %v5738 = vpop.f32.mrf.mxu0
        %5739 = vmatprep.mubr.f32.mxu0 0.0
        %5740 = vmatmul.mubr.f32.gmra.mxu0 %v3547
        %v5741 = vpop.f32.mrf.mxu0
        %v5742 = vadd.f32 0.0, %v5741
        %v5743 = vpop.f32.mrf.mxu0
        %5744 = vmatprep.mubr.f32.mxu0 0.0
        %5745 = vmatmul.mubr.f32.gmra.mxu0 %v3549
        %v5746 = vpop.f32.mrf.mxu0
        %v5747 = vadd.f32 0.0, %v5746
        %v5748 = vpop.f32.mrf.mxu0
        %5749 = vmatprep.mubr.f32.mxu0 0.0
        %5750 = vmatmul.mubr.f32.gmra.mxu0 %v3552
        %v5751 = vpop.f32.mrf.mxu0
        %v5752 = vadd.f32 0.0, %v5751
        %v5753 = vpop.f32.mrf.mxu0
        %5754 = vmatprep.mubr.f32.mxu0 0.0
        %5755 = vmatmul.mubr.f32.gmra.mxu0 %v3554
        %v5756 = vpop.f32.mrf.mxu0
        %v5757 = vadd.f32 0.0, %v5756
        %v5758 = vpop.f32.mrf.mxu0
        %5759 = vmatprep.mubr.f32.mxu0 0.0
        %5760 = vmatmul.mubr.f32.gmra.mxu0 %v3557
        %v5761 = vpop.f32.mrf.mxu0
        %v5762 = vadd.f32 0.0, %v5761
        %v5763 = vpop.f32.mrf.mxu0
        %5764 = vmatprep.mubr.f32.mxu0 0.0
        %5765 = vmatmul.mubr.f32.gmra.mxu0 %v3559
        %v5766 = vpop.f32.mrf.mxu0
        %v5767 = vadd.f32 0.0, %v5766
        %v5768 = vpop.f32.mrf.mxu0
        %5769 = vmatprep.mubr.f32.mxu0 0.0
        %5770 = vmatmul.mubr.f32.gmra.mxu0 %v4714
        %v5771 = vpop.f32.mrf.mxu0
        %v5772 = vadd.f32 0.0, %v5771
        %v5773 = vpop.f32.mrf.mxu0
        %5774 = vmatprep.mubr.f32.mxu0 0.0
        %5775 = vmatmul.mubr.f32.gmra.mxu0 %v4716
        %v5776 = vpop.f32.mrf.mxu0
        %v5777 = vadd.f32 0.0, %v5776
        %v5778 = vpop.f32.mrf.mxu0
        %5779 = vmatprep.mubr.f32.mxu0 0.0
        %5780 = vmatmul.mubr.f32.gmra.mxu0 %v551
        %v5781 = vpop.f32.mrf.mxu0
        %v5782 = vadd.f32 0.0, %v5781
        %v5783 = vpop.f32.mrf.mxu0
        %5784 = vmatprep.mubr.f32.mxu0 0.0
        %5785 = vmatmul.mubr.f32.gmra.mxu0 %v553
        %v5786 = vpop.f32.mrf.mxu0
        %v5787 = vadd.f32 0.0, %v5786
        %v5788 = vpop.f32.mrf.mxu0
        %5789 = vdwg.mxu0
        %v5790 = vadd.f32 %v5516, %v5632
        %v5791 = vadd.f32 %v5517, %v5637
        %v5792 = vadd.f32 %v5518, %v5642
        %v5793 = vadd.f32 %v5519, %v5647
        %v5794 = vadd.f32 %v5520, %v5652
        %v5795 = vadd.f32 %v5521, %v5657
        %v5796 = vadd.f32 %v5522, %v5662
        %v5797 = vadd.f32 %v5523, %v5667
        %v5798 = vadd.f32 %v5524, %v5672
        %v5799 = vadd.f32 %v5525, %v5677
        %v5800 = vadd.f32 %v5526, %v5682
        %v5801 = vadd.f32 %v5527, %v5687
        %v5802 = vadd.f32 %v5528, %v5692
        %v5803 = vadd.f32 %v5529, %v5697
        %v5804 = vadd.f32 %v5530, %v5702
        %v5805 = vadd.f32 %v5531, %v5707
        %v5806 = vadd.f32 %v5532, %v5712
        %v5807 = vadd.f32 %v5533, %v5717
        %v5808 = vadd.f32 %v5534, %v5722
        %v5809 = vadd.f32 %v5535, %v5727
        %v5810 = vadd.f32 %v5536, %v5732
        %v5811 = vadd.f32 %v5537, %v5737
        %v5812 = vadd.f32 %v5538, %v5742
        %v5813 = vadd.f32 %v5539, %v5747
        %v5814 = vadd.f32 %v5540, %v5752
        %v5815 = vadd.f32 %v5541, %v5757
        %v5816 = vadd.f32 %v5542, %v5762
        %v5817 = vadd.f32 %v5543, %v5767
        %v5818 = vadd.f32 %v5544, %v5772
        %v5819 = vadd.f32 %v5545, %v5777
        %v5820 = vadd.f32 %v5546, %v5782
        %v5821 = vadd.f32 %v5547, %v5787
        %s5822 = scalar_lea.vmem [#allocation7], 1024
        %v5823 = vld [vmem:[%s5822] sm:$0xff]
        %v5824 = vld [vmem:[%s5822 + $0x8] sm:$0xff]
        %v5825 = vld [vmem:[%s5822 + $0x10] sm:$0xff]
        %v5826 = vld [vmem:[%s5822 + $0x18] sm:$0xff]
        %v5827 = vld [vmem:[%s5822 + $0x20] sm:$0xff]
        %v5828 = vld [vmem:[%s5822 + $0x28] sm:$0xff]
        %v5829 = vld [vmem:[%s5822 + $0x30] sm:$0xff]
        %v5830 = vld [vmem:[%s5822 + $0x38] sm:$0xff]
        %v5831 = vld [vmem:[%s5822 + $0x40] sm:$0xff]
        %v5832 = vld [vmem:[%s5822 + $0x48] sm:$0xff]
        %v5833 = vld [vmem:[%s5822 + $0x50] sm:$0xff]
        %v5834 = vld [vmem:[%s5822 + $0x58] sm:$0xff]
        %v5835 = vld [vmem:[%s5822 + $0x60] sm:$0xff]
        %v5836 = vld [vmem:[%s5822 + $0x68] sm:$0xff]
        %v5837 = vld [vmem:[%s5822 + $0x70] sm:$0xff]
        %v5838 = vld [vmem:[%s5822 + $0x78] sm:$0xff]
        %5839 = vmatprep.subr.mxu0 0.0
        %5840 = vmatpush1.msra.mxu0 %v5838
        %5841 = vmatprep.subr.mxu0 0.0
        %5842 = vmatpush1.msra.mxu0 %v5837
        %5843 = vmatprep.subr.mxu0 0.0
        %5844 = vmatpush1.msra.mxu0 %v5836
        %5845 = vmatprep.subr.mxu0 0.0
        %5846 = vmatpush1.msra.mxu0 %v5835
        %5847 = vmatprep.subr.mxu0 0.0
        %5848 = vmatpush1.msra.mxu0 %v5834
        %5849 = vmatprep.subr.mxu0 0.0
        %5850 = vmatpush1.msra.mxu0 %v5833
        %5851 = vmatprep.subr.mxu0 0.0
        %5852 = vmatpush1.msra.mxu0 %v5832
        %5853 = vmatprep.subr.mxu0 0.0
        %5854 = vmatpush1.msra.mxu0 %v5831
        %5855 = vmatprep.subr.mxu0 0.0
        %5856 = vmatpush1.msra.mxu0 %v5830
        %5857 = vmatprep.subr.mxu0 0.0
        %5858 = vmatpush1.msra.mxu0 %v5829
        %5859 = vmatprep.subr.mxu0 0.0
        %5860 = vmatpush1.msra.mxu0 %v5828
        %5861 = vmatprep.subr.mxu0 0.0
        %5862 = vmatpush1.msra.mxu0 %v5827
        %5863 = vmatprep.subr.mxu0 0.0
        %5864 = vmatpush1.msra.mxu0 %v5826
        %5865 = vmatprep.subr.mxu0 0.0
        %5866 = vmatpush1.msra.mxu0 %v5825
        %5867 = vmatprep.subr.mxu0 0.0
        %5868 = vmatpush1.msra.mxu0 %v5824
        %5869 = vmatprep.subr.mxu0 0.0
        %5870 = vmatpush1.msra.mxu0 %v5823
        %5871 = vmatprep.subr.mxu0 0.0
        %5872 = vmatpush2.msra.mxu0 0.0
        %5873 = vmatprep.subr.mxu0 0.0
        %5874 = vmatpush2.msra.mxu0 0.0
        %5875 = vmatprep.subr.mxu0 0.0
        %5876 = vmatpush2.msra.mxu0 0.0
        %5877 = vmatprep.subr.mxu0 0.0
        %5878 = vmatpush2.msra.mxu0 0.0
        %5879 = vmatprep.subr.mxu0 0.0
        %5880 = vmatpush2.msra.mxu0 0.0
        %5881 = vmatprep.subr.mxu0 0.0
        %5882 = vmatpush2.msra.mxu0 0.0
        %5883 = vmatprep.subr.mxu0 0.0
        %5884 = vmatpush2.msra.mxu0 0.0
        %5885 = vmatprep.subr.mxu0 0.0
        %5886 = vmatpush2.msra.mxu0 0.0
        %5887 = vmatprep.subr.mxu0 0.0
        %5888 = vmatpush2.msra.mxu0 0.0
        %5889 = vmatprep.subr.mxu0 0.0
        %5890 = vmatpush2.msra.mxu0 0.0
        %5891 = vmatprep.subr.mxu0 0.0
        %5892 = vmatpush2.msra.mxu0 0.0
        %5893 = vmatprep.subr.mxu0 0.0
        %5894 = vmatpush2.msra.mxu0 0.0
        %5895 = vmatprep.subr.mxu0 0.0
        %5896 = vmatpush2.msra.mxu0 0.0
        %5897 = vmatprep.subr.mxu0 0.0
        %5898 = vmatpush2.msra.mxu0 0.0
        %5899 = vmatprep.subr.mxu0 0.0
        %5900 = vmatpush2.msra.mxu0 0.0
        %5901 = vmatprep.subr.mxu0 0.0
        %5902 = vmatpush2.msra.mxu0 0.0
        %5903 = vmatprep.mubr.f32.mxu0 0.0
        %5904 = vmatmul.mubr.f32.gmra.mxu0 %v4064
        %v5905 = vpop.f32.mrf.mxu0
        %v5906 = vadd.f32 0.0, %v5905
        %v5907 = vpop.f32.mrf.mxu0
        %5908 = vmatprep.mubr.f32.mxu0 0.0
        %5909 = vmatmul.mubr.f32.gmra.mxu0 %v4066
        %v5910 = vpop.f32.mrf.mxu0
        %v5911 = vadd.f32 0.0, %v5910
        %v5912 = vpop.f32.mrf.mxu0
        %5913 = vmatprep.mubr.f32.mxu0 0.0
        %5914 = vmatmul.mubr.f32.gmra.mxu0 %v4069
        %v5915 = vpop.f32.mrf.mxu0
        %v5916 = vadd.f32 0.0, %v5915
        %v5917 = vpop.f32.mrf.mxu0
        %5918 = vmatprep.mubr.f32.mxu0 0.0
        %5919 = vmatmul.mubr.f32.gmra.mxu0 %v4071
        %v5920 = vpop.f32.mrf.mxu0
        %v5921 = vadd.f32 0.0, %v5920
        %v5922 = vpop.f32.mrf.mxu0
        %5923 = vmatprep.mubr.f32.mxu0 0.0
        %5924 = vmatmul.mubr.f32.gmra.mxu0 %v4074
        %v5925 = vpop.f32.mrf.mxu0
        %v5926 = vadd.f32 0.0, %v5925
        %v5927 = vpop.f32.mrf.mxu0
        %5928 = vmatprep.mubr.f32.mxu0 0.0
        %5929 = vmatmul.mubr.f32.gmra.mxu0 %v4076
        %v5930 = vpop.f32.mrf.mxu0
        %v5931 = vadd.f32 0.0, %v5930
        %v5932 = vpop.f32.mrf.mxu0
        %5933 = vmatprep.mubr.f32.mxu0 0.0
        %5934 = vmatmul.mubr.f32.gmra.mxu0 %v4079
        %v5935 = vpop.f32.mrf.mxu0
        %v5936 = vadd.f32 0.0, %v5935
        %v5937 = vpop.f32.mrf.mxu0
        %5938 = vmatprep.mubr.f32.mxu0 0.0
        %5939 = vmatmul.mubr.f32.gmra.mxu0 %v4081
        %v5940 = vpop.f32.mrf.mxu0
        %v5941 = vadd.f32 0.0, %v5940
        %v5942 = vpop.f32.mrf.mxu0
        %5943 = vmatprep.mubr.f32.mxu0 0.0
        %5944 = vmatmul.mubr.f32.gmra.mxu0 %v4084
        %v5945 = vpop.f32.mrf.mxu0
        %v5946 = vadd.f32 0.0, %v5945
        %v5947 = vpop.f32.mrf.mxu0
        %5948 = vmatprep.mubr.f32.mxu0 0.0
        %5949 = vmatmul.mubr.f32.gmra.mxu0 %v4086
        %v5950 = vpop.f32.mrf.mxu0
        %v5951 = vadd.f32 0.0, %v5950
        %v5952 = vpop.f32.mrf.mxu0
        %5953 = vmatprep.mubr.f32.mxu0 0.0
        %5954 = vmatmul.mubr.f32.gmra.mxu0 %v4089
        %v5955 = vpop.f32.mrf.mxu0
        %v5956 = vadd.f32 0.0, %v5955
        %v5957 = vpop.f32.mrf.mxu0
        %5958 = vmatprep.mubr.f32.mxu0 0.0
        %5959 = vmatmul.mubr.f32.gmra.mxu0 %v4091
        %v5960 = vpop.f32.mrf.mxu0
        %v5961 = vadd.f32 0.0, %v5960
        %v5962 = vpop.f32.mrf.mxu0
        %5963 = vmatprep.mubr.f32.mxu0 0.0
        %5964 = vmatmul.mubr.f32.gmra.mxu0 %v4094
        %v5965 = vpop.f32.mrf.mxu0
        %v5966 = vadd.f32 0.0, %v5965
        %v5967 = vpop.f32.mrf.mxu0
        %5968 = vmatprep.mubr.f32.mxu0 0.0
        %5969 = vmatmul.mubr.f32.gmra.mxu0 %v4096
        %v5970 = vpop.f32.mrf.mxu0
        %v5971 = vadd.f32 0.0, %v5970
        %v5972 = vpop.f32.mrf.mxu0
        %5973 = vmatprep.mubr.f32.mxu0 0.0
        %5974 = vmatmul.mubr.f32.gmra.mxu0 %v4099
        %v5975 = vpop.f32.mrf.mxu0
        %v5976 = vadd.f32 0.0, %v5975
        %v5977 = vpop.f32.mrf.mxu0
        %5978 = vmatprep.mubr.f32.mxu0 0.0
        %5979 = vmatmul.mubr.f32.gmra.mxu0 %v4101
        %v5980 = vpop.f32.mrf.mxu0
        %v5981 = vadd.f32 0.0, %v5980
        %v5982 = vpop.f32.mrf.mxu0
        %5983 = vmatprep.mubr.f32.mxu0 0.0
        %5984 = vmatmul.mubr.f32.gmra.mxu0 %v4104
        %v5985 = vpop.f32.mrf.mxu0
        %v5986 = vadd.f32 0.0, %v5985
        %v5987 = vpop.f32.mrf.mxu0
        %5988 = vmatprep.mubr.f32.mxu0 0.0
        %5989 = vmatmul.mubr.f32.gmra.mxu0 %v4106
        %v5990 = vpop.f32.mrf.mxu0
        %v5991 = vadd.f32 0.0, %v5990
        %v5992 = vpop.f32.mrf.mxu0
        %5993 = vmatprep.mubr.f32.mxu0 0.0
        %5994 = vmatmul.mubr.f32.gmra.mxu0 %v4109
        %v5995 = vpop.f32.mrf.mxu0
        %v5996 = vadd.f32 0.0, %v5995
        %v5997 = vpop.f32.mrf.mxu0
        %5998 = vmatprep.mubr.f32.mxu0 0.0
        %5999 = vmatmul.mubr.f32.gmra.mxu0 %v4111
        %v6000 = vpop.f32.mrf.mxu0
        %v6001 = vadd.f32 0.0, %v6000
        %v6002 = vpop.f32.mrf.mxu0
        %6003 = vmatprep.mubr.f32.mxu0 0.0
        %6004 = vmatmul.mubr.f32.gmra.mxu0 %v4114
        %v6005 = vpop.f32.mrf.mxu0
        %v6006 = vadd.f32 0.0, %v6005
        %v6007 = vpop.f32.mrf.mxu0
        %6008 = vmatprep.mubr.f32.mxu0 0.0
        %6009 = vmatmul.mubr.f32.gmra.mxu0 %v4116
        %v6010 = vpop.f32.mrf.mxu0
        %v6011 = vadd.f32 0.0, %v6010
        %v6012 = vpop.f32.mrf.mxu0
        %6013 = vmatprep.mubr.f32.mxu0 0.0
        %6014 = vmatmul.mubr.f32.gmra.mxu0 %v4119
        %v6015 = vpop.f32.mrf.mxu0
        %v6016 = vadd.f32 0.0, %v6015
        %v6017 = vpop.f32.mrf.mxu0
        %6018 = vmatprep.mubr.f32.mxu0 0.0
        %6019 = vmatmul.mubr.f32.gmra.mxu0 %v4121
        %v6020 = vpop.f32.mrf.mxu0
        %v6021 = vadd.f32 0.0, %v6020
        %v6022 = vpop.f32.mrf.mxu0
        %6023 = vmatprep.mubr.f32.mxu0 0.0
        %6024 = vmatmul.mubr.f32.gmra.mxu0 %v4124
        %v6025 = vpop.f32.mrf.mxu0
        %v6026 = vadd.f32 0.0, %v6025
        %v6027 = vpop.f32.mrf.mxu0
        %6028 = vmatprep.mubr.f32.mxu0 0.0
        %6029 = vmatmul.mubr.f32.gmra.mxu0 %v4126
        %v6030 = vpop.f32.mrf.mxu0
        %v6031 = vadd.f32 0.0, %v6030
        %v6032 = vpop.f32.mrf.mxu0
        %6033 = vmatprep.mubr.f32.mxu0 0.0
        %6034 = vmatmul.mubr.f32.gmra.mxu0 %v4129
        %v6035 = vpop.f32.mrf.mxu0
        %v6036 = vadd.f32 0.0, %v6035
        %v6037 = vpop.f32.mrf.mxu0
        %6038 = vmatprep.mubr.f32.mxu0 0.0
        %6039 = vmatmul.mubr.f32.gmra.mxu0 %v4131
        %v6040 = vpop.f32.mrf.mxu0
        %v6041 = vadd.f32 0.0, %v6040
        %v6042 = vpop.f32.mrf.mxu0
        %6043 = vmatprep.mubr.f32.mxu0 0.0
        %6044 = vmatmul.mubr.f32.gmra.mxu0 %v4995
        %v6045 = vpop.f32.mrf.mxu0
        %v6046 = vadd.f32 0.0, %v6045
        %v6047 = vpop.f32.mrf.mxu0
        %6048 = vmatprep.mubr.f32.mxu0 0.0
        %6049 = vmatmul.mubr.f32.gmra.mxu0 %v4997
        %v6050 = vpop.f32.mrf.mxu0
        %v6051 = vadd.f32 0.0, %v6050
        %v6052 = vpop.f32.mrf.mxu0
        %6053 = vmatprep.mubr.f32.mxu0 0.0
        %6054 = vmatmul.mubr.f32.gmra.mxu0 %v1131
        %v6055 = vpop.f32.mrf.mxu0
        %v6056 = vadd.f32 0.0, %v6055
        %v6057 = vpop.f32.mrf.mxu0
        %6058 = vmatprep.mubr.f32.mxu0 0.0
        %6059 = vmatmul.mubr.f32.gmra.mxu0 %v1133
        %v6060 = vpop.f32.mrf.mxu0
        %v6061 = vadd.f32 0.0, %v6060
        %v6062 = vpop.f32.mrf.mxu0
        %6063 = vdwg.mxu0
        %v6064 = vadd.f32 %v5790, %v5906
        %v6065 = vadd.f32 %v5791, %v5911
        %v6066 = vadd.f32 %v5792, %v5916
        %v6067 = vadd.f32 %v5793, %v5921
        %v6068 = vadd.f32 %v5794, %v5926
        %v6069 = vadd.f32 %v5795, %v5931
        %v6070 = vadd.f32 %v5796, %v5936
        %v6071 = vadd.f32 %v5797, %v5941
        %v6072 = vadd.f32 %v5798, %v5946
        %v6073 = vadd.f32 %v5799, %v5951
        %v6074 = vadd.f32 %v5800, %v5956
        %v6075 = vadd.f32 %v5801, %v5961
        %v6076 = vadd.f32 %v5802, %v5966
        %v6077 = vadd.f32 %v5803, %v5971
        %v6078 = vadd.f32 %v5804, %v5976
        %v6079 = vadd.f32 %v5805, %v5981
        %v6080 = vadd.f32 %v5806, %v5986
        %v6081 = vadd.f32 %v5807, %v5991
        %v6082 = vadd.f32 %v5808, %v5996
        %v6083 = vadd.f32 %v5809, %v6001
        %v6084 = vadd.f32 %v5810, %v6006
        %v6085 = vadd.f32 %v5811, %v6011
        %v6086 = vadd.f32 %v5812, %v6016
        %v6087 = vadd.f32 %v5813, %v6021
        %v6088 = vadd.f32 %v5814, %v6026
        %v6089 = vadd.f32 %v5815, %v6031
        %v6090 = vadd.f32 %v5816, %v6036
        %v6091 = vadd.f32 %v5817, %v6041
        %v6092 = vadd.f32 %v5818, %v6046
        %v6093 = vadd.f32 %v5819, %v6051
        %v6094 = vadd.f32 %v5820, %v6056
        %v6095 = vadd.f32 %v5821, %v6061
        %v6096 = vlaneseq
        %v6097 = vshrl.u32 %v6096, 7
        %v6098 = vsub.s32 2, %v6097
        %v6099 = vrot.slane %v331, %v6098
        %v6100 = vmul.f32 %v6064, %v6099
        %v6101 = vmul.f32 %v6065, %v6099
        %v6102 = vmul.f32 %v6066, %v6099
        %v6103 = vmul.f32 %v6067, %v6099
        %v6104 = vmul.f32 %v6068, %v6099
        %v6105 = vmul.f32 %v6069, %v6099
        %v6106 = vmul.f32 %v6070, %v6099
        %v6107 = vmul.f32 %v6071, %v6099
        %v6108 = vmul.f32 %v6072, %v6099
        %v6109 = vmul.f32 %v6073, %v6099
        %v6110 = vmul.f32 %v6074, %v6099
        %v6111 = vmul.f32 %v6075, %v6099
        %v6112 = vmul.f32 %v6076, %v6099
        %v6113 = vmul.f32 %v6077, %v6099
        %v6114 = vmul.f32 %v6078, %v6099
        %v6115 = vmul.f32 %v6079, %v6099
        %v6116 = vmul.f32 %v6080, %v6099
        %v6117 = vmul.f32 %v6081, %v6099
        %v6118 = vmul.f32 %v6082, %v6099
        %v6119 = vmul.f32 %v6083, %v6099
        %v6120 = vmul.f32 %v6084, %v6099
        %v6121 = vmul.f32 %v6085, %v6099
        %v6122 = vmul.f32 %v6086, %v6099
        %v6123 = vmul.f32 %v6087, %v6099
        %v6124 = vmul.f32 %v6088, %v6099
        %v6125 = vmul.f32 %v6089, %v6099
        %v6126 = vmul.f32 %v6090, %v6099
        %v6127 = vmul.f32 %v6091, %v6099
        %v6128 = vmul.f32 %v6092, %v6099
        %v6129 = vmul.f32 %v6093, %v6099
        %v6130 = vmul.f32 %v6094, %v6099
        %v6131 = vmul.f32 %v6095, %v6099
        %v6132 = vlaneseq
        %v6133 = vshrl.u32 %v6132, 7
        %v6134 = vsub.s32 3, %v6133
        %v6135 = vrot.slane %v331, %v6134
        %v6136 = vadd.f32 %v6100, %v6135
        %v6137 = vadd.f32 %v6101, %v6135
        %v6138 = vadd.f32 %v6102, %v6135
        %v6139 = vadd.f32 %v6103, %v6135
        %v6140 = vadd.f32 %v6104, %v6135
        %v6141 = vadd.f32 %v6105, %v6135
        %v6142 = vadd.f32 %v6106, %v6135
        %v6143 = vadd.f32 %v6107, %v6135
        %v6144 = vadd.f32 %v6108, %v6135
        %v6145 = vadd.f32 %v6109, %v6135
        %v6146 = vadd.f32 %v6110, %v6135
        %v6147 = vadd.f32 %v6111, %v6135
        %v6148 = vadd.f32 %v6112, %v6135
        %v6149 = vadd.f32 %v6113, %v6135
        %v6150 = vadd.f32 %v6114, %v6135
        %v6151 = vadd.f32 %v6115, %v6135
        %v6152 = vadd.f32 %v6116, %v6135
        %v6153 = vadd.f32 %v6117, %v6135
        %v6154 = vadd.f32 %v6118, %v6135
        %v6155 = vadd.f32 %v6119, %v6135
        %v6156 = vadd.f32 %v6120, %v6135
        %v6157 = vadd.f32 %v6121, %v6135
        %v6158 = vadd.f32 %v6122, %v6135
        %v6159 = vadd.f32 %v6123, %v6135
        %v6160 = vadd.f32 %v6124, %v6135
        %v6161 = vadd.f32 %v6125, %v6135
        %v6162 = vadd.f32 %v6126, %v6135
        %v6163 = vadd.f32 %v6127, %v6135
        %v6164 = vadd.f32 %v6128, %v6135
        %v6165 = vadd.f32 %v6129, %v6135
        %v6166 = vadd.f32 %v6130, %v6135
        %v6167 = vadd.f32 %v6131, %v6135
        %v6168 = vadd.f32 %v6136, %v299
        %v6169 = vadd.f32 %v6137, %v300
        %v6170 = vadd.f32 %v6138, %v301
        %v6171 = vadd.f32 %v6139, %v302
        %v6172 = vadd.f32 %v6140, %v303
        %v6173 = vadd.f32 %v6141, %v304
        %v6174 = vadd.f32 %v6142, %v305
        %v6175 = vadd.f32 %v6143, %v306
        %v6176 = vadd.f32 %v6144, %v307
        %v6177 = vadd.f32 %v6145, %v308
        %v6178 = vadd.f32 %v6146, %v309
        %v6179 = vadd.f32 %v6147, %v310
        %v6180 = vadd.f32 %v6148, %v311
        %v6181 = vadd.f32 %v6149, %v312
        %v6182 = vadd.f32 %v6150, %v313
        %v6183 = vadd.f32 %v6151, %v314
        %v6184 = vadd.f32 %v6152, %v315
        %v6185 = vadd.f32 %v6153, %v316
        %v6186 = vadd.f32 %v6154, %v317
        %v6187 = vadd.f32 %v6155, %v318
        %v6188 = vadd.f32 %v6156, %v319
        %v6189 = vadd.f32 %v6157, %v320
        %v6190 = vadd.f32 %v6158, %v321
        %v6191 = vadd.f32 %v6159, %v322
        %v6192 = vadd.f32 %v6160, %v323
        %v6193 = vadd.f32 %v6161, %v324
        %v6194 = vadd.f32 %v6162, %v325
        %v6195 = vadd.f32 %v6163, %v326
        %v6196 = vadd.f32 %v6164, %v327
        %v6197 = vadd.f32 %v6165, %v328
        %v6198 = vadd.f32 %v6166, %v329
        %v6199 = vadd.f32 %v6167, %v330
        %v6200 = vmax.f32 %v6168, 0.0
        %v6201 = vmax.f32 %v6169, 0.0
        %v6202 = vmax.f32 %v6170, 0.0
        %v6203 = vmax.f32 %v6171, 0.0
        %v6204 = vmax.f32 %v6172, 0.0
        %v6205 = vmax.f32 %v6173, 0.0
        %v6206 = vmax.f32 %v6174, 0.0
        %v6207 = vmax.f32 %v6175, 0.0
        %v6208 = vmax.f32 %v6176, 0.0
        %v6209 = vmax.f32 %v6177, 0.0
        %v6210 = vmax.f32 %v6178, 0.0
        %v6211 = vmax.f32 %v6179, 0.0
        %v6212 = vmax.f32 %v6180, 0.0
        %v6213 = vmax.f32 %v6181, 0.0
        %v6214 = vmax.f32 %v6182, 0.0
        %v6215 = vmax.f32 %v6183, 0.0
        %v6216 = vmax.f32 %v6184, 0.0
        %v6217 = vmax.f32 %v6185, 0.0
        %v6218 = vmax.f32 %v6186, 0.0
        %v6219 = vmax.f32 %v6187, 0.0
        %v6220 = vmax.f32 %v6188, 0.0
        %v6221 = vmax.f32 %v6189, 0.0
        %v6222 = vmax.f32 %v6190, 0.0
        %v6223 = vmax.f32 %v6191, 0.0
        %v6224 = vmax.f32 %v6192, 0.0
        %v6225 = vmax.f32 %v6193, 0.0
        %v6226 = vmax.f32 %v6194, 0.0
        %v6227 = vmax.f32 %v6195, 0.0
        %v6228 = vmax.f32 %v6196, 0.0
        %v6229 = vmax.f32 %v6197, 0.0
        %v6230 = vmax.f32 %v6198, 0.0
        %v6231 = vmax.f32 %v6199, 0.0
        %6232 = vst [vmem:[%s298] sm:$0xff] %v6200
        %6233 = vst [vmem:[%s298 + $0x8] sm:$0xff] %v6201
        %6234 = vst [vmem:[%s298 + $0x10] sm:$0xff] %v6202
        %6235 = vst [vmem:[%s298 + $0x18] sm:$0xff] %v6203
        %6236 = vst [vmem:[%s298 + $0x20] sm:$0xff] %v6204
        %6237 = vst [vmem:[%s298 + $0x28] sm:$0xff] %v6205
        %6238 = vst [vmem:[%s298 + $0x30] sm:$0xff] %v6206
        %6239 = vst [vmem:[%s298 + $0x38] sm:$0xff] %v6207
        %6240 = vst [vmem:[%s298 + $0x40] sm:$0xff] %v6208
        %6241 = vst [vmem:[%s298 + $0x48] sm:$0xff] %v6209
        %6242 = vst [vmem:[%s298 + $0x50] sm:$0xff] %v6210
        %6243 = vst [vmem:[%s298 + $0x58] sm:$0xff] %v6211
        %6244 = vst [vmem:[%s298 + $0x60] sm:$0xff] %v6212
        %6245 = vst [vmem:[%s298 + $0x68] sm:$0xff] %v6213
        %6246 = vst [vmem:[%s298 + $0x70] sm:$0xff] %v6214
        %6247 = vst [vmem:[%s298 + $0x78] sm:$0xff] %v6215
        %6248 = vst [vmem:[%s298 + $0x80] sm:$0xff] %v6216
        %6249 = vst [vmem:[%s298 + $0x88] sm:$0xff] %v6217
        %6250 = vst [vmem:[%s298 + $0x90] sm:$0xff] %v6218
        %6251 = vst [vmem:[%s298 + $0x98] sm:$0xff] %v6219
        %6252 = vst [vmem:[%s298 + $0xa0] sm:$0xff] %v6220
        %6253 = vst [vmem:[%s298 + $0xa8] sm:$0xff] %v6221
        %6254 = vst [vmem:[%s298 + $0xb0] sm:$0xff] %v6222
        %6255 = vst [vmem:[%s298 + $0xb8] sm:$0xff] %v6223
        %6256 = vst [vmem:[%s298 + $0xc0] sm:$0xff] %v6224
        %6257 = vst [vmem:[%s298 + $0xc8] sm:$0xff] %v6225
        %6258 = vst [vmem:[%s298 + $0xd0] sm:$0xff] %v6226
        %6259 = vst [vmem:[%s298 + $0xd8] sm:$0xff] %v6227
        %6260 = vst [vmem:[%s298 + $0xe0] sm:$0xff] %v6228
        %6261 = vst [vmem:[%s298 + $0xe8] sm:$0xff] %v6229
        %6262 = vst [vmem:[%s298 + $0xf0] sm:$0xff] %v6230
        %6263 = vst [vmem:[%s298 + $0xf8] sm:$0xff] %v6231
        %s6264 = sand.u32 %s142, 1
        %s6265 = scalar_lea.sflag [#allocation4], %s6264
        %s6266 = sand.u32 %s142, 1
        %s6267 = smul.addr %s6266, 256
        %s6268 = scalar_lea.vmem [#allocation11], %s6267
        // Predicated region
        $region61: #{tpu_custom_call.1} parent=39 // pred_check
          %p6269 = pneg %p152
        $region62: #{tpu_custom_call.1} parent=39 // pred_check_branch
          %6271 = sbr.rel (%p6269) target = $region64
        $region63: #{tpu_custom_call.1} parent=39 // pred_region
          %s6273 = ssub.s32 4096, 4096
          %6274 = vsyncadd %s6265, %s6273
          %s6275 = smul.addr %s24, 32
          %s6276 = smul.addr %s6275, 128
          %s6277 = scalar_lea.hbm %s5, %s6276
          %s6278 = sshll.u32 %s6268, 4
          %s6279 = int_to_ptr.vmem [resolvable:$true] %s6278
          %6284 = dma.vmem_to_hbm [thread:$0]  %s6279, 4096, %s6277, %s6265, 128, 128, 8
        $region64: #{tpu_custom_call.1} parent=39 // pred_fallthru
          _
      $region40: #{tpu_custom_call.1} parent=5 // pred_fallthru
        _
      %p6285 = scmp.le.s32.totalorder 2, %s19
      // Predicated region
      $region65: #{tpu_custom_call.1} parent=5 // pred_check
        %p6286 = pneg %p6285
      $region66: #{tpu_custom_call.1} parent=5 // pred_check_branch
        %6288 = sbr.rel (%p6286) target = $region68
      $region67: #{tpu_custom_call.1} parent=5 // pred_region
        %s6289 = ssub.s32 %s19, 2
        // Predicated region
        $region69: #{tpu_custom_call.1} parent=67 // pred_check
          %p6290 = pneg %p158
        $region70: #{tpu_custom_call.1} parent=67 // pred_check_branch
          %6292 = sbr.rel (%p6290) target = $region72
        $region71: #{tpu_custom_call.1} parent=67 // pred_region
          %s6293 = sand.u32 %s143, 1
          %s6294 = scalar_lea.sflag [#allocation4], %s6293
          %s6295 = sand.u32 %s143, 1
          %s6296 = smul.addr %s6295, 256
          %s6297 = scalar_lea.vmem [#allocation11], %s6296
          %6298 = dma.done %s6294, 4096
        $region72: #{tpu_custom_call.1} parent=67 // pred_fallthru
          _
      $region68: #{tpu_custom_call.1} parent=5 // pred_fallthru
        _
    $region6: #{tpu_custom_call.1} parent=1 // loop_footer
      %s23 = sadd.s32 1, %s19
    $region7: #{tpu_custom_call.1} parent=1 // loop_footer_branch
      %18 = sbr.rel target = $region3
    $region8: #{tpu_custom_call.1} parent=1 // loop_exit
      _
    %6299 = vsyncpa [#allocation3], 1
    %s6300 = scalar_lea.sflag [#allocation3], 1
    %6301 = vsyncpa %s6300, 1
    %6302 = vsyncpa [#allocation6], 1
    %6303 = vsyncpa [#allocation9], 1
    %6304 = vsyncpa [#allocation4], 1
    %s6305 = scalar_lea.sflag [#allocation4], 1
    %6306 = vsyncpa %s6305, 1

</llo_original>
